<compile_context>
chip_gen: v5e
topology: v5e:2x2
jax: 0.10.0
libtpu: 0.0.40
codegen_flags: <defaults>
</compile_context>

<pallas_src>
import jax
import jax.numpy as jnp
from jax.experimental import pallas as pl
from jax.experimental.pallas import tpu as pltpu


# ---------------------------------------------------------------------------
# Fused kernel: one grid step == one batch element; everything stays in VMEM.
# ---------------------------------------------------------------------------
def _fused_cnn_kernel(x_ref, w1_ref, b1_ref, w2_ref, b2_ref,
                      fc1w_ref, fc1b_ref, fc2w_ref, fc2b_ref,
                      o_ref,
                      xp1_ref, p1_ref, xp2_ref, p2_ref, f_ref):

    def conv3x3_pool2_bias_relu(x_val, xp_ref, p_ref, w_ref, b_ref):
        """Conv2d(3x3, pad=1) + MaxPool2d(2) + bias + ReLU for one NHWC image.

        Pool runs before bias/ReLU: exact (per-channel bias add and monotone
        ReLU both commute with max), and the epilogue touches a 4x smaller tile.
        """
        h, w, cin = x_val.shape
        cout = w_ref.shape[1]
        h2, w2 = h // 2, w // 2

        # -- zero padding entirely in VMEM (no jnp.pad / extra HBM pass) --
        xp_ref[...] = jnp.zeros(xp_ref.shape, xp_ref.dtype)
        xp_ref[1:h + 1, 1:w + 1, :] = x_val

        # -- im2col: 9 shifted views -> one (h*w, 9*cin) patch matrix --
        for t in range(9):                        # static unroll over the taps
            dy, dx = t // 3, t % 3
            p_ref[:, t * cin:(t + 1) * cin] = (
                xp_ref[dy:dy + h, dx:dx + w, :].reshape(h * w, cin))

        # -- single MXU matmul (K = 9*cin), raw f32 accumulator --
        y = jnp.dot(p_ref[...], w_ref[...],
                    preferred_element_type=jnp.float32)        # (h*w, cout)

        # -- fused 2x2 / stride-2 max pool on the VMEM-resident result --
        y = jnp.max(y.reshape(h * w2, 2, cout), axis=1)        # pool along W
        y = y.reshape(h2, 2, w2, cout)
        y = jnp.maximum(y[:, 0], y[:, 1])                      # pool along H

        # -- bias + ReLU on the pooled (h2, w2, cout) tile --
        return jnp.maximum(y + b_ref[...], 0.0)

    a1 = conv3x3_pool2_bias_relu(x_ref[0], xp1_ref, p1_ref, w1_ref, b1_ref)
    a2 = conv3x3_pool2_bias_relu(a1, xp2_ref, p2_ref, w2_ref, b2_ref)

    # -- flatten to a lane-dense (1, h*w*c) slab in VMEM (kernel order h,w,c;
    #    the fc1 weight is pre-permuted so this equals PyTorch's NCHW Flatten) --
    h4, w4, c2 = a2.shape
    a2f = a2.reshape(h4 * w4, c2)
    for s in range(h4 * w4):                      # static unroll, 64-lane slices
        f_ref[:, s * c2:(s + 1) * c2] = a2f[s:s + 1, :]

    # -- classifier fused in the same kernel (hidden never leaves VMEM) --
    hid = jnp.dot(f_ref[...], fc1w_ref[...],
                  preferred_element_type=jnp.float32) + fc1b_ref[...]
    hid = jnp.maximum(hid, 0.0)
    # nn.Dropout(0.5): eval-mode identity.
    # TODO(synk): training-mode dropout (pltpu.prng_seed / prng_random_bits) not implemented.
    out = jnp.dot(hid, fc2w_ref[...],
                  preferred_element_type=jnp.float32) + fc2b_ref[...]
    o_ref[0] = out.astype(o_ref.dtype)


# ---------------------------------------------------------------------------
# One-time parameter preprocessing: no per-forward transposes / reshapes.
# ---------------------------------------------------------------------------
def prepare_params(params, image_hw):
    H, W = image_hw
    h4, w4 = H // 4, W // 4
    p = {}
    # conv weights: PyTorch OIHW -> (9*Cin, Cout) with tap-major rows (dy, dx, cin)
    for i in (1, 2):
        w = params[f"conv{i}_w"]
        cout, cin = w.shape[0], w.shape[1]
        p[f"conv{i}_w"] = jnp.transpose(w, (2, 3, 1, 0)).reshape(9 * cin, cout)
        p[f"conv{i}_b"] = params[f"conv{i}_b"].reshape(1, cout)
    # fc1: PyTorch flatten order is (C, H, W); permute to the kernel's (H, W, C)
    c2 = params["conv2_w"].shape[0]
    fo = params["fc1_w"].shape[0]
    wfc1 = params["fc1_w"].reshape(fo, c2, h4, w4)            # (O, C, H, W)
    p["fc1_w"] = jnp.transpose(wfc1, (2, 3, 1, 0)).reshape(h4 * w4 * c2, fo)
    p["fc1_b"] = params["fc1_b"].reshape(1, fo)
    p["fc2_w"] = jnp.transpose(params["fc2_w"])               # (512, num_classes)
    p["fc2_b"] = params["fc2_b"].reshape(1, -1)
    return p


# ---------------------------------------------------------------------------
# Forward: one pallas_call for the whole network.
# ---------------------------------------------------------------------------
@jax.jit
def sample_cnn_forward(x_nchw, prep):
    N, Cin, H, W = x_nchw.shape
    C1 = prep["conv1_w"].shape[1]
    C2 = prep["conv2_w"].shape[1]
    H2, W2 = H // 2, W // 2
    feat = (H // 4) * (W // 4) * C2
    num_classes = prep["fc2_w"].shape[1]

    x = jnp.transpose(x_nchw, (0, 2, 3, 1))       # NCHW -> NHWC (tiny boundary op)

    full2d = lambda a: pl.BlockSpec(a.shape, lambda n: (0, 0))

    out = pl.pallas_call(
        _fused_cnn_kernel,
        out_shape=jax.ShapeDtypeStruct((N, 1, num_classes), jnp.float32),
        grid=(N,),
        in_specs=[
            pl.BlockSpec((1, H, W, Cin), lambda n: (n, 0, 0, 0)),
            full2d(prep["conv1_w"]), full2d(prep["conv1_b"]),
            full2d(prep["conv2_w"]), full2d(prep["conv2_b"]),
            full2d(prep["fc1_w"]), full2d(prep["fc1_b"]),
            full2d(prep["fc2_w"]), full2d(prep["fc2_b"]),
        ],
        out_specs=pl.BlockSpec((1, 1, num_classes), lambda n: (n, 0, 0)),
        scratch_shapes=[
            pltpu.VMEM((H + 2, W + 2, Cin), jnp.float32),     # padded conv1 input
            pltpu.VMEM((H * W, 9 * Cin), jnp.float32),        # conv1 im2col patches
            pltpu.VMEM((H2 + 2, W2 + 2, C1), jnp.float32),    # padded conv2 input
            pltpu.VMEM((H2 * W2, 9 * C1), jnp.float32),       # conv2 im2col patches
            pltpu.VMEM((1, feat), jnp.float32),               # lane-dense flat features
        ],
        compiler_params=pltpu.CompilerParams(
            dimension_semantics=("parallel",)),
    )(x, prep["conv1_w"], prep["conv1_b"], prep["conv2_w"], prep["conv2_b"],
      prep["fc1_w"], prep["fc1_b"], prep["fc2_w"], prep["fc2_b"])
    return out.reshape(N, num_classes)


# ---------------------------------------------------------------------------
# Plain-JAX reference (mirrors the PyTorch module) used as a numerical oracle.
# ---------------------------------------------------------------------------
def _reference_forward(x_nchw, params):
    def conv_relu(x, w, b):
        y = jax.lax.conv_general_dilated(
            x, w, window_strides=(1, 1), padding=((1, 1), (1, 1)),
            dimension_numbers=("NCHW", "OIHW", "NCHW"))
        return jax.nn.relu(y + b[None, :, None, None])

    def pool(x):
        return jax.lax.reduce_window(x, -jnp.inf, jax.lax.max,
                                     (1, 1, 2, 2), (1, 1, 2, 2), "VALID")

    x = pool(conv_relu(x_nchw, params["conv1_w"], params["conv1_b"]))
    x = pool(conv_relu(x, params["conv2_w"], params["conv2_b"]))
    x = x.reshape(x.shape[0], -1)                              # nn.Flatten (NCHW)
    x = jax.nn.relu(x @ params["fc1_w"].T + params["fc1_b"])
    return x @ params["fc2_w"].T + params["fc2_b"]             # Dropout: eval identity


# ---------------------------------------------------------------------------
if __name__ == "__main__":
    N, Cin, H, W = 2, 3, 16, 16
    num_classes = 2
    feat = 64 * (H // 4) * (W // 4)   # 1024 at 16x16 (64*56*56 in the 224x224 original)

    key = jax.random.PRNGKey(0)
    keys = jax.random.split(key, 9)
    params = {
        "conv1_w": jax.random.normal(keys[0], (32, 3, 3, 3), jnp.float32) * 0.10,
        "conv1_b": jax.random.normal(keys[1], (32,), jnp.float32) * 0.10,
        "conv2_w": jax.random.normal(keys[2], (64, 32, 3, 3), jnp.float32) * 0.05,
        "conv2_b": jax.random.normal(keys[3], (64,), jnp.float32) * 0.05,
        "fc1_w": jax.random.normal(keys[4], (512, feat), jnp.float32) * 0.02,
        "fc1_b": jax.random.normal(keys[5], (512,), jnp.float32) * 0.02,
        "fc2_w": jax.random.normal(keys[6], (num_classes, 512), jnp.float32) * 0.05,
        "fc2_b": jax.random.normal(keys[7], (num_classes,), jnp.float32) * 0.05,
    }
    x = jax.random.normal(keys[8], (N, Cin, H, W), jnp.float32)

    prep = prepare_params(params, (H, W))     # one-time: keeps transposes out of forward
    out = jax.block_until_ready(sample_cnn_forward(x, prep))

    assert out.shape == (N, num_classes), out.shape
    assert out.dtype == jnp.float32

    ref = _reference_forward(x, params)
    assert jnp.allclose(out, ref, rtol=2e-2, atol=2e-2), (
        float(jnp.max(jnp.abs(out - ref))))
    print("KERNEL_OK")
</pallas_src>

<mosaic_0001>
module attributes {stable_mosaic.version = 11 : i64} {
  func.func @_fused_cnn_kernel(%arg0: i32, %arg1: memref<1x16x16x3xf32, #tpu.memory_space<vmem>>, %arg2: memref<27x32xf32, #tpu.memory_space<vmem>>, %arg3: memref<1x32xf32, #tpu.memory_space<vmem>>, %arg4: memref<288x64xf32, #tpu.memory_space<vmem>>, %arg5: memref<1x64xf32, #tpu.memory_space<vmem>>, %arg6: memref<1024x512xf32, #tpu.memory_space<vmem>>, %arg7: memref<1x512xf32, #tpu.memory_space<vmem>>, %arg8: memref<512x2xf32, #tpu.memory_space<vmem>>, %arg9: memref<1x2xf32, #tpu.memory_space<vmem>>, %arg10: memref<1x1x2xf32, #tpu.memory_space<vmem>>, %arg11: memref<18x18x3xf32, #tpu.memory_space<vmem>>, %arg12: memref<256x27xf32, #tpu.memory_space<vmem>>, %arg13: memref<10x10x32xf32, #tpu.memory_space<vmem>>, %arg14: memref<64x288xf32, #tpu.memory_space<vmem>>, %arg15: memref<1x1024xf32, #tpu.memory_space<vmem>>) attributes {dimension_semantics = [#tpu.dimension_semantics<parallel>], iteration_bounds = array<i64: 2>, scalar_prefetch = 0 : i64, scratch_operands = 5 : i64, tpu.core_type = #tpu.core_type<tc>, window_params = [{transform_indices = @transform_0, window_bounds = array<i64: 1, 16, 16, 3>}, {pipeline_mode = #tpu.pipeline_mode<synchronous>, transform_indices = @transform_1, window_bounds = array<i64: 27, 32>}, {pipeline_mode = #tpu.pipeline_mode<synchronous>, transform_indices = @transform_2, window_bounds = array<i64: 1, 32>}, {pipeline_mode = #tpu.pipeline_mode<synchronous>, transform_indices = @transform_3, window_bounds = array<i64: 288, 64>}, {pipeline_mode = #tpu.pipeline_mode<synchronous>, transform_indices = @transform_4, window_bounds = array<i64: 1, 64>}, {pipeline_mode = #tpu.pipeline_mode<synchronous>, transform_indices = @transform_5, window_bounds = array<i64: 1024, 512>}, {pipeline_mode = #tpu.pipeline_mode<synchronous>, transform_indices = @transform_6, window_bounds = array<i64: 1, 512>}, {pipeline_mode = #tpu.pipeline_mode<synchronous>, transform_indices = @transform_7, window_bounds = array<i64: 512, 2>}, {pipeline_mode = #tpu.pipeline_mode<synchronous>, transform_indices = @transform_8, window_bounds = array<i64: 1, 2>}, {transform_indices = @transform_9, window_bounds = array<i64: 1, 1, 2>}]} {
    %c0 = arith.constant 0 : index
    %c0_0 = arith.constant 0 : index
    %c0_1 = arith.constant 0 : index
    %c0_2 = arith.constant 0 : index
    %0 = vector.load %arg1[%c0, %c0_0, %c0_1, %c0_2] : memref<1x16x16x3xf32, #tpu.memory_space<vmem>>, vector<1x16x16x3xf32>
    %1 = vector.shape_cast %0 : vector<1x16x16x3xf32> to vector<16x16x3xf32>
    %cst = arith.constant 0.000000e+00 : f32
    %2 = vector.broadcast %cst : f32 to vector<18x18x3xf32>
    %c0_3 = arith.constant 0 : index
    %c0_4 = arith.constant 0 : index
    %c0_5 = arith.constant 0 : index
    %3 = vector.load %arg11[%c0_3, %c0_4, %c0_5] : memref<18x18x3xf32, #tpu.memory_space<vmem>>, vector<18x18x3xf32>
    tpu.vector_store %arg11[%c0_3, %c0_4, %c0_5], %2 {strides = array<i32>} : memref<18x18x3xf32, #tpu.memory_space<vmem>>, vector<18x18x3xf32>,
    %c1 = arith.constant 1 : index
    %c1_6 = arith.constant 1 : index
    %c0_7 = arith.constant 0 : index
    %4 = vector.load %arg11[%c1, %c1_6, %c0_7] : memref<18x18x3xf32, #tpu.memory_space<vmem>>, vector<16x16x3xf32>
    tpu.vector_store %arg11[%c1, %c1_6, %c0_7], %1 {strides = array<i32>} : memref<18x18x3xf32, #tpu.memory_space<vmem>>, vector<16x16x3xf32>,
    %c0_8 = arith.constant 0 : index
    %c0_9 = arith.constant 0 : index
    %c0_10 = arith.constant 0 : index
    %5 = vector.load %arg11[%c0_8, %c0_9, %c0_10] : memref<18x18x3xf32, #tpu.memory_space<vmem>>, vector<16x16x3xf32>
    %6 = vector.shape_cast %5 : vector<16x16x3xf32> to vector<256x3xf32>
    %c0_11 = arith.constant 0 : index
    %c0_12 = arith.constant 0 : index
    %7 = vector.load %arg12[%c0_11, %c0_12] : memref<256x27xf32, #tpu.memory_space<vmem>>, vector<256x3xf32>
    tpu.vector_store %arg12[%c0_11, %c0_12], %6 {strides = array<i32>} : memref<256x27xf32, #tpu.memory_space<vmem>>, vector<256x3xf32>,
    %c0_13 = arith.constant 0 : index
    %c1_14 = arith.constant 1 : index
    %c0_15 = arith.constant 0 : index
    %8 = vector.load %arg11[%c0_13, %c1_14, %c0_15] : memref<18x18x3xf32, #tpu.memory_space<vmem>>, vector<16x16x3xf32>
    %9 = vector.shape_cast %8 : vector<16x16x3xf32> to vector<256x3xf32>
    %c0_16 = arith.constant 0 : index
    %c3 = arith.constant 3 : index
    %10 = vector.load %arg12[%c0_16, %c3] : memref<256x27xf32, #tpu.memory_space<vmem>>, vector<256x3xf32>
    tpu.vector_store %arg12[%c0_16, %c3], %9 {strides = array<i32>} : memref<256x27xf32, #tpu.memory_space<vmem>>, vector<256x3xf32>,
    %c0_17 = arith.constant 0 : index
    %c2 = arith.constant 2 : index
    %c0_18 = arith.constant 0 : index
    %11 = vector.load %arg11[%c0_17, %c2, %c0_18] : memref<18x18x3xf32, #tpu.memory_space<vmem>>, vector<16x16x3xf32>
    %12 = vector.shape_cast %11 : vector<16x16x3xf32> to vector<256x3xf32>
    %c0_19 = arith.constant 0 : index
    %c6 = arith.constant 6 : index
    %13 = vector.load %arg12[%c0_19, %c6] : memref<256x27xf32, #tpu.memory_space<vmem>>, vector<256x3xf32>
    tpu.vector_store %arg12[%c0_19, %c6], %12 {strides = array<i32>} : memref<256x27xf32, #tpu.memory_space<vmem>>, vector<256x3xf32>,
    %c1_20 = arith.constant 1 : index
    %c0_21 = arith.constant 0 : index
    %c0_22 = arith.constant 0 : index
    %14 = vector.load %arg11[%c1_20, %c0_21, %c0_22] : memref<18x18x3xf32, #tpu.memory_space<vmem>>, vector<16x16x3xf32>
    %15 = vector.shape_cast %14 : vector<16x16x3xf32> to vector<256x3xf32>
    %c0_23 = arith.constant 0 : index
    %c9 = arith.constant 9 : index
    %16 = vector.load %arg12[%c0_23, %c9] : memref<256x27xf32, #tpu.memory_space<vmem>>, vector<256x3xf32>
    tpu.vector_store %arg12[%c0_23, %c9], %15 {strides = array<i32>} : memref<256x27xf32, #tpu.memory_space<vmem>>, vector<256x3xf32>,
    %c1_24 = arith.constant 1 : index
    %c1_25 = arith.constant 1 : index
    %c0_26 = arith.constant 0 : index
    %17 = vector.load %arg11[%c1_24, %c1_25, %c0_26] : memref<18x18x3xf32, #tpu.memory_space<vmem>>, vector<16x16x3xf32>
    %18 = vector.shape_cast %17 : vector<16x16x3xf32> to vector<256x3xf32>
    %c0_27 = arith.constant 0 : index
    %c12 = arith.constant 12 : index
    %19 = vector.load %arg12[%c0_27, %c12] : memref<256x27xf32, #tpu.memory_space<vmem>>, vector<256x3xf32>
    tpu.vector_store %arg12[%c0_27, %c12], %18 {strides = array<i32>} : memref<256x27xf32, #tpu.memory_space<vmem>>, vector<256x3xf32>,
    %c1_28 = arith.constant 1 : index
    %c2_29 = arith.constant 2 : index
    %c0_30 = arith.constant 0 : index
    %20 = vector.load %arg11[%c1_28, %c2_29, %c0_30] : memref<18x18x3xf32, #tpu.memory_space<vmem>>, vector<16x16x3xf32>
    %21 = vector.shape_cast %20 : vector<16x16x3xf32> to vector<256x3xf32>
    %c0_31 = arith.constant 0 : index
    %c15 = arith.constant 15 : index
    %22 = vector.load %arg12[%c0_31, %c15] : memref<256x27xf32, #tpu.memory_space<vmem>>, vector<256x3xf32>
    tpu.vector_store %arg12[%c0_31, %c15], %21 {strides = array<i32>} : memref<256x27xf32, #tpu.memory_space<vmem>>, vector<256x3xf32>,
    %c2_32 = arith.constant 2 : index
    %c0_33 = arith.constant 0 : index
    %c0_34 = arith.constant 0 : index
    %23 = vector.load %arg11[%c2_32, %c0_33, %c0_34] : memref<18x18x3xf32, #tpu.memory_space<vmem>>, vector<16x16x3xf32>
    %24 = vector.shape_cast %23 : vector<16x16x3xf32> to vector<256x3xf32>
    %c0_35 = arith.constant 0 : index
    %c18 = arith.constant 18 : index
    %25 = vector.load %arg12[%c0_35, %c18] : memref<256x27xf32, #tpu.memory_space<vmem>>, vector<256x3xf32>
    tpu.vector_store %arg12[%c0_35, %c18], %24 {strides = array<i32>} : memref<256x27xf32, #tpu.memory_space<vmem>>, vector<256x3xf32>,
    %c2_36 = arith.constant 2 : index
    %c1_37 = arith.constant 1 : index
    %c0_38 = arith.constant 0 : index
    %26 = vector.load %arg11[%c2_36, %c1_37, %c0_38] : memref<18x18x3xf32, #tpu.memory_space<vmem>>, vector<16x16x3xf32>
    %27 = vector.shape_cast %26 : vector<16x16x3xf32> to vector<256x3xf32>
    %c0_39 = arith.constant 0 : index
    %c21 = arith.constant 21 : index
    %28 = vector.load %arg12[%c0_39, %c21] : memref<256x27xf32, #tpu.memory_space<vmem>>, vector<256x3xf32>
    tpu.vector_store %arg12[%c0_39, %c21], %27 {strides = array<i32>} : memref<256x27xf32, #tpu.memory_space<vmem>>, vector<256x3xf32>,
    %c2_40 = arith.constant 2 : index
    %c2_41 = arith.constant 2 : index
    %c0_42 = arith.constant 0 : index
    %29 = vector.load %arg11[%c2_40, %c2_41, %c0_42] : memref<18x18x3xf32, #tpu.memory_space<vmem>>, vector<16x16x3xf32>
    %30 = vector.shape_cast %29 : vector<16x16x3xf32> to vector<256x3xf32>
    %c0_43 = arith.constant 0 : index
    %c24 = arith.constant 24 : index
    %31 = vector.load %arg12[%c0_43, %c24] : memref<256x27xf32, #tpu.memory_space<vmem>>, vector<256x3xf32>
    tpu.vector_store %arg12[%c0_43, %c24], %30 {strides = array<i32>} : memref<256x27xf32, #tpu.memory_space<vmem>>, vector<256x3xf32>,
    %c0_44 = arith.constant 0 : index
    %c0_45 = arith.constant 0 : index
    %32 = vector.load %arg12[%c0_44, %c0_45] : memref<256x27xf32, #tpu.memory_space<vmem>>, vector<256x27xf32>
    %c0_46 = arith.constant 0 : index
    %c0_47 = arith.constant 0 : index
    %33 = vector.load %arg2[%c0_46, %c0_47] : memref<27x32xf32, #tpu.memory_space<vmem>>, vector<27x32xf32>
    %cst_48 = arith.constant dense<0.000000e+00> : vector<256x32xf32>
    %34 = tpu.matmul %32, %33, %cst_48 {dimension_numbers = #tpu.dot_dimension_numbers<[1], [0], [0], [1], [0, 0, 1, 1], [], []>} : vector<256x27xf32>, vector<27x32xf32>, vector<256x32xf32> -> vector<256x32xf32>
    %35 = vector.shape_cast %34 : vector<256x32xf32> to vector<128x2x32xf32>
    %cst_49 = arith.constant dense<0xFF800000> : vector<128x32xf32>
    %36 = vector.multi_reduction <maximumf>, %35, %cst_49 [1] : vector<128x2x32xf32> to vector<128x32xf32>
    %37 = vector.shape_cast %36 : vector<128x32xf32> to vector<8x2x8x32xf32>
    %38 = vector.extract_strided_slice %37 {offsets = [0, 0, 0, 0], sizes = [8, 1, 8, 32], strides = [1, 1, 1, 1]} : vector<8x2x8x32xf32> to vector<8x1x8x32xf32>
    %39 = vector.shape_cast %38 : vector<8x1x8x32xf32> to vector<8x8x32xf32>
    %40 = vector.extract_strided_slice %37 {offsets = [0, 1, 0, 0], sizes = [8, 1, 8, 32], strides = [1, 1, 1, 1]} : vector<8x2x8x32xf32> to vector<8x1x8x32xf32>
    %41 = vector.shape_cast %40 : vector<8x1x8x32xf32> to vector<8x8x32xf32>
    %42 = arith.maximumf %39, %41 : vector<8x8x32xf32>
    %c0_50 = arith.constant 0 : index
    %c0_51 = arith.constant 0 : index
    %43 = vector.load %arg3[%c0_50, %c0_51] : memref<1x32xf32, #tpu.memory_space<vmem>>, vector<1x32xf32>
    %44 = vector.shape_cast %43 : vector<1x32xf32> to vector<1x1x32xf32>
    %45 = vector.broadcast %44 : vector<1x1x32xf32> to vector<8x8x32xf32>
    %46 = arith.addf %42, %45 : vector<8x8x32xf32>
    %cst_52 = arith.constant 0.000000e+00 : f32
    %47 = vector.broadcast %cst_52 : f32 to vector<8x8x32xf32>
    %48 = arith.maximumf %46, %47 : vector<8x8x32xf32>
    %cst_53 = arith.constant 0.000000e+00 : f32
    %49 = vector.broadcast %cst_53 : f32 to vector<10x10x32xf32>
    %c0_54 = arith.constant 0 : index
    %c0_55 = arith.constant 0 : index
    %c0_56 = arith.constant 0 : index
    %50 = vector.load %arg13[%c0_54, %c0_55, %c0_56] : memref<10x10x32xf32, #tpu.memory_space<vmem>>, vector<10x10x32xf32>
    tpu.vector_store %arg13[%c0_54, %c0_55, %c0_56], %49 {strides = array<i32>} : memref<10x10x32xf32, #tpu.memory_space<vmem>>, vector<10x10x32xf32>,
    %c1_57 = arith.constant 1 : index
    %c1_58 = arith.constant 1 : index
    %c0_59 = arith.constant 0 : index
    %51 = vector.load %arg13[%c1_57, %c1_58, %c0_59] : memref<10x10x32xf32, #tpu.memory_space<vmem>>, vector<8x8x32xf32>
    tpu.vector_store %arg13[%c1_57, %c1_58, %c0_59], %48 {strides = array<i32>} : memref<10x10x32xf32, #tpu.memory_space<vmem>>, vector<8x8x32xf32>,
    %c0_60 = arith.constant 0 : index
    %c0_61 = arith.constant 0 : index
    %c0_62 = arith.constant 0 : index
    %52 = vector.load %arg13[%c0_60, %c0_61, %c0_62] : memref<10x10x32xf32, #tpu.memory_space<vmem>>, vector<8x8x32xf32>
    %53 = vector.shape_cast %52 : vector<8x8x32xf32> to vector<64x32xf32>
    %c0_63 = arith.constant 0 : index
    %c0_64 = arith.constant 0 : index
    %54 = vector.load %arg14[%c0_63, %c0_64] : memref<64x288xf32, #tpu.memory_space<vmem>>, vector<64x32xf32>
    tpu.vector_store %arg14[%c0_63, %c0_64], %53 {strides = array<i32>} : memref<64x288xf32, #tpu.memory_space<vmem>>, vector<64x32xf32>,
    %c0_65 = arith.constant 0 : index
    %c1_66 = arith.constant 1 : index
    %c0_67 = arith.constant 0 : index
    %55 = vector.load %arg13[%c0_65, %c1_66, %c0_67] : memref<10x10x32xf32, #tpu.memory_space<vmem>>, vector<8x8x32xf32>
    %56 = vector.shape_cast %55 : vector<8x8x32xf32> to vector<64x32xf32>
    %c0_68 = arith.constant 0 : index
    %c32 = arith.constant 32 : index
    %57 = vector.load %arg14[%c0_68, %c32] : memref<64x288xf32, #tpu.memory_space<vmem>>, vector<64x32xf32>
    tpu.vector_store %arg14[%c0_68, %c32], %56 {strides = array<i32>} : memref<64x288xf32, #tpu.memory_space<vmem>>, vector<64x32xf32>,
    %c0_69 = arith.constant 0 : index
    %c2_70 = arith.constant 2 : index
    %c0_71 = arith.constant 0 : index
    %58 = vector.load %arg13[%c0_69, %c2_70, %c0_71] : memref<10x10x32xf32, #tpu.memory_space<vmem>>, vector<8x8x32xf32>
    %59 = vector.shape_cast %58 : vector<8x8x32xf32> to vector<64x32xf32>
    %c0_72 = arith.constant 0 : index
    %c64 = arith.constant 64 : index
    %60 = vector.load %arg14[%c0_72, %c64] : memref<64x288xf32, #tpu.memory_space<vmem>>, vector<64x32xf32>
    tpu.vector_store %arg14[%c0_72, %c64], %59 {strides = array<i32>} : memref<64x288xf32, #tpu.memory_space<vmem>>, vector<64x32xf32>,
    %c1_73 = arith.constant 1 : index
    %c0_74 = arith.constant 0 : index
    %c0_75 = arith.constant 0 : index
    %61 = vector.load %arg13[%c1_73, %c0_74, %c0_75] : memref<10x10x32xf32, #tpu.memory_space<vmem>>, vector<8x8x32xf32>
    %62 = vector.shape_cast %61 : vector<8x8x32xf32> to vector<64x32xf32>
    %c0_76 = arith.constant 0 : index
    %c96 = arith.constant 96 : index
    %63 = vector.load %arg14[%c0_76, %c96] : memref<64x288xf32, #tpu.memory_space<vmem>>, vector<64x32xf32>
    tpu.vector_store %arg14[%c0_76, %c96], %62 {strides = array<i32>} : memref<64x288xf32, #tpu.memory_space<vmem>>, vector<64x32xf32>,
    %c1_77 = arith.constant 1 : index
    %c1_78 = arith.constant 1 : index
    %c0_79 = arith.constant 0 : index
    %64 = vector.load %arg13[%c1_77, %c1_78, %c0_79] : memref<10x10x32xf32, #tpu.memory_space<vmem>>, vector<8x8x32xf32>
    %65 = vector.shape_cast %64 : vector<8x8x32xf32> to vector<64x32xf32>
    %c0_80 = arith.constant 0 : index
    %c128 = arith.constant 128 : index
    %66 = vector.load %arg14[%c0_80, %c128] : memref<64x288xf32, #tpu.memory_space<vmem>>, vector<64x32xf32>
    tpu.vector_store %arg14[%c0_80, %c128], %65 {strides = array<i32>} : memref<64x288xf32, #tpu.memory_space<vmem>>, vector<64x32xf32>,
    %c1_81 = arith.constant 1 : index
    %c2_82 = arith.constant 2 : index
    %c0_83 = arith.constant 0 : index
    %67 = vector.load %arg13[%c1_81, %c2_82, %c0_83] : memref<10x10x32xf32, #tpu.memory_space<vmem>>, vector<8x8x32xf32>
    %68 = vector.shape_cast %67 : vector<8x8x32xf32> to vector<64x32xf32>
    %c0_84 = arith.constant 0 : index
    %c160 = arith.constant 160 : index
    %69 = vector.load %arg14[%c0_84, %c160] : memref<64x288xf32, #tpu.memory_space<vmem>>, vector<64x32xf32>
    tpu.vector_store %arg14[%c0_84, %c160], %68 {strides = array<i32>} : memref<64x288xf32, #tpu.memory_space<vmem>>, vector<64x32xf32>,
    %c2_85 = arith.constant 2 : index
    %c0_86 = arith.constant 0 : index
    %c0_87 = arith.constant 0 : index
    %70 = vector.load %arg13[%c2_85, %c0_86, %c0_87] : memref<10x10x32xf32, #tpu.memory_space<vmem>>, vector<8x8x32xf32>
    %71 = vector.shape_cast %70 : vector<8x8x32xf32> to vector<64x32xf32>
    %c0_88 = arith.constant 0 : index
    %c192 = arith.constant 192 : index
    %72 = vector.load %arg14[%c0_88, %c192] : memref<64x288xf32, #tpu.memory_space<vmem>>, vector<64x32xf32>
    tpu.vector_store %arg14[%c0_88, %c192], %71 {strides = array<i32>} : memref<64x288xf32, #tpu.memory_space<vmem>>, vector<64x32xf32>,
    %c2_89 = arith.constant 2 : index
    %c1_90 = arith.constant 1 : index
    %c0_91 = arith.constant 0 : index
    %73 = vector.load %arg13[%c2_89, %c1_90, %c0_91] : memref<10x10x32xf32, #tpu.memory_space<vmem>>, vector<8x8x32xf32>
    %74 = vector.shape_cast %73 : vector<8x8x32xf32> to vector<64x32xf32>
    %c0_92 = arith.constant 0 : index
    %c224 = arith.constant 224 : index
    %75 = vector.load %arg14[%c0_92, %c224] : memref<64x288xf32, #tpu.memory_space<vmem>>, vector<64x32xf32>
    tpu.vector_store %arg14[%c0_92, %c224], %74 {strides = array<i32>} : memref<64x288xf32, #tpu.memory_space<vmem>>, vector<64x32xf32>,
    %c2_93 = arith.constant 2 : index
    %c2_94 = arith.constant 2 : index
    %c0_95 = arith.constant 0 : index
    %76 = vector.load %arg13[%c2_93, %c2_94, %c0_95] : memref<10x10x32xf32, #tpu.memory_space<vmem>>, vector<8x8x32xf32>
    %77 = vector.shape_cast %76 : vector<8x8x32xf32> to vector<64x32xf32>
    %c0_96 = arith.constant 0 : index
    %c256 = arith.constant 256 : index
    %78 = vector.load %arg14[%c0_96, %c256] : memref<64x288xf32, #tpu.memory_space<vmem>>, vector<64x32xf32>
    tpu.vector_store %arg14[%c0_96, %c256], %77 {strides = array<i32>} : memref<64x288xf32, #tpu.memory_space<vmem>>, vector<64x32xf32>,
    %c0_97 = arith.constant 0 : index
    %c0_98 = arith.constant 0 : index
    %79 = vector.load %arg14[%c0_97, %c0_98] : memref<64x288xf32, #tpu.memory_space<vmem>>, vector<64x288xf32>
    %c0_99 = arith.constant 0 : index
    %c0_100 = arith.constant 0 : index
    %80 = vector.load %arg4[%c0_99, %c0_100] : memref<288x64xf32, #tpu.memory_space<vmem>>, vector<288x64xf32>
    %cst_101 = arith.constant dense<0.000000e+00> : vector<64x64xf32>
    %81 = tpu.matmul %79, %80, %cst_101 {dimension_numbers = #tpu.dot_dimension_numbers<[1], [0], [0], [1], [0, 0, 1, 1], [], []>} : vector<64x288xf32>, vector<288x64xf32>, vector<64x64xf32> -> vector<64x64xf32>
    %82 = vector.shape_cast %81 : vector<64x64xf32> to vector<32x2x64xf32>
    %cst_102 = arith.constant dense<0xFF800000> : vector<32x64xf32>
    %83 = vector.multi_reduction <maximumf>, %82, %cst_102 [1] : vector<32x2x64xf32> to vector<32x64xf32>
    %84 = vector.shape_cast %83 : vector<32x64xf32> to vector<4x2x4x64xf32>
    %85 = vector.extract_strided_slice %84 {offsets = [0, 0, 0, 0], sizes = [4, 1, 4, 64], strides = [1, 1, 1, 1]} : vector<4x2x4x64xf32> to vector<4x1x4x64xf32>
    %86 = vector.shape_cast %85 : vector<4x1x4x64xf32> to vector<4x4x64xf32>
    %87 = vector.extract_strided_slice %84 {offsets = [0, 1, 0, 0], sizes = [4, 1, 4, 64], strides = [1, 1, 1, 1]} : vector<4x2x4x64xf32> to vector<4x1x4x64xf32>
    %88 = vector.shape_cast %87 : vector<4x1x4x64xf32> to vector<4x4x64xf32>
    %89 = arith.maximumf %86, %88 : vector<4x4x64xf32>
    %c0_103 = arith.constant 0 : index
    %c0_104 = arith.constant 0 : index
    %90 = vector.load %arg5[%c0_103, %c0_104] : memref<1x64xf32, #tpu.memory_space<vmem>>, vector<1x64xf32>
    %91 = vector.shape_cast %90 : vector<1x64xf32> to vector<1x1x64xf32>
    %92 = vector.broadcast %91 : vector<1x1x64xf32> to vector<4x4x64xf32>
    %93 = arith.addf %89, %92 : vector<4x4x64xf32>
    %cst_105 = arith.constant 0.000000e+00 : f32
    %94 = vector.broadcast %cst_105 : f32 to vector<4x4x64xf32>
    %95 = arith.maximumf %93, %94 : vector<4x4x64xf32>
    %96 = vector.shape_cast %95 : vector<4x4x64xf32> to vector<16x64xf32>
    %97 = vector.extract_strided_slice %96 {offsets = [0, 0], sizes = [1, 64], strides = [1, 1]} : vector<16x64xf32> to vector<1x64xf32>
    %c0_106 = arith.constant 0 : index
    %c0_107 = arith.constant 0 : index
    %98 = vector.load %arg15[%c0_106, %c0_107] : memref<1x1024xf32, #tpu.memory_space<vmem>>, vector<1x64xf32>
    tpu.vector_store %arg15[%c0_106, %c0_107], %97 {strides = array<i32>} : memref<1x1024xf32, #tpu.memory_space<vmem>>, vector<1x64xf32>,
    %99 = vector.extract_strided_slice %96 {offsets = [1, 0], sizes = [1, 64], strides = [1, 1]} : vector<16x64xf32> to vector<1x64xf32>
    %c0_108 = arith.constant 0 : index
    %c64_109 = arith.constant 64 : index
    %100 = vector.load %arg15[%c0_108, %c64_109] : memref<1x1024xf32, #tpu.memory_space<vmem>>, vector<1x64xf32>
    tpu.vector_store %arg15[%c0_108, %c64_109], %99 {strides = array<i32>} : memref<1x1024xf32, #tpu.memory_space<vmem>>, vector<1x64xf32>,
    %101 = vector.extract_strided_slice %96 {offsets = [2, 0], sizes = [1, 64], strides = [1, 1]} : vector<16x64xf32> to vector<1x64xf32>
    %c0_110 = arith.constant 0 : index
    %c128_111 = arith.constant 128 : index
    %102 = vector.load %arg15[%c0_110, %c128_111] : memref<1x1024xf32, #tpu.memory_space<vmem>>, vector<1x64xf32>
    tpu.vector_store %arg15[%c0_110, %c128_111], %101 {strides = array<i32>} : memref<1x1024xf32, #tpu.memory_space<vmem>>, vector<1x64xf32>,
    %103 = vector.extract_strided_slice %96 {offsets = [3, 0], sizes = [1, 64], strides = [1, 1]} : vector<16x64xf32> to vector<1x64xf32>
    %c0_112 = arith.constant 0 : index
    %c192_113 = arith.constant 192 : index
    %104 = vector.load %arg15[%c0_112, %c192_113] : memref<1x1024xf32, #tpu.memory_space<vmem>>, vector<1x64xf32>
    tpu.vector_store %arg15[%c0_112, %c192_113], %103 {strides = array<i32>} : memref<1x1024xf32, #tpu.memory_space<vmem>>, vector<1x64xf32>,
    %105 = vector.extract_strided_slice %96 {offsets = [4, 0], sizes = [1, 64], strides = [1, 1]} : vector<16x64xf32> to vector<1x64xf32>
    %c0_114 = arith.constant 0 : index
    %c256_115 = arith.constant 256 : index
    %106 = vector.load %arg15[%c0_114, %c256_115] : memref<1x1024xf32, #tpu.memory_space<vmem>>, vector<1x64xf32>
    tpu.vector_store %arg15[%c0_114, %c256_115], %105 {strides = array<i32>} : memref<1x1024xf32, #tpu.memory_space<vmem>>, vector<1x64xf32>,
    %107 = vector.extract_strided_slice %96 {offsets = [5, 0], sizes = [1, 64], strides = [1, 1]} : vector<16x64xf32> to vector<1x64xf32>
    %c0_116 = arith.constant 0 : index
    %c320 = arith.constant 320 : index
    %108 = vector.load %arg15[%c0_116, %c320] : memref<1x1024xf32, #tpu.memory_space<vmem>>, vector<1x64xf32>
    tpu.vector_store %arg15[%c0_116, %c320], %107 {strides = array<i32>} : memref<1x1024xf32, #tpu.memory_space<vmem>>, vector<1x64xf32>,
    %109 = vector.extract_strided_slice %96 {offsets = [6, 0], sizes = [1, 64], strides = [1, 1]} : vector<16x64xf32> to vector<1x64xf32>
    %c0_117 = arith.constant 0 : index
    %c384 = arith.constant 384 : index
    %110 = vector.load %arg15[%c0_117, %c384] : memref<1x1024xf32, #tpu.memory_space<vmem>>, vector<1x64xf32>
    tpu.vector_store %arg15[%c0_117, %c384], %109 {strides = array<i32>} : memref<1x1024xf32, #tpu.memory_space<vmem>>, vector<1x64xf32>,
    %111 = vector.extract_strided_slice %96 {offsets = [7, 0], sizes = [1, 64], strides = [1, 1]} : vector<16x64xf32> to vector<1x64xf32>
    %c0_118 = arith.constant 0 : index
    %c448 = arith.constant 448 : index
    %112 = vector.load %arg15[%c0_118, %c448] : memref<1x1024xf32, #tpu.memory_space<vmem>>, vector<1x64xf32>
    tpu.vector_store %arg15[%c0_118, %c448], %111 {strides = array<i32>} : memref<1x1024xf32, #tpu.memory_space<vmem>>, vector<1x64xf32>,
    %113 = vector.extract_strided_slice %96 {offsets = [8, 0], sizes = [1, 64], strides = [1, 1]} : vector<16x64xf32> to vector<1x64xf32>
    %c0_119 = arith.constant 0 : index
    %c512 = arith.constant 512 : index
    %114 = vector.load %arg15[%c0_119, %c512] : memref<1x1024xf32, #tpu.memory_space<vmem>>, vector<1x64xf32>
    tpu.vector_store %arg15[%c0_119, %c512], %113 {strides = array<i32>} : memref<1x1024xf32, #tpu.memory_space<vmem>>, vector<1x64xf32>,
    %115 = vector.extract_strided_slice %96 {offsets = [9, 0], sizes = [1, 64], strides = [1, 1]} : vector<16x64xf32> to vector<1x64xf32>
    %c0_120 = arith.constant 0 : index
    %c576 = arith.constant 576 : index
    %116 = vector.load %arg15[%c0_120, %c576] : memref<1x1024xf32, #tpu.memory_space<vmem>>, vector<1x64xf32>
    tpu.vector_store %arg15[%c0_120, %c576], %115 {strides = array<i32>} : memref<1x1024xf32, #tpu.memory_space<vmem>>, vector<1x64xf32>,
    %117 = vector.extract_strided_slice %96 {offsets = [10, 0], sizes = [1, 64], strides = [1, 1]} : vector<16x64xf32> to vector<1x64xf32>
    %c0_121 = arith.constant 0 : index
    %c640 = arith.constant 640 : index
    %118 = vector.load %arg15[%c0_121, %c640] : memref<1x1024xf32, #tpu.memory_space<vmem>>, vector<1x64xf32>
    tpu.vector_store %arg15[%c0_121, %c640], %117 {strides = array<i32>} : memref<1x1024xf32, #tpu.memory_space<vmem>>, vector<1x64xf32>,
    %119 = vector.extract_strided_slice %96 {offsets = [11, 0], sizes = [1, 64], strides = [1, 1]} : vector<16x64xf32> to vector<1x64xf32>
    %c0_122 = arith.constant 0 : index
    %c704 = arith.constant 704 : index
    %120 = vector.load %arg15[%c0_122, %c704] : memref<1x1024xf32, #tpu.memory_space<vmem>>, vector<1x64xf32>
    tpu.vector_store %arg15[%c0_122, %c704], %119 {strides = array<i32>} : memref<1x1024xf32, #tpu.memory_space<vmem>>, vector<1x64xf32>,
    %121 = vector.extract_strided_slice %96 {offsets = [12, 0], sizes = [1, 64], strides = [1, 1]} : vector<16x64xf32> to vector<1x64xf32>
    %c0_123 = arith.constant 0 : index
    %c768 = arith.constant 768 : index
    %122 = vector.load %arg15[%c0_123, %c768] : memref<1x1024xf32, #tpu.memory_space<vmem>>, vector<1x64xf32>
    tpu.vector_store %arg15[%c0_123, %c768], %121 {strides = array<i32>} : memref<1x1024xf32, #tpu.memory_space<vmem>>, vector<1x64xf32>,
    %123 = vector.extract_strided_slice %96 {offsets = [13, 0], sizes = [1, 64], strides = [1, 1]} : vector<16x64xf32> to vector<1x64xf32>
    %c0_124 = arith.constant 0 : index
    %c832 = arith.constant 832 : index
    %124 = vector.load %arg15[%c0_124, %c832] : memref<1x1024xf32, #tpu.memory_space<vmem>>, vector<1x64xf32>
    tpu.vector_store %arg15[%c0_124, %c832], %123 {strides = array<i32>} : memref<1x1024xf32, #tpu.memory_space<vmem>>, vector<1x64xf32>,
    %125 = vector.extract_strided_slice %96 {offsets = [14, 0], sizes = [1, 64], strides = [1, 1]} : vector<16x64xf32> to vector<1x64xf32>
    %c0_125 = arith.constant 0 : index
    %c896 = arith.constant 896 : index
    %126 = vector.load %arg15[%c0_125, %c896] : memref<1x1024xf32, #tpu.memory_space<vmem>>, vector<1x64xf32>
    tpu.vector_store %arg15[%c0_125, %c896], %125 {strides = array<i32>} : memref<1x1024xf32, #tpu.memory_space<vmem>>, vector<1x64xf32>,
    %127 = vector.extract_strided_slice %96 {offsets = [15, 0], sizes = [1, 64], strides = [1, 1]} : vector<16x64xf32> to vector<1x64xf32>
    %c0_126 = arith.constant 0 : index
    %c960 = arith.constant 960 : index
    %128 = vector.load %arg15[%c0_126, %c960] : memref<1x1024xf32, #tpu.memory_space<vmem>>, vector<1x64xf32>
    tpu.vector_store %arg15[%c0_126, %c960], %127 {strides = array<i32>} : memref<1x1024xf32, #tpu.memory_space<vmem>>, vector<1x64xf32>,
    %c0_127 = arith.constant 0 : index
    %c0_128 = arith.constant 0 : index
    %129 = vector.load %arg15[%c0_127, %c0_128] : memref<1x1024xf32, #tpu.memory_space<vmem>>, vector<1x1024xf32>
    %c0_129 = arith.constant 0 : index
    %c0_130 = arith.constant 0 : index
    %130 = vector.load %arg6[%c0_129, %c0_130] : memref<1024x512xf32, #tpu.memory_space<vmem>>, vector<1024x512xf32>
    %cst_131 = arith.constant dense<0.000000e+00> : vector<1x512xf32>
    %131 = tpu.matmul %129, %130, %cst_131 {dimension_numbers = #tpu.dot_dimension_numbers<[1], [0], [0], [1], [0, 0, 1, 1], [], []>} : vector<1x1024xf32>, vector<1024x512xf32>, vector<1x512xf32> -> vector<1x512xf32>
    %c0_132 = arith.constant 0 : index
    %c0_133 = arith.constant 0 : index
    %132 = vector.load %arg7[%c0_132, %c0_133] : memref<1x512xf32, #tpu.memory_space<vmem>>, vector<1x512xf32>
    %133 = arith.addf %131, %132 : vector<1x512xf32>
    %cst_134 = arith.constant 0.000000e+00 : f32
    %134 = vector.broadcast %cst_134 : f32 to vector<1x512xf32>
    %135 = arith.maximumf %133, %134 : vector<1x512xf32>
    %c0_135 = arith.constant 0 : index
    %c0_136 = arith.constant 0 : index
    %136 = vector.load %arg8[%c0_135, %c0_136] : memref<512x2xf32, #tpu.memory_space<vmem>>, vector<512x2xf32>
    %cst_137 = arith.constant dense<0.000000e+00> : vector<1x2xf32>
    %137 = tpu.matmul %135, %136, %cst_137 {dimension_numbers = #tpu.dot_dimension_numbers<[1], [0], [0], [1], [0, 0, 1, 1], [], []>} : vector<1x512xf32>, vector<512x2xf32>, vector<1x2xf32> -> vector<1x2xf32>
    %c0_138 = arith.constant 0 : index
    %c0_139 = arith.constant 0 : index
    %138 = vector.load %arg9[%c0_138, %c0_139] : memref<1x2xf32, #tpu.memory_space<vmem>>, vector<1x2xf32>
    %139 = arith.addf %137, %138 : vector<1x2xf32>
    %c0_140 = arith.constant 0 : index
    %c0_141 = arith.constant 0 : index
    %c0_142 = arith.constant 0 : index
    %140 = vector.load %arg10[%c0_140, %c0_141, %c0_142] : memref<1x1x2xf32, #tpu.memory_space<vmem>>, vector<1x1x2xf32>
    %141 = vector.shape_cast %140 : vector<1x1x2xf32> to vector<1x2xf32>
    %142 = vector.shape_cast %139 : vector<1x2xf32> to vector<1x1x2xf32>
    tpu.vector_store %arg10[%c0_140, %c0_141, %c0_142], %142 {strides = array<i32>} : memref<1x1x2xf32, #tpu.memory_space<vmem>>, vector<1x1x2xf32>,
    return
  }
  func.func @transform_0(%arg0: i32) -> (i32, i32, i32, i32) {
    %c0_i32 = arith.constant 0 : i32
    %c0_i32_0 = arith.constant 0 : i32
    %c0_i32_1 = arith.constant 0 : i32
    %c0_i32_2 = arith.constant 0 : i32
    return %arg0, %c0_i32, %c0_i32_0, %c0_i32_1 : i32, i32, i32, i32
  }
  func.func @transform_1(%arg0: i32) -> (i32, i32) {
    %c0_i32 = arith.constant 0 : i32
    %c0_i32_0 = arith.constant 0 : i32
    %c0_i32_1 = arith.constant 0 : i32
    return %c0_i32, %c0_i32_0 : i32, i32
  }
  func.func @transform_2(%arg0: i32) -> (i32, i32) {
    %c0_i32 = arith.constant 0 : i32
    %c0_i32_0 = arith.constant 0 : i32
    %c0_i32_1 = arith.constant 0 : i32
    return %c0_i32, %c0_i32_0 : i32, i32
  }
  func.func @transform_3(%arg0: i32) -> (i32, i32) {
    %c0_i32 = arith.constant 0 : i32
    %c0_i32_0 = arith.constant 0 : i32
    %c0_i32_1 = arith.constant 0 : i32
    return %c0_i32, %c0_i32_0 : i32, i32
  }
  func.func @transform_4(%arg0: i32) -> (i32, i32) {
    %c0_i32 = arith.constant 0 : i32
    %c0_i32_0 = arith.constant 0 : i32
    %c0_i32_1 = arith.constant 0 : i32
    return %c0_i32, %c0_i32_0 : i32, i32
  }
  func.func @transform_5(%arg0: i32) -> (i32, i32) {
    %c0_i32 = arith.constant 0 : i32
    %c0_i32_0 = arith.constant 0 : i32
    %c0_i32_1 = arith.constant 0 : i32
    return %c0_i32, %c0_i32_0 : i32, i32
  }
  func.func @transform_6(%arg0: i32) -> (i32, i32) {
    %c0_i32 = arith.constant 0 : i32
    %c0_i32_0 = arith.constant 0 : i32
    %c0_i32_1 = arith.constant 0 : i32
    return %c0_i32, %c0_i32_0 : i32, i32
  }
  func.func @transform_7(%arg0: i32) -> (i32, i32) {
    %c0_i32 = arith.constant 0 : i32
    %c0_i32_0 = arith.constant 0 : i32
    %c0_i32_1 = arith.constant 0 : i32
    return %c0_i32, %c0_i32_0 : i32, i32
  }
  func.func @transform_8(%arg0: i32) -> (i32, i32) {
    %c0_i32 = arith.constant 0 : i32
    %c0_i32_0 = arith.constant 0 : i32
    %c0_i32_1 = arith.constant 0 : i32
    return %c0_i32, %c0_i32_0 : i32, i32
  }
  func.func @transform_9(%arg0: i32) -> (i32, i32, i32) {
    %c0_i32 = arith.constant 0 : i32
    %c0_i32_0 = arith.constant 0 : i32
    %c0_i32_1 = arith.constant 0 : i32
    return %arg0, %c0_i32, %c0_i32_0 : i32, i32, i32
  }
}

</mosaic_0001>

<llo_original>
// kernel: sample_cnn_forward.1
$region0: #{sample_cnn_forward.1}
  #allocation0 [shape = 'u32[]', space=smem, size = 0x4, offset = 0x4, fixed_abs, tag = 'smem constant byte address 0x4 - core index']
  #allocation1 [shape = 'u32[72,128]{1,0:T(1,128)}', space=vmem, size = 0x9000, scoped, tag = 'internal scratch']
  #allocation2 [shape = 'f32[18,18,3]{2,1,0:T(8,128)}', space=vmem, size = 0x36000, scoped, tag = 'scratch operand']
  #allocation3 [shape = 'f32[256,27]{1,0:T(8,128)}', space=vmem, size = 0x20000, scoped, tag = 'scratch operand']
  #allocation4 [shape = 'f32[10,10,32]{2,1,0:T(8,128)}', space=vmem, size = 0x14000, scoped, tag = 'scratch operand']
  #allocation5 [shape = 'f32[64,288]{1,0:T(8,128)}', space=vmem, size = 0x18000, scoped, tag = 'scratch operand']
  #allocation6 [shape = 'f32[1,1024]{1,0:T(1,128)}', space=vmem, size = 0x1000, scoped, tag = 'scratch operand']
  %s0 = inlined_call_operand.vmem [shape: f32[2,16,16,3], index: 0, kind: input, shape index: {}]
  %s1 = inlined_call_operand.hbm [shape: f32[27,32], index: 1, kind: input, shape index: {}]
  %s2 = inlined_call_operand.hbm [shape: f32[1,32], index: 2, kind: input, shape index: {}]
  %s3 = inlined_call_operand.vmem [shape: f32[288,64], index: 3, kind: input, shape index: {}]
  %s4 = inlined_call_operand.hbm [shape: f32[1,64], index: 4, kind: input, shape index: {}]
  %s5 = inlined_call_operand.hbm [shape: f32[1024,512], index: 5, kind: input, shape index: {}]
  %s6 = inlined_call_operand.hbm [shape: f32[1,512], index: 6, kind: input, shape index: {}]
  %s7 = inlined_call_operand.vmem [shape: f32[512,2], index: 7, kind: input, shape index: {}]
  %s8 = inlined_call_operand.hbm [shape: f32[1,2], index: 8, kind: input, shape index: {}]
  %s9 = inlined_call_operand.hbm [shape: f32[2,1,2], index: 9, kind: output, shape index: {}]
  %s10 = sld [smem:[#allocation0]]
  $region93: #{sample_cnn_forward.1} parent=0
    _
  %s12 = ssub.s32 1, %s10
  %s13 = scalar_select 0, %s12, %s10
  $region1: #{sample_cnn_forward.1} parent=0
    #allocation7 [shape = 'u8[16384]{0}', space=vmem, size = 0x4000, scoped, tag = 'input window, operand 1, single buffered']
    #allocation8 [shape = 's32[2]{0}', space=sflag, size = 0x8, scoped, tag = 'scoped memory for sample_cnn_forward.1']
    #allocation9 [shape = 's32[2]{0}', space=sflag, size = 0x8, scoped, tag = 'scoped memory for sample_cnn_forward.1']
    #allocation10 [shape = 'u8[512]{0}', space=vmem, size = 0x400, scoped, tag = 'input window, operand 2, single buffered']
    #allocation11 [shape = 's32[1]{0}', space=sflag, size = 0x4, scoped, tag = 'scoped memory for sample_cnn_forward.1']
    #allocation12 [shape = 'u8[512]{0}', space=vmem, size = 0x400, scoped, tag = 'input window, operand 4, single buffered']
    #allocation13 [shape = 'u8[2097152]{0}', space=vmem, size = 0x200000, scoped, tag = 'input window, operand 5, single buffered']
    #allocation14 [shape = 's32[1]{0}', space=sflag, size = 0x4, scoped, tag = 'scoped memory for sample_cnn_forward.1']
    #allocation15 [shape = 'u8[2048]{0}', space=vmem, size = 0x800, scoped, tag = 'input window, operand 6, single buffered']
    #allocation16 [shape = 'u8[512]{0}', space=vmem, size = 0x400, scoped, tag = 'input window, operand 8, single buffered']
    #allocation17 [shape = 's32[1]{0}', space=sflag, size = 0x4, scoped, tag = 'scoped memory for sample_cnn_forward.1']
    #allocation18 [shape = 'u8[1024]{0}', space=vmem, size = 0x400, scoped, tag = 'output window, operand 0']
    %14 = vsyncpa [#allocation8], 0
    %15 = vsyncpa [#allocation11], 0
    %16 = vsyncpa [#allocation14], 0
    %17 = vsyncpa [#allocation17], 0
    %18 = vsyncpa [#allocation9], 0
    %s19 = scalar_lea.sflag [#allocation9], 1
    %20 = vsyncpa %s19, 0
    loop: start=0, step=1, limit=4
    $region2: #{sample_cnn_forward.1} parent=1 // loop_pre_header
      _
    $region3: #{sample_cnn_forward.1} parent=1 // loop_header
      %s22 = sphi 0, %s26
      %p23 = scmp.ge.s32.totalorder %s22, 4
      %s32 = sphi 0, %s34
      %s35 = sphi 0, %s32
      %s36 = sphi 0, %s35
      %s52 = sphi 0, %s36
      %s56 = sphi 0, %s56
      %s58 = sphi 0, %s56
      %s59 = sphi 0, %s58
      %s73 = sphi 0, %s59
      %s77 = sphi 0, %s77
      %s79 = sphi 0, %s77
      %s80 = sphi 0, %s79
      %s94 = sphi 0, %s80
      %s98 = sphi 0, %s98
      %s100 = sphi 0, %s98
      %s101 = sphi 0, %s100
      %s115 = sphi 0, %s101
      %s119 = sphi 0, %s119
      %s121 = sphi 0, %s119
      %s122 = sphi 0, %s121
      %s136 = sphi 0, %s122
      %s140 = sphi 0, %s140
      %s142 = sphi 0, %s140
      %s143 = sphi 0, %s142
      %s157 = sphi 0, %s143
      %s161 = sphi 0, %s161
      %s163 = sphi 0, %s161
      %s164 = sphi 0, %s163
      %s178 = sphi 0, %s164
      %s182 = sphi 0, %s182
      %s184 = sphi 0, %s182
      %s185 = sphi 0, %s184
      %s199 = sphi 0, %s185
      %s203 = sphi 0, %s203
      %s205 = sphi 0, %s203
      %s206 = sphi 0, %s205
      %s220 = sphi 0, %s206
      %s226 = sphi 0, %s228
      %s229 = sphi 0, %s226
      %s230 = sphi 0, %s229
      %s246 = sphi 0, %s230
    $region4: #{sample_cnn_forward.1} parent=1 // loop_header_branch
      %25 = sbr.rel (%p23) target = $region8
    $region5: #{sample_cnn_forward.1} parent=1 // loop_body
      %s27 = ssub.s32 %s22, 1
      %s28 = ssub.s32 %s22, 2
      %s29 = sadd.s32 %s22, 1
      %s30 = ssub.s32 %s22, %s29
      %p31 = scmp.eq.s32.totalorder %s30, 0
      %s33 = sadd.s32 %s32, 1
      %s34 = scalar_select %p31, %s32, %s33
      %p37 = pneg %p31
      %p38 = scmp.eq.s32.totalorder %s22, 1
      %p39 = por %p37, %p38
      %p40 = scmp.ne.s32.totalorder %s32, %s35
      %p41 = scmp.eq.s32.totalorder %s22, 0
      %p42 = por %p40, %p41
      %p43 = scmp.ne.s32.totalorder %s32, %s35
      %p44 = scmp.eq.s32.totalorder %s27, 1
      %p45 = por %p43, %p44
      %p46 = scmp.ne.s32.totalorder %s35, %s36
      %p47 = scmp.eq.s32.totalorder %s27, 0
      %p48 = por %p46, %p47
      %p49 = scmp.ne.s32.totalorder %s35, %s36
      %p50 = scmp.eq.s32.totalorder %s28, 1
      %p51 = por %p49, %p50
      %p53 = scmp.ne.s32.totalorder %s36, %s52
      %p54 = scmp.eq.s32.totalorder %s28, 0
      %p55 = por %p53, %p54
      %s57 = sadd.s32 %s56, 1
      %p60 = scmp.eq.s32.totalorder %s22, 1
      %p61 = scmp.ne.s32.totalorder %s56, %s58
      %p62 = scmp.eq.s32.totalorder %s22, 0
      %p63 = por %p61, %p62
      %p64 = scmp.ne.s32.totalorder %s56, %s58
      %p65 = scmp.eq.s32.totalorder %s27, 1
      %p66 = por %p64, %p65
      %p67 = scmp.ne.s32.totalorder %s58, %s59
      %p68 = scmp.eq.s32.totalorder %s27, 0
      %p69 = por %p67, %p68
      %p70 = scmp.ne.s32.totalorder %s58, %s59
      %p71 = scmp.eq.s32.totalorder %s28, 1
      %p72 = por %p70, %p71
      %p74 = scmp.ne.s32.totalorder %s59, %s73
      %p75 = scmp.eq.s32.totalorder %s28, 0
      %p76 = por %p74, %p75
      %s78 = sadd.s32 %s77, 1
      %p81 = scmp.eq.s32.totalorder %s22, 1
      %p82 = scmp.ne.s32.totalorder %s77, %s79
      %p83 = scmp.eq.s32.totalorder %s22, 0
      %p84 = por %p82, %p83
      %p85 = scmp.ne.s32.totalorder %s77, %s79
      %p86 = scmp.eq.s32.totalorder %s27, 1
      %p87 = por %p85, %p86
      %p88 = scmp.ne.s32.totalorder %s79, %s80
      %p89 = scmp.eq.s32.totalorder %s27, 0
      %p90 = por %p88, %p89
      %p91 = scmp.ne.s32.totalorder %s79, %s80
      %p92 = scmp.eq.s32.totalorder %s28, 1
      %p93 = por %p91, %p92
      %p95 = scmp.ne.s32.totalorder %s80, %s94
      %p96 = scmp.eq.s32.totalorder %s28, 0
      %p97 = por %p95, %p96
      %s99 = sadd.s32 %s98, 1
      %p102 = scmp.eq.s32.totalorder %s22, 1
      %p103 = scmp.ne.s32.totalorder %s98, %s100
      %p104 = scmp.eq.s32.totalorder %s22, 0
      %p105 = por %p103, %p104
      %p106 = scmp.ne.s32.totalorder %s98, %s100
      %p107 = scmp.eq.s32.totalorder %s27, 1
      %p108 = por %p106, %p107
      %p109 = scmp.ne.s32.totalorder %s100, %s101
      %p110 = scmp.eq.s32.totalorder %s27, 0
      %p111 = por %p109, %p110
      %p112 = scmp.ne.s32.totalorder %s100, %s101
      %p113 = scmp.eq.s32.totalorder %s28, 1
      %p114 = por %p112, %p113
      %p116 = scmp.ne.s32.totalorder %s101, %s115
      %p117 = scmp.eq.s32.totalorder %s28, 0
      %p118 = por %p116, %p117
      %s120 = sadd.s32 %s119, 1
      %p123 = scmp.eq.s32.totalorder %s22, 1
      %p124 = scmp.ne.s32.totalorder %s119, %s121
      %p125 = scmp.eq.s32.totalorder %s22, 0
      %p126 = por %p124, %p125
      %p127 = scmp.ne.s32.totalorder %s119, %s121
      %p128 = scmp.eq.s32.totalorder %s27, 1
      %p129 = por %p127, %p128
      %p130 = scmp.ne.s32.totalorder %s121, %s122
      %p131 = scmp.eq.s32.totalorder %s27, 0
      %p132 = por %p130, %p131
      %p133 = scmp.ne.s32.totalorder %s121, %s122
      %p134 = scmp.eq.s32.totalorder %s28, 1
      %p135 = por %p133, %p134
      %p137 = scmp.ne.s32.totalorder %s122, %s136
      %p138 = scmp.eq.s32.totalorder %s28, 0
      %p139 = por %p137, %p138
      %s141 = sadd.s32 %s140, 1
      %p144 = scmp.eq.s32.totalorder %s22, 1
      %p145 = scmp.ne.s32.totalorder %s140, %s142
      %p146 = scmp.eq.s32.totalorder %s22, 0
      %p147 = por %p145, %p146
      %p148 = scmp.ne.s32.totalorder %s140, %s142
      %p149 = scmp.eq.s32.totalorder %s27, 1
      %p150 = por %p148, %p149
      %p151 = scmp.ne.s32.totalorder %s142, %s143
      %p152 = scmp.eq.s32.totalorder %s27, 0
      %p153 = por %p151, %p152
      %p154 = scmp.ne.s32.totalorder %s142, %s143
      %p155 = scmp.eq.s32.totalorder %s28, 1
      %p156 = por %p154, %p155
      %p158 = scmp.ne.s32.totalorder %s143, %s157
      %p159 = scmp.eq.s32.totalorder %s28, 0
      %p160 = por %p158, %p159
      %s162 = sadd.s32 %s161, 1
      %p165 = scmp.eq.s32.totalorder %s22, 1
      %p166 = scmp.ne.s32.totalorder %s161, %s163
      %p167 = scmp.eq.s32.totalorder %s22, 0
      %p168 = por %p166, %p167
      %p169 = scmp.ne.s32.totalorder %s161, %s163
      %p170 = scmp.eq.s32.totalorder %s27, 1
      %p171 = por %p169, %p170
      %p172 = scmp.ne.s32.totalorder %s163, %s164
      %p173 = scmp.eq.s32.totalorder %s27, 0
      %p174 = por %p172, %p173
      %p175 = scmp.ne.s32.totalorder %s163, %s164
      %p176 = scmp.eq.s32.totalorder %s28, 1
      %p177 = por %p175, %p176
      %p179 = scmp.ne.s32.totalorder %s164, %s178
      %p180 = scmp.eq.s32.totalorder %s28, 0
      %p181 = por %p179, %p180
      %s183 = sadd.s32 %s182, 1
      %p186 = scmp.eq.s32.totalorder %s22, 1
      %p187 = scmp.ne.s32.totalorder %s182, %s184
      %p188 = scmp.eq.s32.totalorder %s22, 0
      %p189 = por %p187, %p188
      %p190 = scmp.ne.s32.totalorder %s182, %s184
      %p191 = scmp.eq.s32.totalorder %s27, 1
      %p192 = por %p190, %p191
      %p193 = scmp.ne.s32.totalorder %s184, %s185
      %p194 = scmp.eq.s32.totalorder %s27, 0
      %p195 = por %p193, %p194
      %p196 = scmp.ne.s32.totalorder %s184, %s185
      %p197 = scmp.eq.s32.totalorder %s28, 1
      %p198 = por %p196, %p197
      %p200 = scmp.ne.s32.totalorder %s185, %s199
      %p201 = scmp.eq.s32.totalorder %s28, 0
      %p202 = por %p200, %p201
      %s204 = sadd.s32 %s203, 1
      %p207 = scmp.eq.s32.totalorder %s22, 1
      %p208 = scmp.ne.s32.totalorder %s203, %s205
      %p209 = scmp.eq.s32.totalorder %s22, 0
      %p210 = por %p208, %p209
      %p211 = scmp.ne.s32.totalorder %s203, %s205
      %p212 = scmp.eq.s32.totalorder %s27, 1
      %p213 = por %p211, %p212
      %p214 = scmp.ne.s32.totalorder %s205, %s206
      %p215 = scmp.eq.s32.totalorder %s27, 0
      %p216 = por %p214, %p215
      %p217 = scmp.ne.s32.totalorder %s205, %s206
      %p218 = scmp.eq.s32.totalorder %s28, 1
      %p219 = por %p217, %p218
      %p221 = scmp.ne.s32.totalorder %s206, %s220
      %p222 = scmp.eq.s32.totalorder %s28, 0
      %p223 = por %p221, %p222
      %s224 = ssub.s32 %s22, %s29
      %p225 = scmp.eq.s32.totalorder %s224, 0
      %s227 = sadd.s32 %s226, 1
      %s228 = scalar_select %p225, %s226, %s227
      %p231 = pneg %p225
      %p232 = scmp.eq.s32.totalorder %s22, 1
      %p233 = por %p231, %p232
      %p234 = scmp.ne.s32.totalorder %s226, %s229
      %p235 = scmp.eq.s32.totalorder %s22, 0
      %p236 = por %p234, %p235
      %p237 = scmp.ne.s32.totalorder %s226, %s229
      %p238 = scmp.eq.s32.totalorder %s27, 1
      %p239 = por %p237, %p238
      %p240 = scmp.ne.s32.totalorder %s229, %s230
      %p241 = scmp.eq.s32.totalorder %s27, 0
      %p242 = por %p240, %p241
      %p243 = scmp.ne.s32.totalorder %s229, %s230
      %p244 = scmp.eq.s32.totalorder %s28, 1
      %p245 = por %p243, %p244
      %p247 = scmp.ne.s32.totalorder %s230, %s246
      %p248 = scmp.eq.s32.totalorder %s28, 0
      %p249 = por %p247, %p248
      %p250 = scmp.le.s32.totalorder 1, %s22
      %p251 = scmp.lt.s32.totalorder %s22, 3
      %p252 = pnand %p250, %p251
      %p253 = pneg %p252
      // Predicated region
      $region9: #{sample_cnn_forward.1} parent=5 // pred_check
        _
      $region10: #{sample_cnn_forward.1} parent=5 // pred_check_branch
        %255 = sbr.rel (%p252) target = $region12
      $region11: #{sample_cnn_forward.1} parent=5 // pred_region
        %s256 = ssub.s32 %s22, 1
        // Predicated region
        $region13: #{sample_cnn_forward.1} parent=11 // pred_check
          %p257 = pneg %p69
        $region14: #{sample_cnn_forward.1} parent=11 // pred_check_branch
          %259 = sbr.rel (%p257) target = $region16
        $region15: #{sample_cnn_forward.1} parent=11 // pred_region
          %261 = vsyncadd [#allocation8], 0
          %s262 = sshll.u32 %s1, 4
          %s263 = int_to_ptr.hbm [resolvable:$true] %s262
          %s264 = sshll.u32 [#allocation7], 4
          %s265 = int_to_ptr.vmem [resolvable:$true] %s264
          %270 = dma.hbm_to_vmem [thread:$0]  %s263, 512, %s265, [#allocation8], 128, 128, 8
        $region16: #{sample_cnn_forward.1} parent=11 // pred_fallthru
          _
        // Predicated region
        $region17: #{sample_cnn_forward.1} parent=11 // pred_check
          %p271 = pneg %p90
        $region18: #{sample_cnn_forward.1} parent=11 // pred_check_branch
          %273 = sbr.rel (%p271) target = $region20
        $region19: #{sample_cnn_forward.1} parent=11 // pred_region
          %275 = vsyncadd [#allocation11], 0
          %s277 = sshll.u32 %s2, 4
          %s278 = int_to_ptr.hbm [resolvable:$true] %s277
          %s279 = sshll.u32 [#allocation10], 4
          %s280 = int_to_ptr.vmem [resolvable:$true] %s279
          %282 = dma.hbm_to_vmem [thread:$0]  %s278, 16, %s280, [#allocation11]
        $region20: #{sample_cnn_forward.1} parent=11 // pred_fallthru
          _
        // Predicated region
        $region21: #{sample_cnn_forward.1} parent=11 // pred_check
          %p283 = pneg %p111
        $region22: #{sample_cnn_forward.1} parent=11 // pred_check_branch
          %285 = sbr.rel (%p283) target = $region24
        $region23: #{sample_cnn_forward.1} parent=11 // pred_region
          _
        $region24: #{sample_cnn_forward.1} parent=11 // pred_fallthru
          _
        // Predicated region
        $region25: #{sample_cnn_forward.1} parent=11 // pred_check
          %p286 = pneg %p132
        $region26: #{sample_cnn_forward.1} parent=11 // pred_check_branch
          %288 = sbr.rel (%p286) target = $region28
        $region27: #{sample_cnn_forward.1} parent=11 // pred_region
          %290 = vsyncadd [#allocation11], 0
          %s292 = sshll.u32 %s4, 4
          %s293 = int_to_ptr.hbm [resolvable:$true] %s292
          %s294 = sshll.u32 [#allocation12], 4
          %s295 = int_to_ptr.vmem [resolvable:$true] %s294
          %297 = dma.hbm_to_vmem [thread:$0]  %s293, 16, %s295, [#allocation11]
        $region28: #{sample_cnn_forward.1} parent=11 // pred_fallthru
          _
        // Predicated region
        $region29: #{sample_cnn_forward.1} parent=11 // pred_check
          %p298 = pneg %p153
        $region30: #{sample_cnn_forward.1} parent=11 // pred_check_branch
          %300 = sbr.rel (%p298) target = $region32
        $region31: #{sample_cnn_forward.1} parent=11 // pred_region
          %302 = vsyncadd [#allocation14], 0
          %s303 = sshll.u32 %s5, 4
          %s304 = int_to_ptr.hbm [resolvable:$true] %s303
          %s305 = sshll.u32 [#allocation13], 4
          %s306 = int_to_ptr.vmem [resolvable:$true] %s305
          %311 = dma.hbm_to_vmem [thread:$0]  %s304, 65536, %s306, [#allocation14], 512, 512, 32
        $region32: #{sample_cnn_forward.1} parent=11 // pred_fallthru
          _
        // Predicated region
        $region33: #{sample_cnn_forward.1} parent=11 // pred_check
          %p312 = pneg %p174
        $region34: #{sample_cnn_forward.1} parent=11 // pred_check_branch
          %314 = sbr.rel (%p312) target = $region36
        $region35: #{sample_cnn_forward.1} parent=11 // pred_region
          %316 = vsyncadd [#allocation14], 0
          %s318 = sshll.u32 %s6, 4
          %s319 = int_to_ptr.hbm [resolvable:$true] %s318
          %s320 = sshll.u32 [#allocation15], 4
          %s321 = int_to_ptr.vmem [resolvable:$true] %s320
          %323 = dma.hbm_to_vmem [thread:$0]  %s319, 64, %s321, [#allocation14]
        $region36: #{sample_cnn_forward.1} parent=11 // pred_fallthru
          _
        // Predicated region
        $region37: #{sample_cnn_forward.1} parent=11 // pred_check
          %p324 = pneg %p195
        $region38: #{sample_cnn_forward.1} parent=11 // pred_check_branch
          %326 = sbr.rel (%p324) target = $region40
        $region39: #{sample_cnn_forward.1} parent=11 // pred_region
          _
        $region40: #{sample_cnn_forward.1} parent=11 // pred_fallthru
          _
        // Predicated region
        $region41: #{sample_cnn_forward.1} parent=11 // pred_check
          %p327 = pneg %p216
        $region42: #{sample_cnn_forward.1} parent=11 // pred_check_branch
          %329 = sbr.rel (%p327) target = $region44
        $region43: #{sample_cnn_forward.1} parent=11 // pred_region
          %331 = vsyncadd [#allocation17], 0
          %s333 = sshll.u32 %s8, 4
          %s334 = int_to_ptr.hbm [resolvable:$true] %s333
          %s335 = sshll.u32 [#allocation16], 4
          %s336 = int_to_ptr.vmem [resolvable:$true] %s335
          %338 = dma.hbm_to_vmem [thread:$0]  %s334, 16, %s336, [#allocation17]
        $region44: #{sample_cnn_forward.1} parent=11 // pred_fallthru
          _
      $region12: #{sample_cnn_forward.1} parent=5 // pred_fallthru
        _
      %p339 = scmp.lt.s32.totalorder %s22, 2
      // Predicated region
      $region45: #{sample_cnn_forward.1} parent=5 // pred_check
        %p340 = pneg %p339
      $region46: #{sample_cnn_forward.1} parent=5 // pred_check_branch
        %342 = sbr.rel (%p340) target = $region48
      $region47: #{sample_cnn_forward.1} parent=5 // pred_region
        // Predicated region
        $region49: #{sample_cnn_forward.1} parent=47 // pred_check
          %p343 = pneg %p42
        $region50: #{sample_cnn_forward.1} parent=47 // pred_check_branch
          %345 = sbr.rel (%p343) target = $region52
        $region51: #{sample_cnn_forward.1} parent=47 // pred_region
          %p346 = scmp.lt.s32.totalorder %s22, 1
          %s347 = scalar_select %p346, %s22, 1
          %s348 = smul.addr %s347, 32
          %s349 = smul.addr %s348, 8
          %s350 = scalar_lea.vmem %s0, %s349
        $region52: #{sample_cnn_forward.1} parent=47 // pred_fallthru
          _
      $region48: #{sample_cnn_forward.1} parent=5 // pred_fallthru
        _
      %p351 = scmp.le.s32.totalorder 1, %s22
      %p352 = scmp.lt.s32.totalorder %s22, 3
      %p353 = pnand %p351, %p352
      %p354 = pneg %p353
      // Predicated region
      $region53: #{sample_cnn_forward.1} parent=5 // pred_check
        _
      $region54: #{sample_cnn_forward.1} parent=5 // pred_check_branch
        %356 = sbr.rel (%p353) target = $region56
      $region55: #{sample_cnn_forward.1} parent=5 // pred_region
        %s357 = ssub.s32 %s22, 1
        // Predicated region
        $region57: #{sample_cnn_forward.1} parent=55 // pred_check
          %p358 = pneg %p69
        $region58: #{sample_cnn_forward.1} parent=55 // pred_check_branch
          %360 = sbr.rel (%p358) target = $region60
        $region59: #{sample_cnn_forward.1} parent=55 // pred_region
          %362 = dma.done [#allocation8], 512
        $region60: #{sample_cnn_forward.1} parent=55 // pred_fallthru
          _
        // Predicated region
        $region61: #{sample_cnn_forward.1} parent=55 // pred_check
          %p363 = pneg %p90
        $region62: #{sample_cnn_forward.1} parent=55 // pred_check_branch
          %365 = sbr.rel (%p363) target = $region64
        $region63: #{sample_cnn_forward.1} parent=55 // pred_region
          %367 = dma.done [#allocation11], 16
        $region64: #{sample_cnn_forward.1} parent=55 // pred_fallthru
          _
        // Predicated region
        $region65: #{sample_cnn_forward.1} parent=55 // pred_check
          %p368 = pneg %p132
        $region66: #{sample_cnn_forward.1} parent=55 // pred_check_branch
          %370 = sbr.rel (%p368) target = $region68
        $region67: #{sample_cnn_forward.1} parent=55 // pred_region
          %372 = dma.done [#allocation11], 16
        $region68: #{sample_cnn_forward.1} parent=55 // pred_fallthru
          _
        // Predicated region
        $region69: #{sample_cnn_forward.1} parent=55 // pred_check
          %p373 = pneg %p153
        $region70: #{sample_cnn_forward.1} parent=55 // pred_check_branch
          %375 = sbr.rel (%p373) target = $region72
        $region71: #{sample_cnn_forward.1} parent=55 // pred_region
          %377 = dma.done [#allocation14], 65536
        $region72: #{sample_cnn_forward.1} parent=55 // pred_fallthru
          _
        // Predicated region
        $region73: #{sample_cnn_forward.1} parent=55 // pred_check
          %p378 = pneg %p174
        $region74: #{sample_cnn_forward.1} parent=55 // pred_check_branch
          %380 = sbr.rel (%p378) target = $region76
        $region75: #{sample_cnn_forward.1} parent=55 // pred_region
          %382 = dma.done [#allocation14], 64
        $region76: #{sample_cnn_forward.1} parent=55 // pred_fallthru
          _
        // Predicated region
        $region77: #{sample_cnn_forward.1} parent=55 // pred_check
          %p383 = pneg %p216
        $region78: #{sample_cnn_forward.1} parent=55 // pred_check_branch
          %385 = sbr.rel (%p383) target = $region80
        $region79: #{sample_cnn_forward.1} parent=55 // pred_region
          %387 = dma.done [#allocation17], 16
        $region80: #{sample_cnn_forward.1} parent=55 // pred_fallthru
          _
        %p388 = scmp.lt.s32.totalorder %s27, 1
        %s389 = scalar_select %p388, %s27, 1
        %s390 = smul.addr %s389, 32
        %s391 = smul.addr %s390, 8
        %s392 = scalar_lea.vmem %s0, %s391
        %p393 = pneg %p48
        %p394 = pneg %p45
        %p395 = pneg %p69
        %p396 = pneg %p66
        %p397 = pneg %p90
        %p398 = pneg %p87
        %p399 = pneg %p111
        %p400 = pneg %p108
        %p401 = pneg %p132
        %p402 = pneg %p129
        %p403 = pneg %p153
        %p404 = pneg %p150
        %p405 = pneg %p174
        %p406 = pneg %p171
        %p407 = pneg %p195
        %p408 = pneg %p192
        %p409 = pneg %p216
        %p410 = pneg %p213
        %p411 = pneg %p242
        %p412 = pneg %p239
        %s413 = sand.u32 %s229, 1
        %s414 = scalar_lea.sflag [#allocation9], %s413
        %s415 = sand.u32 %s229, 1
        %s416 = scalar_lea.vmem [#allocation18], %s415
        %p417 = scmp.lt.s32.totalorder %s27, 1
        %s418 = scalar_select %p417, %s27, 1
        %s419 = smul.addr %s418, 32
        %s420 = smul.addr %s419, 8
        %s421 = scalar_lea.vmem %s0, %s420
        %v422 = vld [vmem:[%s421] sm:$0xff]
        %v423 = vld [vmem:[%s421 + $0x8] sm:$0xff]
        %v424 = vld [vmem:[%s421 + $0x10] sm:$0xff]
        %v425 = vld [vmem:[%s421 + $0x18] sm:$0xff]
        %v426 = vld [vmem:[%s421 + $0x20] sm:$0xff]
        %v427 = vld [vmem:[%s421 + $0x28] sm:$0xff]
        %v428 = vld [vmem:[%s421 + $0x30] sm:$0xff]
        %v429 = vld [vmem:[%s421 + $0x38] sm:$0xff]
        %v430 = vld [vmem:[%s421 + $0x40] sm:$0xff]
        %v431 = vld [vmem:[%s421 + $0x48] sm:$0xff]
        %v432 = vld [vmem:[%s421 + $0x50] sm:$0xff]
        %v433 = vld [vmem:[%s421 + $0x58] sm:$0xff]
        %v434 = vld [vmem:[%s421 + $0x60] sm:$0xff]
        %v435 = vld [vmem:[%s421 + $0x68] sm:$0xff]
        %v436 = vld [vmem:[%s421 + $0x70] sm:$0xff]
        %v437 = vld [vmem:[%s421 + $0x78] sm:$0xff]
        %v438 = vld [vmem:[%s421 + $0x80] sm:$0xff]
        %v439 = vld [vmem:[%s421 + $0x88] sm:$0xff]
        %v440 = vld [vmem:[%s421 + $0x90] sm:$0xff]
        %v441 = vld [vmem:[%s421 + $0x98] sm:$0xff]
        %v442 = vld [vmem:[%s421 + $0xa0] sm:$0xff]
        %v443 = vld [vmem:[%s421 + $0xa8] sm:$0xff]
        %v444 = vld [vmem:[%s421 + $0xb0] sm:$0xff]
        %v445 = vld [vmem:[%s421 + $0xb8] sm:$0xff]
        %v446 = vld [vmem:[%s421 + $0xc0] sm:$0xff]
        %v447 = vld [vmem:[%s421 + $0xc8] sm:$0xff]
        %v448 = vld [vmem:[%s421 + $0xd0] sm:$0xff]
        %v449 = vld [vmem:[%s421 + $0xd8] sm:$0xff]
        %v450 = vld [vmem:[%s421 + $0xe0] sm:$0xff]
        %v451 = vld [vmem:[%s421 + $0xe8] sm:$0xff]
        %v452 = vld [vmem:[%s421 + $0xf0] sm:$0xff]
        %v453 = vld [vmem:[%s421 + $0xf8] sm:$0xff]
        %vm454 = vcmask 23552
        %455 = vst.msk [vmem:[#allocation2] sm:$0xff] %vm454, 0.0
        %456 = vst.msk [vmem:[#allocation2 + $0x8] sm:$0xff] %vm454, 0.0
        %vm457 = vcmask 17408
        %458 = vst.msk [vmem:[#allocation2 + $0x10] sm:$0x3] %vm457, 0.0
        %459 = vst.msk [vmem:[#allocation2 + $0x18] sm:$0xff] %vm454, 0.0
        %460 = vst.msk [vmem:[#allocation2 + $0x20] sm:$0xff] %vm454, 0.0
        %461 = vst.msk [vmem:[#allocation2 + $0x28] sm:$0x3] %vm457, 0.0
        %462 = vst.msk [vmem:[#allocation2 + $0x30] sm:$0xff] %vm454, 0.0
        %463 = vst.msk [vmem:[#allocation2 + $0x38] sm:$0xff] %vm454, 0.0
        %464 = vst.msk [vmem:[#allocation2 + $0x40] sm:$0x3] %vm457, 0.0
        %465 = vst.msk [vmem:[#allocation2 + $0x48] sm:$0xff] %vm454, 0.0
        %466 = vst.msk [vmem:[#allocation2 + $0x50] sm:$0xff] %vm454, 0.0
        %467 = vst.msk [vmem:[#allocation2 + $0x58] sm:$0x3] %vm457, 0.0
        %468 = vst.msk [vmem:[#allocation2 + $0x60] sm:$0xff] %vm454, 0.0
        %469 = vst.msk [vmem:[#allocation2 + $0x68] sm:$0xff] %vm454, 0.0
        %470 = vst.msk [vmem:[#allocation2 + $0x70] sm:$0x3] %vm457, 0.0
        %471 = vst.msk [vmem:[#allocation2 + $0x78] sm:$0xff] %vm454, 0.0
        %472 = vst.msk [vmem:[#allocation2 + $0x80] sm:$0xff] %vm454, 0.0
        %473 = vst.msk [vmem:[#allocation2 + $0x88] sm:$0x3] %vm457, 0.0
        %474 = vst.msk [vmem:[#allocation2 + $0x90] sm:$0xff] %vm454, 0.0
        %475 = vst.msk [vmem:[#allocation2 + $0x98] sm:$0xff] %vm454, 0.0
        %476 = vst.msk [vmem:[#allocation2 + $0xa0] sm:$0x3] %vm457, 0.0
        %477 = vst.msk [vmem:[#allocation2 + $0xa8] sm:$0xff] %vm454, 0.0
        %478 = vst.msk [vmem:[#allocation2 + $0xb0] sm:$0xff] %vm454, 0.0
        %479 = vst.msk [vmem:[#allocation2 + $0xb8] sm:$0x3] %vm457, 0.0
        %480 = vst.msk [vmem:[#allocation2 + $0xc0] sm:$0xff] %vm454, 0.0
        %481 = vst.msk [vmem:[#allocation2 + $0xc8] sm:$0xff] %vm454, 0.0
        %482 = vst.msk [vmem:[#allocation2 + $0xd0] sm:$0x3] %vm457, 0.0
        %483 = vst.msk [vmem:[#allocation2 + $0xd8] sm:$0xff] %vm454, 0.0
        %484 = vst.msk [vmem:[#allocation2 + $0xe0] sm:$0xff] %vm454, 0.0
        %485 = vst.msk [vmem:[#allocation2 + $0xe8] sm:$0x3] %vm457, 0.0
        %486 = vst.msk [vmem:[#allocation2 + $0xf0] sm:$0xff] %vm454, 0.0
        %487 = vst.msk [vmem:[#allocation2 + $0xf8] sm:$0xff] %vm454, 0.0
        %488 = vst.msk [vmem:[#allocation2 + $0x100] sm:$0x3] %vm457, 0.0
        %489 = vst.msk [vmem:[#allocation2 + $0x108] sm:$0xff] %vm454, 0.0
        %490 = vst.msk [vmem:[#allocation2 + $0x110] sm:$0xff] %vm454, 0.0
        %491 = vst.msk [vmem:[#allocation2 + $0x118] sm:$0x3] %vm457, 0.0
        %492 = vst.msk [vmem:[#allocation2 + $0x120] sm:$0xff] %vm454, 0.0
        %493 = vst.msk [vmem:[#allocation2 + $0x128] sm:$0xff] %vm454, 0.0
        %494 = vst.msk [vmem:[#allocation2 + $0x130] sm:$0x3] %vm457, 0.0
        %495 = vst.msk [vmem:[#allocation2 + $0x138] sm:$0xff] %vm454, 0.0
        %496 = vst.msk [vmem:[#allocation2 + $0x140] sm:$0xff] %vm454, 0.0
        %497 = vst.msk [vmem:[#allocation2 + $0x148] sm:$0x3] %vm457, 0.0
        %498 = vst.msk [vmem:[#allocation2 + $0x150] sm:$0xff] %vm454, 0.0
        %499 = vst.msk [vmem:[#allocation2 + $0x158] sm:$0xff] %vm454, 0.0
        %500 = vst.msk [vmem:[#allocation2 + $0x160] sm:$0x3] %vm457, 0.0
        %501 = vst.msk [vmem:[#allocation2 + $0x168] sm:$0xff] %vm454, 0.0
        %502 = vst.msk [vmem:[#allocation2 + $0x170] sm:$0xff] %vm454, 0.0
        %503 = vst.msk [vmem:[#allocation2 + $0x178] sm:$0x3] %vm457, 0.0
        %504 = vst.msk [vmem:[#allocation2 + $0x180] sm:$0xff] %vm454, 0.0
        %505 = vst.msk [vmem:[#allocation2 + $0x188] sm:$0xff] %vm454, 0.0
        %506 = vst.msk [vmem:[#allocation2 + $0x190] sm:$0x3] %vm457, 0.0
        %507 = vst.msk [vmem:[#allocation2 + $0x198] sm:$0xff] %vm454, 0.0
        %508 = vst.msk [vmem:[#allocation2 + $0x1a0] sm:$0xff] %vm454, 0.0
        %509 = vst.msk [vmem:[#allocation2 + $0x1a8] sm:$0x3] %vm457, 0.0
        %s510 = scalar_lea.vmem [#allocation2], 24
        %511 = vst.msk [vmem:[%s510 + $0x1] sm:$0xff] %vm454, %v422
        %512 = vst.msk [vmem:[%s510 + $0x9] sm:$0xff] %vm454, %v423
        %513 = vst.msk [vmem:[%s510 + $0x19] sm:$0xff] %vm454, %v424
        %514 = vst.msk [vmem:[%s510 + $0x21] sm:$0xff] %vm454, %v425
        %515 = vst.msk [vmem:[%s510 + $0x31] sm:$0xff] %vm454, %v426
        %516 = vst.msk [vmem:[%s510 + $0x39] sm:$0xff] %vm454, %v427
        %517 = vst.msk [vmem:[%s510 + $0x49] sm:$0xff] %vm454, %v428
        %518 = vst.msk [vmem:[%s510 + $0x51] sm:$0xff] %vm454, %v429
        %519 = vst.msk [vmem:[%s510 + $0x61] sm:$0xff] %vm454, %v430
        %520 = vst.msk [vmem:[%s510 + $0x69] sm:$0xff] %vm454, %v431
        %521 = vst.msk [vmem:[%s510 + $0x79] sm:$0xff] %vm454, %v432
        %522 = vst.msk [vmem:[%s510 + $0x81] sm:$0xff] %vm454, %v433
        %523 = vst.msk [vmem:[%s510 + $0x91] sm:$0xff] %vm454, %v434
        %524 = vst.msk [vmem:[%s510 + $0x99] sm:$0xff] %vm454, %v435
        %525 = vst.msk [vmem:[%s510 + $0xa9] sm:$0xff] %vm454, %v436
        %526 = vst.msk [vmem:[%s510 + $0xb1] sm:$0xff] %vm454, %v437
        %527 = vst.msk [vmem:[%s510 + $0xc1] sm:$0xff] %vm454, %v438
        %528 = vst.msk [vmem:[%s510 + $0xc9] sm:$0xff] %vm454, %v439
        %529 = vst.msk [vmem:[%s510 + $0xd9] sm:$0xff] %vm454, %v440
        %530 = vst.msk [vmem:[%s510 + $0xe1] sm:$0xff] %vm454, %v441
        %531 = vst.msk [vmem:[%s510 + $0xf1] sm:$0xff] %vm454, %v442
        %532 = vst.msk [vmem:[%s510 + $0xf9] sm:$0xff] %vm454, %v443
        %533 = vst.msk [vmem:[%s510 + $0x109] sm:$0xff] %vm454, %v444
        %534 = vst.msk [vmem:[%s510 + $0x111] sm:$0xff] %vm454, %v445
        %535 = vst.msk [vmem:[%s510 + $0x121] sm:$0xff] %vm454, %v446
        %536 = vst.msk [vmem:[%s510 + $0x129] sm:$0xff] %vm454, %v447
        %537 = vst.msk [vmem:[%s510 + $0x139] sm:$0xff] %vm454, %v448
        %538 = vst.msk [vmem:[%s510 + $0x141] sm:$0xff] %vm454, %v449
        %539 = vst.msk [vmem:[%s510 + $0x151] sm:$0xff] %vm454, %v450
        %540 = vst.msk [vmem:[%s510 + $0x159] sm:$0xff] %vm454, %v451
        %541 = vst.msk [vmem:[%s510 + $0x169] sm:$0xff] %vm454, %v452
        %542 = vst.msk [vmem:[%s510 + $0x171] sm:$0xff] %vm454, %v453
        %v543 = vld [vmem:[#allocation2] sm:$0xff]
        %v544 = vld [vmem:[#allocation2 + $0x8] sm:$0xff]
        %v545 = vld [vmem:[#allocation2 + $0x18] sm:$0xff]
        %v546 = vld [vmem:[#allocation2 + $0x20] sm:$0xff]
        %v547 = vld [vmem:[#allocation2 + $0x30] sm:$0xff]
        %v548 = vld [vmem:[#allocation2 + $0x38] sm:$0xff]
        %v549 = vld [vmem:[#allocation2 + $0x48] sm:$0xff]
        %v550 = vld [vmem:[#allocation2 + $0x50] sm:$0xff]
        %v551 = vld [vmem:[#allocation2 + $0x60] sm:$0xff]
        %v552 = vld [vmem:[#allocation2 + $0x68] sm:$0xff]
        %v553 = vld [vmem:[#allocation2 + $0x78] sm:$0xff]
        %v554 = vld [vmem:[#allocation2 + $0x80] sm:$0xff]
        %v555 = vld [vmem:[#allocation2 + $0x90] sm:$0xff]
        %v556 = vld [vmem:[#allocation2 + $0x98] sm:$0xff]
        %v557 = vld [vmem:[#allocation2 + $0xa8] sm:$0xff]
        %v558 = vld [vmem:[#allocation2 + $0xb0] sm:$0xff]
        %v559 = vld [vmem:[#allocation2 + $0xc0] sm:$0xff]
        %v560 = vld [vmem:[#allocation2 + $0xc8] sm:$0xff]
        %v561 = vld [vmem:[#allocation2 + $0xd8] sm:$0xff]
        %v562 = vld [vmem:[#allocation2 + $0xe0] sm:$0xff]
        %v563 = vld [vmem:[#allocation2 + $0xf0] sm:$0xff]
        %v564 = vld [vmem:[#allocation2 + $0xf8] sm:$0xff]
        %v565 = vld [vmem:[#allocation2 + $0x108] sm:$0xff]
        %v566 = vld [vmem:[#allocation2 + $0x110] sm:$0xff]
        %v567 = vld [vmem:[#allocation2 + $0x120] sm:$0xff]
        %v568 = vld [vmem:[#allocation2 + $0x128] sm:$0xff]
        %v569 = vld [vmem:[#allocation2 + $0x138] sm:$0xff]
        %v570 = vld [vmem:[#allocation2 + $0x140] sm:$0xff]
        %v571 = vld [vmem:[#allocation2 + $0x150] sm:$0xff]
        %v572 = vld [vmem:[#allocation2 + $0x158] sm:$0xff]
        %v573 = vld [vmem:[#allocation2 + $0x168] sm:$0xff]
        %v574 = vld [vmem:[#allocation2 + $0x170] sm:$0xff]
        %575 = vst.msk [vmem:[#allocation3] sm:$0xff] %vm454, %v543
        %576 = vst.msk [vmem:[#allocation3 + $0x8] sm:$0xff] %vm454, %v544
        %577 = vst.msk [vmem:[#allocation3 + $0x10] sm:$0xff] %vm454, %v545
        %578 = vst.msk [vmem:[#allocation3 + $0x18] sm:$0xff] %vm454, %v546
        %579 = vst.msk [vmem:[#allocation3 + $0x20] sm:$0xff] %vm454, %v547
        %580 = vst.msk [vmem:[#allocation3 + $0x28] sm:$0xff] %vm454, %v548
        %581 = vst.msk [vmem:[#allocation3 + $0x30] sm:$0xff] %vm454, %v549
        %582 = vst.msk [vmem:[#allocation3 + $0x38] sm:$0xff] %vm454, %v550
        %583 = vst.msk [vmem:[#allocation3 + $0x40] sm:$0xff] %vm454, %v551
        %584 = vst.msk [vmem:[#allocation3 + $0x48] sm:$0xff] %vm454, %v552
        %585 = vst.msk [vmem:[#allocation3 + $0x50] sm:$0xff] %vm454, %v553
        %586 = vst.msk [vmem:[#allocation3 + $0x58] sm:$0xff] %vm454, %v554
        %587 = vst.msk [vmem:[#allocation3 + $0x60] sm:$0xff] %vm454, %v555
        %588 = vst.msk [vmem:[#allocation3 + $0x68] sm:$0xff] %vm454, %v556
        %589 = vst.msk [vmem:[#allocation3 + $0x70] sm:$0xff] %vm454, %v557
        %590 = vst.msk [vmem:[#allocation3 + $0x78] sm:$0xff] %vm454, %v558
        %591 = vst.msk [vmem:[#allocation3 + $0x80] sm:$0xff] %vm454, %v559
        %592 = vst.msk [vmem:[#allocation3 + $0x88] sm:$0xff] %vm454, %v560
        %593 = vst.msk [vmem:[#allocation3 + $0x90] sm:$0xff] %vm454, %v561
        %594 = vst.msk [vmem:[#allocation3 + $0x98] sm:$0xff] %vm454, %v562
        %595 = vst.msk [vmem:[#allocation3 + $0xa0] sm:$0xff] %vm454, %v563
        %596 = vst.msk [vmem:[#allocation3 + $0xa8] sm:$0xff] %vm454, %v564
        %597 = vst.msk [vmem:[#allocation3 + $0xb0] sm:$0xff] %vm454, %v565
        %598 = vst.msk [vmem:[#allocation3 + $0xb8] sm:$0xff] %vm454, %v566
        %599 = vst.msk [vmem:[#allocation3 + $0xc0] sm:$0xff] %vm454, %v567
        %600 = vst.msk [vmem:[#allocation3 + $0xc8] sm:$0xff] %vm454, %v568
        %601 = vst.msk [vmem:[#allocation3 + $0xd0] sm:$0xff] %vm454, %v569
        %602 = vst.msk [vmem:[#allocation3 + $0xd8] sm:$0xff] %vm454, %v570
        %603 = vst.msk [vmem:[#allocation3 + $0xe0] sm:$0xff] %vm454, %v571
        %604 = vst.msk [vmem:[#allocation3 + $0xe8] sm:$0xff] %vm454, %v572
        %605 = vst.msk [vmem:[#allocation3 + $0xf0] sm:$0xff] %vm454, %v573
        %606 = vst.msk [vmem:[#allocation3 + $0xf8] sm:$0xff] %vm454, %v574
        %v607 = vld [vmem:[#allocation2 + $0x1] sm:$0xff]
        %v608 = vld [vmem:[#allocation2 + $0x9] sm:$0xff]
        %v609 = vld [vmem:[#allocation2 + $0x19] sm:$0xff]
        %v610 = vld [vmem:[#allocation2 + $0x21] sm:$0xff]
        %v611 = vld [vmem:[#allocation2 + $0x31] sm:$0xff]
        %v612 = vld [vmem:[#allocation2 + $0x39] sm:$0xff]
        %v613 = vld [vmem:[#allocation2 + $0x49] sm:$0xff]
        %v614 = vld [vmem:[#allocation2 + $0x51] sm:$0xff]
        %v615 = vld [vmem:[#allocation2 + $0x61] sm:$0xff]
        %v616 = vld [vmem:[#allocation2 + $0x69] sm:$0xff]
        %v617 = vld [vmem:[#allocation2 + $0x79] sm:$0xff]
        %v618 = vld [vmem:[#allocation2 + $0x81] sm:$0xff]
        %v619 = vld [vmem:[#allocation2 + $0x91] sm:$0xff]
        %v620 = vld [vmem:[#allocation2 + $0x99] sm:$0xff]
        %v621 = vld [vmem:[#allocation2 + $0xa9] sm:$0xff]
        %v622 = vld [vmem:[#allocation2 + $0xb1] sm:$0xff]
        %v623 = vld [vmem:[#allocation2 + $0xc1] sm:$0xff]
        %v624 = vld [vmem:[#allocation2 + $0xc9] sm:$0xff]
        %v625 = vld [vmem:[#allocation2 + $0xd9] sm:$0xff]
        %v626 = vld [vmem:[#allocation2 + $0xe1] sm:$0xff]
        %v627 = vld [vmem:[#allocation2 + $0xf1] sm:$0xff]
        %v628 = vld [vmem:[#allocation2 + $0xf9] sm:$0xff]
        %v629 = vld [vmem:[#allocation2 + $0x109] sm:$0xff]
        %v630 = vld [vmem:[#allocation2 + $0x111] sm:$0xff]
        %v631 = vld [vmem:[#allocation2 + $0x121] sm:$0xff]
        %v632 = vld [vmem:[#allocation2 + $0x129] sm:$0xff]
        %v633 = vld [vmem:[#allocation2 + $0x139] sm:$0xff]
        %v634 = vld [vmem:[#allocation2 + $0x141] sm:$0xff]
        %v635 = vld [vmem:[#allocation2 + $0x151] sm:$0xff]
        %v636 = vld [vmem:[#allocation2 + $0x159] sm:$0xff]
        %v637 = vld [vmem:[#allocation2 + $0x169] sm:$0xff]
        %v638 = vld [vmem:[#allocation2 + $0x171] sm:$0xff]
        %671 = vrot.lane.b32.xlu0 %v607, 3
        %v672 = vpop.permute.xlu0 %671
        %673 = vrot.lane.b32.xlu0 %v608, 3
        %v674 = vpop.permute.xlu0 %673
        %675 = vrot.lane.b32.xlu0 %v609, 3
        %v676 = vpop.permute.xlu0 %675
        %677 = vrot.lane.b32.xlu0 %v610, 3
        %v678 = vpop.permute.xlu0 %677
        %679 = vrot.lane.b32.xlu0 %v611, 3
        %v680 = vpop.permute.xlu0 %679
        %681 = vrot.lane.b32.xlu0 %v612, 3
        %v682 = vpop.permute.xlu0 %681
        %683 = vrot.lane.b32.xlu0 %v613, 3
        %v684 = vpop.permute.xlu0 %683
        %685 = vrot.lane.b32.xlu0 %v614, 3
        %v686 = vpop.permute.xlu0 %685
        %687 = vrot.lane.b32.xlu0 %v615, 3
        %v688 = vpop.permute.xlu0 %687
        %689 = vrot.lane.b32.xlu0 %v616, 3
        %v690 = vpop.permute.xlu0 %689
        %691 = vrot.lane.b32.xlu0 %v617, 3
        %v692 = vpop.permute.xlu0 %691
        %693 = vrot.lane.b32.xlu0 %v618, 3
        %v694 = vpop.permute.xlu0 %693
        %695 = vrot.lane.b32.xlu0 %v619, 3
        %v696 = vpop.permute.xlu0 %695
        %697 = vrot.lane.b32.xlu0 %v620, 3
        %v698 = vpop.permute.xlu0 %697
        %699 = vrot.lane.b32.xlu0 %v621, 3
        %v700 = vpop.permute.xlu0 %699
        %701 = vrot.lane.b32.xlu0 %v622, 3
        %v702 = vpop.permute.xlu0 %701
        %703 = vrot.lane.b32.xlu0 %v623, 3
        %v704 = vpop.permute.xlu0 %703
        %705 = vrot.lane.b32.xlu0 %v624, 3
        %v706 = vpop.permute.xlu0 %705
        %707 = vrot.lane.b32.xlu0 %v625, 3
        %v708 = vpop.permute.xlu0 %707
        %709 = vrot.lane.b32.xlu0 %v626, 3
        %v710 = vpop.permute.xlu0 %709
        %711 = vrot.lane.b32.xlu0 %v627, 3
        %v712 = vpop.permute.xlu0 %711
        %713 = vrot.lane.b32.xlu0 %v628, 3
        %v714 = vpop.permute.xlu0 %713
        %715 = vrot.lane.b32.xlu0 %v629, 3
        %v716 = vpop.permute.xlu0 %715
        %717 = vrot.lane.b32.xlu0 %v630, 3
        %v718 = vpop.permute.xlu0 %717
        %719 = vrot.lane.b32.xlu0 %v631, 3
        %v720 = vpop.permute.xlu0 %719
        %721 = vrot.lane.b32.xlu0 %v632, 3
        %v722 = vpop.permute.xlu0 %721
        %723 = vrot.lane.b32.xlu0 %v633, 3
        %v724 = vpop.permute.xlu0 %723
        %725 = vrot.lane.b32.xlu0 %v634, 3
        %v726 = vpop.permute.xlu0 %725
        %727 = vrot.lane.b32.xlu0 %v635, 3
        %v728 = vpop.permute.xlu0 %727
        %729 = vrot.lane.b32.xlu0 %v636, 3
        %v730 = vpop.permute.xlu0 %729
        %731 = vrot.lane.b32.xlu0 %v637, 3
        %v732 = vpop.permute.xlu0 %731
        %733 = vrot.lane.b32.xlu0 %v638, 3
        %v734 = vpop.permute.xlu0 %733
        %vm767 = vcmask 48152
        %768 = vst.msk [vmem:[#allocation3] sm:$0xff] %vm767, %v672
        %769 = vst.msk [vmem:[#allocation3 + $0x8] sm:$0xff] %vm767, %v674
        %770 = vst.msk [vmem:[#allocation3 + $0x10] sm:$0xff] %vm767, %v676
        %771 = vst.msk [vmem:[#allocation3 + $0x18] sm:$0xff] %vm767, %v678
        %772 = vst.msk [vmem:[#allocation3 + $0x20] sm:$0xff] %vm767, %v680
        %773 = vst.msk [vmem:[#allocation3 + $0x28] sm:$0xff] %vm767, %v682
        %774 = vst.msk [vmem:[#allocation3 + $0x30] sm:$0xff] %vm767, %v684
        %775 = vst.msk [vmem:[#allocation3 + $0x38] sm:$0xff] %vm767, %v686
        %776 = vst.msk [vmem:[#allocation3 + $0x40] sm:$0xff] %vm767, %v688
        %777 = vst.msk [vmem:[#allocation3 + $0x48] sm:$0xff] %vm767, %v690
        %778 = vst.msk [vmem:[#allocation3 + $0x50] sm:$0xff] %vm767, %v692
        %779 = vst.msk [vmem:[#allocation3 + $0x58] sm:$0xff] %vm767, %v694
        %780 = vst.msk [vmem:[#allocation3 + $0x60] sm:$0xff] %vm767, %v696
        %781 = vst.msk [vmem:[#allocation3 + $0x68] sm:$0xff] %vm767, %v698
        %782 = vst.msk [vmem:[#allocation3 + $0x70] sm:$0xff] %vm767, %v700
        %783 = vst.msk [vmem:[#allocation3 + $0x78] sm:$0xff] %vm767, %v702
        %784 = vst.msk [vmem:[#allocation3 + $0x80] sm:$0xff] %vm767, %v704
        %785 = vst.msk [vmem:[#allocation3 + $0x88] sm:$0xff] %vm767, %v706
        %786 = vst.msk [vmem:[#allocation3 + $0x90] sm:$0xff] %vm767, %v708
        %787 = vst.msk [vmem:[#allocation3 + $0x98] sm:$0xff] %vm767, %v710
        %788 = vst.msk [vmem:[#allocation3 + $0xa0] sm:$0xff] %vm767, %v712
        %789 = vst.msk [vmem:[#allocation3 + $0xa8] sm:$0xff] %vm767, %v714
        %790 = vst.msk [vmem:[#allocation3 + $0xb0] sm:$0xff] %vm767, %v716
        %791 = vst.msk [vmem:[#allocation3 + $0xb8] sm:$0xff] %vm767, %v718
        %792 = vst.msk [vmem:[#allocation3 + $0xc0] sm:$0xff] %vm767, %v720
        %793 = vst.msk [vmem:[#allocation3 + $0xc8] sm:$0xff] %vm767, %v722
        %794 = vst.msk [vmem:[#allocation3 + $0xd0] sm:$0xff] %vm767, %v724
        %795 = vst.msk [vmem:[#allocation3 + $0xd8] sm:$0xff] %vm767, %v726
        %796 = vst.msk [vmem:[#allocation3 + $0xe0] sm:$0xff] %vm767, %v728
        %797 = vst.msk [vmem:[#allocation3 + $0xe8] sm:$0xff] %vm767, %v730
        %798 = vst.msk [vmem:[#allocation3 + $0xf0] sm:$0xff] %vm767, %v732
        %799 = vst.msk [vmem:[#allocation3 + $0xf8] sm:$0xff] %vm767, %v734
        %v800 = vld [vmem:[#allocation2 + $0x2] sm:$0xff]
        %v801 = vld [vmem:[#allocation2 + $0xa] sm:$0xff]
        %v802 = vld [vmem:[#allocation2 + $0x1a] sm:$0xff]
        %v803 = vld [vmem:[#allocation2 + $0x22] sm:$0xff]
        %v804 = vld [vmem:[#allocation2 + $0x32] sm:$0xff]
        %v805 = vld [vmem:[#allocation2 + $0x3a] sm:$0xff]
        %v806 = vld [vmem:[#allocation2 + $0x4a] sm:$0xff]
        %v807 = vld [vmem:[#allocation2 + $0x52] sm:$0xff]
        %v808 = vld [vmem:[#allocation2 + $0x62] sm:$0xff]
        %v809 = vld [vmem:[#allocation2 + $0x6a] sm:$0xff]
        %v810 = vld [vmem:[#allocation2 + $0x7a] sm:$0xff]
        %v811 = vld [vmem:[#allocation2 + $0x82] sm:$0xff]
        %v812 = vld [vmem:[#allocation2 + $0x92] sm:$0xff]
        %v813 = vld [vmem:[#allocation2 + $0x9a] sm:$0xff]
        %v814 = vld [vmem:[#allocation2 + $0xaa] sm:$0xff]
        %v815 = vld [vmem:[#allocation2 + $0xb2] sm:$0xff]
        %v816 = vld [vmem:[#allocation2 + $0xc2] sm:$0xff]
        %v817 = vld [vmem:[#allocation2 + $0xca] sm:$0xff]
        %v818 = vld [vmem:[#allocation2 + $0xda] sm:$0xff]
        %v819 = vld [vmem:[#allocation2 + $0xe2] sm:$0xff]
        %v820 = vld [vmem:[#allocation2 + $0xf2] sm:$0xff]
        %v821 = vld [vmem:[#allocation2 + $0xfa] sm:$0xff]
        %v822 = vld [vmem:[#allocation2 + $0x10a] sm:$0xff]
        %v823 = vld [vmem:[#allocation2 + $0x112] sm:$0xff]
        %v824 = vld [vmem:[#allocation2 + $0x122] sm:$0xff]
        %v825 = vld [vmem:[#allocation2 + $0x12a] sm:$0xff]
        %v826 = vld [vmem:[#allocation2 + $0x13a] sm:$0xff]
        %v827 = vld [vmem:[#allocation2 + $0x142] sm:$0xff]
        %v828 = vld [vmem:[#allocation2 + $0x152] sm:$0xff]
        %v829 = vld [vmem:[#allocation2 + $0x15a] sm:$0xff]
        %v830 = vld [vmem:[#allocation2 + $0x16a] sm:$0xff]
        %v831 = vld [vmem:[#allocation2 + $0x172] sm:$0xff]
        %864 = vrot.lane.b32.xlu0 %v800, 6
        %v865 = vpop.permute.xlu0 %864
        %866 = vrot.lane.b32.xlu0 %v801, 6
        %v867 = vpop.permute.xlu0 %866
        %868 = vrot.lane.b32.xlu0 %v802, 6
        %v869 = vpop.permute.xlu0 %868
        %870 = vrot.lane.b32.xlu0 %v803, 6
        %v871 = vpop.permute.xlu0 %870
        %872 = vrot.lane.b32.xlu0 %v804, 6
        %v873 = vpop.permute.xlu0 %872
        %874 = vrot.lane.b32.xlu0 %v805, 6
        %v875 = vpop.permute.xlu0 %874
        %876 = vrot.lane.b32.xlu0 %v806, 6
        %v877 = vpop.permute.xlu0 %876
        %878 = vrot.lane.b32.xlu0 %v807, 6
        %v879 = vpop.permute.xlu0 %878
        %880 = vrot.lane.b32.xlu0 %v808, 6
        %v881 = vpop.permute.xlu0 %880
        %882 = vrot.lane.b32.xlu0 %v809, 6
        %v883 = vpop.permute.xlu0 %882
        %884 = vrot.lane.b32.xlu0 %v810, 6
        %v885 = vpop.permute.xlu0 %884
        %886 = vrot.lane.b32.xlu0 %v811, 6
        %v887 = vpop.permute.xlu0 %886
        %888 = vrot.lane.b32.xlu0 %v812, 6
        %v889 = vpop.permute.xlu0 %888
        %890 = vrot.lane.b32.xlu0 %v813, 6
        %v891 = vpop.permute.xlu0 %890
        %892 = vrot.lane.b32.xlu0 %v814, 6
        %v893 = vpop.permute.xlu0 %892
        %894 = vrot.lane.b32.xlu0 %v815, 6
        %v895 = vpop.permute.xlu0 %894
        %896 = vrot.lane.b32.xlu0 %v816, 6
        %v897 = vpop.permute.xlu0 %896
        %898 = vrot.lane.b32.xlu0 %v817, 6
        %v899 = vpop.permute.xlu0 %898
        %900 = vrot.lane.b32.xlu0 %v818, 6
        %v901 = vpop.permute.xlu0 %900
        %902 = vrot.lane.b32.xlu0 %v819, 6
        %v903 = vpop.permute.xlu0 %902
        %904 = vrot.lane.b32.xlu0 %v820, 6
        %v905 = vpop.permute.xlu0 %904
        %906 = vrot.lane.b32.xlu0 %v821, 6
        %v907 = vpop.permute.xlu0 %906
        %908 = vrot.lane.b32.xlu0 %v822, 6
        %v909 = vpop.permute.xlu0 %908
        %910 = vrot.lane.b32.xlu0 %v823, 6
        %v911 = vpop.permute.xlu0 %910
        %912 = vrot.lane.b32.xlu0 %v824, 6
        %v913 = vpop.permute.xlu0 %912
        %914 = vrot.lane.b32.xlu0 %v825, 6
        %v915 = vpop.permute.xlu0 %914
        %916 = vrot.lane.b32.xlu0 %v826, 6
        %v917 = vpop.permute.xlu0 %916
        %918 = vrot.lane.b32.xlu0 %v827, 6
        %v919 = vpop.permute.xlu0 %918
        %920 = vrot.lane.b32.xlu0 %v828, 6
        %v921 = vpop.permute.xlu0 %920
        %922 = vrot.lane.b32.xlu0 %v829, 6
        %v923 = vpop.permute.xlu0 %922
        %924 = vrot.lane.b32.xlu0 %v830, 6
        %v925 = vpop.permute.xlu0 %924
        %926 = vrot.lane.b32.xlu0 %v831, 6
        %v927 = vpop.permute.xlu0 %926
        %vm960 = vcmask 72752
        %961 = vst.msk [vmem:[#allocation3] sm:$0xff] %vm960, %v865
        %962 = vst.msk [vmem:[#allocation3 + $0x8] sm:$0xff] %vm960, %v867
        %963 = vst.msk [vmem:[#allocation3 + $0x10] sm:$0xff] %vm960, %v869
        %964 = vst.msk [vmem:[#allocation3 + $0x18] sm:$0xff] %vm960, %v871
        %965 = vst.msk [vmem:[#allocation3 + $0x20] sm:$0xff] %vm960, %v873
        %966 = vst.msk [vmem:[#allocation3 + $0x28] sm:$0xff] %vm960, %v875
        %967 = vst.msk [vmem:[#allocation3 + $0x30] sm:$0xff] %vm960, %v877
        %968 = vst.msk [vmem:[#allocation3 + $0x38] sm:$0xff] %vm960, %v879
        %969 = vst.msk [vmem:[#allocation3 + $0x40] sm:$0xff] %vm960, %v881
        %970 = vst.msk [vmem:[#allocation3 + $0x48] sm:$0xff] %vm960, %v883
        %971 = vst.msk [vmem:[#allocation3 + $0x50] sm:$0xff] %vm960, %v885
        %972 = vst.msk [vmem:[#allocation3 + $0x58] sm:$0xff] %vm960, %v887
        %973 = vst.msk [vmem:[#allocation3 + $0x60] sm:$0xff] %vm960, %v889
        %974 = vst.msk [vmem:[#allocation3 + $0x68] sm:$0xff] %vm960, %v891
        %975 = vst.msk [vmem:[#allocation3 + $0x70] sm:$0xff] %vm960, %v893
        %976 = vst.msk [vmem:[#allocation3 + $0x78] sm:$0xff] %vm960, %v895
        %977 = vst.msk [vmem:[#allocation3 + $0x80] sm:$0xff] %vm960, %v897
        %978 = vst.msk [vmem:[#allocation3 + $0x88] sm:$0xff] %vm960, %v899
        %979 = vst.msk [vmem:[#allocation3 + $0x90] sm:$0xff] %vm960, %v901
        %980 = vst.msk [vmem:[#allocation3 + $0x98] sm:$0xff] %vm960, %v903
        %981 = vst.msk [vmem:[#allocation3 + $0xa0] sm:$0xff] %vm960, %v905
        %982 = vst.msk [vmem:[#allocation3 + $0xa8] sm:$0xff] %vm960, %v907
        %983 = vst.msk [vmem:[#allocation3 + $0xb0] sm:$0xff] %vm960, %v909
        %984 = vst.msk [vmem:[#allocation3 + $0xb8] sm:$0xff] %vm960, %v911
        %985 = vst.msk [vmem:[#allocation3 + $0xc0] sm:$0xff] %vm960, %v913
        %986 = vst.msk [vmem:[#allocation3 + $0xc8] sm:$0xff] %vm960, %v915
        %987 = vst.msk [vmem:[#allocation3 + $0xd0] sm:$0xff] %vm960, %v917
        %988 = vst.msk [vmem:[#allocation3 + $0xd8] sm:$0xff] %vm960, %v919
        %989 = vst.msk [vmem:[#allocation3 + $0xe0] sm:$0xff] %vm960, %v921
        %990 = vst.msk [vmem:[#allocation3 + $0xe8] sm:$0xff] %vm960, %v923
        %991 = vst.msk [vmem:[#allocation3 + $0xf0] sm:$0xff] %vm960, %v925
        %992 = vst.msk [vmem:[#allocation3 + $0xf8] sm:$0xff] %vm960, %v927
        %v993 = vld [vmem:[%s510] sm:$0xff]
        %v994 = vld [vmem:[%s510 + $0x8] sm:$0xff]
        %v995 = vld [vmem:[%s510 + $0x18] sm:$0xff]
        %v996 = vld [vmem:[%s510 + $0x20] sm:$0xff]
        %v997 = vld [vmem:[%s510 + $0x30] sm:$0xff]
        %v998 = vld [vmem:[%s510 + $0x38] sm:$0xff]
        %v999 = vld [vmem:[%s510 + $0x48] sm:$0xff]
        %v1000 = vld [vmem:[%s510 + $0x50] sm:$0xff]
        %v1001 = vld [vmem:[%s510 + $0x60] sm:$0xff]
        %v1002 = vld [vmem:[%s510 + $0x68] sm:$0xff]
        %v1003 = vld [vmem:[%s510 + $0x78] sm:$0xff]
        %v1004 = vld [vmem:[%s510 + $0x80] sm:$0xff]
        %v1005 = vld [vmem:[%s510 + $0x90] sm:$0xff]
        %v1006 = vld [vmem:[%s510 + $0x98] sm:$0xff]
        %v1007 = vld [vmem:[%s510 + $0xa8] sm:$0xff]
        %v1008 = vld [vmem:[%s510 + $0xb0] sm:$0xff]
        %v1009 = vld [vmem:[%s510 + $0xc0] sm:$0xff]
        %v1010 = vld [vmem:[%s510 + $0xc8] sm:$0xff]
        %v1011 = vld [vmem:[%s510 + $0xd8] sm:$0xff]
        %v1012 = vld [vmem:[%s510 + $0xe0] sm:$0xff]
        %v1013 = vld [vmem:[%s510 + $0xf0] sm:$0xff]
        %v1014 = vld [vmem:[%s510 + $0xf8] sm:$0xff]
        %v1015 = vld [vmem:[%s510 + $0x108] sm:$0xff]
        %v1016 = vld [vmem:[%s510 + $0x110] sm:$0xff]
        %v1017 = vld [vmem:[%s510 + $0x120] sm:$0xff]
        %v1018 = vld [vmem:[%s510 + $0x128] sm:$0xff]
        %v1019 = vld [vmem:[%s510 + $0x138] sm:$0xff]
        %v1020 = vld [vmem:[%s510 + $0x140] sm:$0xff]
        %v1021 = vld [vmem:[%s510 + $0x150] sm:$0xff]
        %v1022 = vld [vmem:[%s510 + $0x158] sm:$0xff]
        %v1023 = vld [vmem:[%s510 + $0x168] sm:$0xff]
        %v1024 = vld [vmem:[%s510 + $0x170] sm:$0xff]
        %1057 = vrot.lane.b32.xlu0 %v993, 9
        %v1058 = vpop.permute.xlu0 %1057
        %1059 = vrot.lane.b32.xlu0 %v994, 9
        %v1060 = vpop.permute.xlu0 %1059
        %1061 = vrot.lane.b32.xlu0 %v995, 9
        %v1062 = vpop.permute.xlu0 %1061
        %1063 = vrot.lane.b32.xlu0 %v996, 9
        %v1064 = vpop.permute.xlu0 %1063
        %1065 = vrot.lane.b32.xlu0 %v997, 9
        %v1066 = vpop.permute.xlu0 %1065
        %1067 = vrot.lane.b32.xlu0 %v998, 9
        %v1068 = vpop.permute.xlu0 %1067
        %1069 = vrot.lane.b32.xlu0 %v999, 9
        %v1070 = vpop.permute.xlu0 %1069
        %1071 = vrot.lane.b32.xlu0 %v1000, 9
        %v1072 = vpop.permute.xlu0 %1071
        %1073 = vrot.lane.b32.xlu0 %v1001, 9
        %v1074 = vpop.permute.xlu0 %1073
        %1075 = vrot.lane.b32.xlu0 %v1002, 9
        %v1076 = vpop.permute.xlu0 %1075
        %1077 = vrot.lane.b32.xlu0 %v1003, 9
        %v1078 = vpop.permute.xlu0 %1077
        %1079 = vrot.lane.b32.xlu0 %v1004, 9
        %v1080 = vpop.permute.xlu0 %1079
        %1081 = vrot.lane.b32.xlu0 %v1005, 9
        %v1082 = vpop.permute.xlu0 %1081
        %1083 = vrot.lane.b32.xlu0 %v1006, 9
        %v1084 = vpop.permute.xlu0 %1083
        %1085 = vrot.lane.b32.xlu0 %v1007, 9
        %v1086 = vpop.permute.xlu0 %1085
        %1087 = vrot.lane.b32.xlu0 %v1008, 9
        %v1088 = vpop.permute.xlu0 %1087
        %1089 = vrot.lane.b32.xlu0 %v1009, 9
        %v1090 = vpop.permute.xlu0 %1089
        %1091 = vrot.lane.b32.xlu0 %v1010, 9
        %v1092 = vpop.permute.xlu0 %1091
        %1093 = vrot.lane.b32.xlu0 %v1011, 9
        %v1094 = vpop.permute.xlu0 %1093
        %1095 = vrot.lane.b32.xlu0 %v1012, 9
        %v1096 = vpop.permute.xlu0 %1095
        %1097 = vrot.lane.b32.xlu0 %v1013, 9
        %v1098 = vpop.permute.xlu0 %1097
        %1099 = vrot.lane.b32.xlu0 %v1014, 9
        %v1100 = vpop.permute.xlu0 %1099
        %1101 = vrot.lane.b32.xlu0 %v1015, 9
        %v1102 = vpop.permute.xlu0 %1101
        %1103 = vrot.lane.b32.xlu0 %v1016, 9
        %v1104 = vpop.permute.xlu0 %1103
        %1105 = vrot.lane.b32.xlu0 %v1017, 9
        %v1106 = vpop.permute.xlu0 %1105
        %1107 = vrot.lane.b32.xlu0 %v1018, 9
        %v1108 = vpop.permute.xlu0 %1107
        %1109 = vrot.lane.b32.xlu0 %v1019, 9
        %v1110 = vpop.permute.xlu0 %1109
        %1111 = vrot.lane.b32.xlu0 %v1020, 9
        %v1112 = vpop.permute.xlu0 %1111
        %1113 = vrot.lane.b32.xlu0 %v1021, 9
        %v1114 = vpop.permute.xlu0 %1113
        %1115 = vrot.lane.b32.xlu0 %v1022, 9
        %v1116 = vpop.permute.xlu0 %1115
        %1117 = vrot.lane.b32.xlu0 %v1023, 9
        %v1118 = vpop.permute.xlu0 %1117
        %1119 = vrot.lane.b32.xlu0 %v1024, 9
        %v1120 = vpop.permute.xlu0 %1119
        %vm1153 = vcmask 97352
        %1154 = vst.msk [vmem:[#allocation3] sm:$0xff] %vm1153, %v1058
        %1155 = vst.msk [vmem:[#allocation3 + $0x8] sm:$0xff] %vm1153, %v1060
        %1156 = vst.msk [vmem:[#allocation3 + $0x10] sm:$0xff] %vm1153, %v1062
        %1157 = vst.msk [vmem:[#allocation3 + $0x18] sm:$0xff] %vm1153, %v1064
        %1158 = vst.msk [vmem:[#allocation3 + $0x20] sm:$0xff] %vm1153, %v1066
        %1159 = vst.msk [vmem:[#allocation3 + $0x28] sm:$0xff] %vm1153, %v1068
        %1160 = vst.msk [vmem:[#allocation3 + $0x30] sm:$0xff] %vm1153, %v1070
        %1161 = vst.msk [vmem:[#allocation3 + $0x38] sm:$0xff] %vm1153, %v1072
        %1162 = vst.msk [vmem:[#allocation3 + $0x40] sm:$0xff] %vm1153, %v1074
        %1163 = vst.msk [vmem:[#allocation3 + $0x48] sm:$0xff] %vm1153, %v1076
        %1164 = vst.msk [vmem:[#allocation3 + $0x50] sm:$0xff] %vm1153, %v1078
        %1165 = vst.msk [vmem:[#allocation3 + $0x58] sm:$0xff] %vm1153, %v1080
        %1166 = vst.msk [vmem:[#allocation3 + $0x60] sm:$0xff] %vm1153, %v1082
        %1167 = vst.msk [vmem:[#allocation3 + $0x68] sm:$0xff] %vm1153, %v1084
        %1168 = vst.msk [vmem:[#allocation3 + $0x70] sm:$0xff] %vm1153, %v1086
        %1169 = vst.msk [vmem:[#allocation3 + $0x78] sm:$0xff] %vm1153, %v1088
        %1170 = vst.msk [vmem:[#allocation3 + $0x80] sm:$0xff] %vm1153, %v1090
        %1171 = vst.msk [vmem:[#allocation3 + $0x88] sm:$0xff] %vm1153, %v1092
        %1172 = vst.msk [vmem:[#allocation3 + $0x90] sm:$0xff] %vm1153, %v1094
        %1173 = vst.msk [vmem:[#allocation3 + $0x98] sm:$0xff] %vm1153, %v1096
        %1174 = vst.msk [vmem:[#allocation3 + $0xa0] sm:$0xff] %vm1153, %v1098
        %1175 = vst.msk [vmem:[#allocation3 + $0xa8] sm:$0xff] %vm1153, %v1100
        %1176 = vst.msk [vmem:[#allocation3 + $0xb0] sm:$0xff] %vm1153, %v1102
        %1177 = vst.msk [vmem:[#allocation3 + $0xb8] sm:$0xff] %vm1153, %v1104
        %1178 = vst.msk [vmem:[#allocation3 + $0xc0] sm:$0xff] %vm1153, %v1106
        %1179 = vst.msk [vmem:[#allocation3 + $0xc8] sm:$0xff] %vm1153, %v1108
        %1180 = vst.msk [vmem:[#allocation3 + $0xd0] sm:$0xff] %vm1153, %v1110
        %1181 = vst.msk [vmem:[#allocation3 + $0xd8] sm:$0xff] %vm1153, %v1112
        %1182 = vst.msk [vmem:[#allocation3 + $0xe0] sm:$0xff] %vm1153, %v1114
        %1183 = vst.msk [vmem:[#allocation3 + $0xe8] sm:$0xff] %vm1153, %v1116
        %1184 = vst.msk [vmem:[#allocation3 + $0xf0] sm:$0xff] %vm1153, %v1118
        %1185 = vst.msk [vmem:[#allocation3 + $0xf8] sm:$0xff] %vm1153, %v1120
        %v1186 = vld [vmem:[%s510 + $0x1] sm:$0xff]
        %v1187 = vld [vmem:[%s510 + $0x9] sm:$0xff]
        %v1188 = vld [vmem:[%s510 + $0x19] sm:$0xff]
        %v1189 = vld [vmem:[%s510 + $0x21] sm:$0xff]
        %v1190 = vld [vmem:[%s510 + $0x31] sm:$0xff]
        %v1191 = vld [vmem:[%s510 + $0x39] sm:$0xff]
        %v1192 = vld [vmem:[%s510 + $0x49] sm:$0xff]
        %v1193 = vld [vmem:[%s510 + $0x51] sm:$0xff]
        %v1194 = vld [vmem:[%s510 + $0x61] sm:$0xff]
        %v1195 = vld [vmem:[%s510 + $0x69] sm:$0xff]
        %v1196 = vld [vmem:[%s510 + $0x79] sm:$0xff]
        %v1197 = vld [vmem:[%s510 + $0x81] sm:$0xff]
        %v1198 = vld [vmem:[%s510 + $0x91] sm:$0xff]
        %v1199 = vld [vmem:[%s510 + $0x99] sm:$0xff]
        %v1200 = vld [vmem:[%s510 + $0xa9] sm:$0xff]
        %v1201 = vld [vmem:[%s510 + $0xb1] sm:$0xff]
        %v1202 = vld [vmem:[%s510 + $0xc1] sm:$0xff]
        %v1203 = vld [vmem:[%s510 + $0xc9] sm:$0xff]
        %v1204 = vld [vmem:[%s510 + $0xd9] sm:$0xff]
        %v1205 = vld [vmem:[%s510 + $0xe1] sm:$0xff]
        %v1206 = vld [vmem:[%s510 + $0xf1] sm:$0xff]
        %v1207 = vld [vmem:[%s510 + $0xf9] sm:$0xff]
        %v1208 = vld [vmem:[%s510 + $0x109] sm:$0xff]
        %v1209 = vld [vmem:[%s510 + $0x111] sm:$0xff]
        %v1210 = vld [vmem:[%s510 + $0x121] sm:$0xff]
        %v1211 = vld [vmem:[%s510 + $0x129] sm:$0xff]
        %v1212 = vld [vmem:[%s510 + $0x139] sm:$0xff]
        %v1213 = vld [vmem:[%s510 + $0x141] sm:$0xff]
        %v1214 = vld [vmem:[%s510 + $0x151] sm:$0xff]
        %v1215 = vld [vmem:[%s510 + $0x159] sm:$0xff]
        %v1216 = vld [vmem:[%s510 + $0x169] sm:$0xff]
        %v1217 = vld [vmem:[%s510 + $0x171] sm:$0xff]
        %1250 = vrot.lane.b32.xlu0 %v1186, 12
        %v1251 = vpop.permute.xlu0 %1250
        %1252 = vrot.lane.b32.xlu0 %v1187, 12
        %v1253 = vpop.permute.xlu0 %1252
        %1254 = vrot.lane.b32.xlu0 %v1188, 12
        %v1255 = vpop.permute.xlu0 %1254
        %1256 = vrot.lane.b32.xlu0 %v1189, 12
        %v1257 = vpop.permute.xlu0 %1256
        %1258 = vrot.lane.b32.xlu0 %v1190, 12
        %v1259 = vpop.permute.xlu0 %1258
        %1260 = vrot.lane.b32.xlu0 %v1191, 12
        %v1261 = vpop.permute.xlu0 %1260
        %1262 = vrot.lane.b32.xlu0 %v1192, 12
        %v1263 = vpop.permute.xlu0 %1262
        %1264 = vrot.lane.b32.xlu0 %v1193, 12
        %v1265 = vpop.permute.xlu0 %1264
        %1266 = vrot.lane.b32.xlu0 %v1194, 12
        %v1267 = vpop.permute.xlu0 %1266
        %1268 = vrot.lane.b32.xlu0 %v1195, 12
        %v1269 = vpop.permute.xlu0 %1268
        %1270 = vrot.lane.b32.xlu0 %v1196, 12
        %v1271 = vpop.permute.xlu0 %1270
        %1272 = vrot.lane.b32.xlu0 %v1197, 12
        %v1273 = vpop.permute.xlu0 %1272
        %1274 = vrot.lane.b32.xlu0 %v1198, 12
        %v1275 = vpop.permute.xlu0 %1274
        %1276 = vrot.lane.b32.xlu0 %v1199, 12
        %v1277 = vpop.permute.xlu0 %1276
        %1278 = vrot.lane.b32.xlu0 %v1200, 12
        %v1279 = vpop.permute.xlu0 %1278
        %1280 = vrot.lane.b32.xlu0 %v1201, 12
        %v1281 = vpop.permute.xlu0 %1280
        %1282 = vrot.lane.b32.xlu0 %v1202, 12
        %v1283 = vpop.permute.xlu0 %1282
        %1284 = vrot.lane.b32.xlu0 %v1203, 12
        %v1285 = vpop.permute.xlu0 %1284
        %1286 = vrot.lane.b32.xlu0 %v1204, 12
        %v1287 = vpop.permute.xlu0 %1286
        %1288 = vrot.lane.b32.xlu0 %v1205, 12
        %v1289 = vpop.permute.xlu0 %1288
        %1290 = vrot.lane.b32.xlu0 %v1206, 12
        %v1291 = vpop.permute.xlu0 %1290
        %1292 = vrot.lane.b32.xlu0 %v1207, 12
        %v1293 = vpop.permute.xlu0 %1292
        %1294 = vrot.lane.b32.xlu0 %v1208, 12
        %v1295 = vpop.permute.xlu0 %1294
        %1296 = vrot.lane.b32.xlu0 %v1209, 12
        %v1297 = vpop.permute.xlu0 %1296
        %1298 = vrot.lane.b32.xlu0 %v1210, 12
        %v1299 = vpop.permute.xlu0 %1298
        %1300 = vrot.lane.b32.xlu0 %v1211, 12
        %v1301 = vpop.permute.xlu0 %1300
        %1302 = vrot.lane.b32.xlu0 %v1212, 12
        %v1303 = vpop.permute.xlu0 %1302
        %1304 = vrot.lane.b32.xlu0 %v1213, 12
        %v1305 = vpop.permute.xlu0 %1304
        %1306 = vrot.lane.b32.xlu0 %v1214, 12
        %v1307 = vpop.permute.xlu0 %1306
        %1308 = vrot.lane.b32.xlu0 %v1215, 12
        %v1309 = vpop.permute.xlu0 %1308
        %1310 = vrot.lane.b32.xlu0 %v1216, 12
        %v1311 = vpop.permute.xlu0 %1310
        %1312 = vrot.lane.b32.xlu0 %v1217, 12
        %v1313 = vpop.permute.xlu0 %1312
        %vm1346 = vcmask 121952
        %1347 = vst.msk [vmem:[#allocation3] sm:$0xff] %vm1346, %v1251
        %1348 = vst.msk [vmem:[#allocation3 + $0x8] sm:$0xff] %vm1346, %v1253
        %1349 = vst.msk [vmem:[#allocation3 + $0x10] sm:$0xff] %vm1346, %v1255
        %1350 = vst.msk [vmem:[#allocation3 + $0x18] sm:$0xff] %vm1346, %v1257
        %1351 = vst.msk [vmem:[#allocation3 + $0x20] sm:$0xff] %vm1346, %v1259
        %1352 = vst.msk [vmem:[#allocation3 + $0x28] sm:$0xff] %vm1346, %v1261
        %1353 = vst.msk [vmem:[#allocation3 + $0x30] sm:$0xff] %vm1346, %v1263
        %1354 = vst.msk [vmem:[#allocation3 + $0x38] sm:$0xff] %vm1346, %v1265
        %1355 = vst.msk [vmem:[#allocation3 + $0x40] sm:$0xff] %vm1346, %v1267
        %1356 = vst.msk [vmem:[#allocation3 + $0x48] sm:$0xff] %vm1346, %v1269
        %1357 = vst.msk [vmem:[#allocation3 + $0x50] sm:$0xff] %vm1346, %v1271
        %1358 = vst.msk [vmem:[#allocation3 + $0x58] sm:$0xff] %vm1346, %v1273
        %1359 = vst.msk [vmem:[#allocation3 + $0x60] sm:$0xff] %vm1346, %v1275
        %1360 = vst.msk [vmem:[#allocation3 + $0x68] sm:$0xff] %vm1346, %v1277
        %1361 = vst.msk [vmem:[#allocation3 + $0x70] sm:$0xff] %vm1346, %v1279
        %1362 = vst.msk [vmem:[#allocation3 + $0x78] sm:$0xff] %vm1346, %v1281
        %1363 = vst.msk [vmem:[#allocation3 + $0x80] sm:$0xff] %vm1346, %v1283
        %1364 = vst.msk [vmem:[#allocation3 + $0x88] sm:$0xff] %vm1346, %v1285
        %1365 = vst.msk [vmem:[#allocation3 + $0x90] sm:$0xff] %vm1346, %v1287
        %1366 = vst.msk [vmem:[#allocation3 + $0x98] sm:$0xff] %vm1346, %v1289
        %1367 = vst.msk [vmem:[#allocation3 + $0xa0] sm:$0xff] %vm1346, %v1291
        %1368 = vst.msk [vmem:[#allocation3 + $0xa8] sm:$0xff] %vm1346, %v1293
        %1369 = vst.msk [vmem:[#allocation3 + $0xb0] sm:$0xff] %vm1346, %v1295
        %1370 = vst.msk [vmem:[#allocation3 + $0xb8] sm:$0xff] %vm1346, %v1297
        %1371 = vst.msk [vmem:[#allocation3 + $0xc0] sm:$0xff] %vm1346, %v1299
        %1372 = vst.msk [vmem:[#allocation3 + $0xc8] sm:$0xff] %vm1346, %v1301
        %1373 = vst.msk [vmem:[#allocation3 + $0xd0] sm:$0xff] %vm1346, %v1303
        %1374 = vst.msk [vmem:[#allocation3 + $0xd8] sm:$0xff] %vm1346, %v1305
        %1375 = vst.msk [vmem:[#allocation3 + $0xe0] sm:$0xff] %vm1346, %v1307
        %1376 = vst.msk [vmem:[#allocation3 + $0xe8] sm:$0xff] %vm1346, %v1309
        %1377 = vst.msk [vmem:[#allocation3 + $0xf0] sm:$0xff] %vm1346, %v1311
        %1378 = vst.msk [vmem:[#allocation3 + $0xf8] sm:$0xff] %vm1346, %v1313
        %v1379 = vld [vmem:[%s510 + $0x2] sm:$0xff]
        %v1380 = vld [vmem:[%s510 + $0xa] sm:$0xff]
        %v1381 = vld [vmem:[%s510 + $0x1a] sm:$0xff]
        %v1382 = vld [vmem:[%s510 + $0x22] sm:$0xff]
        %v1383 = vld [vmem:[%s510 + $0x32] sm:$0xff]
        %v1384 = vld [vmem:[%s510 + $0x3a] sm:$0xff]
        %v1385 = vld [vmem:[%s510 + $0x4a] sm:$0xff]
        %v1386 = vld [vmem:[%s510 + $0x52] sm:$0xff]
        %v1387 = vld [vmem:[%s510 + $0x62] sm:$0xff]
        %v1388 = vld [vmem:[%s510 + $0x6a] sm:$0xff]
        %v1389 = vld [vmem:[%s510 + $0x7a] sm:$0xff]
        %v1390 = vld [vmem:[%s510 + $0x82] sm:$0xff]
        %v1391 = vld [vmem:[%s510 + $0x92] sm:$0xff]
        %v1392 = vld [vmem:[%s510 + $0x9a] sm:$0xff]
        %v1393 = vld [vmem:[%s510 + $0xaa] sm:$0xff]
        %v1394 = vld [vmem:[%s510 + $0xb2] sm:$0xff]
        %v1395 = vld [vmem:[%s510 + $0xc2] sm:$0xff]
        %v1396 = vld [vmem:[%s510 + $0xca] sm:$0xff]
        %v1397 = vld [vmem:[%s510 + $0xda] sm:$0xff]
        %v1398 = vld [vmem:[%s510 + $0xe2] sm:$0xff]
        %v1399 = vld [vmem:[%s510 + $0xf2] sm:$0xff]
        %v1400 = vld [vmem:[%s510 + $0xfa] sm:$0xff]
        %v1401 = vld [vmem:[%s510 + $0x10a] sm:$0xff]
        %v1402 = vld [vmem:[%s510 + $0x112] sm:$0xff]
        %v1403 = vld [vmem:[%s510 + $0x122] sm:$0xff]
        %v1404 = vld [vmem:[%s510 + $0x12a] sm:$0xff]
        %v1405 = vld [vmem:[%s510 + $0x13a] sm:$0xff]
        %v1406 = vld [vmem:[%s510 + $0x142] sm:$0xff]
        %v1407 = vld [vmem:[%s510 + $0x152] sm:$0xff]
        %v1408 = vld [vmem:[%s510 + $0x15a] sm:$0xff]
        %v1409 = vld [vmem:[%s510 + $0x16a] sm:$0xff]
        %v1410 = vld [vmem:[%s510 + $0x172] sm:$0xff]
        %1443 = vrot.lane.b32.xlu0 %v1379, 15
        %v1444 = vpop.permute.xlu0 %1443
        %1445 = vrot.lane.b32.xlu0 %v1380, 15
        %v1446 = vpop.permute.xlu0 %1445
        %1447 = vrot.lane.b32.xlu0 %v1381, 15
        %v1448 = vpop.permute.xlu0 %1447
        %1449 = vrot.lane.b32.xlu0 %v1382, 15
        %v1450 = vpop.permute.xlu0 %1449
        %1451 = vrot.lane.b32.xlu0 %v1383, 15
        %v1452 = vpop.permute.xlu0 %1451
        %1453 = vrot.lane.b32.xlu0 %v1384, 15
        %v1454 = vpop.permute.xlu0 %1453
        %1455 = vrot.lane.b32.xlu0 %v1385, 15
        %v1456 = vpop.permute.xlu0 %1455
        %1457 = vrot.lane.b32.xlu0 %v1386, 15
        %v1458 = vpop.permute.xlu0 %1457
        %1459 = vrot.lane.b32.xlu0 %v1387, 15
        %v1460 = vpop.permute.xlu0 %1459
        %1461 = vrot.lane.b32.xlu0 %v1388, 15
        %v1462 = vpop.permute.xlu0 %1461
        %1463 = vrot.lane.b32.xlu0 %v1389, 15
        %v1464 = vpop.permute.xlu0 %1463
        %1465 = vrot.lane.b32.xlu0 %v1390, 15
        %v1466 = vpop.permute.xlu0 %1465
        %1467 = vrot.lane.b32.xlu0 %v1391, 15
        %v1468 = vpop.permute.xlu0 %1467
        %1469 = vrot.lane.b32.xlu0 %v1392, 15
        %v1470 = vpop.permute.xlu0 %1469
        %1471 = vrot.lane.b32.xlu0 %v1393, 15
        %v1472 = vpop.permute.xlu0 %1471
        %1473 = vrot.lane.b32.xlu0 %v1394, 15
        %v1474 = vpop.permute.xlu0 %1473
        %1475 = vrot.lane.b32.xlu0 %v1395, 15
        %v1476 = vpop.permute.xlu0 %1475
        %1477 = vrot.lane.b32.xlu0 %v1396, 15
        %v1478 = vpop.permute.xlu0 %1477
        %1479 = vrot.lane.b32.xlu0 %v1397, 15
        %v1480 = vpop.permute.xlu0 %1479
        %1481 = vrot.lane.b32.xlu0 %v1398, 15
        %v1482 = vpop.permute.xlu0 %1481
        %1483 = vrot.lane.b32.xlu0 %v1399, 15
        %v1484 = vpop.permute.xlu0 %1483
        %1485 = vrot.lane.b32.xlu0 %v1400, 15
        %v1486 = vpop.permute.xlu0 %1485
        %1487 = vrot.lane.b32.xlu0 %v1401, 15
        %v1488 = vpop.permute.xlu0 %1487
        %1489 = vrot.lane.b32.xlu0 %v1402, 15
        %v1490 = vpop.permute.xlu0 %1489
        %1491 = vrot.lane.b32.xlu0 %v1403, 15
        %v1492 = vpop.permute.xlu0 %1491
        %1493 = vrot.lane.b32.xlu0 %v1404, 15
        %v1494 = vpop.permute.xlu0 %1493
        %1495 = vrot.lane.b32.xlu0 %v1405, 15
        %v1496 = vpop.permute.xlu0 %1495
        %1497 = vrot.lane.b32.xlu0 %v1406, 15
        %v1498 = vpop.permute.xlu0 %1497
        %1499 = vrot.lane.b32.xlu0 %v1407, 15
        %v1500 = vpop.permute.xlu0 %1499
        %1501 = vrot.lane.b32.xlu0 %v1408, 15
        %v1502 = vpop.permute.xlu0 %1501
        %1503 = vrot.lane.b32.xlu0 %v1409, 15
        %v1504 = vpop.permute.xlu0 %1503
        %1505 = vrot.lane.b32.xlu0 %v1410, 15
        %v1506 = vpop.permute.xlu0 %1505
        %vm1539 = vcmask 146552
        %1540 = vst.msk [vmem:[#allocation3] sm:$0xff] %vm1539, %v1444
        %1541 = vst.msk [vmem:[#allocation3 + $0x8] sm:$0xff] %vm1539, %v1446
        %1542 = vst.msk [vmem:[#allocation3 + $0x10] sm:$0xff] %vm1539, %v1448
        %1543 = vst.msk [vmem:[#allocation3 + $0x18] sm:$0xff] %vm1539, %v1450
        %1544 = vst.msk [vmem:[#allocation3 + $0x20] sm:$0xff] %vm1539, %v1452
        %1545 = vst.msk [vmem:[#allocation3 + $0x28] sm:$0xff] %vm1539, %v1454
        %1546 = vst.msk [vmem:[#allocation3 + $0x30] sm:$0xff] %vm1539, %v1456
        %1547 = vst.msk [vmem:[#allocation3 + $0x38] sm:$0xff] %vm1539, %v1458
        %1548 = vst.msk [vmem:[#allocation3 + $0x40] sm:$0xff] %vm1539, %v1460
        %1549 = vst.msk [vmem:[#allocation3 + $0x48] sm:$0xff] %vm1539, %v1462
        %1550 = vst.msk [vmem:[#allocation3 + $0x50] sm:$0xff] %vm1539, %v1464
        %1551 = vst.msk [vmem:[#allocation3 + $0x58] sm:$0xff] %vm1539, %v1466
        %1552 = vst.msk [vmem:[#allocation3 + $0x60] sm:$0xff] %vm1539, %v1468
        %1553 = vst.msk [vmem:[#allocation3 + $0x68] sm:$0xff] %vm1539, %v1470
        %1554 = vst.msk [vmem:[#allocation3 + $0x70] sm:$0xff] %vm1539, %v1472
        %1555 = vst.msk [vmem:[#allocation3 + $0x78] sm:$0xff] %vm1539, %v1474
        %1556 = vst.msk [vmem:[#allocation3 + $0x80] sm:$0xff] %vm1539, %v1476
        %1557 = vst.msk [vmem:[#allocation3 + $0x88] sm:$0xff] %vm1539, %v1478
        %1558 = vst.msk [vmem:[#allocation3 + $0x90] sm:$0xff] %vm1539, %v1480
        %1559 = vst.msk [vmem:[#allocation3 + $0x98] sm:$0xff] %vm1539, %v1482
        %1560 = vst.msk [vmem:[#allocation3 + $0xa0] sm:$0xff] %vm1539, %v1484
        %1561 = vst.msk [vmem:[#allocation3 + $0xa8] sm:$0xff] %vm1539, %v1486
        %1562 = vst.msk [vmem:[#allocation3 + $0xb0] sm:$0xff] %vm1539, %v1488
        %1563 = vst.msk [vmem:[#allocation3 + $0xb8] sm:$0xff] %vm1539, %v1490
        %1564 = vst.msk [vmem:[#allocation3 + $0xc0] sm:$0xff] %vm1539, %v1492
        %1565 = vst.msk [vmem:[#allocation3 + $0xc8] sm:$0xff] %vm1539, %v1494
        %1566 = vst.msk [vmem:[#allocation3 + $0xd0] sm:$0xff] %vm1539, %v1496
        %1567 = vst.msk [vmem:[#allocation3 + $0xd8] sm:$0xff] %vm1539, %v1498
        %1568 = vst.msk [vmem:[#allocation3 + $0xe0] sm:$0xff] %vm1539, %v1500
        %1569 = vst.msk [vmem:[#allocation3 + $0xe8] sm:$0xff] %vm1539, %v1502
        %1570 = vst.msk [vmem:[#allocation3 + $0xf0] sm:$0xff] %vm1539, %v1504
        %1571 = vst.msk [vmem:[#allocation3 + $0xf8] sm:$0xff] %vm1539, %v1506
        %s1572 = scalar_lea.vmem [#allocation2], 48
        %v1573 = vld [vmem:[%s1572] sm:$0xff]
        %v1574 = vld [vmem:[%s1572 + $0x8] sm:$0xff]
        %v1575 = vld [vmem:[%s1572 + $0x18] sm:$0xff]
        %v1576 = vld [vmem:[%s1572 + $0x20] sm:$0xff]
        %v1577 = vld [vmem:[%s1572 + $0x30] sm:$0xff]
        %v1578 = vld [vmem:[%s1572 + $0x38] sm:$0xff]
        %v1579 = vld [vmem:[%s1572 + $0x48] sm:$0xff]
        %v1580 = vld [vmem:[%s1572 + $0x50] sm:$0xff]
        %v1581 = vld [vmem:[%s1572 + $0x60] sm:$0xff]
        %v1582 = vld [vmem:[%s1572 + $0x68] sm:$0xff]
        %v1583 = vld [vmem:[%s1572 + $0x78] sm:$0xff]
        %v1584 = vld [vmem:[%s1572 + $0x80] sm:$0xff]
        %v1585 = vld [vmem:[%s1572 + $0x90] sm:$0xff]
        %v1586 = vld [vmem:[%s1572 + $0x98] sm:$0xff]
        %v1587 = vld [vmem:[%s1572 + $0xa8] sm:$0xff]
        %v1588 = vld [vmem:[%s1572 + $0xb0] sm:$0xff]
        %v1589 = vld [vmem:[%s1572 + $0xc0] sm:$0xff]
        %v1590 = vld [vmem:[%s1572 + $0xc8] sm:$0xff]
        %v1591 = vld [vmem:[%s1572 + $0xd8] sm:$0xff]
        %v1592 = vld [vmem:[%s1572 + $0xe0] sm:$0xff]
        %v1593 = vld [vmem:[%s1572 + $0xf0] sm:$0xff]
        %v1594 = vld [vmem:[%s1572 + $0xf8] sm:$0xff]
        %v1595 = vld [vmem:[%s1572 + $0x108] sm:$0xff]
        %v1596 = vld [vmem:[%s1572 + $0x110] sm:$0xff]
        %v1597 = vld [vmem:[%s1572 + $0x120] sm:$0xff]
        %v1598 = vld [vmem:[%s1572 + $0x128] sm:$0xff]
        %v1599 = vld [vmem:[%s1572 + $0x138] sm:$0xff]
        %v1600 = vld [vmem:[%s1572 + $0x140] sm:$0xff]
        %v1601 = vld [vmem:[%s1572 + $0x150] sm:$0xff]
        %v1602 = vld [vmem:[%s1572 + $0x158] sm:$0xff]
        %v1603 = vld [vmem:[%s1572 + $0x168] sm:$0xff]
        %v1604 = vld [vmem:[%s1572 + $0x170] sm:$0xff]
        %1637 = vrot.lane.b32.xlu0 %v1573, 18
        %v1638 = vpop.permute.xlu0 %1637
        %1639 = vrot.lane.b32.xlu0 %v1574, 18
        %v1640 = vpop.permute.xlu0 %1639
        %1641 = vrot.lane.b32.xlu0 %v1575, 18
        %v1642 = vpop.permute.xlu0 %1641
        %1643 = vrot.lane.b32.xlu0 %v1576, 18
        %v1644 = vpop.permute.xlu0 %1643
        %1645 = vrot.lane.b32.xlu0 %v1577, 18
        %v1646 = vpop.permute.xlu0 %1645
        %1647 = vrot.lane.b32.xlu0 %v1578, 18
        %v1648 = vpop.permute.xlu0 %1647
        %1649 = vrot.lane.b32.xlu0 %v1579, 18
        %v1650 = vpop.permute.xlu0 %1649
        %1651 = vrot.lane.b32.xlu0 %v1580, 18
        %v1652 = vpop.permute.xlu0 %1651
        %1653 = vrot.lane.b32.xlu0 %v1581, 18
        %v1654 = vpop.permute.xlu0 %1653
        %1655 = vrot.lane.b32.xlu0 %v1582, 18
        %v1656 = vpop.permute.xlu0 %1655
        %1657 = vrot.lane.b32.xlu0 %v1583, 18
        %v1658 = vpop.permute.xlu0 %1657
        %1659 = vrot.lane.b32.xlu0 %v1584, 18
        %v1660 = vpop.permute.xlu0 %1659
        %1661 = vrot.lane.b32.xlu0 %v1585, 18
        %v1662 = vpop.permute.xlu0 %1661
        %1663 = vrot.lane.b32.xlu0 %v1586, 18
        %v1664 = vpop.permute.xlu0 %1663
        %1665 = vrot.lane.b32.xlu0 %v1587, 18
        %v1666 = vpop.permute.xlu0 %1665
        %1667 = vrot.lane.b32.xlu0 %v1588, 18
        %v1668 = vpop.permute.xlu0 %1667
        %1669 = vrot.lane.b32.xlu0 %v1589, 18
        %v1670 = vpop.permute.xlu0 %1669
        %1671 = vrot.lane.b32.xlu0 %v1590, 18
        %v1672 = vpop.permute.xlu0 %1671
        %1673 = vrot.lane.b32.xlu0 %v1591, 18
        %v1674 = vpop.permute.xlu0 %1673
        %1675 = vrot.lane.b32.xlu0 %v1592, 18
        %v1676 = vpop.permute.xlu0 %1675
        %1677 = vrot.lane.b32.xlu0 %v1593, 18
        %v1678 = vpop.permute.xlu0 %1677
        %1679 = vrot.lane.b32.xlu0 %v1594, 18
        %v1680 = vpop.permute.xlu0 %1679
        %1681 = vrot.lane.b32.xlu0 %v1595, 18
        %v1682 = vpop.permute.xlu0 %1681
        %1683 = vrot.lane.b32.xlu0 %v1596, 18
        %v1684 = vpop.permute.xlu0 %1683
        %1685 = vrot.lane.b32.xlu0 %v1597, 18
        %v1686 = vpop.permute.xlu0 %1685
        %1687 = vrot.lane.b32.xlu0 %v1598, 18
        %v1688 = vpop.permute.xlu0 %1687
        %1689 = vrot.lane.b32.xlu0 %v1599, 18
        %v1690 = vpop.permute.xlu0 %1689
        %1691 = vrot.lane.b32.xlu0 %v1600, 18
        %v1692 = vpop.permute.xlu0 %1691
        %1693 = vrot.lane.b32.xlu0 %v1601, 18
        %v1694 = vpop.permute.xlu0 %1693
        %1695 = vrot.lane.b32.xlu0 %v1602, 18
        %v1696 = vpop.permute.xlu0 %1695
        %1697 = vrot.lane.b32.xlu0 %v1603, 18
        %v1698 = vpop.permute.xlu0 %1697
        %1699 = vrot.lane.b32.xlu0 %v1604, 18
        %v1700 = vpop.permute.xlu0 %1699
        %vm1733 = vcmask 171152
        %1734 = vst.msk [vmem:[#allocation3] sm:$0xff] %vm1733, %v1638
        %1735 = vst.msk [vmem:[#allocation3 + $0x8] sm:$0xff] %vm1733, %v1640
        %1736 = vst.msk [vmem:[#allocation3 + $0x10] sm:$0xff] %vm1733, %v1642
        %1737 = vst.msk [vmem:[#allocation3 + $0x18] sm:$0xff] %vm1733, %v1644
        %1738 = vst.msk [vmem:[#allocation3 + $0x20] sm:$0xff] %vm1733, %v1646
        %1739 = vst.msk [vmem:[#allocation3 + $0x28] sm:$0xff] %vm1733, %v1648
        %1740 = vst.msk [vmem:[#allocation3 + $0x30] sm:$0xff] %vm1733, %v1650
        %1741 = vst.msk [vmem:[#allocation3 + $0x38] sm:$0xff] %vm1733, %v1652
        %1742 = vst.msk [vmem:[#allocation3 + $0x40] sm:$0xff] %vm1733, %v1654
        %1743 = vst.msk [vmem:[#allocation3 + $0x48] sm:$0xff] %vm1733, %v1656
        %1744 = vst.msk [vmem:[#allocation3 + $0x50] sm:$0xff] %vm1733, %v1658
        %1745 = vst.msk [vmem:[#allocation3 + $0x58] sm:$0xff] %vm1733, %v1660
        %1746 = vst.msk [vmem:[#allocation3 + $0x60] sm:$0xff] %vm1733, %v1662
        %1747 = vst.msk [vmem:[#allocation3 + $0x68] sm:$0xff] %vm1733, %v1664
        %1748 = vst.msk [vmem:[#allocation3 + $0x70] sm:$0xff] %vm1733, %v1666
        %1749 = vst.msk [vmem:[#allocation3 + $0x78] sm:$0xff] %vm1733, %v1668
        %1750 = vst.msk [vmem:[#allocation3 + $0x80] sm:$0xff] %vm1733, %v1670
        %1751 = vst.msk [vmem:[#allocation3 + $0x88] sm:$0xff] %vm1733, %v1672
        %1752 = vst.msk [vmem:[#allocation3 + $0x90] sm:$0xff] %vm1733, %v1674
        %1753 = vst.msk [vmem:[#allocation3 + $0x98] sm:$0xff] %vm1733, %v1676
        %1754 = vst.msk [vmem:[#allocation3 + $0xa0] sm:$0xff] %vm1733, %v1678
        %1755 = vst.msk [vmem:[#allocation3 + $0xa8] sm:$0xff] %vm1733, %v1680
        %1756 = vst.msk [vmem:[#allocation3 + $0xb0] sm:$0xff] %vm1733, %v1682
        %1757 = vst.msk [vmem:[#allocation3 + $0xb8] sm:$0xff] %vm1733, %v1684
        %1758 = vst.msk [vmem:[#allocation3 + $0xc0] sm:$0xff] %vm1733, %v1686
        %1759 = vst.msk [vmem:[#allocation3 + $0xc8] sm:$0xff] %vm1733, %v1688
        %1760 = vst.msk [vmem:[#allocation3 + $0xd0] sm:$0xff] %vm1733, %v1690
        %1761 = vst.msk [vmem:[#allocation3 + $0xd8] sm:$0xff] %vm1733, %v1692
        %1762 = vst.msk [vmem:[#allocation3 + $0xe0] sm:$0xff] %vm1733, %v1694
        %1763 = vst.msk [vmem:[#allocation3 + $0xe8] sm:$0xff] %vm1733, %v1696
        %1764 = vst.msk [vmem:[#allocation3 + $0xf0] sm:$0xff] %vm1733, %v1698
        %1765 = vst.msk [vmem:[#allocation3 + $0xf8] sm:$0xff] %vm1733, %v1700
        %v1766 = vld [vmem:[%s1572 + $0x1] sm:$0xff]
        %v1767 = vld [vmem:[%s1572 + $0x9] sm:$0xff]
        %v1768 = vld [vmem:[%s1572 + $0x19] sm:$0xff]
        %v1769 = vld [vmem:[%s1572 + $0x21] sm:$0xff]
        %v1770 = vld [vmem:[%s1572 + $0x31] sm:$0xff]
        %v1771 = vld [vmem:[%s1572 + $0x39] sm:$0xff]
        %v1772 = vld [vmem:[%s1572 + $0x49] sm:$0xff]
        %v1773 = vld [vmem:[%s1572 + $0x51] sm:$0xff]
        %v1774 = vld [vmem:[%s1572 + $0x61] sm:$0xff]
        %v1775 = vld [vmem:[%s1572 + $0x69] sm:$0xff]
        %v1776 = vld [vmem:[%s1572 + $0x79] sm:$0xff]
        %v1777 = vld [vmem:[%s1572 + $0x81] sm:$0xff]
        %v1778 = vld [vmem:[%s1572 + $0x91] sm:$0xff]
        %v1779 = vld [vmem:[%s1572 + $0x99] sm:$0xff]
        %v1780 = vld [vmem:[%s1572 + $0xa9] sm:$0xff]
        %v1781 = vld [vmem:[%s1572 + $0xb1] sm:$0xff]
        %v1782 = vld [vmem:[%s1572 + $0xc1] sm:$0xff]
        %v1783 = vld [vmem:[%s1572 + $0xc9] sm:$0xff]
        %v1784 = vld [vmem:[%s1572 + $0xd9] sm:$0xff]
        %v1785 = vld [vmem:[%s1572 + $0xe1] sm:$0xff]
        %v1786 = vld [vmem:[%s1572 + $0xf1] sm:$0xff]
        %v1787 = vld [vmem:[%s1572 + $0xf9] sm:$0xff]
        %v1788 = vld [vmem:[%s1572 + $0x109] sm:$0xff]
        %v1789 = vld [vmem:[%s1572 + $0x111] sm:$0xff]
        %v1790 = vld [vmem:[%s1572 + $0x121] sm:$0xff]
        %v1791 = vld [vmem:[%s1572 + $0x129] sm:$0xff]
        %v1792 = vld [vmem:[%s1572 + $0x139] sm:$0xff]
        %v1793 = vld [vmem:[%s1572 + $0x141] sm:$0xff]
        %v1794 = vld [vmem:[%s1572 + $0x151] sm:$0xff]
        %v1795 = vld [vmem:[%s1572 + $0x159] sm:$0xff]
        %v1796 = vld [vmem:[%s1572 + $0x169] sm:$0xff]
        %v1797 = vld [vmem:[%s1572 + $0x171] sm:$0xff]
        %1830 = vrot.lane.b32.xlu0 %v1766, 21
        %v1831 = vpop.permute.xlu0 %1830
        %1832 = vrot.lane.b32.xlu0 %v1767, 21
        %v1833 = vpop.permute.xlu0 %1832
        %1834 = vrot.lane.b32.xlu0 %v1768, 21
        %v1835 = vpop.permute.xlu0 %1834
        %1836 = vrot.lane.b32.xlu0 %v1769, 21
        %v1837 = vpop.permute.xlu0 %1836
        %1838 = vrot.lane.b32.xlu0 %v1770, 21
        %v1839 = vpop.permute.xlu0 %1838
        %1840 = vrot.lane.b32.xlu0 %v1771, 21
        %v1841 = vpop.permute.xlu0 %1840
        %1842 = vrot.lane.b32.xlu0 %v1772, 21
        %v1843 = vpop.permute.xlu0 %1842
        %1844 = vrot.lane.b32.xlu0 %v1773, 21
        %v1845 = vpop.permute.xlu0 %1844
        %1846 = vrot.lane.b32.xlu0 %v1774, 21
        %v1847 = vpop.permute.xlu0 %1846
        %1848 = vrot.lane.b32.xlu0 %v1775, 21
        %v1849 = vpop.permute.xlu0 %1848
        %1850 = vrot.lane.b32.xlu0 %v1776, 21
        %v1851 = vpop.permute.xlu0 %1850
        %1852 = vrot.lane.b32.xlu0 %v1777, 21
        %v1853 = vpop.permute.xlu0 %1852
        %1854 = vrot.lane.b32.xlu0 %v1778, 21
        %v1855 = vpop.permute.xlu0 %1854
        %1856 = vrot.lane.b32.xlu0 %v1779, 21
        %v1857 = vpop.permute.xlu0 %1856
        %1858 = vrot.lane.b32.xlu0 %v1780, 21
        %v1859 = vpop.permute.xlu0 %1858
        %1860 = vrot.lane.b32.xlu0 %v1781, 21
        %v1861 = vpop.permute.xlu0 %1860
        %1862 = vrot.lane.b32.xlu0 %v1782, 21
        %v1863 = vpop.permute.xlu0 %1862
        %1864 = vrot.lane.b32.xlu0 %v1783, 21
        %v1865 = vpop.permute.xlu0 %1864
        %1866 = vrot.lane.b32.xlu0 %v1784, 21
        %v1867 = vpop.permute.xlu0 %1866
        %1868 = vrot.lane.b32.xlu0 %v1785, 21
        %v1869 = vpop.permute.xlu0 %1868
        %1870 = vrot.lane.b32.xlu0 %v1786, 21
        %v1871 = vpop.permute.xlu0 %1870
        %1872 = vrot.lane.b32.xlu0 %v1787, 21
        %v1873 = vpop.permute.xlu0 %1872
        %1874 = vrot.lane.b32.xlu0 %v1788, 21
        %v1875 = vpop.permute.xlu0 %1874
        %1876 = vrot.lane.b32.xlu0 %v1789, 21
        %v1877 = vpop.permute.xlu0 %1876
        %1878 = vrot.lane.b32.xlu0 %v1790, 21
        %v1879 = vpop.permute.xlu0 %1878
        %1880 = vrot.lane.b32.xlu0 %v1791, 21
        %v1881 = vpop.permute.xlu0 %1880
        %1882 = vrot.lane.b32.xlu0 %v1792, 21
        %v1883 = vpop.permute.xlu0 %1882
        %1884 = vrot.lane.b32.xlu0 %v1793, 21
        %v1885 = vpop.permute.xlu0 %1884
        %1886 = vrot.lane.b32.xlu0 %v1794, 21
        %v1887 = vpop.permute.xlu0 %1886
        %1888 = vrot.lane.b32.xlu0 %v1795, 21
        %v1889 = vpop.permute.xlu0 %1888
        %1890 = vrot.lane.b32.xlu0 %v1796, 21
        %v1891 = vpop.permute.xlu0 %1890
        %1892 = vrot.lane.b32.xlu0 %v1797, 21
        %v1893 = vpop.permute.xlu0 %1892
        %vm1926 = vcmask 195752
        %1927 = vst.msk [vmem:[#allocation3] sm:$0xff] %vm1926, %v1831
        %1928 = vst.msk [vmem:[#allocation3 + $0x8] sm:$0xff] %vm1926, %v1833
        %1929 = vst.msk [vmem:[#allocation3 + $0x10] sm:$0xff] %vm1926, %v1835
        %1930 = vst.msk [vmem:[#allocation3 + $0x18] sm:$0xff] %vm1926, %v1837
        %1931 = vst.msk [vmem:[#allocation3 + $0x20] sm:$0xff] %vm1926, %v1839
        %1932 = vst.msk [vmem:[#allocation3 + $0x28] sm:$0xff] %vm1926, %v1841
        %1933 = vst.msk [vmem:[#allocation3 + $0x30] sm:$0xff] %vm1926, %v1843
        %1934 = vst.msk [vmem:[#allocation3 + $0x38] sm:$0xff] %vm1926, %v1845
        %1935 = vst.msk [vmem:[#allocation3 + $0x40] sm:$0xff] %vm1926, %v1847
        %1936 = vst.msk [vmem:[#allocation3 + $0x48] sm:$0xff] %vm1926, %v1849
        %1937 = vst.msk [vmem:[#allocation3 + $0x50] sm:$0xff] %vm1926, %v1851
        %1938 = vst.msk [vmem:[#allocation3 + $0x58] sm:$0xff] %vm1926, %v1853
        %1939 = vst.msk [vmem:[#allocation3 + $0x60] sm:$0xff] %vm1926, %v1855
        %1940 = vst.msk [vmem:[#allocation3 + $0x68] sm:$0xff] %vm1926, %v1857
        %1941 = vst.msk [vmem:[#allocation3 + $0x70] sm:$0xff] %vm1926, %v1859
        %1942 = vst.msk [vmem:[#allocation3 + $0x78] sm:$0xff] %vm1926, %v1861
        %1943 = vst.msk [vmem:[#allocation3 + $0x80] sm:$0xff] %vm1926, %v1863
        %1944 = vst.msk [vmem:[#allocation3 + $0x88] sm:$0xff] %vm1926, %v1865
        %1945 = vst.msk [vmem:[#allocation3 + $0x90] sm:$0xff] %vm1926, %v1867
        %1946 = vst.msk [vmem:[#allocation3 + $0x98] sm:$0xff] %vm1926, %v1869
        %1947 = vst.msk [vmem:[#allocation3 + $0xa0] sm:$0xff] %vm1926, %v1871
        %1948 = vst.msk [vmem:[#allocation3 + $0xa8] sm:$0xff] %vm1926, %v1873
        %1949 = vst.msk [vmem:[#allocation3 + $0xb0] sm:$0xff] %vm1926, %v1875
        %1950 = vst.msk [vmem:[#allocation3 + $0xb8] sm:$0xff] %vm1926, %v1877
        %1951 = vst.msk [vmem:[#allocation3 + $0xc0] sm:$0xff] %vm1926, %v1879
        %1952 = vst.msk [vmem:[#allocation3 + $0xc8] sm:$0xff] %vm1926, %v1881
        %1953 = vst.msk [vmem:[#allocation3 + $0xd0] sm:$0xff] %vm1926, %v1883
        %1954 = vst.msk [vmem:[#allocation3 + $0xd8] sm:$0xff] %vm1926, %v1885
        %1955 = vst.msk [vmem:[#allocation3 + $0xe0] sm:$0xff] %vm1926, %v1887
        %1956 = vst.msk [vmem:[#allocation3 + $0xe8] sm:$0xff] %vm1926, %v1889
        %1957 = vst.msk [vmem:[#allocation3 + $0xf0] sm:$0xff] %vm1926, %v1891
        %1958 = vst.msk [vmem:[#allocation3 + $0xf8] sm:$0xff] %vm1926, %v1893
        %v1959 = vld [vmem:[%s1572 + $0x2] sm:$0xff]
        %v1960 = vld [vmem:[%s1572 + $0xa] sm:$0xff]
        %v1961 = vld [vmem:[%s1572 + $0x1a] sm:$0xff]
        %v1962 = vld [vmem:[%s1572 + $0x22] sm:$0xff]
        %v1963 = vld [vmem:[%s1572 + $0x32] sm:$0xff]
        %v1964 = vld [vmem:[%s1572 + $0x3a] sm:$0xff]
        %v1965 = vld [vmem:[%s1572 + $0x4a] sm:$0xff]
        %v1966 = vld [vmem:[%s1572 + $0x52] sm:$0xff]
        %v1967 = vld [vmem:[%s1572 + $0x62] sm:$0xff]
        %v1968 = vld [vmem:[%s1572 + $0x6a] sm:$0xff]
        %v1969 = vld [vmem:[%s1572 + $0x7a] sm:$0xff]
        %v1970 = vld [vmem:[%s1572 + $0x82] sm:$0xff]
        %v1971 = vld [vmem:[%s1572 + $0x92] sm:$0xff]
        %v1972 = vld [vmem:[%s1572 + $0x9a] sm:$0xff]
        %v1973 = vld [vmem:[%s1572 + $0xaa] sm:$0xff]
        %v1974 = vld [vmem:[%s1572 + $0xb2] sm:$0xff]
        %v1975 = vld [vmem:[%s1572 + $0xc2] sm:$0xff]
        %v1976 = vld [vmem:[%s1572 + $0xca] sm:$0xff]
        %v1977 = vld [vmem:[%s1572 + $0xda] sm:$0xff]
        %v1978 = vld [vmem:[%s1572 + $0xe2] sm:$0xff]
        %v1979 = vld [vmem:[%s1572 + $0xf2] sm:$0xff]
        %v1980 = vld [vmem:[%s1572 + $0xfa] sm:$0xff]
        %v1981 = vld [vmem:[%s1572 + $0x10a] sm:$0xff]
        %v1982 = vld [vmem:[%s1572 + $0x112] sm:$0xff]
        %v1983 = vld [vmem:[%s1572 + $0x122] sm:$0xff]
        %v1984 = vld [vmem:[%s1572 + $0x12a] sm:$0xff]
        %v1985 = vld [vmem:[%s1572 + $0x13a] sm:$0xff]
        %v1986 = vld [vmem:[%s1572 + $0x142] sm:$0xff]
        %v1987 = vld [vmem:[%s1572 + $0x152] sm:$0xff]
        %v1988 = vld [vmem:[%s1572 + $0x15a] sm:$0xff]
        %v1989 = vld [vmem:[%s1572 + $0x16a] sm:$0xff]
        %v1990 = vld [vmem:[%s1572 + $0x172] sm:$0xff]
        %2023 = vrot.lane.b32.xlu0 %v1959, 24
        %v2024 = vpop.permute.xlu0 %2023
        %2025 = vrot.lane.b32.xlu0 %v1960, 24
        %v2026 = vpop.permute.xlu0 %2025
        %2027 = vrot.lane.b32.xlu0 %v1961, 24
        %v2028 = vpop.permute.xlu0 %2027
        %2029 = vrot.lane.b32.xlu0 %v1962, 24
        %v2030 = vpop.permute.xlu0 %2029
        %2031 = vrot.lane.b32.xlu0 %v1963, 24
        %v2032 = vpop.permute.xlu0 %2031
        %2033 = vrot.lane.b32.xlu0 %v1964, 24
        %v2034 = vpop.permute.xlu0 %2033
        %2035 = vrot.lane.b32.xlu0 %v1965, 24
        %v2036 = vpop.permute.xlu0 %2035
        %2037 = vrot.lane.b32.xlu0 %v1966, 24
        %v2038 = vpop.permute.xlu0 %2037
        %2039 = vrot.lane.b32.xlu0 %v1967, 24
        %v2040 = vpop.permute.xlu0 %2039
        %2041 = vrot.lane.b32.xlu0 %v1968, 24
        %v2042 = vpop.permute.xlu0 %2041
        %2043 = vrot.lane.b32.xlu0 %v1969, 24
        %v2044 = vpop.permute.xlu0 %2043
        %2045 = vrot.lane.b32.xlu0 %v1970, 24
        %v2046 = vpop.permute.xlu0 %2045
        %2047 = vrot.lane.b32.xlu0 %v1971, 24
        %v2048 = vpop.permute.xlu0 %2047
        %2049 = vrot.lane.b32.xlu0 %v1972, 24
        %v2050 = vpop.permute.xlu0 %2049
        %2051 = vrot.lane.b32.xlu0 %v1973, 24
        %v2052 = vpop.permute.xlu0 %2051
        %2053 = vrot.lane.b32.xlu0 %v1974, 24
        %v2054 = vpop.permute.xlu0 %2053
        %2055 = vrot.lane.b32.xlu0 %v1975, 24
        %v2056 = vpop.permute.xlu0 %2055
        %2057 = vrot.lane.b32.xlu0 %v1976, 24
        %v2058 = vpop.permute.xlu0 %2057
        %2059 = vrot.lane.b32.xlu0 %v1977, 24
        %v2060 = vpop.permute.xlu0 %2059
        %2061 = vrot.lane.b32.xlu0 %v1978, 24
        %v2062 = vpop.permute.xlu0 %2061
        %2063 = vrot.lane.b32.xlu0 %v1979, 24
        %v2064 = vpop.permute.xlu0 %2063
        %2065 = vrot.lane.b32.xlu0 %v1980, 24
        %v2066 = vpop.permute.xlu0 %2065
        %2067 = vrot.lane.b32.xlu0 %v1981, 24
        %v2068 = vpop.permute.xlu0 %2067
        %2069 = vrot.lane.b32.xlu0 %v1982, 24
        %v2070 = vpop.permute.xlu0 %2069
        %2071 = vrot.lane.b32.xlu0 %v1983, 24
        %v2072 = vpop.permute.xlu0 %2071
        %2073 = vrot.lane.b32.xlu0 %v1984, 24
        %v2074 = vpop.permute.xlu0 %2073
        %2075 = vrot.lane.b32.xlu0 %v1985, 24
        %v2076 = vpop.permute.xlu0 %2075
        %2077 = vrot.lane.b32.xlu0 %v1986, 24
        %v2078 = vpop.permute.xlu0 %2077
        %2079 = vrot.lane.b32.xlu0 %v1987, 24
        %v2080 = vpop.permute.xlu0 %2079
        %2081 = vrot.lane.b32.xlu0 %v1988, 24
        %v2082 = vpop.permute.xlu0 %2081
        %2083 = vrot.lane.b32.xlu0 %v1989, 24
        %v2084 = vpop.permute.xlu0 %2083
        %2085 = vrot.lane.b32.xlu0 %v1990, 24
        %v2086 = vpop.permute.xlu0 %2085
        %vm2119 = vcmask 220352
        %2120 = vst.msk [vmem:[#allocation3] sm:$0xff] %vm2119, %v2024
        %2121 = vst.msk [vmem:[#allocation3 + $0x8] sm:$0xff] %vm2119, %v2026
        %2122 = vst.msk [vmem:[#allocation3 + $0x10] sm:$0xff] %vm2119, %v2028
        %2123 = vst.msk [vmem:[#allocation3 + $0x18] sm:$0xff] %vm2119, %v2030
        %2124 = vst.msk [vmem:[#allocation3 + $0x20] sm:$0xff] %vm2119, %v2032
        %2125 = vst.msk [vmem:[#allocation3 + $0x28] sm:$0xff] %vm2119, %v2034
        %2126 = vst.msk [vmem:[#allocation3 + $0x30] sm:$0xff] %vm2119, %v2036
        %2127 = vst.msk [vmem:[#allocation3 + $0x38] sm:$0xff] %vm2119, %v2038
        %2128 = vst.msk [vmem:[#allocation3 + $0x40] sm:$0xff] %vm2119, %v2040
        %2129 = vst.msk [vmem:[#allocation3 + $0x48] sm:$0xff] %vm2119, %v2042
        %2130 = vst.msk [vmem:[#allocation3 + $0x50] sm:$0xff] %vm2119, %v2044
        %2131 = vst.msk [vmem:[#allocation3 + $0x58] sm:$0xff] %vm2119, %v2046
        %2132 = vst.msk [vmem:[#allocation3 + $0x60] sm:$0xff] %vm2119, %v2048
        %2133 = vst.msk [vmem:[#allocation3 + $0x68] sm:$0xff] %vm2119, %v2050
        %2134 = vst.msk [vmem:[#allocation3 + $0x70] sm:$0xff] %vm2119, %v2052
        %2135 = vst.msk [vmem:[#allocation3 + $0x78] sm:$0xff] %vm2119, %v2054
        %2136 = vst.msk [vmem:[#allocation3 + $0x80] sm:$0xff] %vm2119, %v2056
        %2137 = vst.msk [vmem:[#allocation3 + $0x88] sm:$0xff] %vm2119, %v2058
        %2138 = vst.msk [vmem:[#allocation3 + $0x90] sm:$0xff] %vm2119, %v2060
        %2139 = vst.msk [vmem:[#allocation3 + $0x98] sm:$0xff] %vm2119, %v2062
        %2140 = vst.msk [vmem:[#allocation3 + $0xa0] sm:$0xff] %vm2119, %v2064
        %2141 = vst.msk [vmem:[#allocation3 + $0xa8] sm:$0xff] %vm2119, %v2066
        %2142 = vst.msk [vmem:[#allocation3 + $0xb0] sm:$0xff] %vm2119, %v2068
        %2143 = vst.msk [vmem:[#allocation3 + $0xb8] sm:$0xff] %vm2119, %v2070
        %2144 = vst.msk [vmem:[#allocation3 + $0xc0] sm:$0xff] %vm2119, %v2072
        %2145 = vst.msk [vmem:[#allocation3 + $0xc8] sm:$0xff] %vm2119, %v2074
        %2146 = vst.msk [vmem:[#allocation3 + $0xd0] sm:$0xff] %vm2119, %v2076
        %2147 = vst.msk [vmem:[#allocation3 + $0xd8] sm:$0xff] %vm2119, %v2078
        %2148 = vst.msk [vmem:[#allocation3 + $0xe0] sm:$0xff] %vm2119, %v2080
        %2149 = vst.msk [vmem:[#allocation3 + $0xe8] sm:$0xff] %vm2119, %v2082
        %2150 = vst.msk [vmem:[#allocation3 + $0xf0] sm:$0xff] %vm2119, %v2084
        %2151 = vst.msk [vmem:[#allocation3 + $0xf8] sm:$0xff] %vm2119, %v2086
        %v2152 = vld [vmem:[#allocation3] sm:$0xff]
        %v2153 = vld [vmem:[#allocation3 + $0x8] sm:$0xff]
        %v2154 = vld [vmem:[#allocation3 + $0x10] sm:$0xff]
        %v2155 = vld [vmem:[#allocation3 + $0x18] sm:$0xff]
        %v2156 = vld [vmem:[#allocation3 + $0x20] sm:$0xff]
        %v2157 = vld [vmem:[#allocation3 + $0x28] sm:$0xff]
        %v2158 = vld [vmem:[#allocation3 + $0x30] sm:$0xff]
        %v2159 = vld [vmem:[#allocation3 + $0x38] sm:$0xff]
        %v2160 = vld [vmem:[#allocation3 + $0x40] sm:$0xff]
        %v2161 = vld [vmem:[#allocation3 + $0x48] sm:$0xff]
        %v2162 = vld [vmem:[#allocation3 + $0x50] sm:$0xff]
        %v2163 = vld [vmem:[#allocation3 + $0x58] sm:$0xff]
        %v2164 = vld [vmem:[#allocation3 + $0x60] sm:$0xff]
        %v2165 = vld [vmem:[#allocation3 + $0x68] sm:$0xff]
        %v2166 = vld [vmem:[#allocation3 + $0x70] sm:$0xff]
        %v2167 = vld [vmem:[#allocation3 + $0x78] sm:$0xff]
        %v2168 = vld [vmem:[#allocation3 + $0x80] sm:$0xff]
        %v2169 = vld [vmem:[#allocation3 + $0x88] sm:$0xff]
        %v2170 = vld [vmem:[#allocation3 + $0x90] sm:$0xff]
        %v2171 = vld [vmem:[#allocation3 + $0x98] sm:$0xff]
        %v2172 = vld [vmem:[#allocation3 + $0xa0] sm:$0xff]
        %v2173 = vld [vmem:[#allocation3 + $0xa8] sm:$0xff]
        %v2174 = vld [vmem:[#allocation3 + $0xb0] sm:$0xff]
        %v2175 = vld [vmem:[#allocation3 + $0xb8] sm:$0xff]
        %v2176 = vld [vmem:[#allocation3 + $0xc0] sm:$0xff]
        %v2177 = vld [vmem:[#allocation3 + $0xc8] sm:$0xff]
        %v2178 = vld [vmem:[#allocation3 + $0xd0] sm:$0xff]
        %v2179 = vld [vmem:[#allocation3 + $0xd8] sm:$0xff]
        %v2180 = vld [vmem:[#allocation3 + $0xe0] sm:$0xff]
        %v2181 = vld [vmem:[#allocation3 + $0xe8] sm:$0xff]
        %v2182 = vld [vmem:[#allocation3 + $0xf0] sm:$0xff]
        %v2183 = vld [vmem:[#allocation3 + $0xf8] sm:$0xff]
        %v2184 = vld [vmem:[#allocation7] sm:$0xff]
        %v2185 = vld [vmem:[#allocation7 + $0x8] sm:$0xff]
        %v2186 = vld [vmem:[#allocation7 + $0x10] sm:$0xff]
        %v2187 = vld [vmem:[#allocation7 + $0x18] sm:$0x7]
        %vm2188 = vcmask 220160
        %v2190 = vsel %vm2188, %v2152, 0
        %v2193 = vsel %vm2188, %v2153, 0
        %v2196 = vsel %vm2188, %v2154, 0
        %v2199 = vsel %vm2188, %v2155, 0
        %v2202 = vsel %vm2188, %v2156, 0
        %v2205 = vsel %vm2188, %v2157, 0
        %v2208 = vsel %vm2188, %v2158, 0
        %v2211 = vsel %vm2188, %v2159, 0
        %v2214 = vsel %vm2188, %v2160, 0
        %v2217 = vsel %vm2188, %v2161, 0
        %v2220 = vsel %vm2188, %v2162, 0
        %v2223 = vsel %vm2188, %v2163, 0
        %v2226 = vsel %vm2188, %v2164, 0
        %v2229 = vsel %vm2188, %v2165, 0
        %v2232 = vsel %vm2188, %v2166, 0
        %v2235 = vsel %vm2188, %v2167, 0
        %v2238 = vsel %vm2188, %v2168, 0
        %v2241 = vsel %vm2188, %v2169, 0
        %v2244 = vsel %vm2188, %v2170, 0
        %v2247 = vsel %vm2188, %v2171, 0
        %v2250 = vsel %vm2188, %v2172, 0
        %v2253 = vsel %vm2188, %v2173, 0
        %v2256 = vsel %vm2188, %v2174, 0
        %v2259 = vsel %vm2188, %v2175, 0
        %v2262 = vsel %vm2188, %v2176, 0
        %v2265 = vsel %vm2188, %v2177, 0
        %v2268 = vsel %vm2188, %v2178, 0
        %v2271 = vsel %vm2188, %v2179, 0
        %v2274 = vsel %vm2188, %v2180, 0
        %v2277 = vsel %vm2188, %v2181, 0
        %v2280 = vsel %vm2188, %v2182, 0
        %v2283 = vsel %vm2188, %v2183, 0
        %vm2285 = vcmask 1042432
        %v2287 = vsel %vm2285, %v2187, 0
        %2289 = vmatpush.msra.mxu0 0.0
        %2290 = vmatpush.msra.mxu0 0.0
        %2291 = vmatpush.msra.mxu0 0.0
        %2292 = vmatpush.msra.mxu0 0.0
        %2293 = vmatpush.msra.mxu0 0.0
        %2294 = vmatpush.msra.mxu0 0.0
        %2295 = vmatpush.msra.mxu0 0.0
        %2296 = vmatpush.msra.mxu0 0.0
        %2297 = vmatpush.msra.mxu0 0.0
        %2298 = vmatpush.msra.mxu0 0.0
        %2299 = vmatpush.msra.mxu0 0.0
        %2300 = vmatpush.msra.mxu0 0.0
        %2301 = vmatpush.msra.mxu0 %v2287
        %2302 = vmatpush.msra.mxu0 %v2186
        %2303 = vmatpush.msra.mxu0 %v2185
        %2304 = vmatpush.msra.mxu0 %v2184
        %2305 = vmatmul.f32.gmra.mxu0 %v2190
        %v2306 = vpop.f32.mrf.mxu0
        %v2307 = vadd.f32 0.0, %v2306
        %2308 = vmatmul.f32.gmra.mxu0 %v2193
        %v2309 = vpop.f32.mrf.mxu0
        %v2310 = vadd.f32 0.0, %v2309
        %2311 = vmatmul.f32.gmra.mxu0 %v2196
        %v2312 = vpop.f32.mrf.mxu0
        %v2313 = vadd.f32 0.0, %v2312
        %2314 = vmatmul.f32.gmra.mxu0 %v2199
        %v2315 = vpop.f32.mrf.mxu0
        %v2316 = vadd.f32 0.0, %v2315
        %2317 = vmatmul.f32.gmra.mxu0 %v2202
        %v2318 = vpop.f32.mrf.mxu0
        %v2319 = vadd.f32 0.0, %v2318
        %2320 = vmatmul.f32.gmra.mxu0 %v2205
        %v2321 = vpop.f32.mrf.mxu0
        %v2322 = vadd.f32 0.0, %v2321
        %2323 = vmatmul.f32.gmra.mxu0 %v2208
        %v2324 = vpop.f32.mrf.mxu0
        %v2325 = vadd.f32 0.0, %v2324
        %2326 = vmatmul.f32.gmra.mxu0 %v2211
        %v2327 = vpop.f32.mrf.mxu0
        %v2328 = vadd.f32 0.0, %v2327
        %2329 = vmatmul.f32.gmra.mxu0 %v2214
        %v2330 = vpop.f32.mrf.mxu0
        %v2331 = vadd.f32 0.0, %v2330
        %2332 = vmatmul.f32.gmra.mxu0 %v2217
        %v2333 = vpop.f32.mrf.mxu0
        %v2334 = vadd.f32 0.0, %v2333
        %2335 = vmatmul.f32.gmra.mxu0 %v2220
        %v2336 = vpop.f32.mrf.mxu0
        %v2337 = vadd.f32 0.0, %v2336
        %2338 = vmatmul.f32.gmra.mxu0 %v2223
        %v2339 = vpop.f32.mrf.mxu0
        %v2340 = vadd.f32 0.0, %v2339
        %2341 = vmatmul.f32.gmra.mxu0 %v2226
        %v2342 = vpop.f32.mrf.mxu0
        %v2343 = vadd.f32 0.0, %v2342
        %2344 = vmatmul.f32.gmra.mxu0 %v2229
        %v2345 = vpop.f32.mrf.mxu0
        %v2346 = vadd.f32 0.0, %v2345
        %2347 = vmatmul.f32.gmra.mxu0 %v2232
        %v2348 = vpop.f32.mrf.mxu0
        %v2349 = vadd.f32 0.0, %v2348
        %2350 = vmatmul.f32.gmra.mxu0 %v2235
        %v2351 = vpop.f32.mrf.mxu0
        %v2352 = vadd.f32 0.0, %v2351
        %2353 = vmatmul.f32.gmra.mxu0 %v2238
        %v2354 = vpop.f32.mrf.mxu0
        %v2355 = vadd.f32 0.0, %v2354
        %2356 = vmatmul.f32.gmra.mxu0 %v2241
        %v2357 = vpop.f32.mrf.mxu0
        %v2358 = vadd.f32 0.0, %v2357
        %2359 = vmatmul.f32.gmra.mxu0 %v2244
        %v2360 = vpop.f32.mrf.mxu0
        %v2361 = vadd.f32 0.0, %v2360
        %2362 = vmatmul.f32.gmra.mxu0 %v2247
        %v2363 = vpop.f32.mrf.mxu0
        %v2364 = vadd.f32 0.0, %v2363
        %2365 = vmatmul.f32.gmra.mxu0 %v2250
        %v2366 = vpop.f32.mrf.mxu0
        %v2367 = vadd.f32 0.0, %v2366
        %2368 = vmatmul.f32.gmra.mxu0 %v2253
        %v2369 = vpop.f32.mrf.mxu0
        %v2370 = vadd.f32 0.0, %v2369
        %2371 = vmatmul.f32.gmra.mxu0 %v2256
        %v2372 = vpop.f32.mrf.mxu0
        %v2373 = vadd.f32 0.0, %v2372
        %2374 = vmatmul.f32.gmra.mxu0 %v2259
        %v2375 = vpop.f32.mrf.mxu0
        %v2376 = vadd.f32 0.0, %v2375
        %2377 = vmatmul.f32.gmra.mxu0 %v2262
        %v2378 = vpop.f32.mrf.mxu0
        %v2379 = vadd.f32 0.0, %v2378
        %2380 = vmatmul.f32.gmra.mxu0 %v2265
        %v2381 = vpop.f32.mrf.mxu0
        %v2382 = vadd.f32 0.0, %v2381
        %2383 = vmatmul.f32.gmra.mxu0 %v2268
        %v2384 = vpop.f32.mrf.mxu0
        %v2385 = vadd.f32 0.0, %v2384
        %2386 = vmatmul.f32.gmra.mxu0 %v2271
        %v2387 = vpop.f32.mrf.mxu0
        %v2388 = vadd.f32 0.0, %v2387
        %2389 = vmatmul.f32.gmra.mxu0 %v2274
        %v2390 = vpop.f32.mrf.mxu0
        %v2391 = vadd.f32 0.0, %v2390
        %2392 = vmatmul.f32.gmra.mxu0 %v2277
        %v2393 = vpop.f32.mrf.mxu0
        %v2394 = vadd.f32 0.0, %v2393
        %2395 = vmatmul.f32.gmra.mxu0 %v2280
        %v2396 = vpop.f32.mrf.mxu0
        %v2397 = vadd.f32 0.0, %v2396
        %2398 = vmatmul.f32.gmra.mxu0 %v2283
        %v2399 = vpop.f32.mrf.mxu0
        %v2400 = vadd.f32 0.0, %v2399
        %2401 = vdwg.mxu0
        %v2434 = vrot.slane %v2307, 2
        %v2435 = vrot.slane %v2307, 4
        %v2436 = vrot.slane %v2307, 6
        %v2437 = vrot.slane %v2310, 2
        %v2438 = vrot.slane %v2310, 4
        %v2439 = vrot.slane %v2310, 6
        %v2440 = vrot.slane %v2313, 2
        %v2441 = vrot.slane %v2313, 4
        %v2442 = vrot.slane %v2313, 6
        %v2443 = vrot.slane %v2316, 2
        %v2444 = vrot.slane %v2316, 4
        %v2445 = vrot.slane %v2316, 6
        %v2446 = vrot.slane %v2319, 2
        %v2447 = vrot.slane %v2319, 4
        %v2448 = vrot.slane %v2319, 6
        %v2449 = vrot.slane %v2322, 2
        %v2450 = vrot.slane %v2322, 4
        %v2451 = vrot.slane %v2322, 6
        %v2452 = vrot.slane %v2325, 2
        %v2453 = vrot.slane %v2325, 4
        %v2454 = vrot.slane %v2325, 6
        %v2455 = vrot.slane %v2328, 2
        %v2456 = vrot.slane %v2328, 4
        %v2457 = vrot.slane %v2328, 6
        %v2458 = vrot.slane %v2331, 2
        %v2459 = vrot.slane %v2331, 4
        %v2460 = vrot.slane %v2331, 6
        %v2461 = vrot.slane %v2334, 2
        %v2462 = vrot.slane %v2334, 4
        %v2463 = vrot.slane %v2334, 6
        %v2464 = vrot.slane %v2337, 2
        %v2465 = vrot.slane %v2337, 4
        %v2466 = vrot.slane %v2337, 6
        %v2467 = vrot.slane %v2340, 2
        %v2468 = vrot.slane %v2340, 4
        %v2469 = vrot.slane %v2340, 6
        %v2470 = vrot.slane %v2343, 2
        %v2471 = vrot.slane %v2343, 4
        %v2472 = vrot.slane %v2343, 6
        %v2473 = vrot.slane %v2346, 2
        %v2474 = vrot.slane %v2346, 4
        %v2475 = vrot.slane %v2346, 6
        %v2476 = vrot.slane %v2349, 2
        %v2477 = vrot.slane %v2349, 4
        %v2478 = vrot.slane %v2349, 6
        %v2479 = vrot.slane %v2352, 2
        %v2480 = vrot.slane %v2352, 4
        %v2481 = vrot.slane %v2352, 6
        %v2482 = vrot.slane %v2355, 2
        %v2483 = vrot.slane %v2355, 4
        %v2484 = vrot.slane %v2355, 6
        %v2485 = vrot.slane %v2358, 2
        %v2486 = vrot.slane %v2358, 4
        %v2487 = vrot.slane %v2358, 6
        %v2488 = vrot.slane %v2361, 2
        %v2489 = vrot.slane %v2361, 4
        %v2490 = vrot.slane %v2361, 6
        %v2491 = vrot.slane %v2364, 2
        %v2492 = vrot.slane %v2364, 4
        %v2493 = vrot.slane %v2364, 6
        %v2494 = vrot.slane %v2367, 2
        %v2495 = vrot.slane %v2367, 4
        %v2496 = vrot.slane %v2367, 6
        %v2497 = vrot.slane %v2370, 2
        %v2498 = vrot.slane %v2370, 4
        %v2499 = vrot.slane %v2370, 6
        %v2500 = vrot.slane %v2373, 2
        %v2501 = vrot.slane %v2373, 4
        %v2502 = vrot.slane %v2373, 6
        %v2503 = vrot.slane %v2376, 2
        %v2504 = vrot.slane %v2376, 4
        %v2505 = vrot.slane %v2376, 6
        %v2506 = vrot.slane %v2379, 2
        %v2507 = vrot.slane %v2379, 4
        %v2508 = vrot.slane %v2379, 6
        %v2509 = vrot.slane %v2382, 2
        %v2510 = vrot.slane %v2382, 4
        %v2511 = vrot.slane %v2382, 6
        %v2512 = vrot.slane %v2385, 2
        %v2513 = vrot.slane %v2385, 4
        %v2514 = vrot.slane %v2385, 6
        %v2515 = vrot.slane %v2388, 2
        %v2516 = vrot.slane %v2388, 4
        %v2517 = vrot.slane %v2388, 6
        %v2518 = vrot.slane %v2391, 2
        %v2519 = vrot.slane %v2391, 4
        %v2520 = vrot.slane %v2391, 6
        %v2521 = vrot.slane %v2394, 2
        %v2522 = vrot.slane %v2394, 4
        %v2523 = vrot.slane %v2394, 6
        %v2524 = vrot.slane %v2397, 2
        %v2525 = vrot.slane %v2397, 4
        %v2526 = vrot.slane %v2397, 6
        %v2527 = vrot.slane %v2400, 2
        %v2528 = vrot.slane %v2400, 4
        %v2529 = vrot.slane %v2400, 6
        %vm2626 = vcmask 254976
        %v2627 = vsel %vm2626, %v2307, -inf
        %v2628 = vrot.slane %v2627, 4
        %v2629 = vmax.f32 %v2627, %v2628
        %v2630 = vrot.slane %v2629, 2
        %v2631 = vmax.f32 %v2629, %v2630
        %v2632 = vrot.slane %v2631, 1
        %v2633 = vmax.f32 %v2631, %v2632
        %v2634 = vsel %vm2626, %v2434, -inf
        %v2635 = vrot.slane %v2634, 4
        %v2636 = vmax.f32 %v2634, %v2635
        %v2637 = vrot.slane %v2636, 2
        %v2638 = vmax.f32 %v2636, %v2637
        %v2639 = vrot.slane %v2638, 1
        %v2640 = vmax.f32 %v2638, %v2639
        %v2641 = vsel %vm2626, %v2435, -inf
        %v2642 = vrot.slane %v2641, 4
        %v2643 = vmax.f32 %v2641, %v2642
        %v2644 = vrot.slane %v2643, 2
        %v2645 = vmax.f32 %v2643, %v2644
        %v2646 = vrot.slane %v2645, 1
        %v2647 = vmax.f32 %v2645, %v2646
        %v2648 = vsel %vm2626, %v2436, -inf
        %v2649 = vrot.slane %v2648, 4
        %v2650 = vmax.f32 %v2648, %v2649
        %v2651 = vrot.slane %v2650, 2
        %v2652 = vmax.f32 %v2650, %v2651
        %v2653 = vrot.slane %v2652, 1
        %v2654 = vmax.f32 %v2652, %v2653
        %v2655 = vsel %vm2626, %v2310, -inf
        %v2656 = vrot.slane %v2655, 4
        %v2657 = vmax.f32 %v2655, %v2656
        %v2658 = vrot.slane %v2657, 2
        %v2659 = vmax.f32 %v2657, %v2658
        %v2660 = vrot.slane %v2659, 1
        %v2661 = vmax.f32 %v2659, %v2660
        %v2662 = vsel %vm2626, %v2437, -inf
        %v2663 = vrot.slane %v2662, 4
        %v2664 = vmax.f32 %v2662, %v2663
        %v2665 = vrot.slane %v2664, 2
        %v2666 = vmax.f32 %v2664, %v2665
        %v2667 = vrot.slane %v2666, 1
        %v2668 = vmax.f32 %v2666, %v2667
        %v2669 = vsel %vm2626, %v2438, -inf
        %v2670 = vrot.slane %v2669, 4
        %v2671 = vmax.f32 %v2669, %v2670
        %v2672 = vrot.slane %v2671, 2
        %v2673 = vmax.f32 %v2671, %v2672
        %v2674 = vrot.slane %v2673, 1
        %v2675 = vmax.f32 %v2673, %v2674
        %v2676 = vsel %vm2626, %v2439, -inf
        %v2677 = vrot.slane %v2676, 4
        %v2678 = vmax.f32 %v2676, %v2677
        %v2679 = vrot.slane %v2678, 2
        %v2680 = vmax.f32 %v2678, %v2679
        %v2681 = vrot.slane %v2680, 1
        %v2682 = vmax.f32 %v2680, %v2681
        %v2683 = vsel %vm2626, %v2313, -inf
        %v2684 = vrot.slane %v2683, 4
        %v2685 = vmax.f32 %v2683, %v2684
        %v2686 = vrot.slane %v2685, 2
        %v2687 = vmax.f32 %v2685, %v2686
        %v2688 = vrot.slane %v2687, 1
        %v2689 = vmax.f32 %v2687, %v2688
        %v2690 = vsel %vm2626, %v2440, -inf
        %v2691 = vrot.slane %v2690, 4
        %v2692 = vmax.f32 %v2690, %v2691
        %v2693 = vrot.slane %v2692, 2
        %v2694 = vmax.f32 %v2692, %v2693
        %v2695 = vrot.slane %v2694, 1
        %v2696 = vmax.f32 %v2694, %v2695
        %v2697 = vsel %vm2626, %v2441, -inf
        %v2698 = vrot.slane %v2697, 4
        %v2699 = vmax.f32 %v2697, %v2698
        %v2700 = vrot.slane %v2699, 2
        %v2701 = vmax.f32 %v2699, %v2700
        %v2702 = vrot.slane %v2701, 1
        %v2703 = vmax.f32 %v2701, %v2702
        %v2704 = vsel %vm2626, %v2442, -inf
        %v2705 = vrot.slane %v2704, 4
        %v2706 = vmax.f32 %v2704, %v2705
        %v2707 = vrot.slane %v2706, 2
        %v2708 = vmax.f32 %v2706, %v2707
        %v2709 = vrot.slane %v2708, 1
        %v2710 = vmax.f32 %v2708, %v2709
        %v2711 = vsel %vm2626, %v2316, -inf
        %v2712 = vrot.slane %v2711, 4
        %v2713 = vmax.f32 %v2711, %v2712
        %v2714 = vrot.slane %v2713, 2
        %v2715 = vmax.f32 %v2713, %v2714
        %v2716 = vrot.slane %v2715, 1
        %v2717 = vmax.f32 %v2715, %v2716
        %v2718 = vsel %vm2626, %v2443, -inf
        %v2719 = vrot.slane %v2718, 4
        %v2720 = vmax.f32 %v2718, %v2719
        %v2721 = vrot.slane %v2720, 2
        %v2722 = vmax.f32 %v2720, %v2721
        %v2723 = vrot.slane %v2722, 1
        %v2724 = vmax.f32 %v2722, %v2723
        %v2725 = vsel %vm2626, %v2444, -inf
        %v2726 = vrot.slane %v2725, 4
        %v2727 = vmax.f32 %v2725, %v2726
        %v2728 = vrot.slane %v2727, 2
        %v2729 = vmax.f32 %v2727, %v2728
        %v2730 = vrot.slane %v2729, 1
        %v2731 = vmax.f32 %v2729, %v2730
        %v2732 = vsel %vm2626, %v2445, -inf
        %v2733 = vrot.slane %v2732, 4
        %v2734 = vmax.f32 %v2732, %v2733
        %v2735 = vrot.slane %v2734, 2
        %v2736 = vmax.f32 %v2734, %v2735
        %v2737 = vrot.slane %v2736, 1
        %v2738 = vmax.f32 %v2736, %v2737
        %v2739 = vsel %vm2626, %v2319, -inf
        %v2740 = vrot.slane %v2739, 4
        %v2741 = vmax.f32 %v2739, %v2740
        %v2742 = vrot.slane %v2741, 2
        %v2743 = vmax.f32 %v2741, %v2742
        %v2744 = vrot.slane %v2743, 1
        %v2745 = vmax.f32 %v2743, %v2744
        %v2746 = vsel %vm2626, %v2446, -inf
        %v2747 = vrot.slane %v2746, 4
        %v2748 = vmax.f32 %v2746, %v2747
        %v2749 = vrot.slane %v2748, 2
        %v2750 = vmax.f32 %v2748, %v2749
        %v2751 = vrot.slane %v2750, 1
        %v2752 = vmax.f32 %v2750, %v2751
        %v2753 = vsel %vm2626, %v2447, -inf
        %v2754 = vrot.slane %v2753, 4
        %v2755 = vmax.f32 %v2753, %v2754
        %v2756 = vrot.slane %v2755, 2
        %v2757 = vmax.f32 %v2755, %v2756
        %v2758 = vrot.slane %v2757, 1
        %v2759 = vmax.f32 %v2757, %v2758
        %v2760 = vsel %vm2626, %v2448, -inf
        %v2761 = vrot.slane %v2760, 4
        %v2762 = vmax.f32 %v2760, %v2761
        %v2763 = vrot.slane %v2762, 2
        %v2764 = vmax.f32 %v2762, %v2763
        %v2765 = vrot.slane %v2764, 1
        %v2766 = vmax.f32 %v2764, %v2765
        %v2767 = vsel %vm2626, %v2322, -inf
        %v2768 = vrot.slane %v2767, 4
        %v2769 = vmax.f32 %v2767, %v2768
        %v2770 = vrot.slane %v2769, 2
        %v2771 = vmax.f32 %v2769, %v2770
        %v2772 = vrot.slane %v2771, 1
        %v2773 = vmax.f32 %v2771, %v2772
        %v2774 = vsel %vm2626, %v2449, -inf
        %v2775 = vrot.slane %v2774, 4
        %v2776 = vmax.f32 %v2774, %v2775
        %v2777 = vrot.slane %v2776, 2
        %v2778 = vmax.f32 %v2776, %v2777
        %v2779 = vrot.slane %v2778, 1
        %v2780 = vmax.f32 %v2778, %v2779
        %v2781 = vsel %vm2626, %v2450, -inf
        %v2782 = vrot.slane %v2781, 4
        %v2783 = vmax.f32 %v2781, %v2782
        %v2784 = vrot.slane %v2783, 2
        %v2785 = vmax.f32 %v2783, %v2784
        %v2786 = vrot.slane %v2785, 1
        %v2787 = vmax.f32 %v2785, %v2786
        %v2788 = vsel %vm2626, %v2451, -inf
        %v2789 = vrot.slane %v2788, 4
        %v2790 = vmax.f32 %v2788, %v2789
        %v2791 = vrot.slane %v2790, 2
        %v2792 = vmax.f32 %v2790, %v2791
        %v2793 = vrot.slane %v2792, 1
        %v2794 = vmax.f32 %v2792, %v2793
        %v2795 = vsel %vm2626, %v2325, -inf
        %v2796 = vrot.slane %v2795, 4
        %v2797 = vmax.f32 %v2795, %v2796
        %v2798 = vrot.slane %v2797, 2
        %v2799 = vmax.f32 %v2797, %v2798
        %v2800 = vrot.slane %v2799, 1
        %v2801 = vmax.f32 %v2799, %v2800
        %v2802 = vsel %vm2626, %v2452, -inf
        %v2803 = vrot.slane %v2802, 4
        %v2804 = vmax.f32 %v2802, %v2803
        %v2805 = vrot.slane %v2804, 2
        %v2806 = vmax.f32 %v2804, %v2805
        %v2807 = vrot.slane %v2806, 1
        %v2808 = vmax.f32 %v2806, %v2807
        %v2809 = vsel %vm2626, %v2453, -inf
        %v2810 = vrot.slane %v2809, 4
        %v2811 = vmax.f32 %v2809, %v2810
        %v2812 = vrot.slane %v2811, 2
        %v2813 = vmax.f32 %v2811, %v2812
        %v2814 = vrot.slane %v2813, 1
        %v2815 = vmax.f32 %v2813, %v2814
        %v2816 = vsel %vm2626, %v2454, -inf
        %v2817 = vrot.slane %v2816, 4
        %v2818 = vmax.f32 %v2816, %v2817
        %v2819 = vrot.slane %v2818, 2
        %v2820 = vmax.f32 %v2818, %v2819
        %v2821 = vrot.slane %v2820, 1
        %v2822 = vmax.f32 %v2820, %v2821
        %v2823 = vsel %vm2626, %v2328, -inf
        %v2824 = vrot.slane %v2823, 4
        %v2825 = vmax.f32 %v2823, %v2824
        %v2826 = vrot.slane %v2825, 2
        %v2827 = vmax.f32 %v2825, %v2826
        %v2828 = vrot.slane %v2827, 1
        %v2829 = vmax.f32 %v2827, %v2828
        %v2830 = vsel %vm2626, %v2455, -inf
        %v2831 = vrot.slane %v2830, 4
        %v2832 = vmax.f32 %v2830, %v2831
        %v2833 = vrot.slane %v2832, 2
        %v2834 = vmax.f32 %v2832, %v2833
        %v2835 = vrot.slane %v2834, 1
        %v2836 = vmax.f32 %v2834, %v2835
        %v2837 = vsel %vm2626, %v2456, -inf
        %v2838 = vrot.slane %v2837, 4
        %v2839 = vmax.f32 %v2837, %v2838
        %v2840 = vrot.slane %v2839, 2
        %v2841 = vmax.f32 %v2839, %v2840
        %v2842 = vrot.slane %v2841, 1
        %v2843 = vmax.f32 %v2841, %v2842
        %v2844 = vsel %vm2626, %v2457, -inf
        %v2845 = vrot.slane %v2844, 4
        %v2846 = vmax.f32 %v2844, %v2845
        %v2847 = vrot.slane %v2846, 2
        %v2848 = vmax.f32 %v2846, %v2847
        %v2849 = vrot.slane %v2848, 1
        %v2850 = vmax.f32 %v2848, %v2849
        %v2851 = vsel %vm2626, %v2331, -inf
        %v2852 = vrot.slane %v2851, 4
        %v2853 = vmax.f32 %v2851, %v2852
        %v2854 = vrot.slane %v2853, 2
        %v2855 = vmax.f32 %v2853, %v2854
        %v2856 = vrot.slane %v2855, 1
        %v2857 = vmax.f32 %v2855, %v2856
        %v2858 = vsel %vm2626, %v2458, -inf
        %v2859 = vrot.slane %v2858, 4
        %v2860 = vmax.f32 %v2858, %v2859
        %v2861 = vrot.slane %v2860, 2
        %v2862 = vmax.f32 %v2860, %v2861
        %v2863 = vrot.slane %v2862, 1
        %v2864 = vmax.f32 %v2862, %v2863
        %v2865 = vsel %vm2626, %v2459, -inf
        %v2866 = vrot.slane %v2865, 4
        %v2867 = vmax.f32 %v2865, %v2866
        %v2868 = vrot.slane %v2867, 2
        %v2869 = vmax.f32 %v2867, %v2868
        %v2870 = vrot.slane %v2869, 1
        %v2871 = vmax.f32 %v2869, %v2870
        %v2872 = vsel %vm2626, %v2460, -inf
        %v2873 = vrot.slane %v2872, 4
        %v2874 = vmax.f32 %v2872, %v2873
        %v2875 = vrot.slane %v2874, 2
        %v2876 = vmax.f32 %v2874, %v2875
        %v2877 = vrot.slane %v2876, 1
        %v2878 = vmax.f32 %v2876, %v2877
        %v2879 = vsel %vm2626, %v2334, -inf
        %v2880 = vrot.slane %v2879, 4
        %v2881 = vmax.f32 %v2879, %v2880
        %v2882 = vrot.slane %v2881, 2
        %v2883 = vmax.f32 %v2881, %v2882
        %v2884 = vrot.slane %v2883, 1
        %v2885 = vmax.f32 %v2883, %v2884
        %v2886 = vsel %vm2626, %v2461, -inf
        %v2887 = vrot.slane %v2886, 4
        %v2888 = vmax.f32 %v2886, %v2887
        %v2889 = vrot.slane %v2888, 2
        %v2890 = vmax.f32 %v2888, %v2889
        %v2891 = vrot.slane %v2890, 1
        %v2892 = vmax.f32 %v2890, %v2891
        %v2893 = vsel %vm2626, %v2462, -inf
        %v2894 = vrot.slane %v2893, 4
        %v2895 = vmax.f32 %v2893, %v2894
        %v2896 = vrot.slane %v2895, 2
        %v2897 = vmax.f32 %v2895, %v2896
        %v2898 = vrot.slane %v2897, 1
        %v2899 = vmax.f32 %v2897, %v2898
        %v2900 = vsel %vm2626, %v2463, -inf
        %v2901 = vrot.slane %v2900, 4
        %v2902 = vmax.f32 %v2900, %v2901
        %v2903 = vrot.slane %v2902, 2
        %v2904 = vmax.f32 %v2902, %v2903
        %v2905 = vrot.slane %v2904, 1
        %v2906 = vmax.f32 %v2904, %v2905
        %v2907 = vsel %vm2626, %v2337, -inf
        %v2908 = vrot.slane %v2907, 4
        %v2909 = vmax.f32 %v2907, %v2908
        %v2910 = vrot.slane %v2909, 2
        %v2911 = vmax.f32 %v2909, %v2910
        %v2912 = vrot.slane %v2911, 1
        %v2913 = vmax.f32 %v2911, %v2912
        %v2914 = vsel %vm2626, %v2464, -inf
        %v2915 = vrot.slane %v2914, 4
        %v2916 = vmax.f32 %v2914, %v2915
        %v2917 = vrot.slane %v2916, 2
        %v2918 = vmax.f32 %v2916, %v2917
        %v2919 = vrot.slane %v2918, 1
        %v2920 = vmax.f32 %v2918, %v2919
        %v2921 = vsel %vm2626, %v2465, -inf
        %v2922 = vrot.slane %v2921, 4
        %v2923 = vmax.f32 %v2921, %v2922
        %v2924 = vrot.slane %v2923, 2
        %v2925 = vmax.f32 %v2923, %v2924
        %v2926 = vrot.slane %v2925, 1
        %v2927 = vmax.f32 %v2925, %v2926
        %v2928 = vsel %vm2626, %v2466, -inf
        %v2929 = vrot.slane %v2928, 4
        %v2930 = vmax.f32 %v2928, %v2929
        %v2931 = vrot.slane %v2930, 2
        %v2932 = vmax.f32 %v2930, %v2931
        %v2933 = vrot.slane %v2932, 1
        %v2934 = vmax.f32 %v2932, %v2933
        %v2935 = vsel %vm2626, %v2340, -inf
        %v2936 = vrot.slane %v2935, 4
        %v2937 = vmax.f32 %v2935, %v2936
        %v2938 = vrot.slane %v2937, 2
        %v2939 = vmax.f32 %v2937, %v2938
        %v2940 = vrot.slane %v2939, 1
        %v2941 = vmax.f32 %v2939, %v2940
        %v2942 = vsel %vm2626, %v2467, -inf
        %v2943 = vrot.slane %v2942, 4
        %v2944 = vmax.f32 %v2942, %v2943
        %v2945 = vrot.slane %v2944, 2
        %v2946 = vmax.f32 %v2944, %v2945
        %v2947 = vrot.slane %v2946, 1
        %v2948 = vmax.f32 %v2946, %v2947
        %v2949 = vsel %vm2626, %v2468, -inf
        %v2950 = vrot.slane %v2949, 4
        %v2951 = vmax.f32 %v2949, %v2950
        %v2952 = vrot.slane %v2951, 2
        %v2953 = vmax.f32 %v2951, %v2952
        %v2954 = vrot.slane %v2953, 1
        %v2955 = vmax.f32 %v2953, %v2954
        %v2956 = vsel %vm2626, %v2469, -inf
        %v2957 = vrot.slane %v2956, 4
        %v2958 = vmax.f32 %v2956, %v2957
        %v2959 = vrot.slane %v2958, 2
        %v2960 = vmax.f32 %v2958, %v2959
        %v2961 = vrot.slane %v2960, 1
        %v2962 = vmax.f32 %v2960, %v2961
        %v2963 = vsel %vm2626, %v2343, -inf
        %v2964 = vrot.slane %v2963, 4
        %v2965 = vmax.f32 %v2963, %v2964
        %v2966 = vrot.slane %v2965, 2
        %v2967 = vmax.f32 %v2965, %v2966
        %v2968 = vrot.slane %v2967, 1
        %v2969 = vmax.f32 %v2967, %v2968
        %v2970 = vsel %vm2626, %v2470, -inf
        %v2971 = vrot.slane %v2970, 4
        %v2972 = vmax.f32 %v2970, %v2971
        %v2973 = vrot.slane %v2972, 2
        %v2974 = vmax.f32 %v2972, %v2973
        %v2975 = vrot.slane %v2974, 1
        %v2976 = vmax.f32 %v2974, %v2975
        %v2977 = vsel %vm2626, %v2471, -inf
        %v2978 = vrot.slane %v2977, 4
        %v2979 = vmax.f32 %v2977, %v2978
        %v2980 = vrot.slane %v2979, 2
        %v2981 = vmax.f32 %v2979, %v2980
        %v2982 = vrot.slane %v2981, 1
        %v2983 = vmax.f32 %v2981, %v2982
        %v2984 = vsel %vm2626, %v2472, -inf
        %v2985 = vrot.slane %v2984, 4
        %v2986 = vmax.f32 %v2984, %v2985
        %v2987 = vrot.slane %v2986, 2
        %v2988 = vmax.f32 %v2986, %v2987
        %v2989 = vrot.slane %v2988, 1
        %v2990 = vmax.f32 %v2988, %v2989
        %v2991 = vsel %vm2626, %v2346, -inf
        %v2992 = vrot.slane %v2991, 4
        %v2993 = vmax.f32 %v2991, %v2992
        %v2994 = vrot.slane %v2993, 2
        %v2995 = vmax.f32 %v2993, %v2994
        %v2996 = vrot.slane %v2995, 1
        %v2997 = vmax.f32 %v2995, %v2996
        %v2998 = vsel %vm2626, %v2473, -inf
        %v2999 = vrot.slane %v2998, 4
        %v3000 = vmax.f32 %v2998, %v2999
        %v3001 = vrot.slane %v3000, 2
        %v3002 = vmax.f32 %v3000, %v3001
        %v3003 = vrot.slane %v3002, 1
        %v3004 = vmax.f32 %v3002, %v3003
        %v3005 = vsel %vm2626, %v2474, -inf
        %v3006 = vrot.slane %v3005, 4
        %v3007 = vmax.f32 %v3005, %v3006
        %v3008 = vrot.slane %v3007, 2
        %v3009 = vmax.f32 %v3007, %v3008
        %v3010 = vrot.slane %v3009, 1
        %v3011 = vmax.f32 %v3009, %v3010
        %v3012 = vsel %vm2626, %v2475, -inf
        %v3013 = vrot.slane %v3012, 4
        %v3014 = vmax.f32 %v3012, %v3013
        %v3015 = vrot.slane %v3014, 2
        %v3016 = vmax.f32 %v3014, %v3015
        %v3017 = vrot.slane %v3016, 1
        %v3018 = vmax.f32 %v3016, %v3017
        %v3019 = vsel %vm2626, %v2349, -inf
        %v3020 = vrot.slane %v3019, 4
        %v3021 = vmax.f32 %v3019, %v3020
        %v3022 = vrot.slane %v3021, 2
        %v3023 = vmax.f32 %v3021, %v3022
        %v3024 = vrot.slane %v3023, 1
        %v3025 = vmax.f32 %v3023, %v3024
        %v3026 = vsel %vm2626, %v2476, -inf
        %v3027 = vrot.slane %v3026, 4
        %v3028 = vmax.f32 %v3026, %v3027
        %v3029 = vrot.slane %v3028, 2
        %v3030 = vmax.f32 %v3028, %v3029
        %v3031 = vrot.slane %v3030, 1
        %v3032 = vmax.f32 %v3030, %v3031
        %v3033 = vsel %vm2626, %v2477, -inf
        %v3034 = vrot.slane %v3033, 4
        %v3035 = vmax.f32 %v3033, %v3034
        %v3036 = vrot.slane %v3035, 2
        %v3037 = vmax.f32 %v3035, %v3036
        %v3038 = vrot.slane %v3037, 1
        %v3039 = vmax.f32 %v3037, %v3038
        %v3040 = vsel %vm2626, %v2478, -inf
        %v3041 = vrot.slane %v3040, 4
        %v3042 = vmax.f32 %v3040, %v3041
        %v3043 = vrot.slane %v3042, 2
        %v3044 = vmax.f32 %v3042, %v3043
        %v3045 = vrot.slane %v3044, 1
        %v3046 = vmax.f32 %v3044, %v3045
        %v3047 = vsel %vm2626, %v2352, -inf
        %v3048 = vrot.slane %v3047, 4
        %v3049 = vmax.f32 %v3047, %v3048
        %v3050 = vrot.slane %v3049, 2
        %v3051 = vmax.f32 %v3049, %v3050
        %v3052 = vrot.slane %v3051, 1
        %v3053 = vmax.f32 %v3051, %v3052
        %v3054 = vsel %vm2626, %v2479, -inf
        %v3055 = vrot.slane %v3054, 4
        %v3056 = vmax.f32 %v3054, %v3055
        %v3057 = vrot.slane %v3056, 2
        %v3058 = vmax.f32 %v3056, %v3057
        %v3059 = vrot.slane %v3058, 1
        %v3060 = vmax.f32 %v3058, %v3059
        %v3061 = vsel %vm2626, %v2480, -inf
        %v3062 = vrot.slane %v3061, 4
        %v3063 = vmax.f32 %v3061, %v3062
        %v3064 = vrot.slane %v3063, 2
        %v3065 = vmax.f32 %v3063, %v3064
        %v3066 = vrot.slane %v3065, 1
        %v3067 = vmax.f32 %v3065, %v3066
        %v3068 = vsel %vm2626, %v2481, -inf
        %v3069 = vrot.slane %v3068, 4
        %v3070 = vmax.f32 %v3068, %v3069
        %v3071 = vrot.slane %v3070, 2
        %v3072 = vmax.f32 %v3070, %v3071
        %v3073 = vrot.slane %v3072, 1
        %v3074 = vmax.f32 %v3072, %v3073
        %v3075 = vsel %vm2626, %v2355, -inf
        %v3076 = vrot.slane %v3075, 4
        %v3077 = vmax.f32 %v3075, %v3076
        %v3078 = vrot.slane %v3077, 2
        %v3079 = vmax.f32 %v3077, %v3078
        %v3080 = vrot.slane %v3079, 1
        %v3081 = vmax.f32 %v3079, %v3080
        %v3082 = vsel %vm2626, %v2482, -inf
        %v3083 = vrot.slane %v3082, 4
        %v3084 = vmax.f32 %v3082, %v3083
        %v3085 = vrot.slane %v3084, 2
        %v3086 = vmax.f32 %v3084, %v3085
        %v3087 = vrot.slane %v3086, 1
        %v3088 = vmax.f32 %v3086, %v3087
        %v3089 = vsel %vm2626, %v2483, -inf
        %v3090 = vrot.slane %v3089, 4
        %v3091 = vmax.f32 %v3089, %v3090
        %v3092 = vrot.slane %v3091, 2
        %v3093 = vmax.f32 %v3091, %v3092
        %v3094 = vrot.slane %v3093, 1
        %v3095 = vmax.f32 %v3093, %v3094
        %v3096 = vsel %vm2626, %v2484, -inf
        %v3097 = vrot.slane %v3096, 4
        %v3098 = vmax.f32 %v3096, %v3097
        %v3099 = vrot.slane %v3098, 2
        %v3100 = vmax.f32 %v3098, %v3099
        %v3101 = vrot.slane %v3100, 1
        %v3102 = vmax.f32 %v3100, %v3101
        %v3103 = vsel %vm2626, %v2358, -inf
        %v3104 = vrot.slane %v3103, 4
        %v3105 = vmax.f32 %v3103, %v3104
        %v3106 = vrot.slane %v3105, 2
        %v3107 = vmax.f32 %v3105, %v3106
        %v3108 = vrot.slane %v3107, 1
        %v3109 = vmax.f32 %v3107, %v3108
        %v3110 = vsel %vm2626, %v2485, -inf
        %v3111 = vrot.slane %v3110, 4
        %v3112 = vmax.f32 %v3110, %v3111
        %v3113 = vrot.slane %v3112, 2
        %v3114 = vmax.f32 %v3112, %v3113
        %v3115 = vrot.slane %v3114, 1
        %v3116 = vmax.f32 %v3114, %v3115
        %v3117 = vsel %vm2626, %v2486, -inf
        %v3118 = vrot.slane %v3117, 4
        %v3119 = vmax.f32 %v3117, %v3118
        %v3120 = vrot.slane %v3119, 2
        %v3121 = vmax.f32 %v3119, %v3120
        %v3122 = vrot.slane %v3121, 1
        %v3123 = vmax.f32 %v3121, %v3122
        %v3124 = vsel %vm2626, %v2487, -inf
        %v3125 = vrot.slane %v3124, 4
        %v3126 = vmax.f32 %v3124, %v3125
        %v3127 = vrot.slane %v3126, 2
        %v3128 = vmax.f32 %v3126, %v3127
        %v3129 = vrot.slane %v3128, 1
        %v3130 = vmax.f32 %v3128, %v3129
        %v3131 = vsel %vm2626, %v2361, -inf
        %v3132 = vrot.slane %v3131, 4
        %v3133 = vmax.f32 %v3131, %v3132
        %v3134 = vrot.slane %v3133, 2
        %v3135 = vmax.f32 %v3133, %v3134
        %v3136 = vrot.slane %v3135, 1
        %v3137 = vmax.f32 %v3135, %v3136
        %v3138 = vsel %vm2626, %v2488, -inf
        %v3139 = vrot.slane %v3138, 4
        %v3140 = vmax.f32 %v3138, %v3139
        %v3141 = vrot.slane %v3140, 2
        %v3142 = vmax.f32 %v3140, %v3141
        %v3143 = vrot.slane %v3142, 1
        %v3144 = vmax.f32 %v3142, %v3143
        %v3145 = vsel %vm2626, %v2489, -inf
        %v3146 = vrot.slane %v3145, 4
        %v3147 = vmax.f32 %v3145, %v3146
        %v3148 = vrot.slane %v3147, 2
        %v3149 = vmax.f32 %v3147, %v3148
        %v3150 = vrot.slane %v3149, 1
        %v3151 = vmax.f32 %v3149, %v3150
        %v3152 = vsel %vm2626, %v2490, -inf
        %v3153 = vrot.slane %v3152, 4
        %v3154 = vmax.f32 %v3152, %v3153
        %v3155 = vrot.slane %v3154, 2
        %v3156 = vmax.f32 %v3154, %v3155
        %v3157 = vrot.slane %v3156, 1
        %v3158 = vmax.f32 %v3156, %v3157
        %v3159 = vsel %vm2626, %v2364, -inf
        %v3160 = vrot.slane %v3159, 4
        %v3161 = vmax.f32 %v3159, %v3160
        %v3162 = vrot.slane %v3161, 2
        %v3163 = vmax.f32 %v3161, %v3162
        %v3164 = vrot.slane %v3163, 1
        %v3165 = vmax.f32 %v3163, %v3164
        %v3166 = vsel %vm2626, %v2491, -inf
        %v3167 = vrot.slane %v3166, 4
        %v3168 = vmax.f32 %v3166, %v3167
        %v3169 = vrot.slane %v3168, 2
        %v3170 = vmax.f32 %v3168, %v3169
        %v3171 = vrot.slane %v3170, 1
        %v3172 = vmax.f32 %v3170, %v3171
        %v3173 = vsel %vm2626, %v2492, -inf
        %v3174 = vrot.slane %v3173, 4
        %v3175 = vmax.f32 %v3173, %v3174
        %v3176 = vrot.slane %v3175, 2
        %v3177 = vmax.f32 %v3175, %v3176
        %v3178 = vrot.slane %v3177, 1
        %v3179 = vmax.f32 %v3177, %v3178
        %v3180 = vsel %vm2626, %v2493, -inf
        %v3181 = vrot.slane %v3180, 4
        %v3182 = vmax.f32 %v3180, %v3181
        %v3183 = vrot.slane %v3182, 2
        %v3184 = vmax.f32 %v3182, %v3183
        %v3185 = vrot.slane %v3184, 1
        %v3186 = vmax.f32 %v3184, %v3185
        %v3187 = vsel %vm2626, %v2367, -inf
        %v3188 = vrot.slane %v3187, 4
        %v3189 = vmax.f32 %v3187, %v3188
        %v3190 = vrot.slane %v3189, 2
        %v3191 = vmax.f32 %v3189, %v3190
        %v3192 = vrot.slane %v3191, 1
        %v3193 = vmax.f32 %v3191, %v3192
        %v3194 = vsel %vm2626, %v2494, -inf
        %v3195 = vrot.slane %v3194, 4
        %v3196 = vmax.f32 %v3194, %v3195
        %v3197 = vrot.slane %v3196, 2
        %v3198 = vmax.f32 %v3196, %v3197
        %v3199 = vrot.slane %v3198, 1
        %v3200 = vmax.f32 %v3198, %v3199
        %v3201 = vsel %vm2626, %v2495, -inf
        %v3202 = vrot.slane %v3201, 4
        %v3203 = vmax.f32 %v3201, %v3202
        %v3204 = vrot.slane %v3203, 2
        %v3205 = vmax.f32 %v3203, %v3204
        %v3206 = vrot.slane %v3205, 1
        %v3207 = vmax.f32 %v3205, %v3206
        %v3208 = vsel %vm2626, %v2496, -inf
        %v3209 = vrot.slane %v3208, 4
        %v3210 = vmax.f32 %v3208, %v3209
        %v3211 = vrot.slane %v3210, 2
        %v3212 = vmax.f32 %v3210, %v3211
        %v3213 = vrot.slane %v3212, 1
        %v3214 = vmax.f32 %v3212, %v3213
        %v3215 = vsel %vm2626, %v2370, -inf
        %v3216 = vrot.slane %v3215, 4
        %v3217 = vmax.f32 %v3215, %v3216
        %v3218 = vrot.slane %v3217, 2
        %v3219 = vmax.f32 %v3217, %v3218
        %v3220 = vrot.slane %v3219, 1
        %v3221 = vmax.f32 %v3219, %v3220
        %v3222 = vsel %vm2626, %v2497, -inf
        %v3223 = vrot.slane %v3222, 4
        %v3224 = vmax.f32 %v3222, %v3223
        %v3225 = vrot.slane %v3224, 2
        %v3226 = vmax.f32 %v3224, %v3225
        %v3227 = vrot.slane %v3226, 1
        %v3228 = vmax.f32 %v3226, %v3227
        %v3229 = vsel %vm2626, %v2498, -inf
        %v3230 = vrot.slane %v3229, 4
        %v3231 = vmax.f32 %v3229, %v3230
        %v3232 = vrot.slane %v3231, 2
        %v3233 = vmax.f32 %v3231, %v3232
        %v3234 = vrot.slane %v3233, 1
        %v3235 = vmax.f32 %v3233, %v3234
        %v3236 = vsel %vm2626, %v2499, -inf
        %v3237 = vrot.slane %v3236, 4
        %v3238 = vmax.f32 %v3236, %v3237
        %v3239 = vrot.slane %v3238, 2
        %v3240 = vmax.f32 %v3238, %v3239
        %v3241 = vrot.slane %v3240, 1
        %v3242 = vmax.f32 %v3240, %v3241
        %v3243 = vsel %vm2626, %v2373, -inf
        %v3244 = vrot.slane %v3243, 4
        %v3245 = vmax.f32 %v3243, %v3244
        %v3246 = vrot.slane %v3245, 2
        %v3247 = vmax.f32 %v3245, %v3246
        %v3248 = vrot.slane %v3247, 1
        %v3249 = vmax.f32 %v3247, %v3248
        %v3250 = vsel %vm2626, %v2500, -inf
        %v3251 = vrot.slane %v3250, 4
        %v3252 = vmax.f32 %v3250, %v3251
        %v3253 = vrot.slane %v3252, 2
        %v3254 = vmax.f32 %v3252, %v3253
        %v3255 = vrot.slane %v3254, 1
        %v3256 = vmax.f32 %v3254, %v3255
        %v3257 = vsel %vm2626, %v2501, -inf
        %v3258 = vrot.slane %v3257, 4
        %v3259 = vmax.f32 %v3257, %v3258
        %v3260 = vrot.slane %v3259, 2
        %v3261 = vmax.f32 %v3259, %v3260
        %v3262 = vrot.slane %v3261, 1
        %v3263 = vmax.f32 %v3261, %v3262
        %v3264 = vsel %vm2626, %v2502, -inf
        %v3265 = vrot.slane %v3264, 4
        %v3266 = vmax.f32 %v3264, %v3265
        %v3267 = vrot.slane %v3266, 2
        %v3268 = vmax.f32 %v3266, %v3267
        %v3269 = vrot.slane %v3268, 1
        %v3270 = vmax.f32 %v3268, %v3269
        %v3271 = vsel %vm2626, %v2376, -inf
        %v3272 = vrot.slane %v3271, 4
        %v3273 = vmax.f32 %v3271, %v3272
        %v3274 = vrot.slane %v3273, 2
        %v3275 = vmax.f32 %v3273, %v3274
        %v3276 = vrot.slane %v3275, 1
        %v3277 = vmax.f32 %v3275, %v3276
        %v3278 = vsel %vm2626, %v2503, -inf
        %v3279 = vrot.slane %v3278, 4
        %v3280 = vmax.f32 %v3278, %v3279
        %v3281 = vrot.slane %v3280, 2
        %v3282 = vmax.f32 %v3280, %v3281
        %v3283 = vrot.slane %v3282, 1
        %v3284 = vmax.f32 %v3282, %v3283
        %v3285 = vsel %vm2626, %v2504, -inf
        %v3286 = vrot.slane %v3285, 4
        %v3287 = vmax.f32 %v3285, %v3286
        %v3288 = vrot.slane %v3287, 2
        %v3289 = vmax.f32 %v3287, %v3288
        %v3290 = vrot.slane %v3289, 1
        %v3291 = vmax.f32 %v3289, %v3290
        %v3292 = vsel %vm2626, %v2505, -inf
        %v3293 = vrot.slane %v3292, 4
        %v3294 = vmax.f32 %v3292, %v3293
        %v3295 = vrot.slane %v3294, 2
        %v3296 = vmax.f32 %v3294, %v3295
        %v3297 = vrot.slane %v3296, 1
        %v3298 = vmax.f32 %v3296, %v3297
        %v3299 = vsel %vm2626, %v2379, -inf
        %v3300 = vrot.slane %v3299, 4
        %v3301 = vmax.f32 %v3299, %v3300
        %v3302 = vrot.slane %v3301, 2
        %v3303 = vmax.f32 %v3301, %v3302
        %v3304 = vrot.slane %v3303, 1
        %v3305 = vmax.f32 %v3303, %v3304
        %v3306 = vsel %vm2626, %v2506, -inf
        %v3307 = vrot.slane %v3306, 4
        %v3308 = vmax.f32 %v3306, %v3307
        %v3309 = vrot.slane %v3308, 2
        %v3310 = vmax.f32 %v3308, %v3309
        %v3311 = vrot.slane %v3310, 1
        %v3312 = vmax.f32 %v3310, %v3311
        %v3313 = vsel %vm2626, %v2507, -inf
        %v3314 = vrot.slane %v3313, 4
        %v3315 = vmax.f32 %v3313, %v3314
        %v3316 = vrot.slane %v3315, 2
        %v3317 = vmax.f32 %v3315, %v3316
        %v3318 = vrot.slane %v3317, 1
        %v3319 = vmax.f32 %v3317, %v3318
        %v3320 = vsel %vm2626, %v2508, -inf
        %v3321 = vrot.slane %v3320, 4
        %v3322 = vmax.f32 %v3320, %v3321
        %v3323 = vrot.slane %v3322, 2
        %v3324 = vmax.f32 %v3322, %v3323
        %v3325 = vrot.slane %v3324, 1
        %v3326 = vmax.f32 %v3324, %v3325
        %v3327 = vsel %vm2626, %v2382, -inf
        %v3328 = vrot.slane %v3327, 4
        %v3329 = vmax.f32 %v3327, %v3328
        %v3330 = vrot.slane %v3329, 2
        %v3331 = vmax.f32 %v3329, %v3330
        %v3332 = vrot.slane %v3331, 1
        %v3333 = vmax.f32 %v3331, %v3332
        %v3334 = vsel %vm2626, %v2509, -inf
        %v3335 = vrot.slane %v3334, 4
        %v3336 = vmax.f32 %v3334, %v3335
        %v3337 = vrot.slane %v3336, 2
        %v3338 = vmax.f32 %v3336, %v3337
        %v3339 = vrot.slane %v3338, 1
        %v3340 = vmax.f32 %v3338, %v3339
        %v3341 = vsel %vm2626, %v2510, -inf
        %v3342 = vrot.slane %v3341, 4
        %v3343 = vmax.f32 %v3341, %v3342
        %v3344 = vrot.slane %v3343, 2
        %v3345 = vmax.f32 %v3343, %v3344
        %v3346 = vrot.slane %v3345, 1
        %v3347 = vmax.f32 %v3345, %v3346
        %v3348 = vsel %vm2626, %v2511, -inf
        %v3349 = vrot.slane %v3348, 4
        %v3350 = vmax.f32 %v3348, %v3349
        %v3351 = vrot.slane %v3350, 2
        %v3352 = vmax.f32 %v3350, %v3351
        %v3353 = vrot.slane %v3352, 1
        %v3354 = vmax.f32 %v3352, %v3353
        %v3355 = vsel %vm2626, %v2385, -inf
        %v3356 = vrot.slane %v3355, 4
        %v3357 = vmax.f32 %v3355, %v3356
        %v3358 = vrot.slane %v3357, 2
        %v3359 = vmax.f32 %v3357, %v3358
        %v3360 = vrot.slane %v3359, 1
        %v3361 = vmax.f32 %v3359, %v3360
        %v3362 = vsel %vm2626, %v2512, -inf
        %v3363 = vrot.slane %v3362, 4
        %v3364 = vmax.f32 %v3362, %v3363
        %v3365 = vrot.slane %v3364, 2
        %v3366 = vmax.f32 %v3364, %v3365
        %v3367 = vrot.slane %v3366, 1
        %v3368 = vmax.f32 %v3366, %v3367
        %v3369 = vsel %vm2626, %v2513, -inf
        %v3370 = vrot.slane %v3369, 4
        %v3371 = vmax.f32 %v3369, %v3370
        %v3372 = vrot.slane %v3371, 2
        %v3373 = vmax.f32 %v3371, %v3372
        %v3374 = vrot.slane %v3373, 1
        %v3375 = vmax.f32 %v3373, %v3374
        %v3376 = vsel %vm2626, %v2514, -inf
        %v3377 = vrot.slane %v3376, 4
        %v3378 = vmax.f32 %v3376, %v3377
        %v3379 = vrot.slane %v3378, 2
        %v3380 = vmax.f32 %v3378, %v3379
        %v3381 = vrot.slane %v3380, 1
        %v3382 = vmax.f32 %v3380, %v3381
        %v3383 = vsel %vm2626, %v2388, -inf
        %v3384 = vrot.slane %v3383, 4
        %v3385 = vmax.f32 %v3383, %v3384
        %v3386 = vrot.slane %v3385, 2
        %v3387 = vmax.f32 %v3385, %v3386
        %v3388 = vrot.slane %v3387, 1
        %v3389 = vmax.f32 %v3387, %v3388
        %v3390 = vsel %vm2626, %v2515, -inf
        %v3391 = vrot.slane %v3390, 4
        %v3392 = vmax.f32 %v3390, %v3391
        %v3393 = vrot.slane %v3392, 2
        %v3394 = vmax.f32 %v3392, %v3393
        %v3395 = vrot.slane %v3394, 1
        %v3396 = vmax.f32 %v3394, %v3395
        %v3397 = vsel %vm2626, %v2516, -inf
        %v3398 = vrot.slane %v3397, 4
        %v3399 = vmax.f32 %v3397, %v3398
        %v3400 = vrot.slane %v3399, 2
        %v3401 = vmax.f32 %v3399, %v3400
        %v3402 = vrot.slane %v3401, 1
        %v3403 = vmax.f32 %v3401, %v3402
        %v3404 = vsel %vm2626, %v2517, -inf
        %v3405 = vrot.slane %v3404, 4
        %v3406 = vmax.f32 %v3404, %v3405
        %v3407 = vrot.slane %v3406, 2
        %v3408 = vmax.f32 %v3406, %v3407
        %v3409 = vrot.slane %v3408, 1
        %v3410 = vmax.f32 %v3408, %v3409
        %v3411 = vsel %vm2626, %v2391, -inf
        %v3412 = vrot.slane %v3411, 4
        %v3413 = vmax.f32 %v3411, %v3412
        %v3414 = vrot.slane %v3413, 2
        %v3415 = vmax.f32 %v3413, %v3414
        %v3416 = vrot.slane %v3415, 1
        %v3417 = vmax.f32 %v3415, %v3416
        %v3418 = vsel %vm2626, %v2518, -inf
        %v3419 = vrot.slane %v3418, 4
        %v3420 = vmax.f32 %v3418, %v3419
        %v3421 = vrot.slane %v3420, 2
        %v3422 = vmax.f32 %v3420, %v3421
        %v3423 = vrot.slane %v3422, 1
        %v3424 = vmax.f32 %v3422, %v3423
        %v3425 = vsel %vm2626, %v2519, -inf
        %v3426 = vrot.slane %v3425, 4
        %v3427 = vmax.f32 %v3425, %v3426
        %v3428 = vrot.slane %v3427, 2
        %v3429 = vmax.f32 %v3427, %v3428
        %v3430 = vrot.slane %v3429, 1
        %v3431 = vmax.f32 %v3429, %v3430
        %v3432 = vsel %vm2626, %v2520, -inf
        %v3433 = vrot.slane %v3432, 4
        %v3434 = vmax.f32 %v3432, %v3433
        %v3435 = vrot.slane %v3434, 2
        %v3436 = vmax.f32 %v3434, %v3435
        %v3437 = vrot.slane %v3436, 1
        %v3438 = vmax.f32 %v3436, %v3437
        %v3439 = vsel %vm2626, %v2394, -inf
        %v3440 = vrot.slane %v3439, 4
        %v3441 = vmax.f32 %v3439, %v3440
        %v3442 = vrot.slane %v3441, 2
        %v3443 = vmax.f32 %v3441, %v3442
        %v3444 = vrot.slane %v3443, 1
        %v3445 = vmax.f32 %v3443, %v3444
        %v3446 = vsel %vm2626, %v2521, -inf
        %v3447 = vrot.slane %v3446, 4
        %v3448 = vmax.f32 %v3446, %v3447
        %v3449 = vrot.slane %v3448, 2
        %v3450 = vmax.f32 %v3448, %v3449
        %v3451 = vrot.slane %v3450, 1
        %v3452 = vmax.f32 %v3450, %v3451
        %v3453 = vsel %vm2626, %v2522, -inf
        %v3454 = vrot.slane %v3453, 4
        %v3455 = vmax.f32 %v3453, %v3454
        %v3456 = vrot.slane %v3455, 2
        %v3457 = vmax.f32 %v3455, %v3456
        %v3458 = vrot.slane %v3457, 1
        %v3459 = vmax.f32 %v3457, %v3458
        %v3460 = vsel %vm2626, %v2523, -inf
        %v3461 = vrot.slane %v3460, 4
        %v3462 = vmax.f32 %v3460, %v3461
        %v3463 = vrot.slane %v3462, 2
        %v3464 = vmax.f32 %v3462, %v3463
        %v3465 = vrot.slane %v3464, 1
        %v3466 = vmax.f32 %v3464, %v3465
        %v3467 = vsel %vm2626, %v2397, -inf
        %v3468 = vrot.slane %v3467, 4
        %v3469 = vmax.f32 %v3467, %v3468
        %v3470 = vrot.slane %v3469, 2
        %v3471 = vmax.f32 %v3469, %v3470
        %v3472 = vrot.slane %v3471, 1
        %v3473 = vmax.f32 %v3471, %v3472
        %v3474 = vsel %vm2626, %v2524, -inf
        %v3475 = vrot.slane %v3474, 4
        %v3476 = vmax.f32 %v3474, %v3475
        %v3477 = vrot.slane %v3476, 2
        %v3478 = vmax.f32 %v3476, %v3477
        %v3479 = vrot.slane %v3478, 1
        %v3480 = vmax.f32 %v3478, %v3479
        %v3481 = vsel %vm2626, %v2525, -inf
        %v3482 = vrot.slane %v3481, 4
        %v3483 = vmax.f32 %v3481, %v3482
        %v3484 = vrot.slane %v3483, 2
        %v3485 = vmax.f32 %v3483, %v3484
        %v3486 = vrot.slane %v3485, 1
        %v3487 = vmax.f32 %v3485, %v3486
        %v3488 = vsel %vm2626, %v2526, -inf
        %v3489 = vrot.slane %v3488, 4
        %v3490 = vmax.f32 %v3488, %v3489
        %v3491 = vrot.slane %v3490, 2
        %v3492 = vmax.f32 %v3490, %v3491
        %v3493 = vrot.slane %v3492, 1
        %v3494 = vmax.f32 %v3492, %v3493
        %v3495 = vsel %vm2626, %v2400, -inf
        %v3496 = vrot.slane %v3495, 4
        %v3497 = vmax.f32 %v3495, %v3496
        %v3498 = vrot.slane %v3497, 2
        %v3499 = vmax.f32 %v3497, %v3498
        %v3500 = vrot.slane %v3499, 1
        %v3501 = vmax.f32 %v3499, %v3500
        %v3502 = vsel %vm2626, %v2527, -inf
        %v3503 = vrot.slane %v3502, 4
        %v3504 = vmax.f32 %v3502, %v3503
        %v3505 = vrot.slane %v3504, 2
        %v3506 = vmax.f32 %v3504, %v3505
        %v3507 = vrot.slane %v3506, 1
        %v3508 = vmax.f32 %v3506, %v3507
        %v3509 = vsel %vm2626, %v2528, -inf
        %v3510 = vrot.slane %v3509, 4
        %v3511 = vmax.f32 %v3509, %v3510
        %v3512 = vrot.slane %v3511, 2
        %v3513 = vmax.f32 %v3511, %v3512
        %v3514 = vrot.slane %v3513, 1
        %v3515 = vmax.f32 %v3513, %v3514
        %v3516 = vsel %vm2626, %v2529, -inf
        %v3517 = vrot.slane %v3516, 4
        %v3518 = vmax.f32 %v3516, %v3517
        %v3519 = vrot.slane %v3518, 2
        %v3520 = vmax.f32 %v3518, %v3519
        %v3521 = vrot.slane %v3520, 1
        %v3522 = vmax.f32 %v3520, %v3521
        %v3523 = vmax.f32 %v2633, %v2689
        %v3524 = vmax.f32 %v2640, %v2696
        %v3525 = vmax.f32 %v2647, %v2703
        %v3526 = vmax.f32 %v2654, %v2710
        %v3527 = vmax.f32 %v2661, %v2717
        %v3528 = vmax.f32 %v2668, %v2724
        %v3529 = vmax.f32 %v2675, %v2731
        %v3530 = vmax.f32 %v2682, %v2738
        %v3531 = vmax.f32 %v2745, %v2801
        %v3532 = vmax.f32 %v2752, %v2808
        %v3533 = vmax.f32 %v2759, %v2815
        %v3534 = vmax.f32 %v2766, %v2822
        %v3535 = vmax.f32 %v2773, %v2829
        %v3536 = vmax.f32 %v2780, %v2836
        %v3537 = vmax.f32 %v2787, %v2843
        %v3538 = vmax.f32 %v2794, %v2850
        %v3539 = vmax.f32 %v2857, %v2913
        %v3540 = vmax.f32 %v2864, %v2920
        %v3541 = vmax.f32 %v2871, %v2927
        %v3542 = vmax.f32 %v2878, %v2934
        %v3543 = vmax.f32 %v2885, %v2941
        %v3544 = vmax.f32 %v2892, %v2948
        %v3545 = vmax.f32 %v2899, %v2955
        %v3546 = vmax.f32 %v2906, %v2962
        %v3547 = vmax.f32 %v2969, %v3025
        %v3548 = vmax.f32 %v2976, %v3032
        %v3549 = vmax.f32 %v2983, %v3039
        %v3550 = vmax.f32 %v2990, %v3046
        %v3551 = vmax.f32 %v2997, %v3053
        %v3552 = vmax.f32 %v3004, %v3060
        %v3553 = vmax.f32 %v3011, %v3067
        %v3554 = vmax.f32 %v3018, %v3074
        %v3555 = vmax.f32 %v3081, %v3137
        %v3556 = vmax.f32 %v3088, %v3144
        %v3557 = vmax.f32 %v3095, %v3151
        %v3558 = vmax.f32 %v3102, %v3158
        %v3559 = vmax.f32 %v3109, %v3165
        %v3560 = vmax.f32 %v3116, %v3172
        %v3561 = vmax.f32 %v3123, %v3179
        %v3562 = vmax.f32 %v3130, %v3186
        %v3563 = vmax.f32 %v3193, %v3249
        %v3564 = vmax.f32 %v3200, %v3256
        %v3565 = vmax.f32 %v3207, %v3263
        %v3566 = vmax.f32 %v3214, %v3270
        %v3567 = vmax.f32 %v3221, %v3277
        %v3568 = vmax.f32 %v3228, %v3284
        %v3569 = vmax.f32 %v3235, %v3291
        %v3570 = vmax.f32 %v3242, %v3298
        %v3571 = vmax.f32 %v3305, %v3361
        %v3572 = vmax.f32 %v3312, %v3368
        %v3573 = vmax.f32 %v3319, %v3375
        %v3574 = vmax.f32 %v3326, %v3382
        %v3575 = vmax.f32 %v3333, %v3389
        %v3576 = vmax.f32 %v3340, %v3396
        %v3577 = vmax.f32 %v3347, %v3403
        %v3578 = vmax.f32 %v3354, %v3410
        %v3579 = vmax.f32 %v3417, %v3473
        %v3580 = vmax.f32 %v3424, %v3480
        %v3581 = vmax.f32 %v3431, %v3487
        %v3582 = vmax.f32 %v3438, %v3494
        %v3583 = vmax.f32 %v3445, %v3501
        %v3584 = vmax.f32 %v3452, %v3508
        %v3585 = vmax.f32 %v3459, %v3515
        %v3586 = vmax.f32 %v3466, %v3522
        %v3587 = vld [vmem:[#allocation10] sm:$0x1]
        %v3589 = vperm.slane %v3587, 0
        %v3591 = vadd.f32 %v3523, %v3589
        %v3592 = vadd.f32 %v3524, %v3589
        %v3593 = vadd.f32 %v3525, %v3589
        %v3594 = vadd.f32 %v3526, %v3589
        %v3595 = vadd.f32 %v3527, %v3589
        %v3596 = vadd.f32 %v3528, %v3589
        %v3597 = vadd.f32 %v3529, %v3589
        %v3598 = vadd.f32 %v3530, %v3589
        %v3599 = vadd.f32 %v3531, %v3589
        %v3600 = vadd.f32 %v3532, %v3589
        %v3601 = vadd.f32 %v3533, %v3589
        %v3602 = vadd.f32 %v3534, %v3589
        %v3603 = vadd.f32 %v3535, %v3589
        %v3604 = vadd.f32 %v3536, %v3589
        %v3605 = vadd.f32 %v3537, %v3589
        %v3606 = vadd.f32 %v3538, %v3589
        %v3607 = vadd.f32 %v3539, %v3589
        %v3608 = vadd.f32 %v3540, %v3589
        %v3609 = vadd.f32 %v3541, %v3589
        %v3610 = vadd.f32 %v3542, %v3589
        %v3611 = vadd.f32 %v3543, %v3589
        %v3612 = vadd.f32 %v3544, %v3589
        %v3613 = vadd.f32 %v3545, %v3589
        %v3614 = vadd.f32 %v3546, %v3589
        %v3615 = vadd.f32 %v3547, %v3589
        %v3616 = vadd.f32 %v3548, %v3589
        %v3617 = vadd.f32 %v3549, %v3589
        %v3618 = vadd.f32 %v3550, %v3589
        %v3619 = vadd.f32 %v3551, %v3589
        %v3620 = vadd.f32 %v3552, %v3589
        %v3621 = vadd.f32 %v3553, %v3589
        %v3622 = vadd.f32 %v3554, %v3589
        %v3623 = vadd.f32 %v3555, %v3589
        %v3624 = vadd.f32 %v3556, %v3589
        %v3625 = vadd.f32 %v3557, %v3589
        %v3626 = vadd.f32 %v3558, %v3589
        %v3627 = vadd.f32 %v3559, %v3589
        %v3628 = vadd.f32 %v3560, %v3589
        %v3629 = vadd.f32 %v3561, %v3589
        %v3630 = vadd.f32 %v3562, %v3589
        %v3631 = vadd.f32 %v3563, %v3589
        %v3632 = vadd.f32 %v3564, %v3589
        %v3633 = vadd.f32 %v3565, %v3589
        %v3634 = vadd.f32 %v3566, %v3589
        %v3635 = vadd.f32 %v3567, %v3589
        %v3636 = vadd.f32 %v3568, %v3589
        %v3637 = vadd.f32 %v3569, %v3589
        %v3638 = vadd.f32 %v3570, %v3589
        %v3639 = vadd.f32 %v3571, %v3589
        %v3640 = vadd.f32 %v3572, %v3589
        %v3641 = vadd.f32 %v3573, %v3589
        %v3642 = vadd.f32 %v3574, %v3589
        %v3643 = vadd.f32 %v3575, %v3589
        %v3644 = vadd.f32 %v3576, %v3589
        %v3645 = vadd.f32 %v3577, %v3589
        %v3646 = vadd.f32 %v3578, %v3589
        %v3647 = vadd.f32 %v3579, %v3589
        %v3648 = vadd.f32 %v3580, %v3589
        %v3649 = vadd.f32 %v3581, %v3589
        %v3650 = vadd.f32 %v3582, %v3589
        %v3651 = vadd.f32 %v3583, %v3589
        %v3652 = vadd.f32 %v3584, %v3589
        %v3653 = vadd.f32 %v3585, %v3589
        %v3654 = vadd.f32 %v3586, %v3589
        %v3655 = vmax.f32 %v3591, 0.0
        %v3656 = vmax.f32 %v3592, 0.0
        %v3657 = vmax.f32 %v3593, 0.0
        %v3658 = vmax.f32 %v3594, 0.0
        %v3659 = vmax.f32 %v3595, 0.0
        %v3660 = vmax.f32 %v3596, 0.0
        %v3661 = vmax.f32 %v3597, 0.0
        %v3662 = vmax.f32 %v3598, 0.0
        %v3663 = vmax.f32 %v3599, 0.0
        %v3664 = vmax.f32 %v3600, 0.0
        %v3665 = vmax.f32 %v3601, 0.0
        %v3666 = vmax.f32 %v3602, 0.0
        %v3667 = vmax.f32 %v3603, 0.0
        %v3668 = vmax.f32 %v3604, 0.0
        %v3669 = vmax.f32 %v3605, 0.0
        %v3670 = vmax.f32 %v3606, 0.0
        %v3671 = vmax.f32 %v3607, 0.0
        %v3672 = vmax.f32 %v3608, 0.0
        %v3673 = vmax.f32 %v3609, 0.0
        %v3674 = vmax.f32 %v3610, 0.0
        %v3675 = vmax.f32 %v3611, 0.0
        %v3676 = vmax.f32 %v3612, 0.0
        %v3677 = vmax.f32 %v3613, 0.0
        %v3678 = vmax.f32 %v3614, 0.0
        %v3679 = vmax.f32 %v3615, 0.0
        %v3680 = vmax.f32 %v3616, 0.0
        %v3681 = vmax.f32 %v3617, 0.0
        %v3682 = vmax.f32 %v3618, 0.0
        %v3683 = vmax.f32 %v3619, 0.0
        %v3684 = vmax.f32 %v3620, 0.0
        %v3685 = vmax.f32 %v3621, 0.0
        %v3686 = vmax.f32 %v3622, 0.0
        %v3687 = vmax.f32 %v3623, 0.0
        %v3688 = vmax.f32 %v3624, 0.0
        %v3689 = vmax.f32 %v3625, 0.0
        %v3690 = vmax.f32 %v3626, 0.0
        %v3691 = vmax.f32 %v3627, 0.0
        %v3692 = vmax.f32 %v3628, 0.0
        %v3693 = vmax.f32 %v3629, 0.0
        %v3694 = vmax.f32 %v3630, 0.0
        %v3695 = vmax.f32 %v3631, 0.0
        %v3696 = vmax.f32 %v3632, 0.0
        %v3697 = vmax.f32 %v3633, 0.0
        %v3698 = vmax.f32 %v3634, 0.0
        %v3699 = vmax.f32 %v3635, 0.0
        %v3700 = vmax.f32 %v3636, 0.0
        %v3701 = vmax.f32 %v3637, 0.0
        %v3702 = vmax.f32 %v3638, 0.0
        %v3703 = vmax.f32 %v3639, 0.0
        %v3704 = vmax.f32 %v3640, 0.0
        %v3705 = vmax.f32 %v3641, 0.0
        %v3706 = vmax.f32 %v3642, 0.0
        %v3707 = vmax.f32 %v3643, 0.0
        %v3708 = vmax.f32 %v3644, 0.0
        %v3709 = vmax.f32 %v3645, 0.0
        %v3710 = vmax.f32 %v3646, 0.0
        %v3711 = vmax.f32 %v3647, 0.0
        %v3712 = vmax.f32 %v3648, 0.0
        %v3713 = vmax.f32 %v3649, 0.0
        %v3714 = vmax.f32 %v3650, 0.0
        %v3715 = vmax.f32 %v3651, 0.0
        %v3716 = vmax.f32 %v3652, 0.0
        %v3717 = vmax.f32 %v3653, 0.0
        %v3718 = vmax.f32 %v3654, 0.0
        %vm3719 = vcmask 261120
        %3720 = vst.msk [vmem:[#allocation4] sm:$0xff] %vm3719, 0.0
        %3721 = vst.msk [vmem:[#allocation4 + $0x8] sm:$0x3] %vm2626, 0.0
        %3722 = vst.msk [vmem:[#allocation4 + $0x10] sm:$0xff] %vm3719, 0.0
        %3723 = vst.msk [vmem:[#allocation4 + $0x18] sm:$0x3] %vm2626, 0.0
        %3724 = vst.msk [vmem:[#allocation4 + $0x20] sm:$0xff] %vm3719, 0.0
        %3725 = vst.msk [vmem:[#allocation4 + $0x28] sm:$0x3] %vm2626, 0.0
        %3726 = vst.msk [vmem:[#allocation4 + $0x30] sm:$0xff] %vm3719, 0.0
        %3727 = vst.msk [vmem:[#allocation4 + $0x38] sm:$0x3] %vm2626, 0.0
        %3728 = vst.msk [vmem:[#allocation4 + $0x40] sm:$0xff] %vm3719, 0.0
        %3729 = vst.msk [vmem:[#allocation4 + $0x48] sm:$0x3] %vm2626, 0.0
        %3730 = vst.msk [vmem:[#allocation4 + $0x50] sm:$0xff] %vm3719, 0.0
        %3731 = vst.msk [vmem:[#allocation4 + $0x58] sm:$0x3] %vm2626, 0.0
        %3732 = vst.msk [vmem:[#allocation4 + $0x60] sm:$0xff] %vm3719, 0.0
        %3733 = vst.msk [vmem:[#allocation4 + $0x68] sm:$0x3] %vm2626, 0.0
        %3734 = vst.msk [vmem:[#allocation4 + $0x70] sm:$0xff] %vm3719, 0.0
        %3735 = vst.msk [vmem:[#allocation4 + $0x78] sm:$0x3] %vm2626, 0.0
        %3736 = vst.msk [vmem:[#allocation4 + $0x80] sm:$0xff] %vm3719, 0.0
        %3737 = vst.msk [vmem:[#allocation4 + $0x88] sm:$0x3] %vm2626, 0.0
        %3738 = vst.msk [vmem:[#allocation4 + $0x90] sm:$0xff] %vm3719, 0.0
        %3739 = vst.msk [vmem:[#allocation4 + $0x98] sm:$0x3] %vm2626, 0.0
        %v3804 = vrot.slane %v3656, 7
        %vm3805 = vcmask 1041409
        %v3806 = vsel %vm3805, %v3804, %v3655
        %v3807 = vrot.slane %v3657, 6
        %vm3808 = vcmask 1042434
        %v3809 = vsel %vm3808, %v3807, %v3806
        %v3810 = vrot.slane %v3658, 5
        %vm3811 = vcmask 1043459
        %v3812 = vsel %vm3811, %v3810, %v3809
        %v3813 = vrot.slane %v3659, 4
        %vm3814 = vcmask 1044484
        %v3815 = vsel %vm3814, %v3813, %v3812
        %v3816 = vrot.slane %v3660, 3
        %vm3817 = vcmask 1045509
        %v3818 = vsel %vm3817, %v3816, %v3815
        %v3819 = vrot.slane %v3661, 2
        %vm3820 = vcmask 1046534
        %v3821 = vsel %vm3820, %v3819, %v3818
        %v3822 = vrot.slane %v3662, 1
        %vm3823 = vcmask 1047559
        %v3824 = vsel %vm3823, %v3822, %v3821
        %v3825 = vrot.slane %v3664, 7
        %v3826 = vsel %vm3805, %v3825, %v3663
        %v3827 = vrot.slane %v3665, 6
        %v3828 = vsel %vm3808, %v3827, %v3826
        %v3829 = vrot.slane %v3666, 5
        %v3830 = vsel %vm3811, %v3829, %v3828
        %v3831 = vrot.slane %v3667, 4
        %v3832 = vsel %vm3814, %v3831, %v3830
        %v3833 = vrot.slane %v3668, 3
        %v3834 = vsel %vm3817, %v3833, %v3832
        %v3835 = vrot.slane %v3669, 2
        %v3836 = vsel %vm3820, %v3835, %v3834
        %v3837 = vrot.slane %v3670, 1
        %v3838 = vsel %vm3823, %v3837, %v3836
        %v3839 = vrot.slane %v3672, 7
        %v3840 = vsel %vm3805, %v3839, %v3671
        %v3841 = vrot.slane %v3673, 6
        %v3842 = vsel %vm3808, %v3841, %v3840
        %v3843 = vrot.slane %v3674, 5
        %v3844 = vsel %vm3811, %v3843, %v3842
        %v3845 = vrot.slane %v3675, 4
        %v3846 = vsel %vm3814, %v3845, %v3844
        %v3847 = vrot.slane %v3676, 3
        %v3848 = vsel %vm3817, %v3847, %v3846
        %v3849 = vrot.slane %v3677, 2
        %v3850 = vsel %vm3820, %v3849, %v3848
        %v3851 = vrot.slane %v3678, 1
        %v3852 = vsel %vm3823, %v3851, %v3850
        %v3853 = vrot.slane %v3680, 7
        %v3854 = vsel %vm3805, %v3853, %v3679
        %v3855 = vrot.slane %v3681, 6
        %v3856 = vsel %vm3808, %v3855, %v3854
        %v3857 = vrot.slane %v3682, 5
        %v3858 = vsel %vm3811, %v3857, %v3856
        %v3859 = vrot.slane %v3683, 4
        %v3860 = vsel %vm3814, %v3859, %v3858
        %v3861 = vrot.slane %v3684, 3
        %v3862 = vsel %vm3817, %v3861, %v3860
        %v3863 = vrot.slane %v3685, 2
        %v3864 = vsel %vm3820, %v3863, %v3862
        %v3865 = vrot.slane %v3686, 1
        %v3866 = vsel %vm3823, %v3865, %v3864
        %v3867 = vrot.slane %v3688, 7
        %v3868 = vsel %vm3805, %v3867, %v3687
        %v3869 = vrot.slane %v3689, 6
        %v3870 = vsel %vm3808, %v3869, %v3868
        %v3871 = vrot.slane %v3690, 5
        %v3872 = vsel %vm3811, %v3871, %v3870
        %v3873 = vrot.slane %v3691, 4
        %v3874 = vsel %vm3814, %v3873, %v3872
        %v3875 = vrot.slane %v3692, 3
        %v3876 = vsel %vm3817, %v3875, %v3874
        %v3877 = vrot.slane %v3693, 2
        %v3878 = vsel %vm3820, %v3877, %v3876
        %v3879 = vrot.slane %v3694, 1
        %v3880 = vsel %vm3823, %v3879, %v3878
        %v3881 = vrot.slane %v3696, 7
        %v3882 = vsel %vm3805, %v3881, %v3695
        %v3883 = vrot.slane %v3697, 6
        %v3884 = vsel %vm3808, %v3883, %v3882
        %v3885 = vrot.slane %v3698, 5
        %v3886 = vsel %vm3811, %v3885, %v3884
        %v3887 = vrot.slane %v3699, 4
        %v3888 = vsel %vm3814, %v3887, %v3886
        %v3889 = vrot.slane %v3700, 3
        %v3890 = vsel %vm3817, %v3889, %v3888
        %v3891 = vrot.slane %v3701, 2
        %v3892 = vsel %vm3820, %v3891, %v3890
        %v3893 = vrot.slane %v3702, 1
        %v3894 = vsel %vm3823, %v3893, %v3892
        %v3895 = vrot.slane %v3704, 7
        %v3896 = vsel %vm3805, %v3895, %v3703
        %v3897 = vrot.slane %v3705, 6
        %v3898 = vsel %vm3808, %v3897, %v3896
        %v3899 = vrot.slane %v3706, 5
        %v3900 = vsel %vm3811, %v3899, %v3898
        %v3901 = vrot.slane %v3707, 4
        %v3902 = vsel %vm3814, %v3901, %v3900
        %v3903 = vrot.slane %v3708, 3
        %v3904 = vsel %vm3817, %v3903, %v3902
        %v3905 = vrot.slane %v3709, 2
        %v3906 = vsel %vm3820, %v3905, %v3904
        %v3907 = vrot.slane %v3710, 1
        %v3908 = vsel %vm3823, %v3907, %v3906
        %v3909 = vrot.slane %v3712, 7
        %v3910 = vsel %vm3805, %v3909, %v3711
        %v3911 = vrot.slane %v3713, 6
        %v3912 = vsel %vm3808, %v3911, %v3910
        %v3913 = vrot.slane %v3714, 5
        %v3914 = vsel %vm3811, %v3913, %v3912
        %v3915 = vrot.slane %v3715, 4
        %v3916 = vsel %vm3814, %v3915, %v3914
        %v3917 = vrot.slane %v3716, 3
        %v3918 = vsel %vm3817, %v3917, %v3916
        %v3919 = vrot.slane %v3717, 2
        %v3920 = vsel %vm3820, %v3919, %v3918
        %v3921 = vrot.slane %v3718, 1
        %v3922 = vsel %vm3823, %v3921, %v3920
        %s3931 = scalar_lea.vmem [#allocation4], 16
        %3932 = vst.msk [vmem:[%s3931 + $0x1] sm:$0xff] %vm3719, %v3824
        %3933 = vst.msk [vmem:[%s3931 + $0x11] sm:$0xff] %vm3719, %v3838
        %3934 = vst.msk [vmem:[%s3931 + $0x21] sm:$0xff] %vm3719, %v3852
        %3935 = vst.msk [vmem:[%s3931 + $0x31] sm:$0xff] %vm3719, %v3866
        %3936 = vst.msk [vmem:[%s3931 + $0x41] sm:$0xff] %vm3719, %v3880
        %3937 = vst.msk [vmem:[%s3931 + $0x51] sm:$0xff] %vm3719, %v3894
        %3938 = vst.msk [vmem:[%s3931 + $0x61] sm:$0xff] %vm3719, %v3908
        %3939 = vst.msk [vmem:[%s3931 + $0x71] sm:$0xff] %vm3719, %v3922
        %v3940 = vld [vmem:[#allocation4] sm:$0xff]
        %v3941 = vld [vmem:[#allocation4 + $0x10] sm:$0xff]
        %v3942 = vld [vmem:[#allocation4 + $0x20] sm:$0xff]
        %v3943 = vld [vmem:[#allocation4 + $0x30] sm:$0xff]
        %v3944 = vld [vmem:[#allocation4 + $0x40] sm:$0xff]
        %v3945 = vld [vmem:[#allocation4 + $0x50] sm:$0xff]
        %v3946 = vld [vmem:[#allocation4 + $0x60] sm:$0xff]
        %v3947 = vld [vmem:[#allocation4 + $0x70] sm:$0xff]
        %3948 = vst.msk [vmem:[#allocation5] sm:$0xff] %vm3719, %v3940
        %3949 = vst.msk [vmem:[#allocation5 + $0x18] sm:$0xff] %vm3719, %v3941
        %3950 = vst.msk [vmem:[#allocation5 + $0x30] sm:$0xff] %vm3719, %v3942
        %3951 = vst.msk [vmem:[#allocation5 + $0x48] sm:$0xff] %vm3719, %v3943
        %3952 = vst.msk [vmem:[#allocation5 + $0x60] sm:$0xff] %vm3719, %v3944
        %3953 = vst.msk [vmem:[#allocation5 + $0x78] sm:$0xff] %vm3719, %v3945
        %3954 = vst.msk [vmem:[#allocation5 + $0x90] sm:$0xff] %vm3719, %v3946
        %3955 = vst.msk [vmem:[#allocation5 + $0xa8] sm:$0xff] %vm3719, %v3947
        %v3956 = vld [vmem:[#allocation4 + $0x1] sm:$0xff]
        %v3957 = vld [vmem:[#allocation4 + $0x11] sm:$0xff]
        %v3958 = vld [vmem:[#allocation4 + $0x21] sm:$0xff]
        %v3959 = vld [vmem:[#allocation4 + $0x31] sm:$0xff]
        %v3960 = vld [vmem:[#allocation4 + $0x41] sm:$0xff]
        %v3961 = vld [vmem:[#allocation4 + $0x51] sm:$0xff]
        %v3962 = vld [vmem:[#allocation4 + $0x61] sm:$0xff]
        %v3963 = vld [vmem:[#allocation4 + $0x71] sm:$0xff]
        %3972 = vrot.lane.b32.xlu0 %v3956, 32
        %v3973 = vpop.permute.xlu0 %3972
        %3974 = vrot.lane.b32.xlu0 %v3957, 32
        %v3975 = vpop.permute.xlu0 %3974
        %3976 = vrot.lane.b32.xlu0 %v3958, 32
        %v3977 = vpop.permute.xlu0 %3976
        %3978 = vrot.lane.b32.xlu0 %v3959, 32
        %v3979 = vpop.permute.xlu0 %3978
        %3980 = vrot.lane.b32.xlu0 %v3960, 32
        %v3981 = vpop.permute.xlu0 %3980
        %3982 = vrot.lane.b32.xlu0 %v3961, 32
        %v3983 = vpop.permute.xlu0 %3982
        %3984 = vrot.lane.b32.xlu0 %v3962, 32
        %v3985 = vpop.permute.xlu0 %3984
        %3986 = vrot.lane.b32.xlu0 %v3963, 32
        %v3987 = vpop.permute.xlu0 %3986
        %vm3996 = vcmask 523520
        %3997 = vst.msk [vmem:[#allocation5] sm:$0xff] %vm3996, %v3973
        %3998 = vst.msk [vmem:[#allocation5 + $0x18] sm:$0xff] %vm3996, %v3975
        %3999 = vst.msk [vmem:[#allocation5 + $0x30] sm:$0xff] %vm3996, %v3977
        %4000 = vst.msk [vmem:[#allocation5 + $0x48] sm:$0xff] %vm3996, %v3979
        %4001 = vst.msk [vmem:[#allocation5 + $0x60] sm:$0xff] %vm3996, %v3981
        %4002 = vst.msk [vmem:[#allocation5 + $0x78] sm:$0xff] %vm3996, %v3983
        %4003 = vst.msk [vmem:[#allocation5 + $0x90] sm:$0xff] %vm3996, %v3985
        %4004 = vst.msk [vmem:[#allocation5 + $0xa8] sm:$0xff] %vm3996, %v3987
        %v4005 = vld [vmem:[#allocation4 + $0x2] sm:$0xff]
        %v4006 = vld [vmem:[#allocation4 + $0x12] sm:$0xff]
        %v4007 = vld [vmem:[#allocation4 + $0x22] sm:$0xff]
        %v4008 = vld [vmem:[#allocation4 + $0x32] sm:$0xff]
        %v4009 = vld [vmem:[#allocation4 + $0x42] sm:$0xff]
        %v4010 = vld [vmem:[#allocation4 + $0x52] sm:$0xff]
        %v4011 = vld [vmem:[#allocation4 + $0x62] sm:$0xff]
        %v4012 = vld [vmem:[#allocation4 + $0x72] sm:$0xff]
        %4021 = vrot.lane.b32.xlu0 %v4005, 64
        %v4022 = vpop.permute.xlu0 %4021
        %4023 = vrot.lane.b32.xlu0 %v4006, 64
        %v4024 = vpop.permute.xlu0 %4023
        %4025 = vrot.lane.b32.xlu0 %v4007, 64
        %v4026 = vpop.permute.xlu0 %4025
        %4027 = vrot.lane.b32.xlu0 %v4008, 64
        %v4028 = vpop.permute.xlu0 %4027
        %4029 = vrot.lane.b32.xlu0 %v4009, 64
        %v4030 = vpop.permute.xlu0 %4029
        %4031 = vrot.lane.b32.xlu0 %v4010, 64
        %v4032 = vpop.permute.xlu0 %4031
        %4033 = vrot.lane.b32.xlu0 %v4011, 64
        %v4034 = vpop.permute.xlu0 %4033
        %4035 = vrot.lane.b32.xlu0 %v4012, 64
        %v4036 = vpop.permute.xlu0 %4035
        %vm4045 = vcmask 785920
        %4046 = vst.msk [vmem:[#allocation5] sm:$0xff] %vm4045, %v4022
        %4047 = vst.msk [vmem:[#allocation5 + $0x18] sm:$0xff] %vm4045, %v4024
        %4048 = vst.msk [vmem:[#allocation5 + $0x30] sm:$0xff] %vm4045, %v4026
        %4049 = vst.msk [vmem:[#allocation5 + $0x48] sm:$0xff] %vm4045, %v4028
        %4050 = vst.msk [vmem:[#allocation5 + $0x60] sm:$0xff] %vm4045, %v4030
        %4051 = vst.msk [vmem:[#allocation5 + $0x78] sm:$0xff] %vm4045, %v4032
        %4052 = vst.msk [vmem:[#allocation5 + $0x90] sm:$0xff] %vm4045, %v4034
        %4053 = vst.msk [vmem:[#allocation5 + $0xa8] sm:$0xff] %vm4045, %v4036
        %v4054 = vld [vmem:[%s3931] sm:$0xff]
        %v4055 = vld [vmem:[%s3931 + $0x10] sm:$0xff]
        %v4056 = vld [vmem:[%s3931 + $0x20] sm:$0xff]
        %v4057 = vld [vmem:[%s3931 + $0x30] sm:$0xff]
        %v4058 = vld [vmem:[%s3931 + $0x40] sm:$0xff]
        %v4059 = vld [vmem:[%s3931 + $0x50] sm:$0xff]
        %v4060 = vld [vmem:[%s3931 + $0x60] sm:$0xff]
        %v4061 = vld [vmem:[%s3931 + $0x70] sm:$0xff]
        %4070 = vrot.lane.b32.xlu0 %v4054, 96
        %v4071 = vpop.permute.xlu0 %4070
        %4072 = vrot.lane.b32.xlu0 %v4055, 96
        %v4073 = vpop.permute.xlu0 %4072
        %4074 = vrot.lane.b32.xlu0 %v4056, 96
        %v4075 = vpop.permute.xlu0 %4074
        %4076 = vrot.lane.b32.xlu0 %v4057, 96
        %v4077 = vpop.permute.xlu0 %4076
        %4078 = vrot.lane.b32.xlu0 %v4058, 96
        %v4079 = vpop.permute.xlu0 %4078
        %4080 = vrot.lane.b32.xlu0 %v4059, 96
        %v4081 = vpop.permute.xlu0 %4080
        %4082 = vrot.lane.b32.xlu0 %v4060, 96
        %v4083 = vpop.permute.xlu0 %4082
        %4084 = vrot.lane.b32.xlu0 %v4061, 96
        %v4085 = vpop.permute.xlu0 %4084
        %vm4094 = vcmask 1048320
        %4095 = vst.msk [vmem:[#allocation5] sm:$0xff] %vm4094, %v4071
        %4096 = vst.msk [vmem:[#allocation5 + $0x18] sm:$0xff] %vm4094, %v4073
        %4097 = vst.msk [vmem:[#allocation5 + $0x30] sm:$0xff] %vm4094, %v4075
        %4098 = vst.msk [vmem:[#allocation5 + $0x48] sm:$0xff] %vm4094, %v4077
        %4099 = vst.msk [vmem:[#allocation5 + $0x60] sm:$0xff] %vm4094, %v4079
        %4100 = vst.msk [vmem:[#allocation5 + $0x78] sm:$0xff] %vm4094, %v4081
        %4101 = vst.msk [vmem:[#allocation5 + $0x90] sm:$0xff] %vm4094, %v4083
        %4102 = vst.msk [vmem:[#allocation5 + $0xa8] sm:$0xff] %vm4094, %v4085
        %v4103 = vld [vmem:[%s3931 + $0x1] sm:$0xff]
        %v4104 = vld [vmem:[%s3931 + $0x11] sm:$0xff]
        %v4105 = vld [vmem:[%s3931 + $0x21] sm:$0xff]
        %v4106 = vld [vmem:[%s3931 + $0x31] sm:$0xff]
        %v4107 = vld [vmem:[%s3931 + $0x41] sm:$0xff]
        %v4108 = vld [vmem:[%s3931 + $0x51] sm:$0xff]
        %v4109 = vld [vmem:[%s3931 + $0x61] sm:$0xff]
        %v4110 = vld [vmem:[%s3931 + $0x71] sm:$0xff]
        %4111 = vst.msk [vmem:[#allocation5 + $0x8] sm:$0xff] %vm3719, %v4103
        %4112 = vst.msk [vmem:[#allocation5 + $0x20] sm:$0xff] %vm3719, %v4104
        %4113 = vst.msk [vmem:[#allocation5 + $0x38] sm:$0xff] %vm3719, %v4105
        %4114 = vst.msk [vmem:[#allocation5 + $0x50] sm:$0xff] %vm3719, %v4106
        %4115 = vst.msk [vmem:[#allocation5 + $0x68] sm:$0xff] %vm3719, %v4107
        %4116 = vst.msk [vmem:[#allocation5 + $0x80] sm:$0xff] %vm3719, %v4108
        %4117 = vst.msk [vmem:[#allocation5 + $0x98] sm:$0xff] %vm3719, %v4109
        %4118 = vst.msk [vmem:[#allocation5 + $0xb0] sm:$0xff] %vm3719, %v4110
        %v4119 = vld [vmem:[%s3931 + $0x2] sm:$0xff]
        %v4120 = vld [vmem:[%s3931 + $0x12] sm:$0xff]
        %v4121 = vld [vmem:[%s3931 + $0x22] sm:$0xff]
        %v4122 = vld [vmem:[%s3931 + $0x32] sm:$0xff]
        %v4123 = vld [vmem:[%s3931 + $0x42] sm:$0xff]
        %v4124 = vld [vmem:[%s3931 + $0x52] sm:$0xff]
        %v4125 = vld [vmem:[%s3931 + $0x62] sm:$0xff]
        %v4126 = vld [vmem:[%s3931 + $0x72] sm:$0xff]
        %4135 = vrot.lane.b32.xlu0 %v4119, 32
        %v4136 = vpop.permute.xlu0 %4135
        %4137 = vrot.lane.b32.xlu0 %v4120, 32
        %v4138 = vpop.permute.xlu0 %4137
        %4139 = vrot.lane.b32.xlu0 %v4121, 32
        %v4140 = vpop.permute.xlu0 %4139
        %4141 = vrot.lane.b32.xlu0 %v4122, 32
        %v4142 = vpop.permute.xlu0 %4141
        %4143 = vrot.lane.b32.xlu0 %v4123, 32
        %v4144 = vpop.permute.xlu0 %4143
        %4145 = vrot.lane.b32.xlu0 %v4124, 32
        %v4146 = vpop.permute.xlu0 %4145
        %4147 = vrot.lane.b32.xlu0 %v4125, 32
        %v4148 = vpop.permute.xlu0 %4147
        %4149 = vrot.lane.b32.xlu0 %v4126, 32
        %v4150 = vpop.permute.xlu0 %4149
        %4159 = vst.msk [vmem:[#allocation5 + $0x8] sm:$0xff] %vm3996, %v4136
        %4160 = vst.msk [vmem:[#allocation5 + $0x20] sm:$0xff] %vm3996, %v4138
        %4161 = vst.msk [vmem:[#allocation5 + $0x38] sm:$0xff] %vm3996, %v4140
        %4162 = vst.msk [vmem:[#allocation5 + $0x50] sm:$0xff] %vm3996, %v4142
        %4163 = vst.msk [vmem:[#allocation5 + $0x68] sm:$0xff] %vm3996, %v4144
        %4164 = vst.msk [vmem:[#allocation5 + $0x80] sm:$0xff] %vm3996, %v4146
        %4165 = vst.msk [vmem:[#allocation5 + $0x98] sm:$0xff] %vm3996, %v4148
        %4166 = vst.msk [vmem:[#allocation5 + $0xb0] sm:$0xff] %vm3996, %v4150
        %s4167 = scalar_lea.vmem [#allocation4], 32
        %v4168 = vld [vmem:[%s4167] sm:$0xff]
        %v4169 = vld [vmem:[%s4167 + $0x10] sm:$0xff]
        %v4170 = vld [vmem:[%s4167 + $0x20] sm:$0xff]
        %v4171 = vld [vmem:[%s4167 + $0x30] sm:$0xff]
        %v4172 = vld [vmem:[%s4167 + $0x40] sm:$0xff]
        %v4173 = vld [vmem:[%s4167 + $0x50] sm:$0xff]
        %v4174 = vld [vmem:[%s4167 + $0x60] sm:$0xff]
        %v4175 = vld [vmem:[%s4167 + $0x70] sm:$0xff]
        %4184 = vrot.lane.b32.xlu0 %v4168, 64
        %v4185 = vpop.permute.xlu0 %4184
        %4186 = vrot.lane.b32.xlu0 %v4169, 64
        %v4187 = vpop.permute.xlu0 %4186
        %4188 = vrot.lane.b32.xlu0 %v4170, 64
        %v4189 = vpop.permute.xlu0 %4188
        %4190 = vrot.lane.b32.xlu0 %v4171, 64
        %v4191 = vpop.permute.xlu0 %4190
        %4192 = vrot.lane.b32.xlu0 %v4172, 64
        %v4193 = vpop.permute.xlu0 %4192
        %4194 = vrot.lane.b32.xlu0 %v4173, 64
        %v4195 = vpop.permute.xlu0 %4194
        %4196 = vrot.lane.b32.xlu0 %v4174, 64
        %v4197 = vpop.permute.xlu0 %4196
        %4198 = vrot.lane.b32.xlu0 %v4175, 64
        %v4199 = vpop.permute.xlu0 %4198
        %4208 = vst.msk [vmem:[#allocation5 + $0x8] sm:$0xff] %vm4045, %v4185
        %4209 = vst.msk [vmem:[#allocation5 + $0x20] sm:$0xff] %vm4045, %v4187
        %4210 = vst.msk [vmem:[#allocation5 + $0x38] sm:$0xff] %vm4045, %v4189
        %4211 = vst.msk [vmem:[#allocation5 + $0x50] sm:$0xff] %vm4045, %v4191
        %4212 = vst.msk [vmem:[#allocation5 + $0x68] sm:$0xff] %vm4045, %v4193
        %4213 = vst.msk [vmem:[#allocation5 + $0x80] sm:$0xff] %vm4045, %v4195
        %4214 = vst.msk [vmem:[#allocation5 + $0x98] sm:$0xff] %vm4045, %v4197
        %4215 = vst.msk [vmem:[#allocation5 + $0xb0] sm:$0xff] %vm4045, %v4199
        %v4216 = vld [vmem:[%s4167 + $0x1] sm:$0xff]
        %v4217 = vld [vmem:[%s4167 + $0x11] sm:$0xff]
        %v4218 = vld [vmem:[%s4167 + $0x21] sm:$0xff]
        %v4219 = vld [vmem:[%s4167 + $0x31] sm:$0xff]
        %v4220 = vld [vmem:[%s4167 + $0x41] sm:$0xff]
        %v4221 = vld [vmem:[%s4167 + $0x51] sm:$0xff]
        %v4222 = vld [vmem:[%s4167 + $0x61] sm:$0xff]
        %v4223 = vld [vmem:[%s4167 + $0x71] sm:$0xff]
        %4232 = vrot.lane.b32.xlu0 %v4216, 96
        %v4233 = vpop.permute.xlu0 %4232
        %4234 = vrot.lane.b32.xlu0 %v4217, 96
        %v4235 = vpop.permute.xlu0 %4234
        %4236 = vrot.lane.b32.xlu0 %v4218, 96
        %v4237 = vpop.permute.xlu0 %4236
        %4238 = vrot.lane.b32.xlu0 %v4219, 96
        %v4239 = vpop.permute.xlu0 %4238
        %4240 = vrot.lane.b32.xlu0 %v4220, 96
        %v4241 = vpop.permute.xlu0 %4240
        %4242 = vrot.lane.b32.xlu0 %v4221, 96
        %v4243 = vpop.permute.xlu0 %4242
        %4244 = vrot.lane.b32.xlu0 %v4222, 96
        %v4245 = vpop.permute.xlu0 %4244
        %4246 = vrot.lane.b32.xlu0 %v4223, 96
        %v4247 = vpop.permute.xlu0 %4246
        %4256 = vst.msk [vmem:[#allocation5 + $0x8] sm:$0xff] %vm4094, %v4233
        %4257 = vst.msk [vmem:[#allocation5 + $0x20] sm:$0xff] %vm4094, %v4235
        %4258 = vst.msk [vmem:[#allocation5 + $0x38] sm:$0xff] %vm4094, %v4237
        %4259 = vst.msk [vmem:[#allocation5 + $0x50] sm:$0xff] %vm4094, %v4239
        %4260 = vst.msk [vmem:[#allocation5 + $0x68] sm:$0xff] %vm4094, %v4241
        %4261 = vst.msk [vmem:[#allocation5 + $0x80] sm:$0xff] %vm4094, %v4243
        %4262 = vst.msk [vmem:[#allocation5 + $0x98] sm:$0xff] %vm4094, %v4245
        %4263 = vst.msk [vmem:[#allocation5 + $0xb0] sm:$0xff] %vm4094, %v4247
        %v4264 = vld [vmem:[%s4167 + $0x2] sm:$0xff]
        %v4265 = vld [vmem:[%s4167 + $0x12] sm:$0xff]
        %v4266 = vld [vmem:[%s4167 + $0x22] sm:$0xff]
        %v4267 = vld [vmem:[%s4167 + $0x32] sm:$0xff]
        %v4268 = vld [vmem:[%s4167 + $0x42] sm:$0xff]
        %v4269 = vld [vmem:[%s4167 + $0x52] sm:$0xff]
        %v4270 = vld [vmem:[%s4167 + $0x62] sm:$0xff]
        %v4271 = vld [vmem:[%s4167 + $0x72] sm:$0xff]
        %4272 = vst.msk [vmem:[#allocation5 + $0x10] sm:$0xff] %vm3719, %v4264
        %4273 = vst.msk [vmem:[#allocation5 + $0x28] sm:$0xff] %vm3719, %v4265
        %4274 = vst.msk [vmem:[#allocation5 + $0x40] sm:$0xff] %vm3719, %v4266
        %4275 = vst.msk [vmem:[#allocation5 + $0x58] sm:$0xff] %vm3719, %v4267
        %4276 = vst.msk [vmem:[#allocation5 + $0x70] sm:$0xff] %vm3719, %v4268
        %4277 = vst.msk [vmem:[#allocation5 + $0x88] sm:$0xff] %vm3719, %v4269
        %4278 = vst.msk [vmem:[#allocation5 + $0xa0] sm:$0xff] %vm3719, %v4270
        %4279 = vst.msk [vmem:[#allocation5 + $0xb8] sm:$0xff] %vm3719, %v4271
        %v4280 = vld [vmem:[#allocation5] sm:$0xff]
        %v4281 = vld [vmem:[#allocation5 + $0x8] sm:$0xff]
        %v4282 = vld [vmem:[#allocation5 + $0x10] sm:$0xff]
        %v4283 = vld [vmem:[#allocation5 + $0x18] sm:$0xff]
        %v4284 = vld [vmem:[#allocation5 + $0x20] sm:$0xff]
        %v4285 = vld [vmem:[#allocation5 + $0x28] sm:$0xff]
        %v4286 = vld [vmem:[#allocation5 + $0x30] sm:$0xff]
        %v4287 = vld [vmem:[#allocation5 + $0x38] sm:$0xff]
        %v4288 = vld [vmem:[#allocation5 + $0x40] sm:$0xff]
        %v4289 = vld [vmem:[#allocation5 + $0x48] sm:$0xff]
        %v4290 = vld [vmem:[#allocation5 + $0x50] sm:$0xff]
        %v4291 = vld [vmem:[#allocation5 + $0x58] sm:$0xff]
        %v4292 = vld [vmem:[#allocation5 + $0x60] sm:$0xff]
        %v4293 = vld [vmem:[#allocation5 + $0x68] sm:$0xff]
        %v4294 = vld [vmem:[#allocation5 + $0x70] sm:$0xff]
        %v4295 = vld [vmem:[#allocation5 + $0x78] sm:$0xff]
        %v4296 = vld [vmem:[#allocation5 + $0x80] sm:$0xff]
        %v4297 = vld [vmem:[#allocation5 + $0x88] sm:$0xff]
        %v4298 = vld [vmem:[#allocation5 + $0x90] sm:$0xff]
        %v4299 = vld [vmem:[#allocation5 + $0x98] sm:$0xff]
        %v4300 = vld [vmem:[#allocation5 + $0xa0] sm:$0xff]
        %v4301 = vld [vmem:[#allocation5 + $0xa8] sm:$0xff]
        %v4302 = vld [vmem:[#allocation5 + $0xb0] sm:$0xff]
        %v4303 = vld [vmem:[#allocation5 + $0xb8] sm:$0xff]
        %v4304 = vld [vmem:[%s3] sm:$0xff]
        %v4305 = vld [vmem:[%s3 + $0x8] sm:$0xff]
        %v4306 = vld [vmem:[%s3 + $0x10] sm:$0xff]
        %v4307 = vld [vmem:[%s3 + $0x18] sm:$0xff]
        %v4308 = vld [vmem:[%s3 + $0x20] sm:$0xff]
        %v4309 = vld [vmem:[%s3 + $0x28] sm:$0xff]
        %v4310 = vld [vmem:[%s3 + $0x30] sm:$0xff]
        %v4311 = vld [vmem:[%s3 + $0x38] sm:$0xff]
        %v4312 = vld [vmem:[%s3 + $0x40] sm:$0xff]
        %v4313 = vld [vmem:[%s3 + $0x48] sm:$0xff]
        %v4314 = vld [vmem:[%s3 + $0x50] sm:$0xff]
        %v4315 = vld [vmem:[%s3 + $0x58] sm:$0xff]
        %v4316 = vld [vmem:[%s3 + $0x60] sm:$0xff]
        %v4317 = vld [vmem:[%s3 + $0x68] sm:$0xff]
        %v4318 = vld [vmem:[%s3 + $0x70] sm:$0xff]
        %v4319 = vld [vmem:[%s3 + $0x78] sm:$0xff]
        %v4320 = vld [vmem:[%s3 + $0x80] sm:$0xff]
        %v4321 = vld [vmem:[%s3 + $0x88] sm:$0xff]
        %v4322 = vld [vmem:[%s3 + $0x90] sm:$0xff]
        %v4323 = vld [vmem:[%s3 + $0x98] sm:$0xff]
        %v4324 = vld [vmem:[%s3 + $0xa0] sm:$0xff]
        %v4325 = vld [vmem:[%s3 + $0xa8] sm:$0xff]
        %v4326 = vld [vmem:[%s3 + $0xb0] sm:$0xff]
        %v4327 = vld [vmem:[%s3 + $0xb8] sm:$0xff]
        %v4328 = vld [vmem:[%s3 + $0xc0] sm:$0xff]
        %v4329 = vld [vmem:[%s3 + $0xc8] sm:$0xff]
        %v4330 = vld [vmem:[%s3 + $0xd0] sm:$0xff]
        %v4331 = vld [vmem:[%s3 + $0xd8] sm:$0xff]
        %v4332 = vld [vmem:[%s3 + $0xe0] sm:$0xff]
        %v4333 = vld [vmem:[%s3 + $0xe8] sm:$0xff]
        %v4334 = vld [vmem:[%s3 + $0xf0] sm:$0xff]
        %v4335 = vld [vmem:[%s3 + $0xf8] sm:$0xff]
        %v4336 = vld [vmem:[%s3 + $0x100] sm:$0xff]
        %v4337 = vld [vmem:[%s3 + $0x108] sm:$0xff]
        %v4338 = vld [vmem:[%s3 + $0x110] sm:$0xff]
        %v4339 = vld [vmem:[%s3 + $0x118] sm:$0xff]
        %v4341 = vsel %vm3719, %v4282, 0
        %v4344 = vsel %vm3719, %v4285, 0
        %v4347 = vsel %vm3719, %v4288, 0
        %v4350 = vsel %vm3719, %v4291, 0
        %v4353 = vsel %vm3719, %v4294, 0
        %v4356 = vsel %vm3719, %v4297, 0
        %v4359 = vsel %vm3719, %v4300, 0
        %v4362 = vsel %vm3719, %v4303, 0
        %4364 = vmatpush.msra.mxu0 %v4319
        %4365 = vmatpush.msra.mxu0 %v4318
        %4366 = vmatpush.msra.mxu0 %v4317
        %4367 = vmatpush.msra.mxu0 %v4316
        %4368 = vmatpush.msra.mxu0 %v4315
        %4369 = vmatpush.msra.mxu0 %v4314
        %4370 = vmatpush.msra.mxu0 %v4313
        %4371 = vmatpush.msra.mxu0 %v4312
        %4372 = vmatpush.msra.mxu0 %v4311
        %4373 = vmatpush.msra.mxu0 %v4310
        %4374 = vmatpush.msra.mxu0 %v4309
        %4375 = vmatpush.msra.mxu0 %v4308
        %4376 = vmatpush.msra.mxu0 %v4307
        %4377 = vmatpush.msra.mxu0 %v4306
        %4378 = vmatpush.msra.mxu0 %v4305
        %4379 = vmatpush.msra.mxu0 %v4304
        %4380 = vmatmul.f32.gmra.mxu0 %v4280
        %v4381 = vpop.f32.mrf.mxu0
        %v4382 = vadd.f32 0.0, %v4381
        %4383 = vmatmul.f32.gmra.mxu0 %v4283
        %v4384 = vpop.f32.mrf.mxu0
        %v4385 = vadd.f32 0.0, %v4384
        %4386 = vmatmul.f32.gmra.mxu0 %v4286
        %v4387 = vpop.f32.mrf.mxu0
        %v4388 = vadd.f32 0.0, %v4387
        %4389 = vmatmul.f32.gmra.mxu0 %v4289
        %v4390 = vpop.f32.mrf.mxu0
        %v4391 = vadd.f32 0.0, %v4390
        %4392 = vmatmul.f32.gmra.mxu0 %v4292
        %v4393 = vpop.f32.mrf.mxu0
        %v4394 = vadd.f32 0.0, %v4393
        %4395 = vmatmul.f32.gmra.mxu0 %v4295
        %v4396 = vpop.f32.mrf.mxu0
        %v4397 = vadd.f32 0.0, %v4396
        %4398 = vmatmul.f32.gmra.mxu0 %v4298
        %v4399 = vpop.f32.mrf.mxu0
        %v4400 = vadd.f32 0.0, %v4399
        %4401 = vmatmul.f32.gmra.mxu0 %v4301
        %v4402 = vpop.f32.mrf.mxu0
        %v4403 = vadd.f32 0.0, %v4402
        %4404 = vdwg.mxu0
        %4405 = vmatpush.msra.mxu0 %v4335
        %4406 = vmatpush.msra.mxu0 %v4334
        %4407 = vmatpush.msra.mxu0 %v4333
        %4408 = vmatpush.msra.mxu0 %v4332
        %4409 = vmatpush.msra.mxu0 %v4331
        %4410 = vmatpush.msra.mxu0 %v4330
        %4411 = vmatpush.msra.mxu0 %v4329
        %4412 = vmatpush.msra.mxu0 %v4328
        %4413 = vmatpush.msra.mxu0 %v4327
        %4414 = vmatpush.msra.mxu0 %v4326
        %4415 = vmatpush.msra.mxu0 %v4325
        %4416 = vmatpush.msra.mxu0 %v4324
        %4417 = vmatpush.msra.mxu0 %v4323
        %4418 = vmatpush.msra.mxu0 %v4322
        %4419 = vmatpush.msra.mxu0 %v4321
        %4420 = vmatpush.msra.mxu0 %v4320
        %4421 = vmatmul.f32.gmra.mxu0 %v4281
        %v4422 = vpop.f32.mrf.mxu0
        %v4423 = vadd.f32 %v4382, %v4422
        %4424 = vmatmul.f32.gmra.mxu0 %v4284
        %v4425 = vpop.f32.mrf.mxu0
        %v4426 = vadd.f32 %v4385, %v4425
        %4427 = vmatmul.f32.gmra.mxu0 %v4287
        %v4428 = vpop.f32.mrf.mxu0
        %v4429 = vadd.f32 %v4388, %v4428
        %4430 = vmatmul.f32.gmra.mxu0 %v4290
        %v4431 = vpop.f32.mrf.mxu0
        %v4432 = vadd.f32 %v4391, %v4431
        %4433 = vmatmul.f32.gmra.mxu0 %v4293
        %v4434 = vpop.f32.mrf.mxu0
        %v4435 = vadd.f32 %v4394, %v4434
        %4436 = vmatmul.f32.gmra.mxu0 %v4296
        %v4437 = vpop.f32.mrf.mxu0
        %v4438 = vadd.f32 %v4397, %v4437
        %4439 = vmatmul.f32.gmra.mxu0 %v4299
        %v4440 = vpop.f32.mrf.mxu0
        %v4441 = vadd.f32 %v4400, %v4440
        %4442 = vmatmul.f32.gmra.mxu0 %v4302
        %v4443 = vpop.f32.mrf.mxu0
        %v4444 = vadd.f32 %v4403, %v4443
        %4445 = vdwg.mxu0
        %4446 = vmatpush.msra.mxu0 0.0
        %4447 = vmatpush.msra.mxu0 0.0
        %4448 = vmatpush.msra.mxu0 0.0
        %4449 = vmatpush.msra.mxu0 0.0
        %4450 = vmatpush.msra.mxu0 0.0
        %4451 = vmatpush.msra.mxu0 0.0
        %4452 = vmatpush.msra.mxu0 0.0
        %4453 = vmatpush.msra.mxu0 0.0
        %4454 = vmatpush.msra.mxu0 0.0
        %4455 = vmatpush.msra.mxu0 0.0
        %4456 = vmatpush.msra.mxu0 0.0
        %4457 = vmatpush.msra.mxu0 0.0
        %4458 = vmatpush.msra.mxu0 %v4339
        %4459 = vmatpush.msra.mxu0 %v4338
        %4460 = vmatpush.msra.mxu0 %v4337
        %4461 = vmatpush.msra.mxu0 %v4336
        %4462 = vmatmul.f32.gmra.mxu0 %v4341
        %v4463 = vpop.f32.mrf.mxu0
        %v4464 = vadd.f32 %v4423, %v4463
        %4465 = vmatmul.f32.gmra.mxu0 %v4344
        %v4466 = vpop.f32.mrf.mxu0
        %v4467 = vadd.f32 %v4426, %v4466
        %4468 = vmatmul.f32.gmra.mxu0 %v4347
        %v4469 = vpop.f32.mrf.mxu0
        %v4470 = vadd.f32 %v4429, %v4469
        %4471 = vmatmul.f32.gmra.mxu0 %v4350
        %v4472 = vpop.f32.mrf.mxu0
        %v4473 = vadd.f32 %v4432, %v4472
        %4474 = vmatmul.f32.gmra.mxu0 %v4353
        %v4475 = vpop.f32.mrf.mxu0
        %v4476 = vadd.f32 %v4435, %v4475
        %4477 = vmatmul.f32.gmra.mxu0 %v4356
        %v4478 = vpop.f32.mrf.mxu0
        %v4479 = vadd.f32 %v4438, %v4478
        %4480 = vmatmul.f32.gmra.mxu0 %v4359
        %v4481 = vpop.f32.mrf.mxu0
        %v4482 = vadd.f32 %v4441, %v4481
        %4483 = vmatmul.f32.gmra.mxu0 %v4362
        %v4484 = vpop.f32.mrf.mxu0
        %v4485 = vadd.f32 %v4444, %v4484
        %4486 = vdwg.mxu0
        %v4495 = vrot.slane %v4464, 2
        %v4496 = vrot.slane %v4464, 4
        %v4497 = vrot.slane %v4464, 6
        %v4498 = vrot.slane %v4467, 2
        %v4499 = vrot.slane %v4467, 4
        %v4500 = vrot.slane %v4467, 6
        %v4501 = vrot.slane %v4470, 2
        %v4502 = vrot.slane %v4470, 4
        %v4503 = vrot.slane %v4470, 6
        %v4504 = vrot.slane %v4473, 2
        %v4505 = vrot.slane %v4473, 4
        %v4506 = vrot.slane %v4473, 6
        %v4507 = vrot.slane %v4476, 2
        %v4508 = vrot.slane %v4476, 4
        %v4509 = vrot.slane %v4476, 6
        %v4510 = vrot.slane %v4479, 2
        %v4511 = vrot.slane %v4479, 4
        %v4512 = vrot.slane %v4479, 6
        %v4513 = vrot.slane %v4482, 2
        %v4514 = vrot.slane %v4482, 4
        %v4515 = vrot.slane %v4482, 6
        %v4516 = vrot.slane %v4485, 2
        %v4517 = vrot.slane %v4485, 4
        %v4518 = vrot.slane %v4485, 6
        %vm4543 = vcmask 517120
        %v4544 = vsel %vm4543, %v4464, -inf
        %v4545 = vrot.slane %v4544, 4
        %v4546 = vmax.f32 %v4544, %v4545
        %v4547 = vrot.slane %v4546, 2
        %v4548 = vmax.f32 %v4546, %v4547
        %v4549 = vrot.slane %v4548, 1
        %v4550 = vmax.f32 %v4548, %v4549
        %v4551 = vsel %vm4543, %v4495, -inf
        %v4552 = vrot.slane %v4551, 4
        %v4553 = vmax.f32 %v4551, %v4552
        %v4554 = vrot.slane %v4553, 2
        %v4555 = vmax.f32 %v4553, %v4554
        %v4556 = vrot.slane %v4555, 1
        %v4557 = vmax.f32 %v4555, %v4556
        %v4558 = vsel %vm4543, %v4496, -inf
        %v4559 = vrot.slane %v4558, 4
        %v4560 = vmax.f32 %v4558, %v4559
        %v4561 = vrot.slane %v4560, 2
        %v4562 = vmax.f32 %v4560, %v4561
        %v4563 = vrot.slane %v4562, 1
        %v4564 = vmax.f32 %v4562, %v4563
        %v4565 = vsel %vm4543, %v4497, -inf
        %v4566 = vrot.slane %v4565, 4
        %v4567 = vmax.f32 %v4565, %v4566
        %v4568 = vrot.slane %v4567, 2
        %v4569 = vmax.f32 %v4567, %v4568
        %v4570 = vrot.slane %v4569, 1
        %v4571 = vmax.f32 %v4569, %v4570
        %v4572 = vsel %vm4543, %v4467, -inf
        %v4573 = vrot.slane %v4572, 4
        %v4574 = vmax.f32 %v4572, %v4573
        %v4575 = vrot.slane %v4574, 2
        %v4576 = vmax.f32 %v4574, %v4575
        %v4577 = vrot.slane %v4576, 1
        %v4578 = vmax.f32 %v4576, %v4577
        %v4579 = vsel %vm4543, %v4498, -inf
        %v4580 = vrot.slane %v4579, 4
        %v4581 = vmax.f32 %v4579, %v4580
        %v4582 = vrot.slane %v4581, 2
        %v4583 = vmax.f32 %v4581, %v4582
        %v4584 = vrot.slane %v4583, 1
        %v4585 = vmax.f32 %v4583, %v4584
        %v4586 = vsel %vm4543, %v4499, -inf
        %v4587 = vrot.slane %v4586, 4
        %v4588 = vmax.f32 %v4586, %v4587
        %v4589 = vrot.slane %v4588, 2
        %v4590 = vmax.f32 %v4588, %v4589
        %v4591 = vrot.slane %v4590, 1
        %v4592 = vmax.f32 %v4590, %v4591
        %v4593 = vsel %vm4543, %v4500, -inf
        %v4594 = vrot.slane %v4593, 4
        %v4595 = vmax.f32 %v4593, %v4594
        %v4596 = vrot.slane %v4595, 2
        %v4597 = vmax.f32 %v4595, %v4596
        %v4598 = vrot.slane %v4597, 1
        %v4599 = vmax.f32 %v4597, %v4598
        %v4600 = vsel %vm4543, %v4470, -inf
        %v4601 = vrot.slane %v4600, 4
        %v4602 = vmax.f32 %v4600, %v4601
        %v4603 = vrot.slane %v4602, 2
        %v4604 = vmax.f32 %v4602, %v4603
        %v4605 = vrot.slane %v4604, 1
        %v4606 = vmax.f32 %v4604, %v4605
        %v4607 = vsel %vm4543, %v4501, -inf
        %v4608 = vrot.slane %v4607, 4
        %v4609 = vmax.f32 %v4607, %v4608
        %v4610 = vrot.slane %v4609, 2
        %v4611 = vmax.f32 %v4609, %v4610
        %v4612 = vrot.slane %v4611, 1
        %v4613 = vmax.f32 %v4611, %v4612
        %v4614 = vsel %vm4543, %v4502, -inf
        %v4615 = vrot.slane %v4614, 4
        %v4616 = vmax.f32 %v4614, %v4615
        %v4617 = vrot.slane %v4616, 2
        %v4618 = vmax.f32 %v4616, %v4617
        %v4619 = vrot.slane %v4618, 1
        %v4620 = vmax.f32 %v4618, %v4619
        %v4621 = vsel %vm4543, %v4503, -inf
        %v4622 = vrot.slane %v4621, 4
        %v4623 = vmax.f32 %v4621, %v4622
        %v4624 = vrot.slane %v4623, 2
        %v4625 = vmax.f32 %v4623, %v4624
        %v4626 = vrot.slane %v4625, 1
        %v4627 = vmax.f32 %v4625, %v4626
        %v4628 = vsel %vm4543, %v4473, -inf
        %v4629 = vrot.slane %v4628, 4
        %v4630 = vmax.f32 %v4628, %v4629
        %v4631 = vrot.slane %v4630, 2
        %v4632 = vmax.f32 %v4630, %v4631
        %v4633 = vrot.slane %v4632, 1
        %v4634 = vmax.f32 %v4632, %v4633
        %v4635 = vsel %vm4543, %v4504, -inf
        %v4636 = vrot.slane %v4635, 4
        %v4637 = vmax.f32 %v4635, %v4636
        %v4638 = vrot.slane %v4637, 2
        %v4639 = vmax.f32 %v4637, %v4638
        %v4640 = vrot.slane %v4639, 1
        %v4641 = vmax.f32 %v4639, %v4640
        %v4642 = vsel %vm4543, %v4505, -inf
        %v4643 = vrot.slane %v4642, 4
        %v4644 = vmax.f32 %v4642, %v4643
        %v4645 = vrot.slane %v4644, 2
        %v4646 = vmax.f32 %v4644, %v4645
        %v4647 = vrot.slane %v4646, 1
        %v4648 = vmax.f32 %v4646, %v4647
        %v4649 = vsel %vm4543, %v4506, -inf
        %v4650 = vrot.slane %v4649, 4
        %v4651 = vmax.f32 %v4649, %v4650
        %v4652 = vrot.slane %v4651, 2
        %v4653 = vmax.f32 %v4651, %v4652
        %v4654 = vrot.slane %v4653, 1
        %v4655 = vmax.f32 %v4653, %v4654
        %v4656 = vsel %vm4543, %v4476, -inf
        %v4657 = vrot.slane %v4656, 4
        %v4658 = vmax.f32 %v4656, %v4657
        %v4659 = vrot.slane %v4658, 2
        %v4660 = vmax.f32 %v4658, %v4659
        %v4661 = vrot.slane %v4660, 1
        %v4662 = vmax.f32 %v4660, %v4661
        %v4663 = vsel %vm4543, %v4507, -inf
        %v4664 = vrot.slane %v4663, 4
        %v4665 = vmax.f32 %v4663, %v4664
        %v4666 = vrot.slane %v4665, 2
        %v4667 = vmax.f32 %v4665, %v4666
        %v4668 = vrot.slane %v4667, 1
        %v4669 = vmax.f32 %v4667, %v4668
        %v4670 = vsel %vm4543, %v4508, -inf
        %v4671 = vrot.slane %v4670, 4
        %v4672 = vmax.f32 %v4670, %v4671
        %v4673 = vrot.slane %v4672, 2
        %v4674 = vmax.f32 %v4672, %v4673
        %v4675 = vrot.slane %v4674, 1
        %v4676 = vmax.f32 %v4674, %v4675
        %v4677 = vsel %vm4543, %v4509, -inf
        %v4678 = vrot.slane %v4677, 4
        %v4679 = vmax.f32 %v4677, %v4678
        %v4680 = vrot.slane %v4679, 2
        %v4681 = vmax.f32 %v4679, %v4680
        %v4682 = vrot.slane %v4681, 1
        %v4683 = vmax.f32 %v4681, %v4682
        %v4684 = vsel %vm4543, %v4479, -inf
        %v4685 = vrot.slane %v4684, 4
        %v4686 = vmax.f32 %v4684, %v4685
        %v4687 = vrot.slane %v4686, 2
        %v4688 = vmax.f32 %v4686, %v4687
        %v4689 = vrot.slane %v4688, 1
        %v4690 = vmax.f32 %v4688, %v4689
        %v4691 = vsel %vm4543, %v4510, -inf
        %v4692 = vrot.slane %v4691, 4
        %v4693 = vmax.f32 %v4691, %v4692
        %v4694 = vrot.slane %v4693, 2
        %v4695 = vmax.f32 %v4693, %v4694
        %v4696 = vrot.slane %v4695, 1
        %v4697 = vmax.f32 %v4695, %v4696
        %v4698 = vsel %vm4543, %v4511, -inf
        %v4699 = vrot.slane %v4698, 4
        %v4700 = vmax.f32 %v4698, %v4699
        %v4701 = vrot.slane %v4700, 2
        %v4702 = vmax.f32 %v4700, %v4701
        %v4703 = vrot.slane %v4702, 1
        %v4704 = vmax.f32 %v4702, %v4703
        %v4705 = vsel %vm4543, %v4512, -inf
        %v4706 = vrot.slane %v4705, 4
        %v4707 = vmax.f32 %v4705, %v4706
        %v4708 = vrot.slane %v4707, 2
        %v4709 = vmax.f32 %v4707, %v4708
        %v4710 = vrot.slane %v4709, 1
        %v4711 = vmax.f32 %v4709, %v4710
        %v4712 = vsel %vm4543, %v4482, -inf
        %v4713 = vrot.slane %v4712, 4
        %v4714 = vmax.f32 %v4712, %v4713
        %v4715 = vrot.slane %v4714, 2
        %v4716 = vmax.f32 %v4714, %v4715
        %v4717 = vrot.slane %v4716, 1
        %v4718 = vmax.f32 %v4716, %v4717
        %v4719 = vsel %vm4543, %v4513, -inf
        %v4720 = vrot.slane %v4719, 4
        %v4721 = vmax.f32 %v4719, %v4720
        %v4722 = vrot.slane %v4721, 2
        %v4723 = vmax.f32 %v4721, %v4722
        %v4724 = vrot.slane %v4723, 1
        %v4725 = vmax.f32 %v4723, %v4724
        %v4726 = vsel %vm4543, %v4514, -inf
        %v4727 = vrot.slane %v4726, 4
        %v4728 = vmax.f32 %v4726, %v4727
        %v4729 = vrot.slane %v4728, 2
        %v4730 = vmax.f32 %v4728, %v4729
        %v4731 = vrot.slane %v4730, 1
        %v4732 = vmax.f32 %v4730, %v4731
        %v4733 = vsel %vm4543, %v4515, -inf
        %v4734 = vrot.slane %v4733, 4
        %v4735 = vmax.f32 %v4733, %v4734
        %v4736 = vrot.slane %v4735, 2
        %v4737 = vmax.f32 %v4735, %v4736
        %v4738 = vrot.slane %v4737, 1
        %v4739 = vmax.f32 %v4737, %v4738
        %v4740 = vsel %vm4543, %v4485, -inf
        %v4741 = vrot.slane %v4740, 4
        %v4742 = vmax.f32 %v4740, %v4741
        %v4743 = vrot.slane %v4742, 2
        %v4744 = vmax.f32 %v4742, %v4743
        %v4745 = vrot.slane %v4744, 1
        %v4746 = vmax.f32 %v4744, %v4745
        %v4747 = vsel %vm4543, %v4516, -inf
        %v4748 = vrot.slane %v4747, 4
        %v4749 = vmax.f32 %v4747, %v4748
        %v4750 = vrot.slane %v4749, 2
        %v4751 = vmax.f32 %v4749, %v4750
        %v4752 = vrot.slane %v4751, 1
        %v4753 = vmax.f32 %v4751, %v4752
        %v4754 = vsel %vm4543, %v4517, -inf
        %v4755 = vrot.slane %v4754, 4
        %v4756 = vmax.f32 %v4754, %v4755
        %v4757 = vrot.slane %v4756, 2
        %v4758 = vmax.f32 %v4756, %v4757
        %v4759 = vrot.slane %v4758, 1
        %v4760 = vmax.f32 %v4758, %v4759
        %v4761 = vsel %vm4543, %v4518, -inf
        %v4762 = vrot.slane %v4761, 4
        %v4763 = vmax.f32 %v4761, %v4762
        %v4764 = vrot.slane %v4763, 2
        %v4765 = vmax.f32 %v4763, %v4764
        %v4766 = vrot.slane %v4765, 1
        %v4767 = vmax.f32 %v4765, %v4766
        %v4768 = vmax.f32 %v4550, %v4578
        %v4769 = vmax.f32 %v4557, %v4585
        %v4770 = vmax.f32 %v4564, %v4592
        %v4771 = vmax.f32 %v4571, %v4599
        %v4772 = vmax.f32 %v4606, %v4634
        %v4773 = vmax.f32 %v4613, %v4641
        %v4774 = vmax.f32 %v4620, %v4648
        %v4775 = vmax.f32 %v4627, %v4655
        %v4776 = vmax.f32 %v4662, %v4690
        %v4777 = vmax.f32 %v4669, %v4697
        %v4778 = vmax.f32 %v4676, %v4704
        %v4779 = vmax.f32 %v4683, %v4711
        %v4780 = vmax.f32 %v4718, %v4746
        %v4781 = vmax.f32 %v4725, %v4753
        %v4782 = vmax.f32 %v4732, %v4760
        %v4783 = vmax.f32 %v4739, %v4767
        %v4784 = vld [vmem:[#allocation12] sm:$0x1]
        %v4786 = vperm.slane %v4784, 0
        %v4788 = vadd.f32 %v4768, %v4786
        %v4789 = vadd.f32 %v4769, %v4786
        %v4790 = vadd.f32 %v4770, %v4786
        %v4791 = vadd.f32 %v4771, %v4786
        %v4792 = vadd.f32 %v4772, %v4786
        %v4793 = vadd.f32 %v4773, %v4786
        %v4794 = vadd.f32 %v4774, %v4786
        %v4795 = vadd.f32 %v4775, %v4786
        %v4796 = vadd.f32 %v4776, %v4786
        %v4797 = vadd.f32 %v4777, %v4786
        %v4798 = vadd.f32 %v4778, %v4786
        %v4799 = vadd.f32 %v4779, %v4786
        %v4800 = vadd.f32 %v4780, %v4786
        %v4801 = vadd.f32 %v4781, %v4786
        %v4802 = vadd.f32 %v4782, %v4786
        %v4803 = vadd.f32 %v4783, %v4786
        %v4804 = vmax.f32 %v4788, 0.0
        %v4805 = vmax.f32 %v4789, 0.0
        %v4806 = vmax.f32 %v4790, 0.0
        %v4807 = vmax.f32 %v4791, 0.0
        %v4808 = vmax.f32 %v4792, 0.0
        %v4809 = vmax.f32 %v4793, 0.0
        %v4810 = vmax.f32 %v4794, 0.0
        %v4811 = vmax.f32 %v4795, 0.0
        %v4812 = vmax.f32 %v4796, 0.0
        %v4813 = vmax.f32 %v4797, 0.0
        %v4814 = vmax.f32 %v4798, 0.0
        %v4815 = vmax.f32 %v4799, 0.0
        %v4816 = vmax.f32 %v4800, 0.0
        %v4817 = vmax.f32 %v4801, 0.0
        %v4818 = vmax.f32 %v4802, 0.0
        %v4819 = vmax.f32 %v4803, 0.0
        %v4820 = vlaneseq
        %vm4821 = vcmp.ge.s32.totalorder %v4820, 0
        %vm4822 = vcmp.lt.s32.totalorder %v4820, 64
        %vm4823 = vmand %vm4821, %vm4822
        %4824 = vst.msk [vmem:[#allocation6] sm:$0x1] %vm4823, %v4804
        %4826 = vrot.lane.b32.xlu0 %v4805, 64
        %v4827 = vpop.permute.xlu0 %4826
        %vm4829 = vcmp.ge.s32.totalorder %v4820, 64
        %vm4830 = vcmp.lt.s32.totalorder %v4820, 128
        %vm4831 = vmand %vm4829, %vm4830
        %4832 = vst.msk [vmem:[#allocation6] sm:$0x1] %vm4831, %v4827
        %4833 = vst.msk [vmem:[#allocation6 + $0x1] sm:$0x1] %vm4823, %v4806
        %4835 = vrot.lane.b32.xlu0 %v4807, 64
        %v4836 = vpop.permute.xlu0 %4835
        %4838 = vst.msk [vmem:[#allocation6 + $0x1] sm:$0x1] %vm4831, %v4836
        %4839 = vst.msk [vmem:[#allocation6 + $0x2] sm:$0x1] %vm4823, %v4808
        %4841 = vrot.lane.b32.xlu0 %v4809, 64
        %v4842 = vpop.permute.xlu0 %4841
        %4844 = vst.msk [vmem:[#allocation6 + $0x2] sm:$0x1] %vm4831, %v4842
        %4845 = vst.msk [vmem:[#allocation6 + $0x3] sm:$0x1] %vm4823, %v4810
        %4847 = vrot.lane.b32.xlu0 %v4811, 64
        %v4848 = vpop.permute.xlu0 %4847
        %4850 = vst.msk [vmem:[#allocation6 + $0x3] sm:$0x1] %vm4831, %v4848
        %4851 = vst.msk [vmem:[#allocation6 + $0x4] sm:$0x1] %vm4823, %v4812
        %4853 = vrot.lane.b32.xlu0 %v4813, 64
        %v4854 = vpop.permute.xlu0 %4853
        %4856 = vst.msk [vmem:[#allocation6 + $0x4] sm:$0x1] %vm4831, %v4854
        %4857 = vst.msk [vmem:[#allocation6 + $0x5] sm:$0x1] %vm4823, %v4814
        %4859 = vrot.lane.b32.xlu0 %v4815, 64
        %v4860 = vpop.permute.xlu0 %4859
        %4862 = vst.msk [vmem:[#allocation6 + $0x5] sm:$0x1] %vm4831, %v4860
        %4863 = vst.msk [vmem:[#allocation6 + $0x6] sm:$0x1] %vm4823, %v4816
        %4865 = vrot.lane.b32.xlu0 %v4817, 64
        %v4866 = vpop.permute.xlu0 %4865
        %4868 = vst.msk [vmem:[#allocation6 + $0x6] sm:$0x1] %vm4831, %v4866
        %4869 = vst.msk [vmem:[#allocation6 + $0x7] sm:$0x1] %vm4823, %v4818
        %4871 = vrot.lane.b32.xlu0 %v4819, 64
        %v4872 = vpop.permute.xlu0 %4871
        %4874 = vst.msk [vmem:[#allocation6 + $0x7] sm:$0x1] %vm4831, %v4872
        %v4875 = vld [vmem:[#allocation6] sm:$0xff]
        %v4876 = vld [vmem:[#allocation13] sm:$0xff]
        %v4877 = vld [vmem:[#allocation13 + $0x8] sm:$0xff]
        %v4878 = vld [vmem:[#allocation13 + $0x10] sm:$0xff]
        %v4879 = vld [vmem:[#allocation13 + $0x18] sm:$0xff]
        %v4880 = vld [vmem:[#allocation13 + $0x20] sm:$0xff]
        %v4881 = vld [vmem:[#allocation13 + $0x28] sm:$0xff]
        %v4882 = vld [vmem:[#allocation13 + $0x30] sm:$0xff]
        %v4883 = vld [vmem:[#allocation13 + $0x38] sm:$0xff]
        %v4884 = vld [vmem:[#allocation13 + $0x40] sm:$0xff]
        %v4885 = vld [vmem:[#allocation13 + $0x48] sm:$0xff]
        %v4886 = vld [vmem:[#allocation13 + $0x50] sm:$0xff]
        %v4887 = vld [vmem:[#allocation13 + $0x58] sm:$0xff]
        %v4888 = vld [vmem:[#allocation13 + $0x60] sm:$0xff]
        %v4889 = vld [vmem:[#allocation13 + $0x68] sm:$0xff]
        %v4890 = vld [vmem:[#allocation13 + $0x70] sm:$0xff]
        %v4891 = vld [vmem:[#allocation13 + $0x78] sm:$0xff]
        %v4892 = vld [vmem:[#allocation13 + $0x80] sm:$0xff]
        %v4893 = vld [vmem:[#allocation13 + $0x88] sm:$0xff]
        %v4894 = vld [vmem:[#allocation13 + $0x90] sm:$0xff]
        %v4895 = vld [vmem:[#allocation13 + $0x98] sm:$0xff]
        %v4896 = vld [vmem:[#allocation13 + $0xa0] sm:$0xff]
        %v4897 = vld [vmem:[#allocation13 + $0xa8] sm:$0xff]
        %v4898 = vld [vmem:[#allocation13 + $0xb0] sm:$0xff]
        %v4899 = vld [vmem:[#allocation13 + $0xb8] sm:$0xff]
        %v4900 = vld [vmem:[#allocation13 + $0xc0] sm:$0xff]
        %v4901 = vld [vmem:[#allocation13 + $0xc8] sm:$0xff]
        %v4902 = vld [vmem:[#allocation13 + $0xd0] sm:$0xff]
        %v4903 = vld [vmem:[#allocation13 + $0xd8] sm:$0xff]
        %v4904 = vld [vmem:[#allocation13 + $0xe0] sm:$0xff]
        %v4905 = vld [vmem:[#allocation13 + $0xe8] sm:$0xff]
        %v4906 = vld [vmem:[#allocation13 + $0xf0] sm:$0xff]
        %v4907 = vld [vmem:[#allocation13 + $0xf8] sm:$0xff]
        %v4908 = vld [vmem:[#allocation13 + $0x100] sm:$0xff]
        %v4909 = vld [vmem:[#allocation13 + $0x108] sm:$0xff]
        %v4910 = vld [vmem:[#allocation13 + $0x110] sm:$0xff]
        %v4911 = vld [vmem:[#allocation13 + $0x118] sm:$0xff]
        %v4912 = vld [vmem:[#allocation13 + $0x120] sm:$0xff]
        %v4913 = vld [vmem:[#allocation13 + $0x128] sm:$0xff]
        %v4914 = vld [vmem:[#allocation13 + $0x130] sm:$0xff]
        %v4915 = vld [vmem:[#allocation13 + $0x138] sm:$0xff]
        %v4916 = vld [vmem:[#allocation13 + $0x140] sm:$0xff]
        %v4917 = vld [vmem:[#allocation13 + $0x148] sm:$0xff]
        %v4918 = vld [vmem:[#allocation13 + $0x150] sm:$0xff]
        %v4919 = vld [vmem:[#allocation13 + $0x158] sm:$0xff]
        %v4920 = vld [vmem:[#allocation13 + $0x160] sm:$0xff]
        %v4921 = vld [vmem:[#allocation13 + $0x168] sm:$0xff]
        %v4922 = vld [vmem:[#allocation13 + $0x170] sm:$0xff]
        %v4923 = vld [vmem:[#allocation13 + $0x178] sm:$0xff]
        %v4924 = vld [vmem:[#allocation13 + $0x180] sm:$0xff]
        %v4925 = vld [vmem:[#allocation13 + $0x188] sm:$0xff]
        %v4926 = vld [vmem:[#allocation13 + $0x190] sm:$0xff]
        %v4927 = vld [vmem:[#allocation13 + $0x198] sm:$0xff]
        %v4928 = vld [vmem:[#allocation13 + $0x1a0] sm:$0xff]
        %v4929 = vld [vmem:[#allocation13 + $0x1a8] sm:$0xff]
        %v4930 = vld [vmem:[#allocation13 + $0x1b0] sm:$0xff]
        %v4931 = vld [vmem:[#allocation13 + $0x1b8] sm:$0xff]
        %v4932 = vld [vmem:[#allocation13 + $0x1c0] sm:$0xff]
        %v4933 = vld [vmem:[#allocation13 + $0x1c8] sm:$0xff]
        %v4934 = vld [vmem:[#allocation13 + $0x1d0] sm:$0xff]
        %v4935 = vld [vmem:[#allocation13 + $0x1d8] sm:$0xff]
        %v4936 = vld [vmem:[#allocation13 + $0x1e0] sm:$0xff]
        %v4937 = vld [vmem:[#allocation13 + $0x1e8] sm:$0xff]
        %v4938 = vld [vmem:[#allocation13 + $0x1f0] sm:$0xff]
        %v4939 = vld [vmem:[#allocation13 + $0x1f8] sm:$0xff]
        %v4940 = vld [vmem:[#allocation13 + $0x200] sm:$0xff]
        %v4941 = vld [vmem:[#allocation13 + $0x208] sm:$0xff]
        %v4942 = vld [vmem:[#allocation13 + $0x210] sm:$0xff]
        %v4943 = vld [vmem:[#allocation13 + $0x218] sm:$0xff]
        %v4944 = vld [vmem:[#allocation13 + $0x220] sm:$0xff]
        %v4945 = vld [vmem:[#allocation13 + $0x228] sm:$0xff]
        %v4946 = vld [vmem:[#allocation13 + $0x230] sm:$0xff]
        %v4947 = vld [vmem:[#allocation13 + $0x238] sm:$0xff]
        %v4948 = vld [vmem:[#allocation13 + $0x240] sm:$0xff]
        %v4949 = vld [vmem:[#allocation13 + $0x248] sm:$0xff]
        %v4950 = vld [vmem:[#allocation13 + $0x250] sm:$0xff]
        %v4951 = vld [vmem:[#allocation13 + $0x258] sm:$0xff]
        %v4952 = vld [vmem:[#allocation13 + $0x260] sm:$0xff]
        %v4953 = vld [vmem:[#allocation13 + $0x268] sm:$0xff]
        %v4954 = vld [vmem:[#allocation13 + $0x270] sm:$0xff]
        %v4955 = vld [vmem:[#allocation13 + $0x278] sm:$0xff]
        %v4956 = vld [vmem:[#allocation13 + $0x280] sm:$0xff]
        %v4957 = vld [vmem:[#allocation13 + $0x288] sm:$0xff]
        %v4958 = vld [vmem:[#allocation13 + $0x290] sm:$0xff]
        %v4959 = vld [vmem:[#allocation13 + $0x298] sm:$0xff]
        %v4960 = vld [vmem:[#allocation13 + $0x2a0] sm:$0xff]
        %v4961 = vld [vmem:[#allocation13 + $0x2a8] sm:$0xff]
        %v4962 = vld [vmem:[#allocation13 + $0x2b0] sm:$0xff]
        %v4963 = vld [vmem:[#allocation13 + $0x2b8] sm:$0xff]
        %v4964 = vld [vmem:[#allocation13 + $0x2c0] sm:$0xff]
        %v4965 = vld [vmem:[#allocation13 + $0x2c8] sm:$0xff]
        %v4966 = vld [vmem:[#allocation13 + $0x2d0] sm:$0xff]
        %v4967 = vld [vmem:[#allocation13 + $0x2d8] sm:$0xff]
        %v4968 = vld [vmem:[#allocation13 + $0x2e0] sm:$0xff]
        %v4969 = vld [vmem:[#allocation13 + $0x2e8] sm:$0xff]
        %v4970 = vld [vmem:[#allocation13 + $0x2f0] sm:$0xff]
        %v4971 = vld [vmem:[#allocation13 + $0x2f8] sm:$0xff]
        %v4972 = vld [vmem:[#allocation13 + $0x300] sm:$0xff]
        %v4973 = vld [vmem:[#allocation13 + $0x308] sm:$0xff]
        %v4974 = vld [vmem:[#allocation13 + $0x310] sm:$0xff]
        %v4975 = vld [vmem:[#allocation13 + $0x318] sm:$0xff]
        %v4976 = vld [vmem:[#allocation13 + $0x320] sm:$0xff]
        %v4977 = vld [vmem:[#allocation13 + $0x328] sm:$0xff]
        %v4978 = vld [vmem:[#allocation13 + $0x330] sm:$0xff]
        %v4979 = vld [vmem:[#allocation13 + $0x338] sm:$0xff]
        %v4980 = vld [vmem:[#allocation13 + $0x340] sm:$0xff]
        %v4981 = vld [vmem:[#allocation13 + $0x348] sm:$0xff]
        %v4982 = vld [vmem:[#allocation13 + $0x350] sm:$0xff]
        %v4983 = vld [vmem:[#allocation13 + $0x358] sm:$0xff]
        %v4984 = vld [vmem:[#allocation13 + $0x360] sm:$0xff]
        %v4985 = vld [vmem:[#allocation13 + $0x368] sm:$0xff]
        %v4986 = vld [vmem:[#allocation13 + $0x370] sm:$0xff]
        %v4987 = vld [vmem:[#allocation13 + $0x378] sm:$0xff]
        %v4988 = vld [vmem:[#allocation13 + $0x380] sm:$0xff]
        %v4989 = vld [vmem:[#allocation13 + $0x388] sm:$0xff]
        %v4990 = vld [vmem:[#allocation13 + $0x390] sm:$0xff]
        %v4991 = vld [vmem:[#allocation13 + $0x398] sm:$0xff]
        %v4992 = vld [vmem:[#allocation13 + $0x3a0] sm:$0xff]
        %v4993 = vld [vmem:[#allocation13 + $0x3a8] sm:$0xff]
        %v4994 = vld [vmem:[#allocation13 + $0x3b0] sm:$0xff]
        %v4995 = vld [vmem:[#allocation13 + $0x3b8] sm:$0xff]
        %v4996 = vld [vmem:[#allocation13 + $0x3c0] sm:$0xff]
        %v4997 = vld [vmem:[#allocation13 + $0x3c8] sm:$0xff]
        %v4998 = vld [vmem:[#allocation13 + $0x3d0] sm:$0xff]
        %v4999 = vld [vmem:[#allocation13 + $0x3d8] sm:$0xff]
        %v5000 = vld [vmem:[#allocation13 + $0x3e0] sm:$0xff]
        %v5001 = vld [vmem:[#allocation13 + $0x3e8] sm:$0xff]
        %v5002 = vld [vmem:[#allocation13 + $0x3f0] sm:$0xff]
        %v5003 = vld [vmem:[#allocation13 + $0x3f8] sm:$0xff]
        %v5004 = vld [vmem:[#allocation13 + $0x400] sm:$0xff]
        %v5005 = vld [vmem:[#allocation13 + $0x408] sm:$0xff]
        %v5006 = vld [vmem:[#allocation13 + $0x410] sm:$0xff]
        %v5007 = vld [vmem:[#allocation13 + $0x418] sm:$0xff]
        %v5008 = vld [vmem:[#allocation13 + $0x420] sm:$0xff]
        %v5009 = vld [vmem:[#allocation13 + $0x428] sm:$0xff]
        %v5010 = vld [vmem:[#allocation13 + $0x430] sm:$0xff]
        %v5011 = vld [vmem:[#allocation13 + $0x438] sm:$0xff]
        %v5012 = vld [vmem:[#allocation13 + $0x440] sm:$0xff]
        %v5013 = vld [vmem:[#allocation13 + $0x448] sm:$0xff]
        %v5014 = vld [vmem:[#allocation13 + $0x450] sm:$0xff]
        %v5015 = vld [vmem:[#allocation13 + $0x458] sm:$0xff]
        %v5016 = vld [vmem:[#allocation13 + $0x460] sm:$0xff]
        %v5017 = vld [vmem:[#allocation13 + $0x468] sm:$0xff]
        %v5018 = vld [vmem:[#allocation13 + $0x470] sm:$0xff]
        %v5019 = vld [vmem:[#allocation13 + $0x478] sm:$0xff]
        %v5020 = vld [vmem:[#allocation13 + $0x480] sm:$0xff]
        %v5021 = vld [vmem:[#allocation13 + $0x488] sm:$0xff]
        %v5022 = vld [vmem:[#allocation13 + $0x490] sm:$0xff]
        %v5023 = vld [vmem:[#allocation13 + $0x498] sm:$0xff]
        %v5024 = vld [vmem:[#allocation13 + $0x4a0] sm:$0xff]
        %v5025 = vld [vmem:[#allocation13 + $0x4a8] sm:$0xff]
        %v5026 = vld [vmem:[#allocation13 + $0x4b0] sm:$0xff]
        %v5027 = vld [vmem:[#allocation13 + $0x4b8] sm:$0xff]
        %v5028 = vld [vmem:[#allocation13 + $0x4c0] sm:$0xff]
        %v5029 = vld [vmem:[#allocation13 + $0x4c8] sm:$0xff]
        %v5030 = vld [vmem:[#allocation13 + $0x4d0] sm:$0xff]
        %v5031 = vld [vmem:[#allocation13 + $0x4d8] sm:$0xff]
        %v5032 = vld [vmem:[#allocation13 + $0x4e0] sm:$0xff]
        %v5033 = vld [vmem:[#allocation13 + $0x4e8] sm:$0xff]
        %v5034 = vld [vmem:[#allocation13 + $0x4f0] sm:$0xff]
        %v5035 = vld [vmem:[#allocation13 + $0x4f8] sm:$0xff]
        %v5036 = vld [vmem:[#allocation13 + $0x500] sm:$0xff]
        %v5037 = vld [vmem:[#allocation13 + $0x508] sm:$0xff]
        %v5038 = vld [vmem:[#allocation13 + $0x510] sm:$0xff]
        %v5039 = vld [vmem:[#allocation13 + $0x518] sm:$0xff]
        %v5040 = vld [vmem:[#allocation13 + $0x520] sm:$0xff]
        %v5041 = vld [vmem:[#allocation13 + $0x528] sm:$0xff]
        %v5042 = vld [vmem:[#allocation13 + $0x530] sm:$0xff]
        %v5043 = vld [vmem:[#allocation13 + $0x538] sm:$0xff]
        %v5044 = vld [vmem:[#allocation13 + $0x540] sm:$0xff]
        %v5045 = vld [vmem:[#allocation13 + $0x548] sm:$0xff]
        %v5046 = vld [vmem:[#allocation13 + $0x550] sm:$0xff]
        %v5047 = vld [vmem:[#allocation13 + $0x558] sm:$0xff]
        %v5048 = vld [vmem:[#allocation13 + $0x560] sm:$0xff]
        %v5049 = vld [vmem:[#allocation13 + $0x568] sm:$0xff]
        %v5050 = vld [vmem:[#allocation13 + $0x570] sm:$0xff]
        %v5051 = vld [vmem:[#allocation13 + $0x578] sm:$0xff]
        %v5052 = vld [vmem:[#allocation13 + $0x580] sm:$0xff]
        %v5053 = vld [vmem:[#allocation13 + $0x588] sm:$0xff]
        %v5054 = vld [vmem:[#allocation13 + $0x590] sm:$0xff]
        %v5055 = vld [vmem:[#allocation13 + $0x598] sm:$0xff]
        %v5056 = vld [vmem:[#allocation13 + $0x5a0] sm:$0xff]
        %v5057 = vld [vmem:[#allocation13 + $0x5a8] sm:$0xff]
        %v5058 = vld [vmem:[#allocation13 + $0x5b0] sm:$0xff]
        %v5059 = vld [vmem:[#allocation13 + $0x5b8] sm:$0xff]
        %v5060 = vld [vmem:[#allocation13 + $0x5c0] sm:$0xff]
        %v5061 = vld [vmem:[#allocation13 + $0x5c8] sm:$0xff]
        %v5062 = vld [vmem:[#allocation13 + $0x5d0] sm:$0xff]
        %v5063 = vld [vmem:[#allocation13 + $0x5d8] sm:$0xff]
        %v5064 = vld [vmem:[#allocation13 + $0x5e0] sm:$0xff]
        %v5065 = vld [vmem:[#allocation13 + $0x5e8] sm:$0xff]
        %v5066 = vld [vmem:[#allocation13 + $0x5f0] sm:$0xff]
        %v5067 = vld [vmem:[#allocation13 + $0x5f8] sm:$0xff]
        %v5068 = vld [vmem:[#allocation13 + $0x600] sm:$0xff]
        %v5069 = vld [vmem:[#allocation13 + $0x608] sm:$0xff]
        %v5070 = vld [vmem:[#allocation13 + $0x610] sm:$0xff]
        %v5071 = vld [vmem:[#allocation13 + $0x618] sm:$0xff]
        %v5072 = vld [vmem:[#allocation13 + $0x620] sm:$0xff]
        %v5073 = vld [vmem:[#allocation13 + $0x628] sm:$0xff]
        %v5074 = vld [vmem:[#allocation13 + $0x630] sm:$0xff]
        %v5075 = vld [vmem:[#allocation13 + $0x638] sm:$0xff]
        %v5076 = vld [vmem:[#allocation13 + $0x640] sm:$0xff]
        %v5077 = vld [vmem:[#allocation13 + $0x648] sm:$0xff]
        %v5078 = vld [vmem:[#allocation13 + $0x650] sm:$0xff]
        %v5079 = vld [vmem:[#allocation13 + $0x658] sm:$0xff]
        %v5080 = vld [vmem:[#allocation13 + $0x660] sm:$0xff]
        %v5081 = vld [vmem:[#allocation13 + $0x668] sm:$0xff]
        %v5082 = vld [vmem:[#allocation13 + $0x670] sm:$0xff]
        %v5083 = vld [vmem:[#allocation13 + $0x678] sm:$0xff]
        %v5084 = vld [vmem:[#allocation13 + $0x680] sm:$0xff]
        %v5085 = vld [vmem:[#allocation13 + $0x688] sm:$0xff]
        %v5086 = vld [vmem:[#allocation13 + $0x690] sm:$0xff]
        %v5087 = vld [vmem:[#allocation13 + $0x698] sm:$0xff]
        %v5088 = vld [vmem:[#allocation13 + $0x6a0] sm:$0xff]
        %v5089 = vld [vmem:[#allocation13 + $0x6a8] sm:$0xff]
        %v5090 = vld [vmem:[#allocation13 + $0x6b0] sm:$0xff]
        %v5091 = vld [vmem:[#allocation13 + $0x6b8] sm:$0xff]
        %v5092 = vld [vmem:[#allocation13 + $0x6c0] sm:$0xff]
        %v5093 = vld [vmem:[#allocation13 + $0x6c8] sm:$0xff]
        %v5094 = vld [vmem:[#allocation13 + $0x6d0] sm:$0xff]
        %v5095 = vld [vmem:[#allocation13 + $0x6d8] sm:$0xff]
        %v5096 = vld [vmem:[#allocation13 + $0x6e0] sm:$0xff]
        %v5097 = vld [vmem:[#allocation13 + $0x6e8] sm:$0xff]
        %v5098 = vld [vmem:[#allocation13 + $0x6f0] sm:$0xff]
        %v5099 = vld [vmem:[#allocation13 + $0x6f8] sm:$0xff]
        %v5100 = vld [vmem:[#allocation13 + $0x700] sm:$0xff]
        %v5101 = vld [vmem:[#allocation13 + $0x708] sm:$0xff]
        %v5102 = vld [vmem:[#allocation13 + $0x710] sm:$0xff]
        %v5103 = vld [vmem:[#allocation13 + $0x718] sm:$0xff]
        %v5104 = vld [vmem:[#allocation13 + $0x720] sm:$0xff]
        %v5105 = vld [vmem:[#allocation13 + $0x728] sm:$0xff]
        %v5106 = vld [vmem:[#allocation13 + $0x730] sm:$0xff]
        %v5107 = vld [vmem:[#allocation13 + $0x738] sm:$0xff]
        %v5108 = vld [vmem:[#allocation13 + $0x740] sm:$0xff]
        %v5109 = vld [vmem:[#allocation13 + $0x748] sm:$0xff]
        %v5110 = vld [vmem:[#allocation13 + $0x750] sm:$0xff]
        %v5111 = vld [vmem:[#allocation13 + $0x758] sm:$0xff]
        %v5112 = vld [vmem:[#allocation13 + $0x760] sm:$0xff]
        %v5113 = vld [vmem:[#allocation13 + $0x768] sm:$0xff]
        %v5114 = vld [vmem:[#allocation13 + $0x770] sm:$0xff]
        %v5115 = vld [vmem:[#allocation13 + $0x778] sm:$0xff]
        %v5116 = vld [vmem:[#allocation13 + $0x780] sm:$0xff]
        %v5117 = vld [vmem:[#allocation13 + $0x788] sm:$0xff]
        %v5118 = vld [vmem:[#allocation13 + $0x790] sm:$0xff]
        %v5119 = vld [vmem:[#allocation13 + $0x798] sm:$0xff]
        %v5120 = vld [vmem:[#allocation13 + $0x7a0] sm:$0xff]
        %v5121 = vld [vmem:[#allocation13 + $0x7a8] sm:$0xff]
        %v5122 = vld [vmem:[#allocation13 + $0x7b0] sm:$0xff]
        %v5123 = vld [vmem:[#allocation13 + $0x7b8] sm:$0xff]
        %v5124 = vld [vmem:[#allocation13 + $0x7c0] sm:$0xff]
        %v5125 = vld [vmem:[#allocation13 + $0x7c8] sm:$0xff]
        %v5126 = vld [vmem:[#allocation13 + $0x7d0] sm:$0xff]
        %v5127 = vld [vmem:[#allocation13 + $0x7d8] sm:$0xff]
        %v5128 = vld [vmem:[#allocation13 + $0x7e0] sm:$0xff]
        %v5129 = vld [vmem:[#allocation13 + $0x7e8] sm:$0xff]
        %v5130 = vld [vmem:[#allocation13 + $0x7f0] sm:$0xff]
        %v5131 = vld [vmem:[#allocation13 + $0x7f8] sm:$0xff]
        %v5132 = vld [vmem:[#allocation13 + $0x800] sm:$0xff]
        %v5133 = vld [vmem:[#allocation13 + $0x808] sm:$0xff]
        %v5134 = vld [vmem:[#allocation13 + $0x810] sm:$0xff]
        %v5135 = vld [vmem:[#allocation13 + $0x818] sm:$0xff]
        %v5136 = vld [vmem:[#allocation13 + $0x820] sm:$0xff]
        %v5137 = vld [vmem:[#allocation13 + $0x828] sm:$0xff]
        %v5138 = vld [vmem:[#allocation13 + $0x830] sm:$0xff]
        %v5139 = vld [vmem:[#allocation13 + $0x838] sm:$0xff]
        %v5140 = vld [vmem:[#allocation13 + $0x840] sm:$0xff]
        %v5141 = vld [vmem:[#allocation13 + $0x848] sm:$0xff]
        %v5142 = vld [vmem:[#allocation13 + $0x850] sm:$0xff]
        %v5143 = vld [vmem:[#allocation13 + $0x858] sm:$0xff]
        %v5144 = vld [vmem:[#allocation13 + $0x860] sm:$0xff]
        %v5145 = vld [vmem:[#allocation13 + $0x868] sm:$0xff]
        %v5146 = vld [vmem:[#allocation13 + $0x870] sm:$0xff]
        %v5147 = vld [vmem:[#allocation13 + $0x878] sm:$0xff]
        %v5148 = vld [vmem:[#allocation13 + $0x880] sm:$0xff]
        %v5149 = vld [vmem:[#allocation13 + $0x888] sm:$0xff]
        %v5150 = vld [vmem:[#allocation13 + $0x890] sm:$0xff]
        %v5151 = vld [vmem:[#allocation13 + $0x898] sm:$0xff]
        %v5152 = vld [vmem:[#allocation13 + $0x8a0] sm:$0xff]
        %v5153 = vld [vmem:[#allocation13 + $0x8a8] sm:$0xff]
        %v5154 = vld [vmem:[#allocation13 + $0x8b0] sm:$0xff]
        %v5155 = vld [vmem:[#allocation13 + $0x8b8] sm:$0xff]
        %v5156 = vld [vmem:[#allocation13 + $0x8c0] sm:$0xff]
        %v5157 = vld [vmem:[#allocation13 + $0x8c8] sm:$0xff]
        %v5158 = vld [vmem:[#allocation13 + $0x8d0] sm:$0xff]
        %v5159 = vld [vmem:[#allocation13 + $0x8d8] sm:$0xff]
        %v5160 = vld [vmem:[#allocation13 + $0x8e0] sm:$0xff]
        %v5161 = vld [vmem:[#allocation13 + $0x8e8] sm:$0xff]
        %v5162 = vld [vmem:[#allocation13 + $0x8f0] sm:$0xff]
        %v5163 = vld [vmem:[#allocation13 + $0x8f8] sm:$0xff]
        %v5164 = vld [vmem:[#allocation13 + $0x900] sm:$0xff]
        %v5165 = vld [vmem:[#allocation13 + $0x908] sm:$0xff]
        %v5166 = vld [vmem:[#allocation13 + $0x910] sm:$0xff]
        %v5167 = vld [vmem:[#allocation13 + $0x918] sm:$0xff]
        %v5168 = vld [vmem:[#allocation13 + $0x920] sm:$0xff]
        %v5169 = vld [vmem:[#allocation13 + $0x928] sm:$0xff]
        %v5170 = vld [vmem:[#allocation13 + $0x930] sm:$0xff]
        %v5171 = vld [vmem:[#allocation13 + $0x938] sm:$0xff]
        %v5172 = vld [vmem:[#allocation13 + $0x940] sm:$0xff]
        %v5173 = vld [vmem:[#allocation13 + $0x948] sm:$0xff]
        %v5174 = vld [vmem:[#allocation13 + $0x950] sm:$0xff]
        %v5175 = vld [vmem:[#allocation13 + $0x958] sm:$0xff]
        %v5176 = vld [vmem:[#allocation13 + $0x960] sm:$0xff]
        %v5177 = vld [vmem:[#allocation13 + $0x968] sm:$0xff]
        %v5178 = vld [vmem:[#allocation13 + $0x970] sm:$0xff]
        %v5179 = vld [vmem:[#allocation13 + $0x978] sm:$0xff]
        %v5180 = vld [vmem:[#allocation13 + $0x980] sm:$0xff]
        %v5181 = vld [vmem:[#allocation13 + $0x988] sm:$0xff]
        %v5182 = vld [vmem:[#allocation13 + $0x990] sm:$0xff]
        %v5183 = vld [vmem:[#allocation13 + $0x998] sm:$0xff]
        %v5184 = vld [vmem:[#allocation13 + $0x9a0] sm:$0xff]
        %v5185 = vld [vmem:[#allocation13 + $0x9a8] sm:$0xff]
        %v5186 = vld [vmem:[#allocation13 + $0x9b0] sm:$0xff]
        %v5187 = vld [vmem:[#allocation13 + $0x9b8] sm:$0xff]
        %v5188 = vld [vmem:[#allocation13 + $0x9c0] sm:$0xff]
        %v5189 = vld [vmem:[#allocation13 + $0x9c8] sm:$0xff]
        %v5190 = vld [vmem:[#allocation13 + $0x9d0] sm:$0xff]
        %v5191 = vld [vmem:[#allocation13 + $0x9d8] sm:$0xff]
        %v5192 = vld [vmem:[#allocation13 + $0x9e0] sm:$0xff]
        %v5193 = vld [vmem:[#allocation13 + $0x9e8] sm:$0xff]
        %v5194 = vld [vmem:[#allocation13 + $0x9f0] sm:$0xff]
        %v5195 = vld [vmem:[#allocation13 + $0x9f8] sm:$0xff]
        %v5196 = vld [vmem:[#allocation13 + $0xa00] sm:$0xff]
        %v5197 = vld [vmem:[#allocation13 + $0xa08] sm:$0xff]
        %v5198 = vld [vmem:[#allocation13 + $0xa10] sm:$0xff]
        %v5199 = vld [vmem:[#allocation13 + $0xa18] sm:$0xff]
        %v5200 = vld [vmem:[#allocation13 + $0xa20] sm:$0xff]
        %v5201 = vld [vmem:[#allocation13 + $0xa28] sm:$0xff]
        %v5202 = vld [vmem:[#allocation13 + $0xa30] sm:$0xff]
        %v5203 = vld [vmem:[#allocation13 + $0xa38] sm:$0xff]
        %v5204 = vld [vmem:[#allocation13 + $0xa40] sm:$0xff]
        %v5205 = vld [vmem:[#allocation13 + $0xa48] sm:$0xff]
        %v5206 = vld [vmem:[#allocation13 + $0xa50] sm:$0xff]
        %v5207 = vld [vmem:[#allocation13 + $0xa58] sm:$0xff]
        %v5208 = vld [vmem:[#allocation13 + $0xa60] sm:$0xff]
        %v5209 = vld [vmem:[#allocation13 + $0xa68] sm:$0xff]
        %v5210 = vld [vmem:[#allocation13 + $0xa70] sm:$0xff]
        %v5211 = vld [vmem:[#allocation13 + $0xa78] sm:$0xff]
        %v5212 = vld [vmem:[#allocation13 + $0xa80] sm:$0xff]
        %v5213 = vld [vmem:[#allocation13 + $0xa88] sm:$0xff]
        %v5214 = vld [vmem:[#allocation13 + $0xa90] sm:$0xff]
        %v5215 = vld [vmem:[#allocation13 + $0xa98] sm:$0xff]
        %v5216 = vld [vmem:[#allocation13 + $0xaa0] sm:$0xff]
        %v5217 = vld [vmem:[#allocation13 + $0xaa8] sm:$0xff]
        %v5218 = vld [vmem:[#allocation13 + $0xab0] sm:$0xff]
        %v5219 = vld [vmem:[#allocation13 + $0xab8] sm:$0xff]
        %v5220 = vld [vmem:[#allocation13 + $0xac0] sm:$0xff]
        %v5221 = vld [vmem:[#allocation13 + $0xac8] sm:$0xff]
        %v5222 = vld [vmem:[#allocation13 + $0xad0] sm:$0xff]
        %v5223 = vld [vmem:[#allocation13 + $0xad8] sm:$0xff]
        %v5224 = vld [vmem:[#allocation13 + $0xae0] sm:$0xff]
        %v5225 = vld [vmem:[#allocation13 + $0xae8] sm:$0xff]
        %v5226 = vld [vmem:[#allocation13 + $0xaf0] sm:$0xff]
        %v5227 = vld [vmem:[#allocation13 + $0xaf8] sm:$0xff]
        %v5228 = vld [vmem:[#allocation13 + $0xb00] sm:$0xff]
        %v5229 = vld [vmem:[#allocation13 + $0xb08] sm:$0xff]
        %v5230 = vld [vmem:[#allocation13 + $0xb10] sm:$0xff]
        %v5231 = vld [vmem:[#allocation13 + $0xb18] sm:$0xff]
        %v5232 = vld [vmem:[#allocation13 + $0xb20] sm:$0xff]
        %v5233 = vld [vmem:[#allocation13 + $0xb28] sm:$0xff]
        %v5234 = vld [vmem:[#allocation13 + $0xb30] sm:$0xff]
        %v5235 = vld [vmem:[#allocation13 + $0xb38] sm:$0xff]
        %v5236 = vld [vmem:[#allocation13 + $0xb40] sm:$0xff]
        %v5237 = vld [vmem:[#allocation13 + $0xb48] sm:$0xff]
        %v5238 = vld [vmem:[#allocation13 + $0xb50] sm:$0xff]
        %v5239 = vld [vmem:[#allocation13 + $0xb58] sm:$0xff]
        %v5240 = vld [vmem:[#allocation13 + $0xb60] sm:$0xff]
        %v5241 = vld [vmem:[#allocation13 + $0xb68] sm:$0xff]
        %v5242 = vld [vmem:[#allocation13 + $0xb70] sm:$0xff]
        %v5243 = vld [vmem:[#allocation13 + $0xb78] sm:$0xff]
        %v5244 = vld [vmem:[#allocation13 + $0xb80] sm:$0xff]
        %v5245 = vld [vmem:[#allocation13 + $0xb88] sm:$0xff]
        %v5246 = vld [vmem:[#allocation13 + $0xb90] sm:$0xff]
        %v5247 = vld [vmem:[#allocation13 + $0xb98] sm:$0xff]
        %v5248 = vld [vmem:[#allocation13 + $0xba0] sm:$0xff]
        %v5249 = vld [vmem:[#allocation13 + $0xba8] sm:$0xff]
        %v5250 = vld [vmem:[#allocation13 + $0xbb0] sm:$0xff]
        %v5251 = vld [vmem:[#allocation13 + $0xbb8] sm:$0xff]
        %v5252 = vld [vmem:[#allocation13 + $0xbc0] sm:$0xff]
        %v5253 = vld [vmem:[#allocation13 + $0xbc8] sm:$0xff]
        %v5254 = vld [vmem:[#allocation13 + $0xbd0] sm:$0xff]
        %v5255 = vld [vmem:[#allocation13 + $0xbd8] sm:$0xff]
        %v5256 = vld [vmem:[#allocation13 + $0xbe0] sm:$0xff]
        %v5257 = vld [vmem:[#allocation13 + $0xbe8] sm:$0xff]
        %v5258 = vld [vmem:[#allocation13 + $0xbf0] sm:$0xff]
        %v5259 = vld [vmem:[#allocation13 + $0xbf8] sm:$0xff]
        %v5260 = vld [vmem:[#allocation13 + $0xc00] sm:$0xff]
        %v5261 = vld [vmem:[#allocation13 + $0xc08] sm:$0xff]
        %v5262 = vld [vmem:[#allocation13 + $0xc10] sm:$0xff]
        %v5263 = vld [vmem:[#allocation13 + $0xc18] sm:$0xff]
        %v5264 = vld [vmem:[#allocation13 + $0xc20] sm:$0xff]
        %v5265 = vld [vmem:[#allocation13 + $0xc28] sm:$0xff]
        %v5266 = vld [vmem:[#allocation13 + $0xc30] sm:$0xff]
        %v5267 = vld [vmem:[#allocation13 + $0xc38] sm:$0xff]
        %v5268 = vld [vmem:[#allocation13 + $0xc40] sm:$0xff]
        %v5269 = vld [vmem:[#allocation13 + $0xc48] sm:$0xff]
        %v5270 = vld [vmem:[#allocation13 + $0xc50] sm:$0xff]
        %v5271 = vld [vmem:[#allocation13 + $0xc58] sm:$0xff]
        %v5272 = vld [vmem:[#allocation13 + $0xc60] sm:$0xff]
        %v5273 = vld [vmem:[#allocation13 + $0xc68] sm:$0xff]
        %v5274 = vld [vmem:[#allocation13 + $0xc70] sm:$0xff]
        %v5275 = vld [vmem:[#allocation13 + $0xc78] sm:$0xff]
        %v5276 = vld [vmem:[#allocation13 + $0xc80] sm:$0xff]
        %v5277 = vld [vmem:[#allocation13 + $0xc88] sm:$0xff]
        %v5278 = vld [vmem:[#allocation13 + $0xc90] sm:$0xff]
        %v5279 = vld [vmem:[#allocation13 + $0xc98] sm:$0xff]
        %v5280 = vld [vmem:[#allocation13 + $0xca0] sm:$0xff]
        %v5281 = vld [vmem:[#allocation13 + $0xca8] sm:$0xff]
        %v5282 = vld [vmem:[#allocation13 + $0xcb0] sm:$0xff]
        %v5283 = vld [vmem:[#allocation13 + $0xcb8] sm:$0xff]
        %v5284 = vld [vmem:[#allocation13 + $0xcc0] sm:$0xff]
        %v5285 = vld [vmem:[#allocation13 + $0xcc8] sm:$0xff]
        %v5286 = vld [vmem:[#allocation13 + $0xcd0] sm:$0xff]
        %v5287 = vld [vmem:[#allocation13 + $0xcd8] sm:$0xff]
        %v5288 = vld [vmem:[#allocation13 + $0xce0] sm:$0xff]
        %v5289 = vld [vmem:[#allocation13 + $0xce8] sm:$0xff]
        %v5290 = vld [vmem:[#allocation13 + $0xcf0] sm:$0xff]
        %v5291 = vld [vmem:[#allocation13 + $0xcf8] sm:$0xff]
        %v5292 = vld [vmem:[#allocation13 + $0xd00] sm:$0xff]
        %v5293 = vld [vmem:[#allocation13 + $0xd08] sm:$0xff]
        %v5294 = vld [vmem:[#allocation13 + $0xd10] sm:$0xff]
        %v5295 = vld [vmem:[#allocation13 + $0xd18] sm:$0xff]
        %v5296 = vld [vmem:[#allocation13 + $0xd20] sm:$0xff]
        %v5297 = vld [vmem:[#allocation13 + $0xd28] sm:$0xff]
        %v5298 = vld [vmem:[#allocation13 + $0xd30] sm:$0xff]
        %v5299 = vld [vmem:[#allocation13 + $0xd38] sm:$0xff]
        %v5300 = vld [vmem:[#allocation13 + $0xd40] sm:$0xff]
        %v5301 = vld [vmem:[#allocation13 + $0xd48] sm:$0xff]
        %v5302 = vld [vmem:[#allocation13 + $0xd50] sm:$0xff]
        %v5303 = vld [vmem:[#allocation13 + $0xd58] sm:$0xff]
        %v5304 = vld [vmem:[#allocation13 + $0xd60] sm:$0xff]
        %v5305 = vld [vmem:[#allocation13 + $0xd68] sm:$0xff]
        %v5306 = vld [vmem:[#allocation13 + $0xd70] sm:$0xff]
        %v5307 = vld [vmem:[#allocation13 + $0xd78] sm:$0xff]
        %v5308 = vld [vmem:[#allocation13 + $0xd80] sm:$0xff]
        %v5309 = vld [vmem:[#allocation13 + $0xd88] sm:$0xff]
        %v5310 = vld [vmem:[#allocation13 + $0xd90] sm:$0xff]
        %v5311 = vld [vmem:[#allocation13 + $0xd98] sm:$0xff]
        %v5312 = vld [vmem:[#allocation13 + $0xda0] sm:$0xff]
        %v5313 = vld [vmem:[#allocation13 + $0xda8] sm:$0xff]
        %v5314 = vld [vmem:[#allocation13 + $0xdb0] sm:$0xff]
        %v5315 = vld [vmem:[#allocation13 + $0xdb8] sm:$0xff]
        %v5316 = vld [vmem:[#allocation13 + $0xdc0] sm:$0xff]
        %v5317 = vld [vmem:[#allocation13 + $0xdc8] sm:$0xff]
        %v5318 = vld [vmem:[#allocation13 + $0xdd0] sm:$0xff]
        %v5319 = vld [vmem:[#allocation13 + $0xdd8] sm:$0xff]
        %v5320 = vld [vmem:[#allocation13 + $0xde0] sm:$0xff]
        %v5321 = vld [vmem:[#allocation13 + $0xde8] sm:$0xff]
        %v5322 = vld [vmem:[#allocation13 + $0xdf0] sm:$0xff]
        %v5323 = vld [vmem:[#allocation13 + $0xdf8] sm:$0xff]
        %v5324 = vld [vmem:[#allocation13 + $0xe00] sm:$0xff]
        %v5325 = vld [vmem:[#allocation13 + $0xe08] sm:$0xff]
        %v5326 = vld [vmem:[#allocation13 + $0xe10] sm:$0xff]
        %v5327 = vld [vmem:[#allocation13 + $0xe18] sm:$0xff]
        %v5328 = vld [vmem:[#allocation13 + $0xe20] sm:$0xff]
        %v5329 = vld [vmem:[#allocation13 + $0xe28] sm:$0xff]
        %v5330 = vld [vmem:[#allocation13 + $0xe30] sm:$0xff]
        %v5331 = vld [vmem:[#allocation13 + $0xe38] sm:$0xff]
        %v5332 = vld [vmem:[#allocation13 + $0xe40] sm:$0xff]
        %v5333 = vld [vmem:[#allocation13 + $0xe48] sm:$0xff]
        %v5334 = vld [vmem:[#allocation13 + $0xe50] sm:$0xff]
        %v5335 = vld [vmem:[#allocation13 + $0xe58] sm:$0xff]
        %v5336 = vld [vmem:[#allocation13 + $0xe60] sm:$0xff]
        %v5337 = vld [vmem:[#allocation13 + $0xe68] sm:$0xff]
        %v5338 = vld [vmem:[#allocation13 + $0xe70] sm:$0xff]
        %v5339 = vld [vmem:[#allocation13 + $0xe78] sm:$0xff]
        %v5340 = vld [vmem:[#allocation13 + $0xe80] sm:$0xff]
        %v5341 = vld [vmem:[#allocation13 + $0xe88] sm:$0xff]
        %v5342 = vld [vmem:[#allocation13 + $0xe90] sm:$0xff]
        %v5343 = vld [vmem:[#allocation13 + $0xe98] sm:$0xff]
        %v5344 = vld [vmem:[#allocation13 + $0xea0] sm:$0xff]
        %v5345 = vld [vmem:[#allocation13 + $0xea8] sm:$0xff]
        %v5346 = vld [vmem:[#allocation13 + $0xeb0] sm:$0xff]
        %v5347 = vld [vmem:[#allocation13 + $0xeb8] sm:$0xff]
        %v5348 = vld [vmem:[#allocation13 + $0xec0] sm:$0xff]
        %v5349 = vld [vmem:[#allocation13 + $0xec8] sm:$0xff]
        %v5350 = vld [vmem:[#allocation13 + $0xed0] sm:$0xff]
        %v5351 = vld [vmem:[#allocation13 + $0xed8] sm:$0xff]
        %v5352 = vld [vmem:[#allocation13 + $0xee0] sm:$0xff]
        %v5353 = vld [vmem:[#allocation13 + $0xee8] sm:$0xff]
        %v5354 = vld [vmem:[#allocation13 + $0xef0] sm:$0xff]
        %v5355 = vld [vmem:[#allocation13 + $0xef8] sm:$0xff]
        %v5356 = vld [vmem:[#allocation13 + $0xf00] sm:$0xff]
        %v5357 = vld [vmem:[#allocation13 + $0xf08] sm:$0xff]
        %v5358 = vld [vmem:[#allocation13 + $0xf10] sm:$0xff]
        %v5359 = vld [vmem:[#allocation13 + $0xf18] sm:$0xff]
        %v5360 = vld [vmem:[#allocation13 + $0xf20] sm:$0xff]
        %v5361 = vld [vmem:[#allocation13 + $0xf28] sm:$0xff]
        %v5362 = vld [vmem:[#allocation13 + $0xf30] sm:$0xff]
        %v5363 = vld [vmem:[#allocation13 + $0xf38] sm:$0xff]
        %v5364 = vld [vmem:[#allocation13 + $0xf40] sm:$0xff]
        %v5365 = vld [vmem:[#allocation13 + $0xf48] sm:$0xff]
        %v5366 = vld [vmem:[#allocation13 + $0xf50] sm:$0xff]
        %v5367 = vld [vmem:[#allocation13 + $0xf58] sm:$0xff]
        %v5368 = vld [vmem:[#allocation13 + $0xf60] sm:$0xff]
        %v5369 = vld [vmem:[#allocation13 + $0xf68] sm:$0xff]
        %v5370 = vld [vmem:[#allocation13 + $0xf70] sm:$0xff]
        %v5371 = vld [vmem:[#allocation13 + $0xf78] sm:$0xff]
        %v5372 = vld [vmem:[#allocation13 + $0xf80] sm:$0xff]
        %v5373 = vld [vmem:[#allocation13 + $0xf88] sm:$0xff]
        %v5374 = vld [vmem:[#allocation13 + $0xf90] sm:$0xff]
        %v5375 = vld [vmem:[#allocation13 + $0xf98] sm:$0xff]
        %v5376 = vld [vmem:[#allocation13 + $0xfa0] sm:$0xff]
        %v5377 = vld [vmem:[#allocation13 + $0xfa8] sm:$0xff]
        %v5378 = vld [vmem:[#allocation13 + $0xfb0] sm:$0xff]
        %v5379 = vld [vmem:[#allocation13 + $0xfb8] sm:$0xff]
        %v5380 = vld [vmem:[#allocation13 + $0xfc0] sm:$0xff]
        %v5381 = vld [vmem:[#allocation13 + $0xfc8] sm:$0xff]
        %v5382 = vld [vmem:[#allocation13 + $0xfd0] sm:$0xff]
        %v5383 = vld [vmem:[#allocation13 + $0xfd8] sm:$0xff]
        %v5384 = vld [vmem:[#allocation13 + $0xfe0] sm:$0xff]
        %v5385 = vld [vmem:[#allocation13 + $0xfe8] sm:$0xff]
        %v5386 = vld [vmem:[#allocation13 + $0xff0] sm:$0xff]
        %v5387 = vld [vmem:[#allocation13 + $0xff8] sm:$0xff]
        %v5388 = vld [vmem:[#allocation15] sm:$0xf]
        %v5390 = vperm.slane %v4875, 0
        %v5391 = vperm.slane %v4875, 1
        %v5392 = vperm.slane %v4875, 2
        %v5393 = vperm.slane %v4875, 3
        %v5394 = vperm.slane %v4875, 4
        %v5395 = vperm.slane %v4875, 5
        %v5396 = vperm.slane %v4875, 6
        %v5397 = vperm.slane %v4875, 7
        %v5407 = vperm.slane %v5388, 0
        %v5408 = vperm.slane %v5388, 1
        %v5409 = vperm.slane %v5388, 2
        %v5410 = vperm.slane %v5388, 3
        %5415 = vmatpush.msra.mxu0 %v4936
        %5416 = vmatpush.msra.mxu0 %v4932
        %5417 = vmatpush.msra.mxu0 %v4928
        %5418 = vmatpush.msra.mxu0 %v4924
        %5419 = vmatpush.msra.mxu0 %v4920
        %5420 = vmatpush.msra.mxu0 %v4916
        %5421 = vmatpush.msra.mxu0 %v4912
        %5422 = vmatpush.msra.mxu0 %v4908
        %5423 = vmatpush.msra.mxu0 %v4904
        %5424 = vmatpush.msra.mxu0 %v4900
        %5425 = vmatpush.msra.mxu0 %v4896
        %5426 = vmatpush.msra.mxu0 %v4892
        %5427 = vmatpush.msra.mxu0 %v4888
        %5428 = vmatpush.msra.mxu0 %v4884
        %5429 = vmatpush.msra.mxu0 %v4880
        %5430 = vmatpush.msra.mxu0 %v4876
        %5431 = vmatmul.f32.gmra.mxu0 %v5390
        %v5432 = vpop.f32.mrf.mxu0
        %v5433 = vadd.f32 %v5407, %v5432
        %5434 = vdwg.mxu0
        %5435 = vmatpush.msra.mxu0 %v5000
        %5436 = vmatpush.msra.mxu0 %v4996
        %5437 = vmatpush.msra.mxu0 %v4992
        %5438 = vmatpush.msra.mxu0 %v4988
        %5439 = vmatpush.msra.mxu0 %v4984
        %5440 = vmatpush.msra.mxu0 %v4980
        %5441 = vmatpush.msra.mxu0 %v4976
        %5442 = vmatpush.msra.mxu0 %v4972
        %5443 = vmatpush.msra.mxu0 %v4968
        %5444 = vmatpush.msra.mxu0 %v4964
        %5445 = vmatpush.msra.mxu0 %v4960
        %5446 = vmatpush.msra.mxu0 %v4956
        %5447 = vmatpush.msra.mxu0 %v4952
        %5448 = vmatpush.msra.mxu0 %v4948
        %5449 = vmatpush.msra.mxu0 %v4944
        %5450 = vmatpush.msra.mxu0 %v4940
        %5451 = vmatmul.f32.gmra.mxu0 %v5391
        %v5452 = vpop.f32.mrf.mxu0
        %v5453 = vadd.f32 %v5433, %v5452
        %5454 = vdwg.mxu0
        %5455 = vmatpush.msra.mxu0 %v5064
        %5456 = vmatpush.msra.mxu0 %v5060
        %5457 = vmatpush.msra.mxu0 %v5056
        %5458 = vmatpush.msra.mxu0 %v5052
        %5459 = vmatpush.msra.mxu0 %v5048
        %5460 = vmatpush.msra.mxu0 %v5044
        %5461 = vmatpush.msra.mxu0 %v5040
        %5462 = vmatpush.msra.mxu0 %v5036
        %5463 = vmatpush.msra.mxu0 %v5032
        %5464 = vmatpush.msra.mxu0 %v5028
        %5465 = vmatpush.msra.mxu0 %v5024
        %5466 = vmatpush.msra.mxu0 %v5020
        %5467 = vmatpush.msra.mxu0 %v5016
        %5468 = vmatpush.msra.mxu0 %v5012
        %5469 = vmatpush.msra.mxu0 %v5008
        %5470 = vmatpush.msra.mxu0 %v5004
        %5471 = vmatmul.f32.gmra.mxu0 %v5392
        %v5472 = vpop.f32.mrf.mxu0
        %v5473 = vadd.f32 %v5453, %v5472
        %5474 = vdwg.mxu0
        %5475 = vmatpush.msra.mxu0 %v5128
        %5476 = vmatpush.msra.mxu0 %v5124
        %5477 = vmatpush.msra.mxu0 %v5120
        %5478 = vmatpush.msra.mxu0 %v5116
        %5479 = vmatpush.msra.mxu0 %v5112
        %5480 = vmatpush.msra.mxu0 %v5108
        %5481 = vmatpush.msra.mxu0 %v5104
        %5482 = vmatpush.msra.mxu0 %v5100
        %5483 = vmatpush.msra.mxu0 %v5096
        %5484 = vmatpush.msra.mxu0 %v5092
        %5485 = vmatpush.msra.mxu0 %v5088
        %5486 = vmatpush.msra.mxu0 %v5084
        %5487 = vmatpush.msra.mxu0 %v5080
        %5488 = vmatpush.msra.mxu0 %v5076
        %5489 = vmatpush.msra.mxu0 %v5072
        %5490 = vmatpush.msra.mxu0 %v5068
        %5491 = vmatmul.f32.gmra.mxu0 %v5393
        %v5492 = vpop.f32.mrf.mxu0
        %v5493 = vadd.f32 %v5473, %v5492
        %5494 = vdwg.mxu0
        %5495 = vmatpush.msra.mxu0 %v5192
        %5496 = vmatpush.msra.mxu0 %v5188
        %5497 = vmatpush.msra.mxu0 %v5184
        %5498 = vmatpush.msra.mxu0 %v5180
        %5499 = vmatpush.msra.mxu0 %v5176
        %5500 = vmatpush.msra.mxu0 %v5172
        %5501 = vmatpush.msra.mxu0 %v5168
        %5502 = vmatpush.msra.mxu0 %v5164
        %5503 = vmatpush.msra.mxu0 %v5160
        %5504 = vmatpush.msra.mxu0 %v5156
        %5505 = vmatpush.msra.mxu0 %v5152
        %5506 = vmatpush.msra.mxu0 %v5148
        %5507 = vmatpush.msra.mxu0 %v5144
        %5508 = vmatpush.msra.mxu0 %v5140
        %5509 = vmatpush.msra.mxu0 %v5136
        %5510 = vmatpush.msra.mxu0 %v5132
        %5511 = vmatmul.f32.gmra.mxu0 %v5394
        %v5512 = vpop.f32.mrf.mxu0
        %v5513 = vadd.f32 %v5493, %v5512
        %5514 = vdwg.mxu0
        %5515 = vmatpush.msra.mxu0 %v5256
        %5516 = vmatpush.msra.mxu0 %v5252
        %5517 = vmatpush.msra.mxu0 %v5248
        %5518 = vmatpush.msra.mxu0 %v5244
        %5519 = vmatpush.msra.mxu0 %v5240
        %5520 = vmatpush.msra.mxu0 %v5236
        %5521 = vmatpush.msra.mxu0 %v5232
        %5522 = vmatpush.msra.mxu0 %v5228
        %5523 = vmatpush.msra.mxu0 %v5224
        %5524 = vmatpush.msra.mxu0 %v5220
        %5525 = vmatpush.msra.mxu0 %v5216
        %5526 = vmatpush.msra.mxu0 %v5212
        %5527 = vmatpush.msra.mxu0 %v5208
        %5528 = vmatpush.msra.mxu0 %v5204
        %5529 = vmatpush.msra.mxu0 %v5200
        %5530 = vmatpush.msra.mxu0 %v5196
        %5531 = vmatmul.f32.gmra.mxu0 %v5395
        %v5532 = vpop.f32.mrf.mxu0
        %v5533 = vadd.f32 %v5513, %v5532
        %5534 = vdwg.mxu0
        %5535 = vmatpush.msra.mxu0 %v5320
        %5536 = vmatpush.msra.mxu0 %v5316
        %5537 = vmatpush.msra.mxu0 %v5312
        %5538 = vmatpush.msra.mxu0 %v5308
        %5539 = vmatpush.msra.mxu0 %v5304
        %5540 = vmatpush.msra.mxu0 %v5300
        %5541 = vmatpush.msra.mxu0 %v5296
        %5542 = vmatpush.msra.mxu0 %v5292
        %5543 = vmatpush.msra.mxu0 %v5288
        %5544 = vmatpush.msra.mxu0 %v5284
        %5545 = vmatpush.msra.mxu0 %v5280
        %5546 = vmatpush.msra.mxu0 %v5276
        %5547 = vmatpush.msra.mxu0 %v5272
        %5548 = vmatpush.msra.mxu0 %v5268
        %5549 = vmatpush.msra.mxu0 %v5264
        %5550 = vmatpush.msra.mxu0 %v5260
        %5551 = vmatmul.f32.gmra.mxu0 %v5396
        %v5552 = vpop.f32.mrf.mxu0
        %v5553 = vadd.f32 %v5533, %v5552
        %5554 = vdwg.mxu0
        %5555 = vmatpush.msra.mxu0 %v5384
        %5556 = vmatpush.msra.mxu0 %v5380
        %5557 = vmatpush.msra.mxu0 %v5376
        %5558 = vmatpush.msra.mxu0 %v5372
        %5559 = vmatpush.msra.mxu0 %v5368
        %5560 = vmatpush.msra.mxu0 %v5364
        %5561 = vmatpush.msra.mxu0 %v5360
        %5562 = vmatpush.msra.mxu0 %v5356
        %5563 = vmatpush.msra.mxu0 %v5352
        %5564 = vmatpush.msra.mxu0 %v5348
        %5565 = vmatpush.msra.mxu0 %v5344
        %5566 = vmatpush.msra.mxu0 %v5340
        %5567 = vmatpush.msra.mxu0 %v5336
        %5568 = vmatpush.msra.mxu0 %v5332
        %5569 = vmatpush.msra.mxu0 %v5328
        %5570 = vmatpush.msra.mxu0 %v5324
        %5571 = vmatmul.f32.gmra.mxu0 %v5397
        %v5572 = vpop.f32.mrf.mxu0
        %v5573 = vadd.f32 %v5553, %v5572
        %5574 = vdwg.mxu0
        %5575 = vmatpush.msra.mxu0 %v4937
        %5576 = vmatpush.msra.mxu0 %v4933
        %5577 = vmatpush.msra.mxu0 %v4929
        %5578 = vmatpush.msra.mxu0 %v4925
        %5579 = vmatpush.msra.mxu0 %v4921
        %5580 = vmatpush.msra.mxu0 %v4917
        %5581 = vmatpush.msra.mxu0 %v4913
        %5582 = vmatpush.msra.mxu0 %v4909
        %5583 = vmatpush.msra.mxu0 %v4905
        %5584 = vmatpush.msra.mxu0 %v4901
        %5585 = vmatpush.msra.mxu0 %v4897
        %5586 = vmatpush.msra.mxu0 %v4893
        %5587 = vmatpush.msra.mxu0 %v4889
        %5588 = vmatpush.msra.mxu0 %v4885
        %5589 = vmatpush.msra.mxu0 %v4881
        %5590 = vmatpush.msra.mxu0 %v4877
        %5591 = vmatmul.f32.gmra.mxu0 %v5390
        %v5592 = vpop.f32.mrf.mxu0
        %v5593 = vadd.f32 %v5408, %v5592
        %5594 = vdwg.mxu0
        %5595 = vmatpush.msra.mxu0 %v5001
        %5596 = vmatpush.msra.mxu0 %v4997
        %5597 = vmatpush.msra.mxu0 %v4993
        %5598 = vmatpush.msra.mxu0 %v4989
        %5599 = vmatpush.msra.mxu0 %v4985
        %5600 = vmatpush.msra.mxu0 %v4981
        %5601 = vmatpush.msra.mxu0 %v4977
        %5602 = vmatpush.msra.mxu0 %v4973
        %5603 = vmatpush.msra.mxu0 %v4969
        %5604 = vmatpush.msra.mxu0 %v4965
        %5605 = vmatpush.msra.mxu0 %v4961
        %5606 = vmatpush.msra.mxu0 %v4957
        %5607 = vmatpush.msra.mxu0 %v4953
        %5608 = vmatpush.msra.mxu0 %v4949
        %5609 = vmatpush.msra.mxu0 %v4945
        %5610 = vmatpush.msra.mxu0 %v4941
        %5611 = vmatmul.f32.gmra.mxu0 %v5391
        %v5612 = vpop.f32.mrf.mxu0
        %v5613 = vadd.f32 %v5593, %v5612
        %5614 = vdwg.mxu0
        %5615 = vmatpush.msra.mxu0 %v5065
        %5616 = vmatpush.msra.mxu0 %v5061
        %5617 = vmatpush.msra.mxu0 %v5057
        %5618 = vmatpush.msra.mxu0 %v5053
        %5619 = vmatpush.msra.mxu0 %v5049
        %5620 = vmatpush.msra.mxu0 %v5045
        %5621 = vmatpush.msra.mxu0 %v5041
        %5622 = vmatpush.msra.mxu0 %v5037
        %5623 = vmatpush.msra.mxu0 %v5033
        %5624 = vmatpush.msra.mxu0 %v5029
        %5625 = vmatpush.msra.mxu0 %v5025
        %5626 = vmatpush.msra.mxu0 %v5021
        %5627 = vmatpush.msra.mxu0 %v5017
        %5628 = vmatpush.msra.mxu0 %v5013
        %5629 = vmatpush.msra.mxu0 %v5009
        %5630 = vmatpush.msra.mxu0 %v5005
        %5631 = vmatmul.f32.gmra.mxu0 %v5392
        %v5632 = vpop.f32.mrf.mxu0
        %v5633 = vadd.f32 %v5613, %v5632
        %5634 = vdwg.mxu0
        %5635 = vmatpush.msra.mxu0 %v5129
        %5636 = vmatpush.msra.mxu0 %v5125
        %5637 = vmatpush.msra.mxu0 %v5121
        %5638 = vmatpush.msra.mxu0 %v5117
        %5639 = vmatpush.msra.mxu0 %v5113
        %5640 = vmatpush.msra.mxu0 %v5109
        %5641 = vmatpush.msra.mxu0 %v5105
        %5642 = vmatpush.msra.mxu0 %v5101
        %5643 = vmatpush.msra.mxu0 %v5097
        %5644 = vmatpush.msra.mxu0 %v5093
        %5645 = vmatpush.msra.mxu0 %v5089
        %5646 = vmatpush.msra.mxu0 %v5085
        %5647 = vmatpush.msra.mxu0 %v5081
        %5648 = vmatpush.msra.mxu0 %v5077
        %5649 = vmatpush.msra.mxu0 %v5073
        %5650 = vmatpush.msra.mxu0 %v5069
        %5651 = vmatmul.f32.gmra.mxu0 %v5393
        %v5652 = vpop.f32.mrf.mxu0
        %v5653 = vadd.f32 %v5633, %v5652
        %5654 = vdwg.mxu0
        %5655 = vmatpush.msra.mxu0 %v5193
        %5656 = vmatpush.msra.mxu0 %v5189
        %5657 = vmatpush.msra.mxu0 %v5185
        %5658 = vmatpush.msra.mxu0 %v5181
        %5659 = vmatpush.msra.mxu0 %v5177
        %5660 = vmatpush.msra.mxu0 %v5173
        %5661 = vmatpush.msra.mxu0 %v5169
        %5662 = vmatpush.msra.mxu0 %v5165
        %5663 = vmatpush.msra.mxu0 %v5161
        %5664 = vmatpush.msra.mxu0 %v5157
        %5665 = vmatpush.msra.mxu0 %v5153
        %5666 = vmatpush.msra.mxu0 %v5149
        %5667 = vmatpush.msra.mxu0 %v5145
        %5668 = vmatpush.msra.mxu0 %v5141
        %5669 = vmatpush.msra.mxu0 %v5137
        %5670 = vmatpush.msra.mxu0 %v5133
        %5671 = vmatmul.f32.gmra.mxu0 %v5394
        %v5672 = vpop.f32.mrf.mxu0
        %v5673 = vadd.f32 %v5653, %v5672
        %5674 = vdwg.mxu0
        %5675 = vmatpush.msra.mxu0 %v5257
        %5676 = vmatpush.msra.mxu0 %v5253
        %5677 = vmatpush.msra.mxu0 %v5249
        %5678 = vmatpush.msra.mxu0 %v5245
        %5679 = vmatpush.msra.mxu0 %v5241
        %5680 = vmatpush.msra.mxu0 %v5237
        %5681 = vmatpush.msra.mxu0 %v5233
        %5682 = vmatpush.msra.mxu0 %v5229
        %5683 = vmatpush.msra.mxu0 %v5225
        %5684 = vmatpush.msra.mxu0 %v5221
        %5685 = vmatpush.msra.mxu0 %v5217
        %5686 = vmatpush.msra.mxu0 %v5213
        %5687 = vmatpush.msra.mxu0 %v5209
        %5688 = vmatpush.msra.mxu0 %v5205
        %5689 = vmatpush.msra.mxu0 %v5201
        %5690 = vmatpush.msra.mxu0 %v5197
        %5691 = vmatmul.f32.gmra.mxu0 %v5395
        %v5692 = vpop.f32.mrf.mxu0
        %v5693 = vadd.f32 %v5673, %v5692
        %5694 = vdwg.mxu0
        %5695 = vmatpush.msra.mxu0 %v5321
        %5696 = vmatpush.msra.mxu0 %v5317
        %5697 = vmatpush.msra.mxu0 %v5313
        %5698 = vmatpush.msra.mxu0 %v5309
        %5699 = vmatpush.msra.mxu0 %v5305
        %5700 = vmatpush.msra.mxu0 %v5301
        %5701 = vmatpush.msra.mxu0 %v5297
        %5702 = vmatpush.msra.mxu0 %v5293
        %5703 = vmatpush.msra.mxu0 %v5289
        %5704 = vmatpush.msra.mxu0 %v5285
        %5705 = vmatpush.msra.mxu0 %v5281
        %5706 = vmatpush.msra.mxu0 %v5277
        %5707 = vmatpush.msra.mxu0 %v5273
        %5708 = vmatpush.msra.mxu0 %v5269
        %5709 = vmatpush.msra.mxu0 %v5265
        %5710 = vmatpush.msra.mxu0 %v5261
        %5711 = vmatmul.f32.gmra.mxu0 %v5396
        %v5712 = vpop.f32.mrf.mxu0
        %v5713 = vadd.f32 %v5693, %v5712
        %5714 = vdwg.mxu0
        %5715 = vmatpush.msra.mxu0 %v5385
        %5716 = vmatpush.msra.mxu0 %v5381
        %5717 = vmatpush.msra.mxu0 %v5377
        %5718 = vmatpush.msra.mxu0 %v5373
        %5719 = vmatpush.msra.mxu0 %v5369
        %5720 = vmatpush.msra.mxu0 %v5365
        %5721 = vmatpush.msra.mxu0 %v5361
        %5722 = vmatpush.msra.mxu0 %v5357
        %5723 = vmatpush.msra.mxu0 %v5353
        %5724 = vmatpush.msra.mxu0 %v5349
        %5725 = vmatpush.msra.mxu0 %v5345
        %5726 = vmatpush.msra.mxu0 %v5341
        %5727 = vmatpush.msra.mxu0 %v5337
        %5728 = vmatpush.msra.mxu0 %v5333
        %5729 = vmatpush.msra.mxu0 %v5329
        %5730 = vmatpush.msra.mxu0 %v5325
        %5731 = vmatmul.f32.gmra.mxu0 %v5397
        %v5732 = vpop.f32.mrf.mxu0
        %v5733 = vadd.f32 %v5713, %v5732
        %5734 = vdwg.mxu0
        %5735 = vmatpush.msra.mxu0 %v4938
        %5736 = vmatpush.msra.mxu0 %v4934
        %5737 = vmatpush.msra.mxu0 %v4930
        %5738 = vmatpush.msra.mxu0 %v4926
        %5739 = vmatpush.msra.mxu0 %v4922
        %5740 = vmatpush.msra.mxu0 %v4918
        %5741 = vmatpush.msra.mxu0 %v4914
        %5742 = vmatpush.msra.mxu0 %v4910
        %5743 = vmatpush.msra.mxu0 %v4906
        %5744 = vmatpush.msra.mxu0 %v4902
        %5745 = vmatpush.msra.mxu0 %v4898
        %5746 = vmatpush.msra.mxu0 %v4894
        %5747 = vmatpush.msra.mxu0 %v4890
        %5748 = vmatpush.msra.mxu0 %v4886
        %5749 = vmatpush.msra.mxu0 %v4882
        %5750 = vmatpush.msra.mxu0 %v4878
        %5751 = vmatmul.f32.gmra.mxu0 %v5390
        %v5752 = vpop.f32.mrf.mxu0
        %v5753 = vadd.f32 %v5409, %v5752
        %5754 = vdwg.mxu0
        %5755 = vmatpush.msra.mxu0 %v5002
        %5756 = vmatpush.msra.mxu0 %v4998
        %5757 = vmatpush.msra.mxu0 %v4994
        %5758 = vmatpush.msra.mxu0 %v4990
        %5759 = vmatpush.msra.mxu0 %v4986
        %5760 = vmatpush.msra.mxu0 %v4982
        %5761 = vmatpush.msra.mxu0 %v4978
        %5762 = vmatpush.msra.mxu0 %v4974
        %5763 = vmatpush.msra.mxu0 %v4970
        %5764 = vmatpush.msra.mxu0 %v4966
        %5765 = vmatpush.msra.mxu0 %v4962
        %5766 = vmatpush.msra.mxu0 %v4958
        %5767 = vmatpush.msra.mxu0 %v4954
        %5768 = vmatpush.msra.mxu0 %v4950
        %5769 = vmatpush.msra.mxu0 %v4946
        %5770 = vmatpush.msra.mxu0 %v4942
        %5771 = vmatmul.f32.gmra.mxu0 %v5391
        %v5772 = vpop.f32.mrf.mxu0
        %v5773 = vadd.f32 %v5753, %v5772
        %5774 = vdwg.mxu0
        %5775 = vmatpush.msra.mxu0 %v5066
        %5776 = vmatpush.msra.mxu0 %v5062
        %5777 = vmatpush.msra.mxu0 %v5058
        %5778 = vmatpush.msra.mxu0 %v5054
        %5779 = vmatpush.msra.mxu0 %v5050
        %5780 = vmatpush.msra.mxu0 %v5046
        %5781 = vmatpush.msra.mxu0 %v5042
        %5782 = vmatpush.msra.mxu0 %v5038
        %5783 = vmatpush.msra.mxu0 %v5034
        %5784 = vmatpush.msra.mxu0 %v5030
        %5785 = vmatpush.msra.mxu0 %v5026
        %5786 = vmatpush.msra.mxu0 %v5022
        %5787 = vmatpush.msra.mxu0 %v5018
        %5788 = vmatpush.msra.mxu0 %v5014
        %5789 = vmatpush.msra.mxu0 %v5010
        %5790 = vmatpush.msra.mxu0 %v5006
        %5791 = vmatmul.f32.gmra.mxu0 %v5392
        %v5792 = vpop.f32.mrf.mxu0
        %v5793 = vadd.f32 %v5773, %v5792
        %5794 = vdwg.mxu0
        %5795 = vmatpush.msra.mxu0 %v5130
        %5796 = vmatpush.msra.mxu0 %v5126
        %5797 = vmatpush.msra.mxu0 %v5122
        %5798 = vmatpush.msra.mxu0 %v5118
        %5799 = vmatpush.msra.mxu0 %v5114
        %5800 = vmatpush.msra.mxu0 %v5110
        %5801 = vmatpush.msra.mxu0 %v5106
        %5802 = vmatpush.msra.mxu0 %v5102
        %5803 = vmatpush.msra.mxu0 %v5098
        %5804 = vmatpush.msra.mxu0 %v5094
        %5805 = vmatpush.msra.mxu0 %v5090
        %5806 = vmatpush.msra.mxu0 %v5086
        %5807 = vmatpush.msra.mxu0 %v5082
        %5808 = vmatpush.msra.mxu0 %v5078
        %5809 = vmatpush.msra.mxu0 %v5074
        %5810 = vmatpush.msra.mxu0 %v5070
        %5811 = vmatmul.f32.gmra.mxu0 %v5393
        %v5812 = vpop.f32.mrf.mxu0
        %v5813 = vadd.f32 %v5793, %v5812
        %5814 = vdwg.mxu0
        %5815 = vmatpush.msra.mxu0 %v5194
        %5816 = vmatpush.msra.mxu0 %v5190
        %5817 = vmatpush.msra.mxu0 %v5186
        %5818 = vmatpush.msra.mxu0 %v5182
        %5819 = vmatpush.msra.mxu0 %v5178
        %5820 = vmatpush.msra.mxu0 %v5174
        %5821 = vmatpush.msra.mxu0 %v5170
        %5822 = vmatpush.msra.mxu0 %v5166
        %5823 = vmatpush.msra.mxu0 %v5162
        %5824 = vmatpush.msra.mxu0 %v5158
        %5825 = vmatpush.msra.mxu0 %v5154
        %5826 = vmatpush.msra.mxu0 %v5150
        %5827 = vmatpush.msra.mxu0 %v5146
        %5828 = vmatpush.msra.mxu0 %v5142
        %5829 = vmatpush.msra.mxu0 %v5138
        %5830 = vmatpush.msra.mxu0 %v5134
        %5831 = vmatmul.f32.gmra.mxu0 %v5394
        %v5832 = vpop.f32.mrf.mxu0
        %v5833 = vadd.f32 %v5813, %v5832
        %5834 = vdwg.mxu0
        %5835 = vmatpush.msra.mxu0 %v5258
        %5836 = vmatpush.msra.mxu0 %v5254
        %5837 = vmatpush.msra.mxu0 %v5250
        %5838 = vmatpush.msra.mxu0 %v5246
        %5839 = vmatpush.msra.mxu0 %v5242
        %5840 = vmatpush.msra.mxu0 %v5238
        %5841 = vmatpush.msra.mxu0 %v5234
        %5842 = vmatpush.msra.mxu0 %v5230
        %5843 = vmatpush.msra.mxu0 %v5226
        %5844 = vmatpush.msra.mxu0 %v5222
        %5845 = vmatpush.msra.mxu0 %v5218
        %5846 = vmatpush.msra.mxu0 %v5214
        %5847 = vmatpush.msra.mxu0 %v5210
        %5848 = vmatpush.msra.mxu0 %v5206
        %5849 = vmatpush.msra.mxu0 %v5202
        %5850 = vmatpush.msra.mxu0 %v5198
        %5851 = vmatmul.f32.gmra.mxu0 %v5395
        %v5852 = vpop.f32.mrf.mxu0
        %v5853 = vadd.f32 %v5833, %v5852
        %5854 = vdwg.mxu0
        %5855 = vmatpush.msra.mxu0 %v5322
        %5856 = vmatpush.msra.mxu0 %v5318
        %5857 = vmatpush.msra.mxu0 %v5314
        %5858 = vmatpush.msra.mxu0 %v5310
        %5859 = vmatpush.msra.mxu0 %v5306
        %5860 = vmatpush.msra.mxu0 %v5302
        %5861 = vmatpush.msra.mxu0 %v5298
        %5862 = vmatpush.msra.mxu0 %v5294
        %5863 = vmatpush.msra.mxu0 %v5290
        %5864 = vmatpush.msra.mxu0 %v5286
        %5865 = vmatpush.msra.mxu0 %v5282
        %5866 = vmatpush.msra.mxu0 %v5278
        %5867 = vmatpush.msra.mxu0 %v5274
        %5868 = vmatpush.msra.mxu0 %v5270
        %5869 = vmatpush.msra.mxu0 %v5266
        %5870 = vmatpush.msra.mxu0 %v5262
        %5871 = vmatmul.f32.gmra.mxu0 %v5396
        %v5872 = vpop.f32.mrf.mxu0
        %v5873 = vadd.f32 %v5853, %v5872
        %5874 = vdwg.mxu0
        %5875 = vmatpush.msra.mxu0 %v5386
        %5876 = vmatpush.msra.mxu0 %v5382
        %5877 = vmatpush.msra.mxu0 %v5378
        %5878 = vmatpush.msra.mxu0 %v5374
        %5879 = vmatpush.msra.mxu0 %v5370
        %5880 = vmatpush.msra.mxu0 %v5366
        %5881 = vmatpush.msra.mxu0 %v5362
        %5882 = vmatpush.msra.mxu0 %v5358
        %5883 = vmatpush.msra.mxu0 %v5354
        %5884 = vmatpush.msra.mxu0 %v5350
        %5885 = vmatpush.msra.mxu0 %v5346
        %5886 = vmatpush.msra.mxu0 %v5342
        %5887 = vmatpush.msra.mxu0 %v5338
        %5888 = vmatpush.msra.mxu0 %v5334
        %5889 = vmatpush.msra.mxu0 %v5330
        %5890 = vmatpush.msra.mxu0 %v5326
        %5891 = vmatmul.f32.gmra.mxu0 %v5397
        %v5892 = vpop.f32.mrf.mxu0
        %v5893 = vadd.f32 %v5873, %v5892
        %5894 = vdwg.mxu0
        %5895 = vmatpush.msra.mxu0 %v4939
        %5896 = vmatpush.msra.mxu0 %v4935
        %5897 = vmatpush.msra.mxu0 %v4931
        %5898 = vmatpush.msra.mxu0 %v4927
        %5899 = vmatpush.msra.mxu0 %v4923
        %5900 = vmatpush.msra.mxu0 %v4919
        %5901 = vmatpush.msra.mxu0 %v4915
        %5902 = vmatpush.msra.mxu0 %v4911
        %5903 = vmatpush.msra.mxu0 %v4907
        %5904 = vmatpush.msra.mxu0 %v4903
        %5905 = vmatpush.msra.mxu0 %v4899
        %5906 = vmatpush.msra.mxu0 %v4895
        %5907 = vmatpush.msra.mxu0 %v4891
        %5908 = vmatpush.msra.mxu0 %v4887
        %5909 = vmatpush.msra.mxu0 %v4883
        %5910 = vmatpush.msra.mxu0 %v4879
        %5911 = vmatmul.f32.gmra.mxu0 %v5390
        %v5912 = vpop.f32.mrf.mxu0
        %v5913 = vadd.f32 %v5410, %v5912
        %5914 = vdwg.mxu0
        %5915 = vmatpush.msra.mxu0 %v5003
        %5916 = vmatpush.msra.mxu0 %v4999
        %5917 = vmatpush.msra.mxu0 %v4995
        %5918 = vmatpush.msra.mxu0 %v4991
        %5919 = vmatpush.msra.mxu0 %v4987
        %5920 = vmatpush.msra.mxu0 %v4983
        %5921 = vmatpush.msra.mxu0 %v4979
        %5922 = vmatpush.msra.mxu0 %v4975
        %5923 = vmatpush.msra.mxu0 %v4971
        %5924 = vmatpush.msra.mxu0 %v4967
        %5925 = vmatpush.msra.mxu0 %v4963
        %5926 = vmatpush.msra.mxu0 %v4959
        %5927 = vmatpush.msra.mxu0 %v4955
        %5928 = vmatpush.msra.mxu0 %v4951
        %5929 = vmatpush.msra.mxu0 %v4947
        %5930 = vmatpush.msra.mxu0 %v4943
        %5931 = vmatmul.f32.gmra.mxu0 %v5391
        %v5932 = vpop.f32.mrf.mxu0
        %v5933 = vadd.f32 %v5913, %v5932
        %5934 = vdwg.mxu0
        %5935 = vmatpush.msra.mxu0 %v5067
        %5936 = vmatpush.msra.mxu0 %v5063
        %5937 = vmatpush.msra.mxu0 %v5059
        %5938 = vmatpush.msra.mxu0 %v5055
        %5939 = vmatpush.msra.mxu0 %v5051
        %5940 = vmatpush.msra.mxu0 %v5047
        %5941 = vmatpush.msra.mxu0 %v5043
        %5942 = vmatpush.msra.mxu0 %v5039
        %5943 = vmatpush.msra.mxu0 %v5035
        %5944 = vmatpush.msra.mxu0 %v5031
        %5945 = vmatpush.msra.mxu0 %v5027
        %5946 = vmatpush.msra.mxu0 %v5023
        %5947 = vmatpush.msra.mxu0 %v5019
        %5948 = vmatpush.msra.mxu0 %v5015
        %5949 = vmatpush.msra.mxu0 %v5011
        %5950 = vmatpush.msra.mxu0 %v5007
        %5951 = vmatmul.f32.gmra.mxu0 %v5392
        %v5952 = vpop.f32.mrf.mxu0
        %v5953 = vadd.f32 %v5933, %v5952
        %5954 = vdwg.mxu0
        %5955 = vmatpush.msra.mxu0 %v5131
        %5956 = vmatpush.msra.mxu0 %v5127
        %5957 = vmatpush.msra.mxu0 %v5123
        %5958 = vmatpush.msra.mxu0 %v5119
        %5959 = vmatpush.msra.mxu0 %v5115
        %5960 = vmatpush.msra.mxu0 %v5111
        %5961 = vmatpush.msra.mxu0 %v5107
        %5962 = vmatpush.msra.mxu0 %v5103
        %5963 = vmatpush.msra.mxu0 %v5099
        %5964 = vmatpush.msra.mxu0 %v5095
        %5965 = vmatpush.msra.mxu0 %v5091
        %5966 = vmatpush.msra.mxu0 %v5087
        %5967 = vmatpush.msra.mxu0 %v5083
        %5968 = vmatpush.msra.mxu0 %v5079
        %5969 = vmatpush.msra.mxu0 %v5075
        %5970 = vmatpush.msra.mxu0 %v5071
        %5971 = vmatmul.f32.gmra.mxu0 %v5393
        %v5972 = vpop.f32.mrf.mxu0
        %v5973 = vadd.f32 %v5953, %v5972
        %5974 = vdwg.mxu0
        %5975 = vmatpush.msra.mxu0 %v5195
        %5976 = vmatpush.msra.mxu0 %v5191
        %5977 = vmatpush.msra.mxu0 %v5187
        %5978 = vmatpush.msra.mxu0 %v5183
        %5979 = vmatpush.msra.mxu0 %v5179
        %5980 = vmatpush.msra.mxu0 %v5175
        %5981 = vmatpush.msra.mxu0 %v5171
        %5982 = vmatpush.msra.mxu0 %v5167
        %5983 = vmatpush.msra.mxu0 %v5163
        %5984 = vmatpush.msra.mxu0 %v5159
        %5985 = vmatpush.msra.mxu0 %v5155
        %5986 = vmatpush.msra.mxu0 %v5151
        %5987 = vmatpush.msra.mxu0 %v5147
        %5988 = vmatpush.msra.mxu0 %v5143
        %5989 = vmatpush.msra.mxu0 %v5139
        %5990 = vmatpush.msra.mxu0 %v5135
        %5991 = vmatmul.f32.gmra.mxu0 %v5394
        %v5992 = vpop.f32.mrf.mxu0
        %v5993 = vadd.f32 %v5973, %v5992
        %5994 = vdwg.mxu0
        %5995 = vmatpush.msra.mxu0 %v5259
        %5996 = vmatpush.msra.mxu0 %v5255
        %5997 = vmatpush.msra.mxu0 %v5251
        %5998 = vmatpush.msra.mxu0 %v5247
        %5999 = vmatpush.msra.mxu0 %v5243
        %6000 = vmatpush.msra.mxu0 %v5239
        %6001 = vmatpush.msra.mxu0 %v5235
        %6002 = vmatpush.msra.mxu0 %v5231
        %6003 = vmatpush.msra.mxu0 %v5227
        %6004 = vmatpush.msra.mxu0 %v5223
        %6005 = vmatpush.msra.mxu0 %v5219
        %6006 = vmatpush.msra.mxu0 %v5215
        %6007 = vmatpush.msra.mxu0 %v5211
        %6008 = vmatpush.msra.mxu0 %v5207
        %6009 = vmatpush.msra.mxu0 %v5203
        %6010 = vmatpush.msra.mxu0 %v5199
        %6011 = vmatmul.f32.gmra.mxu0 %v5395
        %v6012 = vpop.f32.mrf.mxu0
        %v6013 = vadd.f32 %v5993, %v6012
        %6014 = vdwg.mxu0
        %6015 = vmatpush.msra.mxu0 %v5323
        %6016 = vmatpush.msra.mxu0 %v5319
        %6017 = vmatpush.msra.mxu0 %v5315
        %6018 = vmatpush.msra.mxu0 %v5311
        %6019 = vmatpush.msra.mxu0 %v5307
        %6020 = vmatpush.msra.mxu0 %v5303
        %6021 = vmatpush.msra.mxu0 %v5299
        %6022 = vmatpush.msra.mxu0 %v5295
        %6023 = vmatpush.msra.mxu0 %v5291
        %6024 = vmatpush.msra.mxu0 %v5287
        %6025 = vmatpush.msra.mxu0 %v5283
        %6026 = vmatpush.msra.mxu0 %v5279
        %6027 = vmatpush.msra.mxu0 %v5275
        %6028 = vmatpush.msra.mxu0 %v5271
        %6029 = vmatpush.msra.mxu0 %v5267
        %6030 = vmatpush.msra.mxu0 %v5263
        %6031 = vmatmul.f32.gmra.mxu0 %v5396
        %v6032 = vpop.f32.mrf.mxu0
        %v6033 = vadd.f32 %v6013, %v6032
        %6034 = vdwg.mxu0
        %6035 = vmatpush.msra.mxu0 %v5387
        %6036 = vmatpush.msra.mxu0 %v5383
        %6037 = vmatpush.msra.mxu0 %v5379
        %6038 = vmatpush.msra.mxu0 %v5375
        %6039 = vmatpush.msra.mxu0 %v5371
        %6040 = vmatpush.msra.mxu0 %v5367
        %6041 = vmatpush.msra.mxu0 %v5363
        %6042 = vmatpush.msra.mxu0 %v5359
        %6043 = vmatpush.msra.mxu0 %v5355
        %6044 = vmatpush.msra.mxu0 %v5351
        %6045 = vmatpush.msra.mxu0 %v5347
        %6046 = vmatpush.msra.mxu0 %v5343
        %6047 = vmatpush.msra.mxu0 %v5339
        %6048 = vmatpush.msra.mxu0 %v5335
        %6049 = vmatpush.msra.mxu0 %v5331
        %6050 = vmatpush.msra.mxu0 %v5327
        %6051 = vmatmul.f32.gmra.mxu0 %v5397
        %v6052 = vpop.f32.mrf.mxu0
        %v6053 = vadd.f32 %v6033, %v6052
        %6054 = vdwg.mxu0
        %v6055 = vmax.f32 %v5573, 0.0
        %v6056 = vmax.f32 %v5733, 0.0
        %v6057 = vmax.f32 %v5893, 0.0
        %v6058 = vmax.f32 %v6053, 0.0
        %v6059 = vld [vmem:[%s7] sm:$0xff]
        %v6060 = vld [vmem:[%s7 + $0x8] sm:$0xff]
        %v6061 = vld [vmem:[%s7 + $0x10] sm:$0xff]
        %v6062 = vld [vmem:[%s7 + $0x18] sm:$0xff]
        %v6063 = vld [vmem:[%s7 + $0x20] sm:$0xff]
        %v6064 = vld [vmem:[%s7 + $0x28] sm:$0xff]
        %v6065 = vld [vmem:[%s7 + $0x30] sm:$0xff]
        %v6066 = vld [vmem:[%s7 + $0x38] sm:$0xff]
        %v6067 = vld [vmem:[%s7 + $0x40] sm:$0xff]
        %v6068 = vld [vmem:[%s7 + $0x48] sm:$0xff]
        %v6069 = vld [vmem:[%s7 + $0x50] sm:$0xff]
        %v6070 = vld [vmem:[%s7 + $0x58] sm:$0xff]
        %v6071 = vld [vmem:[%s7 + $0x60] sm:$0xff]
        %v6072 = vld [vmem:[%s7 + $0x68] sm:$0xff]
        %v6073 = vld [vmem:[%s7 + $0x70] sm:$0xff]
        %v6074 = vld [vmem:[%s7 + $0x78] sm:$0xff]
        %v6075 = vld [vmem:[%s7 + $0x80] sm:$0xff]
        %v6076 = vld [vmem:[%s7 + $0x88] sm:$0xff]
        %v6077 = vld [vmem:[%s7 + $0x90] sm:$0xff]
        %v6078 = vld [vmem:[%s7 + $0x98] sm:$0xff]
        %v6079 = vld [vmem:[%s7 + $0xa0] sm:$0xff]
        %v6080 = vld [vmem:[%s7 + $0xa8] sm:$0xff]
        %v6081 = vld [vmem:[%s7 + $0xb0] sm:$0xff]
        %v6082 = vld [vmem:[%s7 + $0xb8] sm:$0xff]
        %v6083 = vld [vmem:[%s7 + $0xc0] sm:$0xff]
        %v6084 = vld [vmem:[%s7 + $0xc8] sm:$0xff]
        %v6085 = vld [vmem:[%s7 + $0xd0] sm:$0xff]
        %v6086 = vld [vmem:[%s7 + $0xd8] sm:$0xff]
        %v6087 = vld [vmem:[%s7 + $0xe0] sm:$0xff]
        %v6088 = vld [vmem:[%s7 + $0xe8] sm:$0xff]
        %v6089 = vld [vmem:[%s7 + $0xf0] sm:$0xff]
        %v6090 = vld [vmem:[%s7 + $0xf8] sm:$0xff]
        %v6091 = vld [vmem:[%s7 + $0x100] sm:$0xff]
        %v6092 = vld [vmem:[%s7 + $0x108] sm:$0xff]
        %v6093 = vld [vmem:[%s7 + $0x110] sm:$0xff]
        %v6094 = vld [vmem:[%s7 + $0x118] sm:$0xff]
        %v6095 = vld [vmem:[%s7 + $0x120] sm:$0xff]
        %v6096 = vld [vmem:[%s7 + $0x128] sm:$0xff]
        %v6097 = vld [vmem:[%s7 + $0x130] sm:$0xff]
        %v6098 = vld [vmem:[%s7 + $0x138] sm:$0xff]
        %v6099 = vld [vmem:[%s7 + $0x140] sm:$0xff]
        %v6100 = vld [vmem:[%s7 + $0x148] sm:$0xff]
        %v6101 = vld [vmem:[%s7 + $0x150] sm:$0xff]
        %v6102 = vld [vmem:[%s7 + $0x158] sm:$0xff]
        %v6103 = vld [vmem:[%s7 + $0x160] sm:$0xff]
        %v6104 = vld [vmem:[%s7 + $0x168] sm:$0xff]
        %v6105 = vld [vmem:[%s7 + $0x170] sm:$0xff]
        %v6106 = vld [vmem:[%s7 + $0x178] sm:$0xff]
        %v6107 = vld [vmem:[%s7 + $0x180] sm:$0xff]
        %v6108 = vld [vmem:[%s7 + $0x188] sm:$0xff]
        %v6109 = vld [vmem:[%s7 + $0x190] sm:$0xff]
        %v6110 = vld [vmem:[%s7 + $0x198] sm:$0xff]
        %v6111 = vld [vmem:[%s7 + $0x1a0] sm:$0xff]
        %v6112 = vld [vmem:[%s7 + $0x1a8] sm:$0xff]
        %v6113 = vld [vmem:[%s7 + $0x1b0] sm:$0xff]
        %v6114 = vld [vmem:[%s7 + $0x1b8] sm:$0xff]
        %v6115 = vld [vmem:[%s7 + $0x1c0] sm:$0xff]
        %v6116 = vld [vmem:[%s7 + $0x1c8] sm:$0xff]
        %v6117 = vld [vmem:[%s7 + $0x1d0] sm:$0xff]
        %v6118 = vld [vmem:[%s7 + $0x1d8] sm:$0xff]
        %v6119 = vld [vmem:[%s7 + $0x1e0] sm:$0xff]
        %v6120 = vld [vmem:[%s7 + $0x1e8] sm:$0xff]
        %v6121 = vld [vmem:[%s7 + $0x1f0] sm:$0xff]
        %v6122 = vld [vmem:[%s7 + $0x1f8] sm:$0xff]
        %v6123 = vld [vmem:[#allocation16] sm:$0x1]
        %6124 = vmatpush.msra.mxu0 %v6074
        %6125 = vmatpush.msra.mxu0 %v6073
        %6126 = vmatpush.msra.mxu0 %v6072
        %6127 = vmatpush.msra.mxu0 %v6071
        %6128 = vmatpush.msra.mxu0 %v6070
        %6129 = vmatpush.msra.mxu0 %v6069
        %6130 = vmatpush.msra.mxu0 %v6068
        %6131 = vmatpush.msra.mxu0 %v6067
        %6132 = vmatpush.msra.mxu0 %v6066
        %6133 = vmatpush.msra.mxu0 %v6065
        %6134 = vmatpush.msra.mxu0 %v6064
        %6135 = vmatpush.msra.mxu0 %v6063
        %6136 = vmatpush.msra.mxu0 %v6062
        %6137 = vmatpush.msra.mxu0 %v6061
        %6138 = vmatpush.msra.mxu0 %v6060
        %6139 = vmatpush.msra.mxu0 %v6059
        %6140 = vmatmul.f32.gmra.mxu0 %v6055
        %v6141 = vpop.f32.mrf.mxu0
        %v6142 = vadd.f32 %v6123, %v6141
        %6143 = vdwg.mxu0
        %6144 = vmatpush.msra.mxu0 %v6090
        %6145 = vmatpush.msra.mxu0 %v6089
        %6146 = vmatpush.msra.mxu0 %v6088
        %6147 = vmatpush.msra.mxu0 %v6087
        %6148 = vmatpush.msra.mxu0 %v6086
        %6149 = vmatpush.msra.mxu0 %v6085
        %6150 = vmatpush.msra.mxu0 %v6084
        %6151 = vmatpush.msra.mxu0 %v6083
        %6152 = vmatpush.msra.mxu0 %v6082
        %6153 = vmatpush.msra.mxu0 %v6081
        %6154 = vmatpush.msra.mxu0 %v6080
        %6155 = vmatpush.msra.mxu0 %v6079
        %6156 = vmatpush.msra.mxu0 %v6078
        %6157 = vmatpush.msra.mxu0 %v6077
        %6158 = vmatpush.msra.mxu0 %v6076
        %6159 = vmatpush.msra.mxu0 %v6075
        %6160 = vmatmul.f32.gmra.mxu0 %v6056
        %v6161 = vpop.f32.mrf.mxu0
        %v6162 = vadd.f32 %v6142, %v6161
        %6163 = vdwg.mxu0
        %6164 = vmatpush.msra.mxu0 %v6106
        %6165 = vmatpush.msra.mxu0 %v6105
        %6166 = vmatpush.msra.mxu0 %v6104
        %6167 = vmatpush.msra.mxu0 %v6103
        %6168 = vmatpush.msra.mxu0 %v6102
        %6169 = vmatpush.msra.mxu0 %v6101
        %6170 = vmatpush.msra.mxu0 %v6100
        %6171 = vmatpush.msra.mxu0 %v6099
        %6172 = vmatpush.msra.mxu0 %v6098
        %6173 = vmatpush.msra.mxu0 %v6097
        %6174 = vmatpush.msra.mxu0 %v6096
        %6175 = vmatpush.msra.mxu0 %v6095
        %6176 = vmatpush.msra.mxu0 %v6094
        %6177 = vmatpush.msra.mxu0 %v6093
        %6178 = vmatpush.msra.mxu0 %v6092
        %6179 = vmatpush.msra.mxu0 %v6091
        %6180 = vmatmul.f32.gmra.mxu0 %v6057
        %v6181 = vpop.f32.mrf.mxu0
        %v6182 = vadd.f32 %v6162, %v6181
        %6183 = vdwg.mxu0
        %6184 = vmatpush.msra.mxu0 %v6122
        %6185 = vmatpush.msra.mxu0 %v6121
        %6186 = vmatpush.msra.mxu0 %v6120
        %6187 = vmatpush.msra.mxu0 %v6119
        %6188 = vmatpush.msra.mxu0 %v6118
        %6189 = vmatpush.msra.mxu0 %v6117
        %6190 = vmatpush.msra.mxu0 %v6116
        %6191 = vmatpush.msra.mxu0 %v6115
        %6192 = vmatpush.msra.mxu0 %v6114
        %6193 = vmatpush.msra.mxu0 %v6113
        %6194 = vmatpush.msra.mxu0 %v6112
        %6195 = vmatpush.msra.mxu0 %v6111
        %6196 = vmatpush.msra.mxu0 %v6110
        %6197 = vmatpush.msra.mxu0 %v6109
        %6198 = vmatpush.msra.mxu0 %v6108
        %6199 = vmatpush.msra.mxu0 %v6107
        %6200 = vmatmul.f32.gmra.mxu0 %v6058
        %v6201 = vpop.f32.mrf.mxu0
        %v6202 = vadd.f32 %v6182, %v6201
        %6203 = vdwg.mxu0
        %vm6204 = vcmask 8192
        %6205 = vst.msk [vmem:[%s416] sm:$0x1] %vm6204, %v6202
        %s6206 = sand.u32 %s229, 1
        %s6207 = scalar_lea.sflag [#allocation9], %s6206
        %s6208 = sand.u32 %s229, 1
        %s6209 = scalar_lea.vmem [#allocation18], %s6208
        // Predicated region
        $region81: #{sample_cnn_forward.1} parent=55 // pred_check
          %p6210 = pneg %p239
        $region82: #{sample_cnn_forward.1} parent=55 // pred_check_branch
          %6212 = sbr.rel (%p6210) target = $region84
        $region83: #{sample_cnn_forward.1} parent=55 // pred_region
          %6214 = vsyncadd %s6207, 0
          %s6215 = scalar_lea.hbm %s9, %s27
          %s6217 = sshll.u32 %s6209, 4
          %s6218 = int_to_ptr.vmem [resolvable:$true] %s6217
          %s6219 = sshll.u32 %s6215, 4
          %s6220 = int_to_ptr.hbm [resolvable:$true] %s6219
          %6222 = dma.vmem_to_hbm [thread:$0]  %s6218, 16, %s6220, %s6207
        $region84: #{sample_cnn_forward.1} parent=55 // pred_fallthru
          _
      $region56: #{sample_cnn_forward.1} parent=5 // pred_fallthru
        _
      %p6223 = scmp.le.s32.totalorder 2, %s22
      // Predicated region
      $region85: #{sample_cnn_forward.1} parent=5 // pred_check
        %p6224 = pneg %p6223
      $region86: #{sample_cnn_forward.1} parent=5 // pred_check_branch
        %6226 = sbr.rel (%p6224) target = $region88
      $region87: #{sample_cnn_forward.1} parent=5 // pred_region
        %s6227 = ssub.s32 %s22, 2
        // Predicated region
        $region89: #{sample_cnn_forward.1} parent=87 // pred_check
          %p6228 = pneg %p245
        $region90: #{sample_cnn_forward.1} parent=87 // pred_check_branch
          %6230 = sbr.rel (%p6228) target = $region92
        $region91: #{sample_cnn_forward.1} parent=87 // pred_region
          %s6231 = sand.u32 %s230, 1
          %s6232 = scalar_lea.sflag [#allocation9], %s6231
          %s6233 = sand.u32 %s230, 1
          %s6234 = scalar_lea.vmem [#allocation18], %s6233
          %6236 = dma.done %s6232, 16
        $region92: #{sample_cnn_forward.1} parent=87 // pred_fallthru
          _
      $region88: #{sample_cnn_forward.1} parent=5 // pred_fallthru
        _
    $region6: #{sample_cnn_forward.1} parent=1 // loop_footer
      %s26 = sadd.s32 1, %s22
    $region7: #{sample_cnn_forward.1} parent=1 // loop_footer_branch
      %21 = sbr.rel target = $region3
    $region8: #{sample_cnn_forward.1} parent=1 // loop_exit
      _
    %6237 = vsyncpa [#allocation8], 1
    %s6238 = scalar_lea.sflag [#allocation8], 1
    %6239 = vsyncpa %s6238, 1
    %6240 = vsyncpa [#allocation11], 1
    %6241 = vsyncpa [#allocation14], 1
    %6242 = vsyncpa [#allocation17], 1
    %6243 = vsyncpa [#allocation9], 1
    %s6244 = scalar_lea.sflag [#allocation9], 1
    %6245 = vsyncpa %s6244, 1

</llo_original>
